<compile_context>
chip_gen: v7x
topology: tpu7x:2x2x1
jax: 0.10.0
libtpu: 0.0.40
codegen_flags: <defaults>
</compile_context>

<pallas_src>
import jax
import jax.numpy as jnp
import numpy as np
from jax.experimental import pallas as pl
from jax.experimental.pallas import tpu as pltpu  # noqa: F401  (not needed in single-shot form)

D_MODEL = 64
N_HEADS = 4
HEAD_DIM = D_MODEL // N_HEADS
D_FF = 2048          # nn.TransformerEncoderLayer default dim_feedforward
N_LAYERS = 2
LN_EPS = 1e-5

# Row indices of the packed per-layer vector slab.
_ROW_BO, _ROW_LN1G, _ROW_LN1B, _ROW_B2, _ROW_LN2G, _ROW_LN2B = range(6)
_VEC_ROWS = 8        # padded to a full sublane group


def _layernorm(h, gamma, beta):
    mu = jnp.mean(h, axis=-1, keepdims=True)
    var = jnp.mean((h - mu) ** 2, axis=-1, keepdims=True)
    return (h - mu) * jax.lax.rsqrt(var + LN_EPS) * gamma + beta


def transformer_classifier_kernel(
    x_ref,              # [N, input_dim]   f32
    we_ref, be_ref,     # [input_dim, 64]  bf16, [1, 64] f32
    wqkv_ref,           # [L, 64, 192]     bf16  (Q|K|V fused, Q pre-scaled)
    bqkv_ref,           # [L, 1, 192]      f32   (Q part pre-scaled)
    wo_ref,             # [L, 64, 64]      bf16
    vecs_ref,           # [L, 8, 64]       f32   rows: bo, ln1g, ln1b, b2, ln2g, ln2b, pad, pad
    w1_ref, b1_ref,     # [L, 64, 2048]    bf16, [L, 1, 2048] f32
    w2_ref,             # [L, 2048, 64]    bf16
    wc1_ref, bc1_ref,   # [64, 32] f32, [1, 32] f32
    wc2_ref, bc2_ref,   # [32, C]  f32, [1, C]  f32
    out_ref,            # [N, C]   f32
):
    f32 = jnp.float32
    bf16 = jnp.bfloat16
    n = x_ref.shape[0]

    # --- embedding: Linear(input_dim, 64) + ReLU (Dropout -> identity) ---
    h = jnp.dot(x_ref[...].astype(bf16), we_ref[...],
                preferred_element_type=f32) + be_ref[...]
    h = jnp.maximum(h, 0.0)

    # --- two post-norm encoder layers, statically unrolled ---
    for l in range(N_LAYERS):
        vecs = vecs_ref[l]                                       # [8, 64] f32
        wo_l = wo_ref[l]                                         # [64, 64] bf16

        # Fused QKV projection (1/sqrt(head_dim) already folded into Q).
        qkv = jnp.dot(h.astype(bf16), wqkv_ref[l],
                      preferred_element_type=f32) + bqkv_ref[l]  # [N, 192] f32

        attn = jnp.broadcast_to(vecs[_ROW_BO:_ROW_BO + 1, :], (n, D_MODEL))
        for hh in range(N_HEADS):
            base = hh * HEAD_DIM
            qh = qkv[:, base:base + HEAD_DIM]
            kh = qkv[:, D_MODEL + base:D_MODEL + base + HEAD_DIM]
            vh = qkv[:, 2 * D_MODEL + base:2 * D_MODEL + base + HEAD_DIM]
            # Scores: contract dim 1 of both operands (no materialized kh.T).
            s = jax.lax.dot_general(qh, kh, (((1,), (1,)), ((), ())),
                                    preferred_element_type=f32)  # [N, N]
            s = s - jnp.max(s, axis=-1, keepdims=True)
            p = jnp.exp(s)
            p = p * pl.reciprocal(jnp.sum(p, axis=-1, keepdims=True), approx=True)
            oh = jnp.dot(p, vh, preferred_element_type=f32)      # [N, HEAD_DIM]
            # Fold the output projection into the head loop — no lane concat.
            attn = attn + jnp.dot(oh.astype(bf16), wo_l[base:base + HEAD_DIM, :],
                                  preferred_element_type=f32)

        h = _layernorm(h + attn,
                       vecs[_ROW_LN1G:_ROW_LN1G + 1, :],
                       vecs[_ROW_LN1B:_ROW_LN1B + 1, :])

        # Feed-forward: Linear(64, 2048) + ReLU + Linear(2048, 64).
        ff = jnp.dot(h.astype(bf16), w1_ref[l],
                     preferred_element_type=f32) + b1_ref[l]
        ff = jnp.maximum(ff, 0.0)
        ff = jnp.dot(ff.astype(bf16), w2_ref[l],
                     preferred_element_type=f32) + vecs[_ROW_B2:_ROW_B2 + 1, :]

        h = _layernorm(h + ff,
                       vecs[_ROW_LN2G:_ROW_LN2G + 1, :],
                       vecs[_ROW_LN2B:_ROW_LN2B + 1, :])

    # --- classifier: Flatten (no-op on [N,64]) + Linear(64,32)+ReLU+Linear(32,C) ---
    c = jnp.dot(h, wc1_ref[...], preferred_element_type=f32) + bc1_ref[...]
    c = jnp.maximum(c, 0.0)
    out_ref[...] = jnp.dot(c, wc2_ref[...],
                           preferred_element_type=f32) + bc2_ref[...]


def init_params(key, input_dim, num_classes):
    ks = jax.random.split(key, 12)
    r = lambda k, shape, s=0.1: jax.random.normal(k, shape, jnp.float32) * s
    L = N_LAYERS
    return dict(
        we=r(ks[0], (input_dim, D_MODEL)),
        be=jnp.zeros((1, D_MODEL), jnp.float32),
        wqkv=r(ks[1], (L, 3, D_MODEL, D_MODEL)),
        bqkv=r(ks[2], (L, 3, 1, D_MODEL), 0.02),
        wo=r(ks[3], (L, D_MODEL, D_MODEL)),
        bo=r(ks[4], (L, 1, D_MODEL), 0.02),
        ln1g=jnp.ones((L, 1, D_MODEL), jnp.float32),
        ln1b=jnp.zeros((L, 1, D_MODEL), jnp.float32),
        w1=r(ks[5], (L, D_MODEL, D_FF), 0.05),
        b1=r(ks[6], (L, 1, D_FF), 0.02),
        w2=r(ks[7], (L, D_FF, D_MODEL), 0.05),
        b2=r(ks[8], (L, 1, D_MODEL), 0.02),
        ln2g=jnp.ones((L, 1, D_MODEL), jnp.float32),
        ln2b=jnp.zeros((L, 1, D_MODEL), jnp.float32),
        wc1=r(ks[9], (D_MODEL, 32)),
        bc1=jnp.zeros((1, 32), jnp.float32),
        wc2=r(ks[10], (32, num_classes)),
        bc2=jnp.zeros((1, num_classes), jnp.float32),
    )


def pack_operands(p):
    """Host-side packing: fused QKV (scale folded into Q), bf16 matmul weights,
    per-layer vector slab."""
    bf16 = jnp.bfloat16
    L = p["wqkv"].shape[0]
    scale = 1.0 / float(np.sqrt(HEAD_DIM))          # 0.25, exact in f32/bf16
    wq = p["wqkv"][:, 0] * scale
    bq = p["bqkv"][:, 0] * scale
    wqkv_fused = jnp.concatenate(
        [wq, p["wqkv"][:, 1], p["wqkv"][:, 2]], axis=-1)            # [L, 64, 192]
    bqkv_fused = jnp.concatenate(
        [bq, p["bqkv"][:, 1], p["bqkv"][:, 2]], axis=-1)            # [L, 1, 192]
    vecs = jnp.concatenate(
        [p["bo"], p["ln1g"], p["ln1b"], p["b2"], p["ln2g"], p["ln2b"],
         jnp.zeros((L, _VEC_ROWS - 6, D_MODEL), jnp.float32)], axis=1)  # [L, 8, 64]
    return dict(
        we=p["we"].astype(bf16), be=p["be"],
        wqkv=wqkv_fused.astype(bf16), bqkv=bqkv_fused,
        wo=p["wo"].astype(bf16), vecs=vecs,
        w1=p["w1"].astype(bf16), b1=p["b1"],
        w2=p["w2"].astype(bf16),
        wc1=p["wc1"], bc1=p["bc1"], wc2=p["wc2"], bc2=p["bc2"],
    )


def transformer_classifier(x, params, num_classes):
    ops = pack_operands(params)
    n = x.shape[0]
    operands = [
        x, ops["we"], ops["be"],
        ops["wqkv"], ops["bqkv"], ops["wo"], ops["vecs"],
        ops["w1"], ops["b1"], ops["w2"],
        ops["wc1"], ops["bc1"], ops["wc2"], ops["bc2"],
    ]
    # Single invocation, no grid: every operand is a full-array VMEM block
    # (~1.1 MiB total, far under the scoped-VMEM limit on v5e/v6e/v7x).
    return pl.pallas_call(
        transformer_classifier_kernel,
        out_shape=jax.ShapeDtypeStruct((n, num_classes), jnp.float32),
    )(*operands)


def reference_forward(x, p):
    """Pure-JAX f32 reference mirroring the PyTorch forward (eval mode)."""
    h = jnp.maximum(x @ p["we"] + p["be"], 0.0)
    scale = 1.0 / float(np.sqrt(HEAD_DIM))
    for l in range(N_LAYERS):
        q = h @ p["wqkv"][l, 0] + p["bqkv"][l, 0]
        k = h @ p["wqkv"][l, 1] + p["bqkv"][l, 1]
        v = h @ p["wqkv"][l, 2] + p["bqkv"][l, 2]
        outs = []
        for hh in range(N_HEADS):
            sl = slice(hh * HEAD_DIM, (hh + 1) * HEAD_DIM)
            s = (q[:, sl] @ k[:, sl].T) * scale
            pattn = jax.nn.softmax(s, axis=-1)
            outs.append(pattn @ v[:, sl])
        attn = jnp.concatenate(outs, axis=-1) @ p["wo"][l] + p["bo"][l]
        h = _layernorm(h + attn, p["ln1g"][l], p["ln1b"][l])
        ff = jnp.maximum(h @ p["w1"][l] + p["b1"][l], 0.0) @ p["w2"][l] + p["b2"][l]
        h = _layernorm(h + ff, p["ln2g"][l], p["ln2b"][l])
    c = jnp.maximum(h @ p["wc1"] + p["bc1"], 0.0)
    return c @ p["wc2"] + p["bc2"]


if __name__ == "__main__":
    N, INPUT_DIM, NUM_CLASSES = 8, 16, 4   # seq-of-8 rows, 16 features, 4 classes
    key = jax.random.PRNGKey(0)
    kx, kp = jax.random.split(key)
    x = jax.random.normal(kx, (N, INPUT_DIM), jnp.float32)
    params = init_params(kp, INPUT_DIM, NUM_CLASSES)

    out = jax.block_until_ready(transformer_classifier(x, params, NUM_CLASSES))
    ref = jax.block_until_ready(reference_forward(x, params))

    assert out.shape == (N, NUM_CLASSES)
    # Tolerance accounts for bf16 matmul weights/activations (f32 accumulation)
    # in the kernel vs. the f32 (TPU default-precision) reference.
    np.testing.assert_allclose(np.asarray(out), np.asarray(ref), atol=3e-2, rtol=3e-2)

    print("KERNEL_OK")
</pallas_src>

<mosaic_0001>
module attributes {stable_mosaic.version = 11 : i64} {
  func.func @transformer_classifier_kernel(%arg0: memref<8x16xf32, #tpu.memory_space<vmem>>, %arg1: memref<16x64xbf16, #tpu.memory_space<vmem>>, %arg2: memref<1x64xf32, #tpu.memory_space<vmem>>, %arg3: memref<2x64x192xbf16, #tpu.memory_space<vmem>>, %arg4: memref<2x1x192xf32, #tpu.memory_space<vmem>>, %arg5: memref<2x64x64xbf16, #tpu.memory_space<vmem>>, %arg6: memref<2x8x64xf32, #tpu.memory_space<vmem>>, %arg7: memref<2x64x2048xbf16, #tpu.memory_space<vmem>>, %arg8: memref<2x1x2048xf32, #tpu.memory_space<vmem>>, %arg9: memref<2x2048x64xbf16, #tpu.memory_space<vmem>>, %arg10: memref<64x32xf32, #tpu.memory_space<vmem>>, %arg11: memref<1x32xf32, #tpu.memory_space<vmem>>, %arg12: memref<32x4xf32, #tpu.memory_space<vmem>>, %arg13: memref<1x4xf32, #tpu.memory_space<vmem>>, %arg14: memref<8x4xf32, #tpu.memory_space<vmem>>) attributes {dimension_semantics = [], scalar_prefetch = 0 : i64, scratch_operands = 0 : i64, tpu.core_type = #tpu.core_type<tc>} {
    %c0 = arith.constant 0 : index
    %c0_0 = arith.constant 0 : index
    %0 = vector.load %arg0[%c0, %c0_0] : memref<8x16xf32, #tpu.memory_space<vmem>>, vector<8x16xf32>
    %1 = arith.truncf %0 : vector<8x16xf32> to vector<8x16xbf16>
    %c0_1 = arith.constant 0 : index
    %c0_2 = arith.constant 0 : index
    %2 = vector.load %arg1[%c0_1, %c0_2] : memref<16x64xbf16, #tpu.memory_space<vmem>>, vector<16x64xbf16>
    %cst = arith.constant dense<0.000000e+00> : vector<8x64xf32>
    %3 = tpu.matmul %1, %2, %cst {dimension_numbers = #tpu.dot_dimension_numbers<[1], [0], [0], [1], [0, 0, 1, 1], [], []>} : vector<8x16xbf16>, vector<16x64xbf16>, vector<8x64xf32> -> vector<8x64xf32>
    %c0_3 = arith.constant 0 : index
    %c0_4 = arith.constant 0 : index
    %4 = vector.load %arg2[%c0_3, %c0_4] : memref<1x64xf32, #tpu.memory_space<vmem>>, vector<1x64xf32>
    %5 = vector.broadcast %4 : vector<1x64xf32> to vector<8x64xf32>
    %6 = arith.addf %3, %5 : vector<8x64xf32>
    %cst_5 = arith.constant 0.000000e+00 : f32
    %7 = vector.broadcast %cst_5 : f32 to vector<8x64xf32>
    %8 = arith.maximumf %6, %7 : vector<8x64xf32>
    %c0_6 = arith.constant 0 : index
    %c0_7 = arith.constant 0 : index
    %c0_8 = arith.constant 0 : index
    %9 = vector.load %arg6[%c0_6, %c0_7, %c0_8] : memref<2x8x64xf32, #tpu.memory_space<vmem>>, vector<1x8x64xf32>
    %10 = vector.shape_cast %9 : vector<1x8x64xf32> to vector<8x64xf32>
    %c0_9 = arith.constant 0 : index
    %c0_10 = arith.constant 0 : index
    %c0_11 = arith.constant 0 : index
    %11 = vector.load %arg5[%c0_9, %c0_10, %c0_11] : memref<2x64x64xbf16, #tpu.memory_space<vmem>>, vector<1x64x64xbf16>
    %12 = vector.shape_cast %11 : vector<1x64x64xbf16> to vector<64x64xbf16>
    %13 = arith.truncf %8 : vector<8x64xf32> to vector<8x64xbf16>
    %c0_12 = arith.constant 0 : index
    %c0_13 = arith.constant 0 : index
    %c0_14 = arith.constant 0 : index
    %14 = vector.load %arg3[%c0_12, %c0_13, %c0_14] : memref<2x64x192xbf16, #tpu.memory_space<vmem>>, vector<1x64x192xbf16>
    %15 = vector.shape_cast %14 : vector<1x64x192xbf16> to vector<64x192xbf16>
    %cst_15 = arith.constant dense<0.000000e+00> : vector<8x192xf32>
    %16 = tpu.matmul %13, %15, %cst_15 {dimension_numbers = #tpu.dot_dimension_numbers<[1], [0], [0], [1], [0, 0, 1, 1], [], []>} : vector<8x64xbf16>, vector<64x192xbf16>, vector<8x192xf32> -> vector<8x192xf32>
    %c0_16 = arith.constant 0 : index
    %c0_17 = arith.constant 0 : index
    %c0_18 = arith.constant 0 : index
    %17 = vector.load %arg4[%c0_16, %c0_17, %c0_18] : memref<2x1x192xf32, #tpu.memory_space<vmem>>, vector<1x1x192xf32>
    %18 = vector.shape_cast %17 : vector<1x1x192xf32> to vector<1x192xf32>
    %19 = vector.broadcast %18 : vector<1x192xf32> to vector<8x192xf32>
    %20 = arith.addf %16, %19 : vector<8x192xf32>
    %21 = vector.extract_strided_slice %10 {offsets = [0, 0], sizes = [1, 64], strides = [1, 1]} : vector<8x64xf32> to vector<1x64xf32>
    %22 = vector.shape_cast %21 : vector<1x64xf32> to vector<1x64xf32>
    %23 = vector.broadcast %22 : vector<1x64xf32> to vector<8x64xf32>
    %24 = vector.extract_strided_slice %20 {offsets = [0, 0], sizes = [8, 16], strides = [1, 1]} : vector<8x192xf32> to vector<8x16xf32>
    %25 = vector.extract_strided_slice %20 {offsets = [0, 64], sizes = [8, 16], strides = [1, 1]} : vector<8x192xf32> to vector<8x16xf32>
    %26 = vector.extract_strided_slice %20 {offsets = [0, 128], sizes = [8, 16], strides = [1, 1]} : vector<8x192xf32> to vector<8x16xf32>
    %cst_19 = arith.constant dense<0.000000e+00> : vector<8x8xf32>
    %27 = tpu.matmul %24, %25, %cst_19 {dimension_numbers = #tpu.dot_dimension_numbers<[1], [1], [0], [0], [0, 0, 1, 0], [], []>} : vector<8x16xf32>, vector<8x16xf32>, vector<8x8xf32> -> vector<8x8xf32>
    %cst_20 = arith.constant dense<0xFF800000> : vector<8xf32>
    %28 = vector.multi_reduction <maximumf>, %27, %cst_20 [1] : vector<8x8xf32> to vector<8xf32>
    %29 = vector.shape_cast %28 : vector<8xf32> to vector<8x1xf32>
    %30 = vector.broadcast %29 : vector<8x1xf32> to vector<8x8xf32>
    %31 = arith.subf %27, %30 : vector<8x8xf32>
    %32 = math.exp %31 : vector<8x8xf32>
    %cst_21 = arith.constant dense<0.000000e+00> : vector<8xf32>
    %33 = vector.multi_reduction <add>, %32, %cst_21 [1] : vector<8x8xf32> to vector<8xf32>
    %34 = vector.shape_cast %33 : vector<8xf32> to vector<8x1xf32>
    %35 = tpu.reciprocal %34 {approx = true} : vector<8x1xf32> -> vector<8x1xf32>
    %36 = vector.broadcast %35 : vector<8x1xf32> to vector<8x8xf32>
    %37 = arith.mulf %32, %36 : vector<8x8xf32>
    %cst_22 = arith.constant dense<0.000000e+00> : vector<8x16xf32>
    %38 = tpu.matmul %37, %26, %cst_22 {dimension_numbers = #tpu.dot_dimension_numbers<[1], [0], [0], [1], [0, 0, 1, 1], [], []>} : vector<8x8xf32>, vector<8x16xf32>, vector<8x16xf32> -> vector<8x16xf32>
    %39 = arith.truncf %38 : vector<8x16xf32> to vector<8x16xbf16>
    %40 = vector.extract_strided_slice %12 {offsets = [0, 0], sizes = [16, 64], strides = [1, 1]} : vector<64x64xbf16> to vector<16x64xbf16>
    %cst_23 = arith.constant dense<0.000000e+00> : vector<8x64xf32>
    %41 = tpu.matmul %39, %40, %cst_23 {dimension_numbers = #tpu.dot_dimension_numbers<[1], [0], [0], [1], [0, 0, 1, 1], [], []>} : vector<8x16xbf16>, vector<16x64xbf16>, vector<8x64xf32> -> vector<8x64xf32>
    %42 = arith.addf %23, %41 : vector<8x64xf32>
    %43 = vector.extract_strided_slice %20 {offsets = [0, 16], sizes = [8, 16], strides = [1, 1]} : vector<8x192xf32> to vector<8x16xf32>
    %44 = vector.extract_strided_slice %20 {offsets = [0, 80], sizes = [8, 16], strides = [1, 1]} : vector<8x192xf32> to vector<8x16xf32>
    %45 = vector.extract_strided_slice %20 {offsets = [0, 144], sizes = [8, 16], strides = [1, 1]} : vector<8x192xf32> to vector<8x16xf32>
    %cst_24 = arith.constant dense<0.000000e+00> : vector<8x8xf32>
    %46 = tpu.matmul %43, %44, %cst_24 {dimension_numbers = #tpu.dot_dimension_numbers<[1], [1], [0], [0], [0, 0, 1, 0], [], []>} : vector<8x16xf32>, vector<8x16xf32>, vector<8x8xf32> -> vector<8x8xf32>
    %cst_25 = arith.constant dense<0xFF800000> : vector<8xf32>
    %47 = vector.multi_reduction <maximumf>, %46, %cst_25 [1] : vector<8x8xf32> to vector<8xf32>
    %48 = vector.shape_cast %47 : vector<8xf32> to vector<8x1xf32>
    %49 = vector.broadcast %48 : vector<8x1xf32> to vector<8x8xf32>
    %50 = arith.subf %46, %49 : vector<8x8xf32>
    %51 = math.exp %50 : vector<8x8xf32>
    %cst_26 = arith.constant dense<0.000000e+00> : vector<8xf32>
    %52 = vector.multi_reduction <add>, %51, %cst_26 [1] : vector<8x8xf32> to vector<8xf32>
    %53 = vector.shape_cast %52 : vector<8xf32> to vector<8x1xf32>
    %54 = tpu.reciprocal %53 {approx = true} : vector<8x1xf32> -> vector<8x1xf32>
    %55 = vector.broadcast %54 : vector<8x1xf32> to vector<8x8xf32>
    %56 = arith.mulf %51, %55 : vector<8x8xf32>
    %cst_27 = arith.constant dense<0.000000e+00> : vector<8x16xf32>
    %57 = tpu.matmul %56, %45, %cst_27 {dimension_numbers = #tpu.dot_dimension_numbers<[1], [0], [0], [1], [0, 0, 1, 1], [], []>} : vector<8x8xf32>, vector<8x16xf32>, vector<8x16xf32> -> vector<8x16xf32>
    %58 = arith.truncf %57 : vector<8x16xf32> to vector<8x16xbf16>
    %59 = vector.extract_strided_slice %12 {offsets = [16, 0], sizes = [16, 64], strides = [1, 1]} : vector<64x64xbf16> to vector<16x64xbf16>
    %cst_28 = arith.constant dense<0.000000e+00> : vector<8x64xf32>
    %60 = tpu.matmul %58, %59, %cst_28 {dimension_numbers = #tpu.dot_dimension_numbers<[1], [0], [0], [1], [0, 0, 1, 1], [], []>} : vector<8x16xbf16>, vector<16x64xbf16>, vector<8x64xf32> -> vector<8x64xf32>
    %61 = arith.addf %42, %60 : vector<8x64xf32>
    %62 = vector.extract_strided_slice %20 {offsets = [0, 32], sizes = [8, 16], strides = [1, 1]} : vector<8x192xf32> to vector<8x16xf32>
    %63 = vector.extract_strided_slice %20 {offsets = [0, 96], sizes = [8, 16], strides = [1, 1]} : vector<8x192xf32> to vector<8x16xf32>
    %64 = vector.extract_strided_slice %20 {offsets = [0, 160], sizes = [8, 16], strides = [1, 1]} : vector<8x192xf32> to vector<8x16xf32>
    %cst_29 = arith.constant dense<0.000000e+00> : vector<8x8xf32>
    %65 = tpu.matmul %62, %63, %cst_29 {dimension_numbers = #tpu.dot_dimension_numbers<[1], [1], [0], [0], [0, 0, 1, 0], [], []>} : vector<8x16xf32>, vector<8x16xf32>, vector<8x8xf32> -> vector<8x8xf32>
    %cst_30 = arith.constant dense<0xFF800000> : vector<8xf32>
    %66 = vector.multi_reduction <maximumf>, %65, %cst_30 [1] : vector<8x8xf32> to vector<8xf32>
    %67 = vector.shape_cast %66 : vector<8xf32> to vector<8x1xf32>
    %68 = vector.broadcast %67 : vector<8x1xf32> to vector<8x8xf32>
    %69 = arith.subf %65, %68 : vector<8x8xf32>
    %70 = math.exp %69 : vector<8x8xf32>
    %cst_31 = arith.constant dense<0.000000e+00> : vector<8xf32>
    %71 = vector.multi_reduction <add>, %70, %cst_31 [1] : vector<8x8xf32> to vector<8xf32>
    %72 = vector.shape_cast %71 : vector<8xf32> to vector<8x1xf32>
    %73 = tpu.reciprocal %72 {approx = true} : vector<8x1xf32> -> vector<8x1xf32>
    %74 = vector.broadcast %73 : vector<8x1xf32> to vector<8x8xf32>
    %75 = arith.mulf %70, %74 : vector<8x8xf32>
    %cst_32 = arith.constant dense<0.000000e+00> : vector<8x16xf32>
    %76 = tpu.matmul %75, %64, %cst_32 {dimension_numbers = #tpu.dot_dimension_numbers<[1], [0], [0], [1], [0, 0, 1, 1], [], []>} : vector<8x8xf32>, vector<8x16xf32>, vector<8x16xf32> -> vector<8x16xf32>
    %77 = arith.truncf %76 : vector<8x16xf32> to vector<8x16xbf16>
    %78 = vector.extract_strided_slice %12 {offsets = [32, 0], sizes = [16, 64], strides = [1, 1]} : vector<64x64xbf16> to vector<16x64xbf16>
    %cst_33 = arith.constant dense<0.000000e+00> : vector<8x64xf32>
    %79 = tpu.matmul %77, %78, %cst_33 {dimension_numbers = #tpu.dot_dimension_numbers<[1], [0], [0], [1], [0, 0, 1, 1], [], []>} : vector<8x16xbf16>, vector<16x64xbf16>, vector<8x64xf32> -> vector<8x64xf32>
    %80 = arith.addf %61, %79 : vector<8x64xf32>
    %81 = vector.extract_strided_slice %20 {offsets = [0, 48], sizes = [8, 16], strides = [1, 1]} : vector<8x192xf32> to vector<8x16xf32>
    %82 = vector.extract_strided_slice %20 {offsets = [0, 112], sizes = [8, 16], strides = [1, 1]} : vector<8x192xf32> to vector<8x16xf32>
    %83 = vector.extract_strided_slice %20 {offsets = [0, 176], sizes = [8, 16], strides = [1, 1]} : vector<8x192xf32> to vector<8x16xf32>
    %cst_34 = arith.constant dense<0.000000e+00> : vector<8x8xf32>
    %84 = tpu.matmul %81, %82, %cst_34 {dimension_numbers = #tpu.dot_dimension_numbers<[1], [1], [0], [0], [0, 0, 1, 0], [], []>} : vector<8x16xf32>, vector<8x16xf32>, vector<8x8xf32> -> vector<8x8xf32>
    %cst_35 = arith.constant dense<0xFF800000> : vector<8xf32>
    %85 = vector.multi_reduction <maximumf>, %84, %cst_35 [1] : vector<8x8xf32> to vector<8xf32>
    %86 = vector.shape_cast %85 : vector<8xf32> to vector<8x1xf32>
    %87 = vector.broadcast %86 : vector<8x1xf32> to vector<8x8xf32>
    %88 = arith.subf %84, %87 : vector<8x8xf32>
    %89 = math.exp %88 : vector<8x8xf32>
    %cst_36 = arith.constant dense<0.000000e+00> : vector<8xf32>
    %90 = vector.multi_reduction <add>, %89, %cst_36 [1] : vector<8x8xf32> to vector<8xf32>
    %91 = vector.shape_cast %90 : vector<8xf32> to vector<8x1xf32>
    %92 = tpu.reciprocal %91 {approx = true} : vector<8x1xf32> -> vector<8x1xf32>
    %93 = vector.broadcast %92 : vector<8x1xf32> to vector<8x8xf32>
    %94 = arith.mulf %89, %93 : vector<8x8xf32>
    %cst_37 = arith.constant dense<0.000000e+00> : vector<8x16xf32>
    %95 = tpu.matmul %94, %83, %cst_37 {dimension_numbers = #tpu.dot_dimension_numbers<[1], [0], [0], [1], [0, 0, 1, 1], [], []>} : vector<8x8xf32>, vector<8x16xf32>, vector<8x16xf32> -> vector<8x16xf32>
    %96 = arith.truncf %95 : vector<8x16xf32> to vector<8x16xbf16>
    %97 = vector.extract_strided_slice %12 {offsets = [48, 0], sizes = [16, 64], strides = [1, 1]} : vector<64x64xbf16> to vector<16x64xbf16>
    %cst_38 = arith.constant dense<0.000000e+00> : vector<8x64xf32>
    %98 = tpu.matmul %96, %97, %cst_38 {dimension_numbers = #tpu.dot_dimension_numbers<[1], [0], [0], [1], [0, 0, 1, 1], [], []>} : vector<8x16xbf16>, vector<16x64xbf16>, vector<8x64xf32> -> vector<8x64xf32>
    %99 = arith.addf %80, %98 : vector<8x64xf32>
    %100 = arith.addf %8, %99 : vector<8x64xf32>
    %101 = vector.extract_strided_slice %10 {offsets = [1, 0], sizes = [1, 64], strides = [1, 1]} : vector<8x64xf32> to vector<1x64xf32>
    %102 = vector.extract_strided_slice %10 {offsets = [2, 0], sizes = [1, 64], strides = [1, 1]} : vector<8x64xf32> to vector<1x64xf32>
    %cst_39 = arith.constant dense<0.000000e+00> : vector<8xf32>
    %103 = vector.multi_reduction <add>, %100, %cst_39 [1] : vector<8x64xf32> to vector<8xf32>
    %104 = vector.shape_cast %103 : vector<8xf32> to vector<8x1xf32>
    %cst_40 = arith.constant 6.400000e+01 : f32
    %105 = vector.broadcast %cst_40 : f32 to vector<8x1xf32>
    %106 = arith.divf %104, %105 : vector<8x1xf32>
    %107 = vector.broadcast %106 : vector<8x1xf32> to vector<8x64xf32>
    %108 = arith.subf %100, %107 : vector<8x64xf32>
    %109 = arith.mulf %108, %108 : vector<8x64xf32>
    %cst_41 = arith.constant dense<0.000000e+00> : vector<8xf32>
    %110 = vector.multi_reduction <add>, %109, %cst_41 [1] : vector<8x64xf32> to vector<8xf32>
    %111 = vector.shape_cast %110 : vector<8xf32> to vector<8x1xf32>
    %cst_42 = arith.constant 6.400000e+01 : f32
    %112 = vector.broadcast %cst_42 : f32 to vector<8x1xf32>
    %113 = arith.divf %111, %112 : vector<8x1xf32>
    %114 = vector.broadcast %106 : vector<8x1xf32> to vector<8x64xf32>
    %115 = arith.subf %100, %114 : vector<8x64xf32>
    %cst_43 = arith.constant 9.99999974E-6 : f32
    %116 = vector.broadcast %cst_43 : f32 to vector<8x1xf32>
    %117 = arith.addf %113, %116 : vector<8x1xf32>
    %118 = math.rsqrt %117 : vector<8x1xf32>
    %119 = vector.broadcast %118 : vector<8x1xf32> to vector<8x64xf32>
    %120 = arith.mulf %115, %119 : vector<8x64xf32>
    %121 = vector.broadcast %101 : vector<1x64xf32> to vector<8x64xf32>
    %122 = arith.mulf %120, %121 : vector<8x64xf32>
    %123 = vector.broadcast %102 : vector<1x64xf32> to vector<8x64xf32>
    %124 = arith.addf %122, %123 : vector<8x64xf32>
    %125 = arith.truncf %124 : vector<8x64xf32> to vector<8x64xbf16>
    %c0_44 = arith.constant 0 : index
    %c0_45 = arith.constant 0 : index
    %c0_46 = arith.constant 0 : index
    %126 = vector.load %arg7[%c0_44, %c0_45, %c0_46] : memref<2x64x2048xbf16, #tpu.memory_space<vmem>>, vector<1x64x2048xbf16>
    %127 = vector.shape_cast %126 : vector<1x64x2048xbf16> to vector<64x2048xbf16>
    %cst_47 = arith.constant dense<0.000000e+00> : vector<8x2048xf32>
    %128 = tpu.matmul %125, %127, %cst_47 {dimension_numbers = #tpu.dot_dimension_numbers<[1], [0], [0], [1], [0, 0, 1, 1], [], []>} : vector<8x64xbf16>, vector<64x2048xbf16>, vector<8x2048xf32> -> vector<8x2048xf32>
    %c0_48 = arith.constant 0 : index
    %c0_49 = arith.constant 0 : index
    %c0_50 = arith.constant 0 : index
    %129 = vector.load %arg8[%c0_48, %c0_49, %c0_50] : memref<2x1x2048xf32, #tpu.memory_space<vmem>>, vector<1x1x2048xf32>
    %130 = vector.shape_cast %129 : vector<1x1x2048xf32> to vector<1x2048xf32>
    %131 = vector.broadcast %130 : vector<1x2048xf32> to vector<8x2048xf32>
    %132 = arith.addf %128, %131 : vector<8x2048xf32>
    %cst_51 = arith.constant 0.000000e+00 : f32
    %133 = vector.broadcast %cst_51 : f32 to vector<8x2048xf32>
    %134 = arith.maximumf %132, %133 : vector<8x2048xf32>
    %135 = arith.truncf %134 : vector<8x2048xf32> to vector<8x2048xbf16>
    %c0_52 = arith.constant 0 : index
    %c0_53 = arith.constant 0 : index
    %c0_54 = arith.constant 0 : index
    %136 = vector.load %arg9[%c0_52, %c0_53, %c0_54] : memref<2x2048x64xbf16, #tpu.memory_space<vmem>>, vector<1x2048x64xbf16>
    %137 = vector.shape_cast %136 : vector<1x2048x64xbf16> to vector<2048x64xbf16>
    %cst_55 = arith.constant dense<0.000000e+00> : vector<8x64xf32>
    %138 = tpu.matmul %135, %137, %cst_55 {dimension_numbers = #tpu.dot_dimension_numbers<[1], [0], [0], [1], [0, 0, 1, 1], [], []>} : vector<8x2048xbf16>, vector<2048x64xbf16>, vector<8x64xf32> -> vector<8x64xf32>
    %139 = vector.extract_strided_slice %10 {offsets = [3, 0], sizes = [1, 64], strides = [1, 1]} : vector<8x64xf32> to vector<1x64xf32>
    %140 = vector.broadcast %139 : vector<1x64xf32> to vector<8x64xf32>
    %141 = arith.addf %138, %140 : vector<8x64xf32>
    %142 = arith.addf %124, %141 : vector<8x64xf32>
    %143 = vector.extract_strided_slice %10 {offsets = [4, 0], sizes = [1, 64], strides = [1, 1]} : vector<8x64xf32> to vector<1x64xf32>
    %144 = vector.extract_strided_slice %10 {offsets = [5, 0], sizes = [1, 64], strides = [1, 1]} : vector<8x64xf32> to vector<1x64xf32>
    %cst_56 = arith.constant dense<0.000000e+00> : vector<8xf32>
    %145 = vector.multi_reduction <add>, %142, %cst_56 [1] : vector<8x64xf32> to vector<8xf32>
    %146 = vector.shape_cast %145 : vector<8xf32> to vector<8x1xf32>
    %cst_57 = arith.constant 6.400000e+01 : f32
    %147 = vector.broadcast %cst_57 : f32 to vector<8x1xf32>
    %148 = arith.divf %146, %147 : vector<8x1xf32>
    %149 = vector.broadcast %148 : vector<8x1xf32> to vector<8x64xf32>
    %150 = arith.subf %142, %149 : vector<8x64xf32>
    %151 = arith.mulf %150, %150 : vector<8x64xf32>
    %cst_58 = arith.constant dense<0.000000e+00> : vector<8xf32>
    %152 = vector.multi_reduction <add>, %151, %cst_58 [1] : vector<8x64xf32> to vector<8xf32>
    %153 = vector.shape_cast %152 : vector<8xf32> to vector<8x1xf32>
    %cst_59 = arith.constant 6.400000e+01 : f32
    %154 = vector.broadcast %cst_59 : f32 to vector<8x1xf32>
    %155 = arith.divf %153, %154 : vector<8x1xf32>
    %156 = vector.broadcast %148 : vector<8x1xf32> to vector<8x64xf32>
    %157 = arith.subf %142, %156 : vector<8x64xf32>
    %cst_60 = arith.constant 9.99999974E-6 : f32
    %158 = vector.broadcast %cst_60 : f32 to vector<8x1xf32>
    %159 = arith.addf %155, %158 : vector<8x1xf32>
    %160 = math.rsqrt %159 : vector<8x1xf32>
    %161 = vector.broadcast %160 : vector<8x1xf32> to vector<8x64xf32>
    %162 = arith.mulf %157, %161 : vector<8x64xf32>
    %163 = vector.broadcast %143 : vector<1x64xf32> to vector<8x64xf32>
    %164 = arith.mulf %162, %163 : vector<8x64xf32>
    %165 = vector.broadcast %144 : vector<1x64xf32> to vector<8x64xf32>
    %166 = arith.addf %164, %165 : vector<8x64xf32>
    %c1 = arith.constant 1 : index
    %c0_61 = arith.constant 0 : index
    %c0_62 = arith.constant 0 : index
    %167 = vector.load %arg6[%c1, %c0_61, %c0_62] : memref<2x8x64xf32, #tpu.memory_space<vmem>>, vector<1x8x64xf32>
    %168 = vector.shape_cast %167 : vector<1x8x64xf32> to vector<8x64xf32>
    %c1_63 = arith.constant 1 : index
    %c0_64 = arith.constant 0 : index
    %c0_65 = arith.constant 0 : index
    %169 = vector.load %arg5[%c1_63, %c0_64, %c0_65] : memref<2x64x64xbf16, #tpu.memory_space<vmem>>, vector<1x64x64xbf16>
    %170 = vector.shape_cast %169 : vector<1x64x64xbf16> to vector<64x64xbf16>
    %171 = arith.truncf %166 : vector<8x64xf32> to vector<8x64xbf16>
    %c1_66 = arith.constant 1 : index
    %c0_67 = arith.constant 0 : index
    %c0_68 = arith.constant 0 : index
    %172 = vector.load %arg3[%c1_66, %c0_67, %c0_68] : memref<2x64x192xbf16, #tpu.memory_space<vmem>>, vector<1x64x192xbf16>
    %173 = vector.shape_cast %172 : vector<1x64x192xbf16> to vector<64x192xbf16>
    %cst_69 = arith.constant dense<0.000000e+00> : vector<8x192xf32>
    %174 = tpu.matmul %171, %173, %cst_69 {dimension_numbers = #tpu.dot_dimension_numbers<[1], [0], [0], [1], [0, 0, 1, 1], [], []>} : vector<8x64xbf16>, vector<64x192xbf16>, vector<8x192xf32> -> vector<8x192xf32>
    %c1_70 = arith.constant 1 : index
    %c0_71 = arith.constant 0 : index
    %c0_72 = arith.constant 0 : index
    %175 = vector.load %arg4[%c1_70, %c0_71, %c0_72] : memref<2x1x192xf32, #tpu.memory_space<vmem>>, vector<1x1x192xf32>
    %176 = vector.shape_cast %175 : vector<1x1x192xf32> to vector<1x192xf32>
    %177 = vector.broadcast %176 : vector<1x192xf32> to vector<8x192xf32>
    %178 = arith.addf %174, %177 : vector<8x192xf32>
    %179 = vector.extract_strided_slice %168 {offsets = [0, 0], sizes = [1, 64], strides = [1, 1]} : vector<8x64xf32> to vector<1x64xf32>
    %180 = vector.shape_cast %179 : vector<1x64xf32> to vector<1x64xf32>
    %181 = vector.broadcast %180 : vector<1x64xf32> to vector<8x64xf32>
    %182 = vector.extract_strided_slice %178 {offsets = [0, 0], sizes = [8, 16], strides = [1, 1]} : vector<8x192xf32> to vector<8x16xf32>
    %183 = vector.extract_strided_slice %178 {offsets = [0, 64], sizes = [8, 16], strides = [1, 1]} : vector<8x192xf32> to vector<8x16xf32>
    %184 = vector.extract_strided_slice %178 {offsets = [0, 128], sizes = [8, 16], strides = [1, 1]} : vector<8x192xf32> to vector<8x16xf32>
    %cst_73 = arith.constant dense<0.000000e+00> : vector<8x8xf32>
    %185 = tpu.matmul %182, %183, %cst_73 {dimension_numbers = #tpu.dot_dimension_numbers<[1], [1], [0], [0], [0, 0, 1, 0], [], []>} : vector<8x16xf32>, vector<8x16xf32>, vector<8x8xf32> -> vector<8x8xf32>
    %cst_74 = arith.constant dense<0xFF800000> : vector<8xf32>
    %186 = vector.multi_reduction <maximumf>, %185, %cst_74 [1] : vector<8x8xf32> to vector<8xf32>
    %187 = vector.shape_cast %186 : vector<8xf32> to vector<8x1xf32>
    %188 = vector.broadcast %187 : vector<8x1xf32> to vector<8x8xf32>
    %189 = arith.subf %185, %188 : vector<8x8xf32>
    %190 = math.exp %189 : vector<8x8xf32>
    %cst_75 = arith.constant dense<0.000000e+00> : vector<8xf32>
    %191 = vector.multi_reduction <add>, %190, %cst_75 [1] : vector<8x8xf32> to vector<8xf32>
    %192 = vector.shape_cast %191 : vector<8xf32> to vector<8x1xf32>
    %193 = tpu.reciprocal %192 {approx = true} : vector<8x1xf32> -> vector<8x1xf32>
    %194 = vector.broadcast %193 : vector<8x1xf32> to vector<8x8xf32>
    %195 = arith.mulf %190, %194 : vector<8x8xf32>
    %cst_76 = arith.constant dense<0.000000e+00> : vector<8x16xf32>
    %196 = tpu.matmul %195, %184, %cst_76 {dimension_numbers = #tpu.dot_dimension_numbers<[1], [0], [0], [1], [0, 0, 1, 1], [], []>} : vector<8x8xf32>, vector<8x16xf32>, vector<8x16xf32> -> vector<8x16xf32>
    %197 = arith.truncf %196 : vector<8x16xf32> to vector<8x16xbf16>
    %198 = vector.extract_strided_slice %170 {offsets = [0, 0], sizes = [16, 64], strides = [1, 1]} : vector<64x64xbf16> to vector<16x64xbf16>
    %cst_77 = arith.constant dense<0.000000e+00> : vector<8x64xf32>
    %199 = tpu.matmul %197, %198, %cst_77 {dimension_numbers = #tpu.dot_dimension_numbers<[1], [0], [0], [1], [0, 0, 1, 1], [], []>} : vector<8x16xbf16>, vector<16x64xbf16>, vector<8x64xf32> -> vector<8x64xf32>
    %200 = arith.addf %181, %199 : vector<8x64xf32>
    %201 = vector.extract_strided_slice %178 {offsets = [0, 16], sizes = [8, 16], strides = [1, 1]} : vector<8x192xf32> to vector<8x16xf32>
    %202 = vector.extract_strided_slice %178 {offsets = [0, 80], sizes = [8, 16], strides = [1, 1]} : vector<8x192xf32> to vector<8x16xf32>
    %203 = vector.extract_strided_slice %178 {offsets = [0, 144], sizes = [8, 16], strides = [1, 1]} : vector<8x192xf32> to vector<8x16xf32>
    %cst_78 = arith.constant dense<0.000000e+00> : vector<8x8xf32>
    %204 = tpu.matmul %201, %202, %cst_78 {dimension_numbers = #tpu.dot_dimension_numbers<[1], [1], [0], [0], [0, 0, 1, 0], [], []>} : vector<8x16xf32>, vector<8x16xf32>, vector<8x8xf32> -> vector<8x8xf32>
    %cst_79 = arith.constant dense<0xFF800000> : vector<8xf32>
    %205 = vector.multi_reduction <maximumf>, %204, %cst_79 [1] : vector<8x8xf32> to vector<8xf32>
    %206 = vector.shape_cast %205 : vector<8xf32> to vector<8x1xf32>
    %207 = vector.broadcast %206 : vector<8x1xf32> to vector<8x8xf32>
    %208 = arith.subf %204, %207 : vector<8x8xf32>
    %209 = math.exp %208 : vector<8x8xf32>
    %cst_80 = arith.constant dense<0.000000e+00> : vector<8xf32>
    %210 = vector.multi_reduction <add>, %209, %cst_80 [1] : vector<8x8xf32> to vector<8xf32>
    %211 = vector.shape_cast %210 : vector<8xf32> to vector<8x1xf32>
    %212 = tpu.reciprocal %211 {approx = true} : vector<8x1xf32> -> vector<8x1xf32>
    %213 = vector.broadcast %212 : vector<8x1xf32> to vector<8x8xf32>
    %214 = arith.mulf %209, %213 : vector<8x8xf32>
    %cst_81 = arith.constant dense<0.000000e+00> : vector<8x16xf32>
    %215 = tpu.matmul %214, %203, %cst_81 {dimension_numbers = #tpu.dot_dimension_numbers<[1], [0], [0], [1], [0, 0, 1, 1], [], []>} : vector<8x8xf32>, vector<8x16xf32>, vector<8x16xf32> -> vector<8x16xf32>
    %216 = arith.truncf %215 : vector<8x16xf32> to vector<8x16xbf16>
    %217 = vector.extract_strided_slice %170 {offsets = [16, 0], sizes = [16, 64], strides = [1, 1]} : vector<64x64xbf16> to vector<16x64xbf16>
    %cst_82 = arith.constant dense<0.000000e+00> : vector<8x64xf32>
    %218 = tpu.matmul %216, %217, %cst_82 {dimension_numbers = #tpu.dot_dimension_numbers<[1], [0], [0], [1], [0, 0, 1, 1], [], []>} : vector<8x16xbf16>, vector<16x64xbf16>, vector<8x64xf32> -> vector<8x64xf32>
    %219 = arith.addf %200, %218 : vector<8x64xf32>
    %220 = vector.extract_strided_slice %178 {offsets = [0, 32], sizes = [8, 16], strides = [1, 1]} : vector<8x192xf32> to vector<8x16xf32>
    %221 = vector.extract_strided_slice %178 {offsets = [0, 96], sizes = [8, 16], strides = [1, 1]} : vector<8x192xf32> to vector<8x16xf32>
    %222 = vector.extract_strided_slice %178 {offsets = [0, 160], sizes = [8, 16], strides = [1, 1]} : vector<8x192xf32> to vector<8x16xf32>
    %cst_83 = arith.constant dense<0.000000e+00> : vector<8x8xf32>
    %223 = tpu.matmul %220, %221, %cst_83 {dimension_numbers = #tpu.dot_dimension_numbers<[1], [1], [0], [0], [0, 0, 1, 0], [], []>} : vector<8x16xf32>, vector<8x16xf32>, vector<8x8xf32> -> vector<8x8xf32>
    %cst_84 = arith.constant dense<0xFF800000> : vector<8xf32>
    %224 = vector.multi_reduction <maximumf>, %223, %cst_84 [1] : vector<8x8xf32> to vector<8xf32>
    %225 = vector.shape_cast %224 : vector<8xf32> to vector<8x1xf32>
    %226 = vector.broadcast %225 : vector<8x1xf32> to vector<8x8xf32>
    %227 = arith.subf %223, %226 : vector<8x8xf32>
    %228 = math.exp %227 : vector<8x8xf32>
    %cst_85 = arith.constant dense<0.000000e+00> : vector<8xf32>
    %229 = vector.multi_reduction <add>, %228, %cst_85 [1] : vector<8x8xf32> to vector<8xf32>
    %230 = vector.shape_cast %229 : vector<8xf32> to vector<8x1xf32>
    %231 = tpu.reciprocal %230 {approx = true} : vector<8x1xf32> -> vector<8x1xf32>
    %232 = vector.broadcast %231 : vector<8x1xf32> to vector<8x8xf32>
    %233 = arith.mulf %228, %232 : vector<8x8xf32>
    %cst_86 = arith.constant dense<0.000000e+00> : vector<8x16xf32>
    %234 = tpu.matmul %233, %222, %cst_86 {dimension_numbers = #tpu.dot_dimension_numbers<[1], [0], [0], [1], [0, 0, 1, 1], [], []>} : vector<8x8xf32>, vector<8x16xf32>, vector<8x16xf32> -> vector<8x16xf32>
    %235 = arith.truncf %234 : vector<8x16xf32> to vector<8x16xbf16>
    %236 = vector.extract_strided_slice %170 {offsets = [32, 0], sizes = [16, 64], strides = [1, 1]} : vector<64x64xbf16> to vector<16x64xbf16>
    %cst_87 = arith.constant dense<0.000000e+00> : vector<8x64xf32>
    %237 = tpu.matmul %235, %236, %cst_87 {dimension_numbers = #tpu.dot_dimension_numbers<[1], [0], [0], [1], [0, 0, 1, 1], [], []>} : vector<8x16xbf16>, vector<16x64xbf16>, vector<8x64xf32> -> vector<8x64xf32>
    %238 = arith.addf %219, %237 : vector<8x64xf32>
    %239 = vector.extract_strided_slice %178 {offsets = [0, 48], sizes = [8, 16], strides = [1, 1]} : vector<8x192xf32> to vector<8x16xf32>
    %240 = vector.extract_strided_slice %178 {offsets = [0, 112], sizes = [8, 16], strides = [1, 1]} : vector<8x192xf32> to vector<8x16xf32>
    %241 = vector.extract_strided_slice %178 {offsets = [0, 176], sizes = [8, 16], strides = [1, 1]} : vector<8x192xf32> to vector<8x16xf32>
    %cst_88 = arith.constant dense<0.000000e+00> : vector<8x8xf32>
    %242 = tpu.matmul %239, %240, %cst_88 {dimension_numbers = #tpu.dot_dimension_numbers<[1], [1], [0], [0], [0, 0, 1, 0], [], []>} : vector<8x16xf32>, vector<8x16xf32>, vector<8x8xf32> -> vector<8x8xf32>
    %cst_89 = arith.constant dense<0xFF800000> : vector<8xf32>
    %243 = vector.multi_reduction <maximumf>, %242, %cst_89 [1] : vector<8x8xf32> to vector<8xf32>
    %244 = vector.shape_cast %243 : vector<8xf32> to vector<8x1xf32>
    %245 = vector.broadcast %244 : vector<8x1xf32> to vector<8x8xf32>
    %246 = arith.subf %242, %245 : vector<8x8xf32>
    %247 = math.exp %246 : vector<8x8xf32>
    %cst_90 = arith.constant dense<0.000000e+00> : vector<8xf32>
    %248 = vector.multi_reduction <add>, %247, %cst_90 [1] : vector<8x8xf32> to vector<8xf32>
    %249 = vector.shape_cast %248 : vector<8xf32> to vector<8x1xf32>
    %250 = tpu.reciprocal %249 {approx = true} : vector<8x1xf32> -> vector<8x1xf32>
    %251 = vector.broadcast %250 : vector<8x1xf32> to vector<8x8xf32>
    %252 = arith.mulf %247, %251 : vector<8x8xf32>
    %cst_91 = arith.constant dense<0.000000e+00> : vector<8x16xf32>
    %253 = tpu.matmul %252, %241, %cst_91 {dimension_numbers = #tpu.dot_dimension_numbers<[1], [0], [0], [1], [0, 0, 1, 1], [], []>} : vector<8x8xf32>, vector<8x16xf32>, vector<8x16xf32> -> vector<8x16xf32>
    %254 = arith.truncf %253 : vector<8x16xf32> to vector<8x16xbf16>
    %255 = vector.extract_strided_slice %170 {offsets = [48, 0], sizes = [16, 64], strides = [1, 1]} : vector<64x64xbf16> to vector<16x64xbf16>
    %cst_92 = arith.constant dense<0.000000e+00> : vector<8x64xf32>
    %256 = tpu.matmul %254, %255, %cst_92 {dimension_numbers = #tpu.dot_dimension_numbers<[1], [0], [0], [1], [0, 0, 1, 1], [], []>} : vector<8x16xbf16>, vector<16x64xbf16>, vector<8x64xf32> -> vector<8x64xf32>
    %257 = arith.addf %238, %256 : vector<8x64xf32>
    %258 = arith.addf %166, %257 : vector<8x64xf32>
    %259 = vector.extract_strided_slice %168 {offsets = [1, 0], sizes = [1, 64], strides = [1, 1]} : vector<8x64xf32> to vector<1x64xf32>
    %260 = vector.extract_strided_slice %168 {offsets = [2, 0], sizes = [1, 64], strides = [1, 1]} : vector<8x64xf32> to vector<1x64xf32>
    %cst_93 = arith.constant dense<0.000000e+00> : vector<8xf32>
    %261 = vector.multi_reduction <add>, %258, %cst_93 [1] : vector<8x64xf32> to vector<8xf32>
    %262 = vector.shape_cast %261 : vector<8xf32> to vector<8x1xf32>
    %cst_94 = arith.constant 6.400000e+01 : f32
    %263 = vector.broadcast %cst_94 : f32 to vector<8x1xf32>
    %264 = arith.divf %262, %263 : vector<8x1xf32>
    %265 = vector.broadcast %264 : vector<8x1xf32> to vector<8x64xf32>
    %266 = arith.subf %258, %265 : vector<8x64xf32>
    %267 = arith.mulf %266, %266 : vector<8x64xf32>
    %cst_95 = arith.constant dense<0.000000e+00> : vector<8xf32>
    %268 = vector.multi_reduction <add>, %267, %cst_95 [1] : vector<8x64xf32> to vector<8xf32>
    %269 = vector.shape_cast %268 : vector<8xf32> to vector<8x1xf32>
    %cst_96 = arith.constant 6.400000e+01 : f32
    %270 = vector.broadcast %cst_96 : f32 to vector<8x1xf32>
    %271 = arith.divf %269, %270 : vector<8x1xf32>
    %272 = vector.broadcast %264 : vector<8x1xf32> to vector<8x64xf32>
    %273 = arith.subf %258, %272 : vector<8x64xf32>
    %cst_97 = arith.constant 9.99999974E-6 : f32
    %274 = vector.broadcast %cst_97 : f32 to vector<8x1xf32>
    %275 = arith.addf %271, %274 : vector<8x1xf32>
    %276 = math.rsqrt %275 : vector<8x1xf32>
    %277 = vector.broadcast %276 : vector<8x1xf32> to vector<8x64xf32>
    %278 = arith.mulf %273, %277 : vector<8x64xf32>
    %279 = vector.broadcast %259 : vector<1x64xf32> to vector<8x64xf32>
    %280 = arith.mulf %278, %279 : vector<8x64xf32>
    %281 = vector.broadcast %260 : vector<1x64xf32> to vector<8x64xf32>
    %282 = arith.addf %280, %281 : vector<8x64xf32>
    %283 = arith.truncf %282 : vector<8x64xf32> to vector<8x64xbf16>
    %c1_98 = arith.constant 1 : index
    %c0_99 = arith.constant 0 : index
    %c0_100 = arith.constant 0 : index
    %284 = vector.load %arg7[%c1_98, %c0_99, %c0_100] : memref<2x64x2048xbf16, #tpu.memory_space<vmem>>, vector<1x64x2048xbf16>
    %285 = vector.shape_cast %284 : vector<1x64x2048xbf16> to vector<64x2048xbf16>
    %cst_101 = arith.constant dense<0.000000e+00> : vector<8x2048xf32>
    %286 = tpu.matmul %283, %285, %cst_101 {dimension_numbers = #tpu.dot_dimension_numbers<[1], [0], [0], [1], [0, 0, 1, 1], [], []>} : vector<8x64xbf16>, vector<64x2048xbf16>, vector<8x2048xf32> -> vector<8x2048xf32>
    %c1_102 = arith.constant 1 : index
    %c0_103 = arith.constant 0 : index
    %c0_104 = arith.constant 0 : index
    %287 = vector.load %arg8[%c1_102, %c0_103, %c0_104] : memref<2x1x2048xf32, #tpu.memory_space<vmem>>, vector<1x1x2048xf32>
    %288 = vector.shape_cast %287 : vector<1x1x2048xf32> to vector<1x2048xf32>
    %289 = vector.broadcast %288 : vector<1x2048xf32> to vector<8x2048xf32>
    %290 = arith.addf %286, %289 : vector<8x2048xf32>
    %cst_105 = arith.constant 0.000000e+00 : f32
    %291 = vector.broadcast %cst_105 : f32 to vector<8x2048xf32>
    %292 = arith.maximumf %290, %291 : vector<8x2048xf32>
    %293 = arith.truncf %292 : vector<8x2048xf32> to vector<8x2048xbf16>
    %c1_106 = arith.constant 1 : index
    %c0_107 = arith.constant 0 : index
    %c0_108 = arith.constant 0 : index
    %294 = vector.load %arg9[%c1_106, %c0_107, %c0_108] : memref<2x2048x64xbf16, #tpu.memory_space<vmem>>, vector<1x2048x64xbf16>
    %295 = vector.shape_cast %294 : vector<1x2048x64xbf16> to vector<2048x64xbf16>
    %cst_109 = arith.constant dense<0.000000e+00> : vector<8x64xf32>
    %296 = tpu.matmul %293, %295, %cst_109 {dimension_numbers = #tpu.dot_dimension_numbers<[1], [0], [0], [1], [0, 0, 1, 1], [], []>} : vector<8x2048xbf16>, vector<2048x64xbf16>, vector<8x64xf32> -> vector<8x64xf32>
    %297 = vector.extract_strided_slice %168 {offsets = [3, 0], sizes = [1, 64], strides = [1, 1]} : vector<8x64xf32> to vector<1x64xf32>
    %298 = vector.broadcast %297 : vector<1x64xf32> to vector<8x64xf32>
    %299 = arith.addf %296, %298 : vector<8x64xf32>
    %300 = arith.addf %282, %299 : vector<8x64xf32>
    %301 = vector.extract_strided_slice %168 {offsets = [4, 0], sizes = [1, 64], strides = [1, 1]} : vector<8x64xf32> to vector<1x64xf32>
    %302 = vector.extract_strided_slice %168 {offsets = [5, 0], sizes = [1, 64], strides = [1, 1]} : vector<8x64xf32> to vector<1x64xf32>
    %cst_110 = arith.constant dense<0.000000e+00> : vector<8xf32>
    %303 = vector.multi_reduction <add>, %300, %cst_110 [1] : vector<8x64xf32> to vector<8xf32>
    %304 = vector.shape_cast %303 : vector<8xf32> to vector<8x1xf32>
    %cst_111 = arith.constant 6.400000e+01 : f32
    %305 = vector.broadcast %cst_111 : f32 to vector<8x1xf32>
    %306 = arith.divf %304, %305 : vector<8x1xf32>
    %307 = vector.broadcast %306 : vector<8x1xf32> to vector<8x64xf32>
    %308 = arith.subf %300, %307 : vector<8x64xf32>
    %309 = arith.mulf %308, %308 : vector<8x64xf32>
    %cst_112 = arith.constant dense<0.000000e+00> : vector<8xf32>
    %310 = vector.multi_reduction <add>, %309, %cst_112 [1] : vector<8x64xf32> to vector<8xf32>
    %311 = vector.shape_cast %310 : vector<8xf32> to vector<8x1xf32>
    %cst_113 = arith.constant 6.400000e+01 : f32
    %312 = vector.broadcast %cst_113 : f32 to vector<8x1xf32>
    %313 = arith.divf %311, %312 : vector<8x1xf32>
    %314 = vector.broadcast %306 : vector<8x1xf32> to vector<8x64xf32>
    %315 = arith.subf %300, %314 : vector<8x64xf32>
    %cst_114 = arith.constant 9.99999974E-6 : f32
    %316 = vector.broadcast %cst_114 : f32 to vector<8x1xf32>
    %317 = arith.addf %313, %316 : vector<8x1xf32>
    %318 = math.rsqrt %317 : vector<8x1xf32>
    %319 = vector.broadcast %318 : vector<8x1xf32> to vector<8x64xf32>
    %320 = arith.mulf %315, %319 : vector<8x64xf32>
    %321 = vector.broadcast %301 : vector<1x64xf32> to vector<8x64xf32>
    %322 = arith.mulf %320, %321 : vector<8x64xf32>
    %323 = vector.broadcast %302 : vector<1x64xf32> to vector<8x64xf32>
    %324 = arith.addf %322, %323 : vector<8x64xf32>
    %c0_115 = arith.constant 0 : index
    %c0_116 = arith.constant 0 : index
    %325 = vector.load %arg10[%c0_115, %c0_116] : memref<64x32xf32, #tpu.memory_space<vmem>>, vector<64x32xf32>
    %cst_117 = arith.constant dense<0.000000e+00> : vector<8x32xf32>
    %326 = tpu.matmul %324, %325, %cst_117 {dimension_numbers = #tpu.dot_dimension_numbers<[1], [0], [0], [1], [0, 0, 1, 1], [], []>} : vector<8x64xf32>, vector<64x32xf32>, vector<8x32xf32> -> vector<8x32xf32>
    %c0_118 = arith.constant 0 : index
    %c0_119 = arith.constant 0 : index
    %327 = vector.load %arg11[%c0_118, %c0_119] : memref<1x32xf32, #tpu.memory_space<vmem>>, vector<1x32xf32>
    %328 = vector.broadcast %327 : vector<1x32xf32> to vector<8x32xf32>
    %329 = arith.addf %326, %328 : vector<8x32xf32>
    %cst_120 = arith.constant 0.000000e+00 : f32
    %330 = vector.broadcast %cst_120 : f32 to vector<8x32xf32>
    %331 = arith.maximumf %329, %330 : vector<8x32xf32>
    %c0_121 = arith.constant 0 : index
    %c0_122 = arith.constant 0 : index
    %332 = vector.load %arg12[%c0_121, %c0_122] : memref<32x4xf32, #tpu.memory_space<vmem>>, vector<32x4xf32>
    %cst_123 = arith.constant dense<0.000000e+00> : vector<8x4xf32>
    %333 = tpu.matmul %331, %332, %cst_123 {dimension_numbers = #tpu.dot_dimension_numbers<[1], [0], [0], [1], [0, 0, 1, 1], [], []>} : vector<8x32xf32>, vector<32x4xf32>, vector<8x4xf32> -> vector<8x4xf32>
    %c0_124 = arith.constant 0 : index
    %c0_125 = arith.constant 0 : index
    %334 = vector.load %arg13[%c0_124, %c0_125] : memref<1x4xf32, #tpu.memory_space<vmem>>, vector<1x4xf32>
    %335 = vector.broadcast %334 : vector<1x4xf32> to vector<8x4xf32>
    %336 = arith.addf %333, %335 : vector<8x4xf32>
    %c0_126 = arith.constant 0 : index
    %c0_127 = arith.constant 0 : index
    %337 = vector.load %arg14[%c0_126, %c0_127] : memref<8x4xf32, #tpu.memory_space<vmem>>, vector<8x4xf32>
    tpu.vector_store %arg14[%c0_126, %c0_127], %336 {strides = array<i32>} : memref<8x4xf32, #tpu.memory_space<vmem>>, vector<8x4xf32>,
    return
  }
}

</mosaic_0001>

<llo_original>
// kernel: tpu_custom_call.1
$region0: #{tpu_custom_call.1}
  #allocation0 [shape = 'u32[]', space=smem, size = 0x4, offset = 0x4, fixed_abs, tag = 'smem constant byte address 0x4 - core index']
  #allocation1 [shape = 'u32[144,128]{1,0:T(1,128)}', space=vmem, size = 0x12000, scoped, tag = 'internal scratch']
  %s0 = inlined_call_operand.vmem [shape: f32[8,16], index: 0, kind: input, shape index: {}]
  %s1 = inlined_call_operand.vmem [shape: bf16[16,64], index: 1, kind: input, shape index: {}]
  %s2 = inlined_call_operand.vmem [shape: f32[1,64], index: 2, kind: input, shape index: {}]
  %s3 = inlined_call_operand.vmem [shape: bf16[2,64,192], index: 3, kind: input, shape index: {}]
  %s4 = inlined_call_operand.vmem [shape: f32[2,1,192], index: 4, kind: input, shape index: {}]
  %s5 = inlined_call_operand.vmem [shape: bf16[2,64,64], index: 5, kind: input, shape index: {}]
  %s6 = inlined_call_operand.vmem [shape: f32[2,8,64], index: 6, kind: input, shape index: {}]
  %s7 = inlined_call_operand.vmem [shape: bf16[2,64,2048], index: 7, kind: input, shape index: {}]
  %s8 = inlined_call_operand.vmem [shape: f32[2,1,2048], index: 8, kind: input, shape index: {}]
  %s9 = inlined_call_operand.vmem [shape: bf16[2,2048,64], index: 9, kind: input, shape index: {}]
  %s10 = inlined_call_operand.vmem [shape: f32[64,32], index: 10, kind: input, shape index: {}]
  %s11 = inlined_call_operand.vmem [shape: f32[1,32], index: 11, kind: input, shape index: {}]
  %s12 = inlined_call_operand.vmem [shape: f32[32,4], index: 12, kind: input, shape index: {}]
  %s13 = inlined_call_operand.vmem [shape: f32[1,4], index: 13, kind: input, shape index: {}]
  %s14 = inlined_call_operand.vmem [shape: f32[8,4], index: 14, kind: output, shape index: {}]
  %s15 = sld [smem:[#allocation0]]
  $region66: #{tpu_custom_call.1} parent=0
    _
  %s17 = ssub.s32 1, %s15
  %s18 = scalar_select 0, %s17, %s15
  // Predicated region
  $region2: #{tpu_custom_call.1} parent=0 // pred_check
    _
  $region3: #{tpu_custom_call.1} parent=0 // pred_check_branch
    %20 = sbr.rel (0) target = $region5
  $region4: #{tpu_custom_call.1} parent=0 // pred_region
    _
  $region5: #{tpu_custom_call.1} parent=0 // pred_fallthru
    _
  // Predicated region
  $region6: #{tpu_custom_call.1} parent=0 // pred_check
    _
  $region7: #{tpu_custom_call.1} parent=0 // pred_check_branch
    %22 = sbr.rel (0) target = $region9
  $region8: #{tpu_custom_call.1} parent=0 // pred_region
    _
  $region9: #{tpu_custom_call.1} parent=0 // pred_fallthru
    _
  // Predicated region
  $region10: #{tpu_custom_call.1} parent=0 // pred_check
    _
  $region11: #{tpu_custom_call.1} parent=0 // pred_check_branch
    %24 = sbr.rel (0) target = $region13
  $region12: #{tpu_custom_call.1} parent=0 // pred_region
    _
  $region13: #{tpu_custom_call.1} parent=0 // pred_fallthru
    _
  // Predicated region
  $region14: #{tpu_custom_call.1} parent=0 // pred_check
    _
  $region15: #{tpu_custom_call.1} parent=0 // pred_check_branch
    %26 = sbr.rel (0) target = $region17
  $region16: #{tpu_custom_call.1} parent=0 // pred_region
    _
  $region17: #{tpu_custom_call.1} parent=0 // pred_fallthru
    _
  // Predicated region
  $region18: #{tpu_custom_call.1} parent=0 // pred_check
    _
  $region19: #{tpu_custom_call.1} parent=0 // pred_check_branch
    %28 = sbr.rel (0) target = $region21
  $region20: #{tpu_custom_call.1} parent=0 // pred_region
    _
  $region21: #{tpu_custom_call.1} parent=0 // pred_fallthru
    _
  // Predicated region
  $region22: #{tpu_custom_call.1} parent=0 // pred_check
    _
  $region23: #{tpu_custom_call.1} parent=0 // pred_check_branch
    %30 = sbr.rel (0) target = $region25
  $region24: #{tpu_custom_call.1} parent=0 // pred_region
    _
  $region25: #{tpu_custom_call.1} parent=0 // pred_fallthru
    _
  // Predicated region
  $region26: #{tpu_custom_call.1} parent=0 // pred_check
    _
  $region27: #{tpu_custom_call.1} parent=0 // pred_check_branch
    %32 = sbr.rel (0) target = $region29
  $region28: #{tpu_custom_call.1} parent=0 // pred_region
    _
  $region29: #{tpu_custom_call.1} parent=0 // pred_fallthru
    _
  // Predicated region
  $region30: #{tpu_custom_call.1} parent=0 // pred_check
    _
  $region31: #{tpu_custom_call.1} parent=0 // pred_check_branch
    %34 = sbr.rel (0) target = $region33
  $region32: #{tpu_custom_call.1} parent=0 // pred_region
    _
  $region33: #{tpu_custom_call.1} parent=0 // pred_fallthru
    _
  // Predicated region
  $region34: #{tpu_custom_call.1} parent=0 // pred_check
    _
  $region35: #{tpu_custom_call.1} parent=0 // pred_check_branch
    %36 = sbr.rel (0) target = $region37
  $region36: #{tpu_custom_call.1} parent=0 // pred_region
    _
  $region37: #{tpu_custom_call.1} parent=0 // pred_fallthru
    _
  // Predicated region
  $region38: #{tpu_custom_call.1} parent=0 // pred_check
    _
  $region39: #{tpu_custom_call.1} parent=0 // pred_check_branch
    %38 = sbr.rel (0) target = $region41
  $region40: #{tpu_custom_call.1} parent=0 // pred_region
    _
  $region41: #{tpu_custom_call.1} parent=0 // pred_fallthru
    _
  // Predicated region
  $region42: #{tpu_custom_call.1} parent=0 // pred_check
    _
  $region43: #{tpu_custom_call.1} parent=0 // pred_check_branch
    %40 = sbr.rel (0) target = $region45
  $region44: #{tpu_custom_call.1} parent=0 // pred_region
    _
  $region45: #{tpu_custom_call.1} parent=0 // pred_fallthru
    _
  // Predicated region
  $region46: #{tpu_custom_call.1} parent=0 // pred_check
    _
  $region47: #{tpu_custom_call.1} parent=0 // pred_check_branch
    %42 = sbr.rel (0) target = $region49
  $region48: #{tpu_custom_call.1} parent=0 // pred_region
    _
  $region49: #{tpu_custom_call.1} parent=0 // pred_fallthru
    _
  // Predicated region
  $region50: #{tpu_custom_call.1} parent=0 // pred_check
    _
  $region51: #{tpu_custom_call.1} parent=0 // pred_check_branch
    %44 = sbr.rel (0) target = $region53
  $region52: #{tpu_custom_call.1} parent=0 // pred_region
    _
  $region53: #{tpu_custom_call.1} parent=0 // pred_fallthru
    _
  // Predicated region
  $region54: #{tpu_custom_call.1} parent=0 // pred_check
    _
  $region55: #{tpu_custom_call.1} parent=0 // pred_check_branch
    %46 = sbr.rel (0) target = $region57
  $region56: #{tpu_custom_call.1} parent=0 // pred_region
    _
  $region57: #{tpu_custom_call.1} parent=0 // pred_fallthru
    _
  %v48 = vld [vmem:[%s0] sm:$0xff]
  %v49 = vpack.c.bf16 %v48, %v48
  %v50 = vld [vmem:[%s1] sm:$0xf]
  %v51 = vld [vmem:[%s1 + $0x4] sm:$0xf]
  %v52 = vld [vmem:[%s2] sm:$0x1]
  %v54 = vlaneseq
  %v55 = vshrl.u32 %v54, 7
  %v56 = vsub.s32 0, %v55
  %v57 = vrot.slane %v52, %v56
  %v61 = vunpack.c.l.b16 %v50
  %v62 = vunpack.c.l.b16 %v51
  %v63 = vpack.c.b16 %v62, %v61
  %vm65 = vcmask 130048
  %v67 = vsel %vm65, %v49, 0
  %69 = vmatprep.subr.bf16.mxu0 0
  %70 = vmatpush1.bf16.msra.mxu0 %v63
  %71 = vmatprep.subr.bf16.mxu0 0
  %72 = vmatpush1.bf16.msra.mxu0 0
  %73 = vmatprep.subr.bf16.mxu0 0
  %74 = vmatpush1.bf16.msra.mxu0 0
  %75 = vmatprep.subr.bf16.mxu0 0
  %76 = vmatpush1.bf16.msra.mxu0 0
  %77 = vmatprep.subr.bf16.mxu0 0
  %78 = vmatpush1.bf16.msra.mxu0 0
  %79 = vmatprep.subr.bf16.mxu0 0
  %80 = vmatpush1.bf16.msra.mxu0 0
  %81 = vmatprep.subr.bf16.mxu0 0
  %82 = vmatpush1.bf16.msra.mxu0 0
  %83 = vmatprep.subr.bf16.mxu0 0
  %84 = vmatpush1.bf16.msra.mxu0 0
  %85 = vmatprep.subr.bf16.mxu0 0
  %86 = vmatpush1.bf16.msra.mxu0 0
  %87 = vmatprep.subr.bf16.mxu0 0
  %88 = vmatpush1.bf16.msra.mxu0 0
  %89 = vmatprep.subr.bf16.mxu0 0
  %90 = vmatpush1.bf16.msra.mxu0 0
  %91 = vmatprep.subr.bf16.mxu0 0
  %92 = vmatpush1.bf16.msra.mxu0 0
  %93 = vmatprep.subr.bf16.mxu0 0
  %94 = vmatpush1.bf16.msra.mxu0 0
  %95 = vmatprep.subr.bf16.mxu0 0
  %96 = vmatpush1.bf16.msra.mxu0 0
  %97 = vmatprep.subr.bf16.mxu0 0
  %98 = vmatpush1.bf16.msra.mxu0 0
  %99 = vmatprep.subr.bf16.mxu0 0
  %100 = vmatpush1.bf16.msra.mxu0 0
  %101 = vmatprep.mubr.bf16.mxu0 0
  %102 = vmatmul.mubr.bf16.gmra.mrb[0].mxu0 %v67
  %v103 = vpop.f32.mrb[0].mxu0
  %v104 = vadd.f32 %v57, %v103
  %v105 = vpop.f32.mrb[0].mxu0
  %v106 = vpop.f32.mrb[0].mxu0
  %v107 = vpop.f32.mrb[0].mxu0
  %108 = vdwg.mxu0
  %v109 = vmax.f32 %v104, 0.0
  %v110 = vld [vmem:[%s6] sm:$0xff]
  %v111 = vld [vmem:[%s5] sm:$0xf]
  %v112 = vld [vmem:[%s5 + $0x4] sm:$0xf]
  %v113 = vld [vmem:[%s5 + $0x8] sm:$0xf]
  %v114 = vld [vmem:[%s5 + $0xc] sm:$0xf]
  %v115 = vld [vmem:[%s5 + $0x10] sm:$0xf]
  %v116 = vld [vmem:[%s5 + $0x14] sm:$0xf]
  %v117 = vld [vmem:[%s5 + $0x18] sm:$0xf]
  %v118 = vld [vmem:[%s5 + $0x1c] sm:$0xf]
  %v119 = vpack.c.bf16 %v109, %v109
  %v120 = vld [vmem:[%s3] sm:$0xff]
  %v121 = vld [vmem:[%s3 + $0x8] sm:$0xff]
  %v122 = vld [vmem:[%s3 + $0x10] sm:$0xff]
  %v123 = vld [vmem:[%s3 + $0x18] sm:$0xff]
  %v124 = vld [vmem:[%s3 + $0x20] sm:$0xff]
  %v125 = vld [vmem:[%s3 + $0x28] sm:$0xff]
  %v126 = vld [vmem:[%s3 + $0x30] sm:$0xff]
  %v127 = vld [vmem:[%s3 + $0x38] sm:$0xff]
  %v128 = vld [vmem:[%s4] sm:$0x3]
  %v130 = vlaneseq
  %v131 = vshrl.u32 %v130, 7
  %v132 = vsub.s32 0, %v131
  %v133 = vrot.slane %v128, %v132
  %v134 = vlaneseq
  %v135 = vshrl.u32 %v134, 7
  %v136 = vsub.s32 1, %v135
  %v137 = vrot.slane %v128, %v136
  %v148 = vunpack.c.l.b16 %v120
  %v149 = vunpack.c.h.b16 %v120
  %v150 = vunpack.c.l.b16 %v121
  %v151 = vunpack.c.h.b16 %v121
  %v152 = vunpack.c.l.b16 %v122
  %v153 = vunpack.c.h.b16 %v122
  %v154 = vunpack.c.l.b16 %v123
  %v155 = vunpack.c.h.b16 %v123
  %v156 = vunpack.c.l.b16 %v124
  %v157 = vunpack.c.h.b16 %v124
  %v158 = vunpack.c.l.b16 %v125
  %v159 = vunpack.c.h.b16 %v125
  %v160 = vunpack.c.l.b16 %v126
  %v161 = vunpack.c.h.b16 %v126
  %v162 = vunpack.c.l.b16 %v127
  %v163 = vunpack.c.h.b16 %v127
  %v164 = vpack.c.b16 %v150, %v148
  %v165 = vpack.c.b16 %v151, %v149
  %v166 = vpack.c.b16 %v154, %v152
  %v167 = vpack.c.b16 %v155, %v153
  %v168 = vpack.c.b16 %v158, %v156
  %v169 = vpack.c.b16 %v159, %v157
  %v170 = vpack.c.b16 %v162, %v160
  %v171 = vpack.c.b16 %v163, %v161
  %vm180 = vcmask 523264
  %v182 = vsel %vm180, %v119, 0
  %184 = vmatprep.subr.bf16.mxu0 %v165
  %185 = vmatpush1.bf16.msra.mxu0 %v164
  %186 = vmatprep.subr.bf16.mxu0 %v167
  %187 = vmatpush1.bf16.msra.mxu0 %v166
  %188 = vmatprep.subr.bf16.mxu0 %v169
  %189 = vmatpush1.bf16.msra.mxu0 %v168
  %190 = vmatprep.subr.bf16.mxu0 %v171
  %191 = vmatpush1.bf16.msra.mxu0 %v170
  %192 = vmatprep.subr.bf16.mxu0 0
  %193 = vmatpush1.bf16.msra.mxu0 0
  %194 = vmatprep.subr.bf16.mxu0 0
  %195 = vmatpush1.bf16.msra.mxu0 0
  %196 = vmatprep.subr.bf16.mxu0 0
  %197 = vmatpush1.bf16.msra.mxu0 0
  %198 = vmatprep.subr.bf16.mxu0 0
  %199 = vmatpush1.bf16.msra.mxu0 0
  %200 = vmatprep.subr.bf16.mxu0 0
  %201 = vmatpush1.bf16.msra.mxu0 0
  %202 = vmatprep.subr.bf16.mxu0 0
  %203 = vmatpush1.bf16.msra.mxu0 0
  %204 = vmatprep.subr.bf16.mxu0 0
  %205 = vmatpush1.bf16.msra.mxu0 0
  %206 = vmatprep.subr.bf16.mxu0 0
  %207 = vmatpush1.bf16.msra.mxu0 0
  %208 = vmatprep.subr.bf16.mxu0 0
  %209 = vmatpush1.bf16.msra.mxu0 0
  %210 = vmatprep.subr.bf16.mxu0 0
  %211 = vmatpush1.bf16.msra.mxu0 0
  %212 = vmatprep.subr.bf16.mxu0 0
  %213 = vmatpush1.bf16.msra.mxu0 0
  %214 = vmatprep.subr.bf16.mxu0 0
  %215 = vmatpush1.bf16.msra.mxu0 0
  %216 = vmatprep.mubr.bf16.mxu0 0
  %217 = vmatmul.mubr.bf16.gmra.mrb[0].mxu0 %v182
  %v218 = vpop.f32.mrb[0].mxu0
  %v219 = vadd.f32 %v133, %v218
  %v220 = vpop.f32.mrb[0].mxu0
  %v221 = vadd.f32 %v137, %v220
  %v222 = vpop.f32.mrb[0].mxu0
  %v223 = vpop.f32.mrb[0].mxu0
  %224 = vdwg.mxu0
  %v225 = vlaneseq
  %v226 = vshrl.u32 %v225, 7
  %v227 = vsub.s32 0, %v226
  %v228 = vrot.slane %v110, %v227
  %230 = vrot.lane.b32.xlu0 %v219, 64
  %v231 = vpop.permute.xlu0 %230
  %v232 = vsel %vm65, %v219, 0
  %v234 = vsel %vm65, %v231, 0
  %236 = vmatprep.subr.mxu0 0.0
  %237 = vmatpush1.xpose.msra.mxu0 %v234
  %238 = vmatprep.subr.mxu0 0.0
  %239 = vmatpush1.xpose.msra.mxu0 0.0
  %240 = vmatprep.subr.mxu0 0.0
  %241 = vmatpush1.xpose.msra.mxu0 0.0
  %242 = vmatprep.subr.mxu0 0.0
  %243 = vmatpush1.xpose.msra.mxu0 0.0
  %244 = vmatprep.subr.mxu0 0.0
  %245 = vmatpush1.xpose.msra.mxu0 0.0
  %246 = vmatprep.subr.mxu0 0.0
  %247 = vmatpush1.xpose.msra.mxu0 0.0
  %248 = vmatprep.subr.mxu0 0.0
  %249 = vmatpush1.xpose.msra.mxu0 0.0
  %250 = vmatprep.subr.mxu0 0.0
  %251 = vmatpush1.xpose.msra.mxu0 0.0
  %252 = vmatprep.subr.mxu0 0.0
  %253 = vmatpush1.xpose.msra.mxu0 0.0
  %254 = vmatprep.subr.mxu0 0.0
  %255 = vmatpush1.xpose.msra.mxu0 0.0
  %256 = vmatprep.subr.mxu0 0.0
  %257 = vmatpush1.xpose.msra.mxu0 0.0
  %258 = vmatprep.subr.mxu0 0.0
  %259 = vmatpush1.xpose.msra.mxu0 0.0
  %260 = vmatprep.subr.mxu0 0.0
  %261 = vmatpush1.xpose.msra.mxu0 0.0
  %262 = vmatprep.subr.mxu0 0.0
  %263 = vmatpush1.xpose.msra.mxu0 0.0
  %264 = vmatprep.subr.mxu0 0.0
  %265 = vmatpush1.xpose.msra.mxu0 0.0
  %266 = vmatprep.subr.mxu0 0.0
  %267 = vmatpush1.xpose.msra.mxu0 0.0
  %268 = vmatprep.subr.mxu0 0.0
  %269 = vmatpush1.xpose.msra.mxu0 0.0
  %270 = vmatprep.subr.mxu0 0.0
  %271 = vmatpush1.xpose.msra.mxu0 0.0
  %272 = vmatprep.subr.mxu0 0.0
  %273 = vmatpush1.xpose.msra.mxu0 0.0
  %274 = vmatprep.subr.mxu0 0.0
  %275 = vmatpush1.xpose.msra.mxu0 0.0
  %276 = vmatprep.subr.mxu0 0.0
  %277 = vmatpush1.xpose.msra.mxu0 0.0
  %278 = vmatprep.subr.mxu0 0.0
  %279 = vmatpush1.xpose.msra.mxu0 0.0
  %280 = vmatprep.subr.mxu0 0.0
  %281 = vmatpush1.xpose.msra.mxu0 0.0
  %282 = vmatprep.subr.mxu0 0.0
  %283 = vmatpush1.xpose.msra.mxu0 0.0
  %284 = vmatprep.subr.mxu0 0.0
  %285 = vmatpush1.xpose.msra.mxu0 0.0
  %286 = vmatprep.subr.mxu0 0.0
  %287 = vmatpush1.xpose.msra.mxu0 0.0
  %288 = vmatprep.subr.mxu0 0.0
  %289 = vmatpush1.xpose.msra.mxu0 0.0
  %290 = vmatprep.subr.mxu0 0.0
  %291 = vmatpush1.xpose.msra.mxu0 0.0
  %292 = vmatprep.subr.mxu0 0.0
  %293 = vmatpush1.xpose.msra.mxu0 0.0
  %294 = vmatprep.subr.mxu0 0.0
  %295 = vmatpush1.xpose.msra.mxu0 0.0
  %296 = vmatprep.subr.mxu0 0.0
  %297 = vmatpush1.xpose.msra.mxu0 0.0
  %298 = vmatprep.subr.mxu0 0.0
  %299 = vmatpush1.xpose.msra.mxu0 0.0
  %300 = vmatprep.mubr.f32.mxu0 0.0
  %301 = vmatmul.mubr.f32.gmra.mrb[0].mxu0 %v232
  %v302 = vpop.f32.mrb[0].mxu0
  %v303 = vadd.f32 0.0, %v302
  %v304 = vpop.f32.mrb[0].mxu0
  %305 = vdwg.mxu0
  %vm306 = vcmask 64512
  %v307 = vsel %vm306, %v303, -inf
  %308 = vmax.xlane.f32.xlu0 %v307
  %v309 = vpop.xlane.xlu0 %308
  %v310 = vsub.f32 %v303, %v309
  %v311 = vmul.f32 %v310, 1.442695
  %v312 = vpow.pop %v311
  %v313 = vsel %vm306, %v312, 0.0
  %314 = vadd.xlane.f32.xlu0 %v313
  %v315 = vpop.xlane.xlu0 %314
  %v316 = vrcp.pop %v315
  %v317 = vmul.f32 %v312, %v316
  %v319 = vsel %vm306, %v317, 0
  %321 = vmatprep.subr.mxu0 0.0
  %322 = vmatpush1.msra.mxu0 %v221
  %323 = vmatprep.subr.mxu0 0.0
  %324 = vmatpush1.msra.mxu0 0.0
  %325 = vmatprep.subr.mxu0 0.0
  %326 = vmatpush1.msra.mxu0 0.0
  %327 = vmatprep.subr.mxu0 0.0
  %328 = vmatpush1.msra.mxu0 0.0
  %329 = vmatprep.subr.mxu0 0.0
  %330 = vmatpush1.msra.mxu0 0.0
  %331 = vmatprep.subr.mxu0 0.0
  %332 = vmatpush1.msra.mxu0 0.0
  %333 = vmatprep.subr.mxu0 0.0
  %334 = vmatpush1.msra.mxu0 0.0
  %335 = vmatprep.subr.mxu0 0.0
  %336 = vmatpush1.msra.mxu0 0.0
  %337 = vmatprep.subr.mxu0 0.0
  %338 = vmatpush1.msra.mxu0 0.0
  %339 = vmatprep.subr.mxu0 0.0
  %340 = vmatpush1.msra.mxu0 0.0
  %341 = vmatprep.subr.mxu0 0.0
  %342 = vmatpush1.msra.mxu0 0.0
  %343 = vmatprep.subr.mxu0 0.0
  %344 = vmatpush1.msra.mxu0 0.0
  %345 = vmatprep.subr.mxu0 0.0
  %346 = vmatpush1.msra.mxu0 0.0
  %347 = vmatprep.subr.mxu0 0.0
  %348 = vmatpush1.msra.mxu0 0.0
  %349 = vmatprep.subr.mxu0 0.0
  %350 = vmatpush1.msra.mxu0 0.0
  %351 = vmatprep.subr.mxu0 0.0
  %352 = vmatpush1.msra.mxu0 0.0
  %353 = vmatprep.subr.mxu0 0.0
  %354 = vmatpush1.msra.mxu0 0.0
  %355 = vmatprep.subr.mxu0 0.0
  %356 = vmatpush1.msra.mxu0 0.0
  %357 = vmatprep.subr.mxu0 0.0
  %358 = vmatpush1.msra.mxu0 0.0
  %359 = vmatprep.subr.mxu0 0.0
  %360 = vmatpush1.msra.mxu0 0.0
  %361 = vmatprep.subr.mxu0 0.0
  %362 = vmatpush1.msra.mxu0 0.0
  %363 = vmatprep.subr.mxu0 0.0
  %364 = vmatpush1.msra.mxu0 0.0
  %365 = vmatprep.subr.mxu0 0.0
  %366 = vmatpush1.msra.mxu0 0.0
  %367 = vmatprep.subr.mxu0 0.0
  %368 = vmatpush1.msra.mxu0 0.0
  %369 = vmatprep.subr.mxu0 0.0
  %370 = vmatpush1.msra.mxu0 0.0
  %371 = vmatprep.subr.mxu0 0.0
  %372 = vmatpush1.msra.mxu0 0.0
  %373 = vmatprep.subr.mxu0 0.0
  %374 = vmatpush1.msra.mxu0 0.0
  %375 = vmatprep.subr.mxu0 0.0
  %376 = vmatpush1.msra.mxu0 0.0
  %377 = vmatprep.subr.mxu0 0.0
  %378 = vmatpush1.msra.mxu0 0.0
  %379 = vmatprep.subr.mxu0 0.0
  %380 = vmatpush1.msra.mxu0 0.0
  %381 = vmatprep.subr.mxu0 0.0
  %382 = vmatpush1.msra.mxu0 0.0
  %383 = vmatprep.subr.mxu0 0.0
  %384 = vmatpush1.msra.mxu0 0.0
  %385 = vmatprep.mubr.f32.mxu0 0.0
  %386 = vmatmul.mubr.f32.gmra.mrb[0].mxu0 %v319
  %v387 = vpop.f32.mrb[0].mxu0
  %v388 = vadd.f32 0.0, %v387
  %v389 = vpop.f32.mrb[0].mxu0
  %390 = vdwg.mxu0
  %v391 = vpack.c.bf16 %v388, %v388
  %v394 = vunpack.c.l.b16 %v111
  %v395 = vunpack.c.l.b16 %v112
  %v396 = vpack.c.b16 %v395, %v394
  %v399 = vsel %vm65, %v391, 0
  %401 = vmatprep.subr.bf16.mxu0 0
  %402 = vmatpush1.bf16.msra.mxu0 %v396
  %403 = vmatprep.subr.bf16.mxu0 0
  %404 = vmatpush1.bf16.msra.mxu0 0
  %405 = vmatprep.subr.bf16.mxu0 0
  %406 = vmatpush1.bf16.msra.mxu0 0
  %407 = vmatprep.subr.bf16.mxu0 0
  %408 = vmatpush1.bf16.msra.mxu0 0
  %409 = vmatprep.subr.bf16.mxu0 0
  %410 = vmatpush1.bf16.msra.mxu0 0
  %411 = vmatprep.subr.bf16.mxu0 0
  %412 = vmatpush1.bf16.msra.mxu0 0
  %413 = vmatprep.subr.bf16.mxu0 0
  %414 = vmatpush1.bf16.msra.mxu0 0
  %415 = vmatprep.subr.bf16.mxu0 0
  %416 = vmatpush1.bf16.msra.mxu0 0
  %417 = vmatprep.subr.bf16.mxu0 0
  %418 = vmatpush1.bf16.msra.mxu0 0
  %419 = vmatprep.subr.bf16.mxu0 0
  %420 = vmatpush1.bf16.msra.mxu0 0
  %421 = vmatprep.subr.bf16.mxu0 0
  %422 = vmatpush1.bf16.msra.mxu0 0
  %423 = vmatprep.subr.bf16.mxu0 0
  %424 = vmatpush1.bf16.msra.mxu0 0
  %425 = vmatprep.subr.bf16.mxu0 0
  %426 = vmatpush1.bf16.msra.mxu0 0
  %427 = vmatprep.subr.bf16.mxu0 0
  %428 = vmatpush1.bf16.msra.mxu0 0
  %429 = vmatprep.subr.bf16.mxu0 0
  %430 = vmatpush1.bf16.msra.mxu0 0
  %431 = vmatprep.subr.bf16.mxu0 0
  %432 = vmatpush1.bf16.msra.mxu0 0
  %433 = vmatprep.mubr.bf16.mxu0 0
  %434 = vmatmul.mubr.bf16.gmra.mrb[0].mxu0 %v399
  %v435 = vpop.f32.mrb[0].mxu0
  %v436 = vadd.f32 0.0, %v435
  %v437 = vpop.f32.mrb[0].mxu0
  %v438 = vpop.f32.mrb[0].mxu0
  %v439 = vpop.f32.mrb[0].mxu0
  %440 = vdwg.mxu0
  %v441 = vadd.f32 %v228, %v436
  %442 = vrot.lane.b32.xlu0 %v219, 112
  %v443 = vpop.permute.xlu0 %442
  %444 = vrot.lane.b32.xlu0 %v219, 48
  %v445 = vpop.permute.xlu0 %444
  %v446 = vsel %vm65, %v443, 0
  %v448 = vsel %vm65, %v445, 0
  %450 = vmatprep.subr.mxu0 0.0
  %451 = vmatpush1.xpose.msra.mxu0 %v448
  %452 = vmatprep.subr.mxu0 0.0
  %453 = vmatpush1.xpose.msra.mxu0 0.0
  %454 = vmatprep.subr.mxu0 0.0
  %455 = vmatpush1.xpose.msra.mxu0 0.0
  %456 = vmatprep.subr.mxu0 0.0
  %457 = vmatpush1.xpose.msra.mxu0 0.0
  %458 = vmatprep.subr.mxu0 0.0
  %459 = vmatpush1.xpose.msra.mxu0 0.0
  %460 = vmatprep.subr.mxu0 0.0
  %461 = vmatpush1.xpose.msra.mxu0 0.0
  %462 = vmatprep.subr.mxu0 0.0
  %463 = vmatpush1.xpose.msra.mxu0 0.0
  %464 = vmatprep.subr.mxu0 0.0
  %465 = vmatpush1.xpose.msra.mxu0 0.0
  %466 = vmatprep.subr.mxu0 0.0
  %467 = vmatpush1.xpose.msra.mxu0 0.0
  %468 = vmatprep.subr.mxu0 0.0
  %469 = vmatpush1.xpose.msra.mxu0 0.0
  %470 = vmatprep.subr.mxu0 0.0
  %471 = vmatpush1.xpose.msra.mxu0 0.0
  %472 = vmatprep.subr.mxu0 0.0
  %473 = vmatpush1.xpose.msra.mxu0 0.0
  %474 = vmatprep.subr.mxu0 0.0
  %475 = vmatpush1.xpose.msra.mxu0 0.0
  %476 = vmatprep.subr.mxu0 0.0
  %477 = vmatpush1.xpose.msra.mxu0 0.0
  %478 = vmatprep.subr.mxu0 0.0
  %479 = vmatpush1.xpose.msra.mxu0 0.0
  %480 = vmatprep.subr.mxu0 0.0
  %481 = vmatpush1.xpose.msra.mxu0 0.0
  %482 = vmatprep.subr.mxu0 0.0
  %483 = vmatpush1.xpose.msra.mxu0 0.0
  %484 = vmatprep.subr.mxu0 0.0
  %485 = vmatpush1.xpose.msra.mxu0 0.0
  %486 = vmatprep.subr.mxu0 0.0
  %487 = vmatpush1.xpose.msra.mxu0 0.0
  %488 = vmatprep.subr.mxu0 0.0
  %489 = vmatpush1.xpose.msra.mxu0 0.0
  %490 = vmatprep.subr.mxu0 0.0
  %491 = vmatpush1.xpose.msra.mxu0 0.0
  %492 = vmatprep.subr.mxu0 0.0
  %493 = vmatpush1.xpose.msra.mxu0 0.0
  %494 = vmatprep.subr.mxu0 0.0
  %495 = vmatpush1.xpose.msra.mxu0 0.0
  %496 = vmatprep.subr.mxu0 0.0
  %497 = vmatpush1.xpose.msra.mxu0 0.0
  %498 = vmatprep.subr.mxu0 0.0
  %499 = vmatpush1.xpose.msra.mxu0 0.0
  %500 = vmatprep.subr.mxu0 0.0
  %501 = vmatpush1.xpose.msra.mxu0 0.0
  %502 = vmatprep.subr.mxu0 0.0
  %503 = vmatpush1.xpose.msra.mxu0 0.0
  %504 = vmatprep.subr.mxu0 0.0
  %505 = vmatpush1.xpose.msra.mxu0 0.0
  %506 = vmatprep.subr.mxu0 0.0
  %507 = vmatpush1.xpose.msra.mxu0 0.0
  %508 = vmatprep.subr.mxu0 0.0
  %509 = vmatpush1.xpose.msra.mxu0 0.0
  %510 = vmatprep.subr.mxu0 0.0
  %511 = vmatpush1.xpose.msra.mxu0 0.0
  %512 = vmatprep.subr.mxu0 0.0
  %513 = vmatpush1.xpose.msra.mxu0 0.0
  %514 = vmatprep.mubr.f32.mxu0 0.0
  %515 = vmatmul.mubr.f32.gmra.mrb[0].mxu0 %v446
  %v516 = vpop.f32.mrb[0].mxu0
  %v517 = vadd.f32 0.0, %v516
  %v518 = vpop.f32.mrb[0].mxu0
  %519 = vdwg.mxu0
  %v520 = vsel %vm306, %v517, -inf
  %521 = vmax.xlane.f32.xlu0 %v520
  %v522 = vpop.xlane.xlu0 %521
  %v523 = vsub.f32 %v517, %v522
  %v524 = vmul.f32 %v523, 1.442695
  %v525 = vpow.pop %v524
  %v526 = vsel %vm306, %v525, 0.0
  %527 = vadd.xlane.f32.xlu0 %v526
  %v528 = vpop.xlane.xlu0 %527
  %v529 = vrcp.pop %v528
  %v530 = vmul.f32 %v525, %v529
  %532 = vrot.lane.b32.xlu0 %v221, 112
  %v533 = vpop.permute.xlu0 %532
  %v536 = vsel %vm306, %v530, 0
  %538 = vmatprep.subr.mxu0 0.0
  %539 = vmatpush1.msra.mxu0 %v533
  %540 = vmatprep.subr.mxu0 0.0
  %541 = vmatpush1.msra.mxu0 0.0
  %542 = vmatprep.subr.mxu0 0.0
  %543 = vmatpush1.msra.mxu0 0.0
  %544 = vmatprep.subr.mxu0 0.0
  %545 = vmatpush1.msra.mxu0 0.0
  %546 = vmatprep.subr.mxu0 0.0
  %547 = vmatpush1.msra.mxu0 0.0
  %548 = vmatprep.subr.mxu0 0.0
  %549 = vmatpush1.msra.mxu0 0.0
  %550 = vmatprep.subr.mxu0 0.0
  %551 = vmatpush1.msra.mxu0 0.0
  %552 = vmatprep.subr.mxu0 0.0
  %553 = vmatpush1.msra.mxu0 0.0
  %554 = vmatprep.subr.mxu0 0.0
  %555 = vmatpush1.msra.mxu0 0.0
  %556 = vmatprep.subr.mxu0 0.0
  %557 = vmatpush1.msra.mxu0 0.0
  %558 = vmatprep.subr.mxu0 0.0
  %559 = vmatpush1.msra.mxu0 0.0
  %560 = vmatprep.subr.mxu0 0.0
  %561 = vmatpush1.msra.mxu0 0.0
  %562 = vmatprep.subr.mxu0 0.0
  %563 = vmatpush1.msra.mxu0 0.0
  %564 = vmatprep.subr.mxu0 0.0
  %565 = vmatpush1.msra.mxu0 0.0
  %566 = vmatprep.subr.mxu0 0.0
  %567 = vmatpush1.msra.mxu0 0.0
  %568 = vmatprep.subr.mxu0 0.0
  %569 = vmatpush1.msra.mxu0 0.0
  %570 = vmatprep.subr.mxu0 0.0
  %571 = vmatpush1.msra.mxu0 0.0
  %572 = vmatprep.subr.mxu0 0.0
  %573 = vmatpush1.msra.mxu0 0.0
  %574 = vmatprep.subr.mxu0 0.0
  %575 = vmatpush1.msra.mxu0 0.0
  %576 = vmatprep.subr.mxu0 0.0
  %577 = vmatpush1.msra.mxu0 0.0
  %578 = vmatprep.subr.mxu0 0.0
  %579 = vmatpush1.msra.mxu0 0.0
  %580 = vmatprep.subr.mxu0 0.0
  %581 = vmatpush1.msra.mxu0 0.0
  %582 = vmatprep.subr.mxu0 0.0
  %583 = vmatpush1.msra.mxu0 0.0
  %584 = vmatprep.subr.mxu0 0.0
  %585 = vmatpush1.msra.mxu0 0.0
  %586 = vmatprep.subr.mxu0 0.0
  %587 = vmatpush1.msra.mxu0 0.0
  %588 = vmatprep.subr.mxu0 0.0
  %589 = vmatpush1.msra.mxu0 0.0
  %590 = vmatprep.subr.mxu0 0.0
  %591 = vmatpush1.msra.mxu0 0.0
  %592 = vmatprep.subr.mxu0 0.0
  %593 = vmatpush1.msra.mxu0 0.0
  %594 = vmatprep.subr.mxu0 0.0
  %595 = vmatpush1.msra.mxu0 0.0
  %596 = vmatprep.subr.mxu0 0.0
  %597 = vmatpush1.msra.mxu0 0.0
  %598 = vmatprep.subr.mxu0 0.0
  %599 = vmatpush1.msra.mxu0 0.0
  %600 = vmatprep.subr.mxu0 0.0
  %601 = vmatpush1.msra.mxu0 0.0
  %602 = vmatprep.mubr.f32.mxu0 0.0
  %603 = vmatmul.mubr.f32.gmra.mrb[0].mxu0 %v536
  %v604 = vpop.f32.mrb[0].mxu0
  %v605 = vadd.f32 0.0, %v604
  %v606 = vpop.f32.mrb[0].mxu0
  %607 = vdwg.mxu0
  %v608 = vpack.c.bf16 %v605, %v605
  %v611 = vunpack.c.l.b16 %v113
  %v612 = vunpack.c.l.b16 %v114
  %v613 = vpack.c.b16 %v612, %v611
  %v616 = vsel %vm65, %v608, 0
  %618 = vmatprep.subr.bf16.mxu0 0
  %619 = vmatpush1.bf16.msra.mxu0 %v613
  %620 = vmatprep.subr.bf16.mxu0 0
  %621 = vmatpush1.bf16.msra.mxu0 0
  %622 = vmatprep.subr.bf16.mxu0 0
  %623 = vmatpush1.bf16.msra.mxu0 0
  %624 = vmatprep.subr.bf16.mxu0 0
  %625 = vmatpush1.bf16.msra.mxu0 0
  %626 = vmatprep.subr.bf16.mxu0 0
  %627 = vmatpush1.bf16.msra.mxu0 0
  %628 = vmatprep.subr.bf16.mxu0 0
  %629 = vmatpush1.bf16.msra.mxu0 0
  %630 = vmatprep.subr.bf16.mxu0 0
  %631 = vmatpush1.bf16.msra.mxu0 0
  %632 = vmatprep.subr.bf16.mxu0 0
  %633 = vmatpush1.bf16.msra.mxu0 0
  %634 = vmatprep.subr.bf16.mxu0 0
  %635 = vmatpush1.bf16.msra.mxu0 0
  %636 = vmatprep.subr.bf16.mxu0 0
  %637 = vmatpush1.bf16.msra.mxu0 0
  %638 = vmatprep.subr.bf16.mxu0 0
  %639 = vmatpush1.bf16.msra.mxu0 0
  %640 = vmatprep.subr.bf16.mxu0 0
  %641 = vmatpush1.bf16.msra.mxu0 0
  %642 = vmatprep.subr.bf16.mxu0 0
  %643 = vmatpush1.bf16.msra.mxu0 0
  %644 = vmatprep.subr.bf16.mxu0 0
  %645 = vmatpush1.bf16.msra.mxu0 0
  %646 = vmatprep.subr.bf16.mxu0 0
  %647 = vmatpush1.bf16.msra.mxu0 0
  %648 = vmatprep.subr.bf16.mxu0 0
  %649 = vmatpush1.bf16.msra.mxu0 0
  %650 = vmatprep.mubr.bf16.mxu0 0
  %651 = vmatmul.mubr.bf16.gmra.mrb[0].mxu0 %v616
  %v652 = vpop.f32.mrb[0].mxu0
  %v653 = vadd.f32 0.0, %v652
  %v654 = vpop.f32.mrb[0].mxu0
  %v655 = vpop.f32.mrb[0].mxu0
  %v656 = vpop.f32.mrb[0].mxu0
  %657 = vdwg.mxu0
  %v658 = vadd.f32 %v441, %v653
  %659 = vrot.lane.b32.xlu0 %v219, 96
  %v660 = vpop.permute.xlu0 %659
  %661 = vrot.lane.b32.xlu0 %v219, 32
  %v662 = vpop.permute.xlu0 %661
  %v663 = vsel %vm65, %v660, 0
  %v665 = vsel %vm65, %v662, 0
  %667 = vmatprep.subr.mxu0 0.0
  %668 = vmatpush1.xpose.msra.mxu0 %v665
  %669 = vmatprep.subr.mxu0 0.0
  %670 = vmatpush1.xpose.msra.mxu0 0.0
  %671 = vmatprep.subr.mxu0 0.0
  %672 = vmatpush1.xpose.msra.mxu0 0.0
  %673 = vmatprep.subr.mxu0 0.0
  %674 = vmatpush1.xpose.msra.mxu0 0.0
  %675 = vmatprep.subr.mxu0 0.0
  %676 = vmatpush1.xpose.msra.mxu0 0.0
  %677 = vmatprep.subr.mxu0 0.0
  %678 = vmatpush1.xpose.msra.mxu0 0.0
  %679 = vmatprep.subr.mxu0 0.0
  %680 = vmatpush1.xpose.msra.mxu0 0.0
  %681 = vmatprep.subr.mxu0 0.0
  %682 = vmatpush1.xpose.msra.mxu0 0.0
  %683 = vmatprep.subr.mxu0 0.0
  %684 = vmatpush1.xpose.msra.mxu0 0.0
  %685 = vmatprep.subr.mxu0 0.0
  %686 = vmatpush1.xpose.msra.mxu0 0.0
  %687 = vmatprep.subr.mxu0 0.0
  %688 = vmatpush1.xpose.msra.mxu0 0.0
  %689 = vmatprep.subr.mxu0 0.0
  %690 = vmatpush1.xpose.msra.mxu0 0.0
  %691 = vmatprep.subr.mxu0 0.0
  %692 = vmatpush1.xpose.msra.mxu0 0.0
  %693 = vmatprep.subr.mxu0 0.0
  %694 = vmatpush1.xpose.msra.mxu0 0.0
  %695 = vmatprep.subr.mxu0 0.0
  %696 = vmatpush1.xpose.msra.mxu0 0.0
  %697 = vmatprep.subr.mxu0 0.0
  %698 = vmatpush1.xpose.msra.mxu0 0.0
  %699 = vmatprep.subr.mxu0 0.0
  %700 = vmatpush1.xpose.msra.mxu0 0.0
  %701 = vmatprep.subr.mxu0 0.0
  %702 = vmatpush1.xpose.msra.mxu0 0.0
  %703 = vmatprep.subr.mxu0 0.0
  %704 = vmatpush1.xpose.msra.mxu0 0.0
  %705 = vmatprep.subr.mxu0 0.0
  %706 = vmatpush1.xpose.msra.mxu0 0.0
  %707 = vmatprep.subr.mxu0 0.0
  %708 = vmatpush1.xpose.msra.mxu0 0.0
  %709 = vmatprep.subr.mxu0 0.0
  %710 = vmatpush1.xpose.msra.mxu0 0.0
  %711 = vmatprep.subr.mxu0 0.0
  %712 = vmatpush1.xpose.msra.mxu0 0.0
  %713 = vmatprep.subr.mxu0 0.0
  %714 = vmatpush1.xpose.msra.mxu0 0.0
  %715 = vmatprep.subr.mxu0 0.0
  %716 = vmatpush1.xpose.msra.mxu0 0.0
  %717 = vmatprep.subr.mxu0 0.0
  %718 = vmatpush1.xpose.msra.mxu0 0.0
  %719 = vmatprep.subr.mxu0 0.0
  %720 = vmatpush1.xpose.msra.mxu0 0.0
  %721 = vmatprep.subr.mxu0 0.0
  %722 = vmatpush1.xpose.msra.mxu0 0.0
  %723 = vmatprep.subr.mxu0 0.0
  %724 = vmatpush1.xpose.msra.mxu0 0.0
  %725 = vmatprep.subr.mxu0 0.0
  %726 = vmatpush1.xpose.msra.mxu0 0.0
  %727 = vmatprep.subr.mxu0 0.0
  %728 = vmatpush1.xpose.msra.mxu0 0.0
  %729 = vmatprep.subr.mxu0 0.0
  %730 = vmatpush1.xpose.msra.mxu0 0.0
  %731 = vmatprep.mubr.f32.mxu0 0.0
  %732 = vmatmul.mubr.f32.gmra.mrb[0].mxu0 %v663
  %v733 = vpop.f32.mrb[0].mxu0
  %v734 = vadd.f32 0.0, %v733
  %v735 = vpop.f32.mrb[0].mxu0
  %736 = vdwg.mxu0
  %v737 = vsel %vm306, %v734, -inf
  %738 = vmax.xlane.f32.xlu0 %v737
  %v739 = vpop.xlane.xlu0 %738
  %v740 = vsub.f32 %v734, %v739
  %v741 = vmul.f32 %v740, 1.442695
  %v742 = vpow.pop %v741
  %v743 = vsel %vm306, %v742, 0.0
  %744 = vadd.xlane.f32.xlu0 %v743
  %v745 = vpop.xlane.xlu0 %744
  %v746 = vrcp.pop %v745
  %v747 = vmul.f32 %v742, %v746
  %748 = vrot.lane.b32.xlu0 %v221, 96
  %v749 = vpop.permute.xlu0 %748
  %v752 = vsel %vm306, %v747, 0
  %754 = vmatprep.subr.mxu0 0.0
  %755 = vmatpush1.msra.mxu0 %v749
  %756 = vmatprep.subr.mxu0 0.0
  %757 = vmatpush1.msra.mxu0 0.0
  %758 = vmatprep.subr.mxu0 0.0
  %759 = vmatpush1.msra.mxu0 0.0
  %760 = vmatprep.subr.mxu0 0.0
  %761 = vmatpush1.msra.mxu0 0.0
  %762 = vmatprep.subr.mxu0 0.0
  %763 = vmatpush1.msra.mxu0 0.0
  %764 = vmatprep.subr.mxu0 0.0
  %765 = vmatpush1.msra.mxu0 0.0
  %766 = vmatprep.subr.mxu0 0.0
  %767 = vmatpush1.msra.mxu0 0.0
  %768 = vmatprep.subr.mxu0 0.0
  %769 = vmatpush1.msra.mxu0 0.0
  %770 = vmatprep.subr.mxu0 0.0
  %771 = vmatpush1.msra.mxu0 0.0
  %772 = vmatprep.subr.mxu0 0.0
  %773 = vmatpush1.msra.mxu0 0.0
  %774 = vmatprep.subr.mxu0 0.0
  %775 = vmatpush1.msra.mxu0 0.0
  %776 = vmatprep.subr.mxu0 0.0
  %777 = vmatpush1.msra.mxu0 0.0
  %778 = vmatprep.subr.mxu0 0.0
  %779 = vmatpush1.msra.mxu0 0.0
  %780 = vmatprep.subr.mxu0 0.0
  %781 = vmatpush1.msra.mxu0 0.0
  %782 = vmatprep.subr.mxu0 0.0
  %783 = vmatpush1.msra.mxu0 0.0
  %784 = vmatprep.subr.mxu0 0.0
  %785 = vmatpush1.msra.mxu0 0.0
  %786 = vmatprep.subr.mxu0 0.0
  %787 = vmatpush1.msra.mxu0 0.0
  %788 = vmatprep.subr.mxu0 0.0
  %789 = vmatpush1.msra.mxu0 0.0
  %790 = vmatprep.subr.mxu0 0.0
  %791 = vmatpush1.msra.mxu0 0.0
  %792 = vmatprep.subr.mxu0 0.0
  %793 = vmatpush1.msra.mxu0 0.0
  %794 = vmatprep.subr.mxu0 0.0
  %795 = vmatpush1.msra.mxu0 0.0
  %796 = vmatprep.subr.mxu0 0.0
  %797 = vmatpush1.msra.mxu0 0.0
  %798 = vmatprep.subr.mxu0 0.0
  %799 = vmatpush1.msra.mxu0 0.0
  %800 = vmatprep.subr.mxu0 0.0
  %801 = vmatpush1.msra.mxu0 0.0
  %802 = vmatprep.subr.mxu0 0.0
  %803 = vmatpush1.msra.mxu0 0.0
  %804 = vmatprep.subr.mxu0 0.0
  %805 = vmatpush1.msra.mxu0 0.0
  %806 = vmatprep.subr.mxu0 0.0
  %807 = vmatpush1.msra.mxu0 0.0
  %808 = vmatprep.subr.mxu0 0.0
  %809 = vmatpush1.msra.mxu0 0.0
  %810 = vmatprep.subr.mxu0 0.0
  %811 = vmatpush1.msra.mxu0 0.0
  %812 = vmatprep.subr.mxu0 0.0
  %813 = vmatpush1.msra.mxu0 0.0
  %814 = vmatprep.subr.mxu0 0.0
  %815 = vmatpush1.msra.mxu0 0.0
  %816 = vmatprep.subr.mxu0 0.0
  %817 = vmatpush1.msra.mxu0 0.0
  %818 = vmatprep.mubr.f32.mxu0 0.0
  %819 = vmatmul.mubr.f32.gmra.mrb[0].mxu0 %v752
  %v820 = vpop.f32.mrb[0].mxu0
  %v821 = vadd.f32 0.0, %v820
  %v822 = vpop.f32.mrb[0].mxu0
  %823 = vdwg.mxu0
  %v824 = vpack.c.bf16 %v821, %v821
  %v827 = vunpack.c.l.b16 %v115
  %v828 = vunpack.c.l.b16 %v116
  %v829 = vpack.c.b16 %v828, %v827
  %v832 = vsel %vm65, %v824, 0
  %834 = vmatprep.subr.bf16.mxu0 0
  %835 = vmatpush1.bf16.msra.mxu0 %v829
  %836 = vmatprep.subr.bf16.mxu0 0
  %837 = vmatpush1.bf16.msra.mxu0 0
  %838 = vmatprep.subr.bf16.mxu0 0
  %839 = vmatpush1.bf16.msra.mxu0 0
  %840 = vmatprep.subr.bf16.mxu0 0
  %841 = vmatpush1.bf16.msra.mxu0 0
  %842 = vmatprep.subr.bf16.mxu0 0
  %843 = vmatpush1.bf16.msra.mxu0 0
  %844 = vmatprep.subr.bf16.mxu0 0
  %845 = vmatpush1.bf16.msra.mxu0 0
  %846 = vmatprep.subr.bf16.mxu0 0
  %847 = vmatpush1.bf16.msra.mxu0 0
  %848 = vmatprep.subr.bf16.mxu0 0
  %849 = vmatpush1.bf16.msra.mxu0 0
  %850 = vmatprep.subr.bf16.mxu0 0
  %851 = vmatpush1.bf16.msra.mxu0 0
  %852 = vmatprep.subr.bf16.mxu0 0
  %853 = vmatpush1.bf16.msra.mxu0 0
  %854 = vmatprep.subr.bf16.mxu0 0
  %855 = vmatpush1.bf16.msra.mxu0 0
  %856 = vmatprep.subr.bf16.mxu0 0
  %857 = vmatpush1.bf16.msra.mxu0 0
  %858 = vmatprep.subr.bf16.mxu0 0
  %859 = vmatpush1.bf16.msra.mxu0 0
  %860 = vmatprep.subr.bf16.mxu0 0
  %861 = vmatpush1.bf16.msra.mxu0 0
  %862 = vmatprep.subr.bf16.mxu0 0
  %863 = vmatpush1.bf16.msra.mxu0 0
  %864 = vmatprep.subr.bf16.mxu0 0
  %865 = vmatpush1.bf16.msra.mxu0 0
  %866 = vmatprep.mubr.bf16.mxu0 0
  %867 = vmatmul.mubr.bf16.gmra.mrb[0].mxu0 %v832
  %v868 = vpop.f32.mrb[0].mxu0
  %v869 = vadd.f32 0.0, %v868
  %v870 = vpop.f32.mrb[0].mxu0
  %v871 = vpop.f32.mrb[0].mxu0
  %v872 = vpop.f32.mrb[0].mxu0
  %873 = vdwg.mxu0
  %v874 = vadd.f32 %v658, %v869
  %875 = vrot.lane.b32.xlu0 %v219, 80
  %v876 = vpop.permute.xlu0 %875
  %877 = vrot.lane.b32.xlu0 %v219, 16
  %v878 = vpop.permute.xlu0 %877
  %v879 = vsel %vm65, %v876, 0
  %v881 = vsel %vm65, %v878, 0
  %883 = vmatprep.subr.mxu0 0.0
  %884 = vmatpush1.xpose.msra.mxu0 %v881
  %885 = vmatprep.subr.mxu0 0.0
  %886 = vmatpush1.xpose.msra.mxu0 0.0
  %887 = vmatprep.subr.mxu0 0.0
  %888 = vmatpush1.xpose.msra.mxu0 0.0
  %889 = vmatprep.subr.mxu0 0.0
  %890 = vmatpush1.xpose.msra.mxu0 0.0
  %891 = vmatprep.subr.mxu0 0.0
  %892 = vmatpush1.xpose.msra.mxu0 0.0
  %893 = vmatprep.subr.mxu0 0.0
  %894 = vmatpush1.xpose.msra.mxu0 0.0
  %895 = vmatprep.subr.mxu0 0.0
  %896 = vmatpush1.xpose.msra.mxu0 0.0
  %897 = vmatprep.subr.mxu0 0.0
  %898 = vmatpush1.xpose.msra.mxu0 0.0
  %899 = vmatprep.subr.mxu0 0.0
  %900 = vmatpush1.xpose.msra.mxu0 0.0
  %901 = vmatprep.subr.mxu0 0.0
  %902 = vmatpush1.xpose.msra.mxu0 0.0
  %903 = vmatprep.subr.mxu0 0.0
  %904 = vmatpush1.xpose.msra.mxu0 0.0
  %905 = vmatprep.subr.mxu0 0.0
  %906 = vmatpush1.xpose.msra.mxu0 0.0
  %907 = vmatprep.subr.mxu0 0.0
  %908 = vmatpush1.xpose.msra.mxu0 0.0
  %909 = vmatprep.subr.mxu0 0.0
  %910 = vmatpush1.xpose.msra.mxu0 0.0
  %911 = vmatprep.subr.mxu0 0.0
  %912 = vmatpush1.xpose.msra.mxu0 0.0
  %913 = vmatprep.subr.mxu0 0.0
  %914 = vmatpush1.xpose.msra.mxu0 0.0
  %915 = vmatprep.subr.mxu0 0.0
  %916 = vmatpush1.xpose.msra.mxu0 0.0
  %917 = vmatprep.subr.mxu0 0.0
  %918 = vmatpush1.xpose.msra.mxu0 0.0
  %919 = vmatprep.subr.mxu0 0.0
  %920 = vmatpush1.xpose.msra.mxu0 0.0
  %921 = vmatprep.subr.mxu0 0.0
  %922 = vmatpush1.xpose.msra.mxu0 0.0
  %923 = vmatprep.subr.mxu0 0.0
  %924 = vmatpush1.xpose.msra.mxu0 0.0
  %925 = vmatprep.subr.mxu0 0.0
  %926 = vmatpush1.xpose.msra.mxu0 0.0
  %927 = vmatprep.subr.mxu0 0.0
  %928 = vmatpush1.xpose.msra.mxu0 0.0
  %929 = vmatprep.subr.mxu0 0.0
  %930 = vmatpush1.xpose.msra.mxu0 0.0
  %931 = vmatprep.subr.mxu0 0.0
  %932 = vmatpush1.xpose.msra.mxu0 0.0
  %933 = vmatprep.subr.mxu0 0.0
  %934 = vmatpush1.xpose.msra.mxu0 0.0
  %935 = vmatprep.subr.mxu0 0.0
  %936 = vmatpush1.xpose.msra.mxu0 0.0
  %937 = vmatprep.subr.mxu0 0.0
  %938 = vmatpush1.xpose.msra.mxu0 0.0
  %939 = vmatprep.subr.mxu0 0.0
  %940 = vmatpush1.xpose.msra.mxu0 0.0
  %941 = vmatprep.subr.mxu0 0.0
  %942 = vmatpush1.xpose.msra.mxu0 0.0
  %943 = vmatprep.subr.mxu0 0.0
  %944 = vmatpush1.xpose.msra.mxu0 0.0
  %945 = vmatprep.subr.mxu0 0.0
  %946 = vmatpush1.xpose.msra.mxu0 0.0
  %947 = vmatprep.mubr.f32.mxu0 0.0
  %948 = vmatmul.mubr.f32.gmra.mrb[0].mxu0 %v879
  %v949 = vpop.f32.mrb[0].mxu0
  %v950 = vadd.f32 0.0, %v949
  %v951 = vpop.f32.mrb[0].mxu0
  %952 = vdwg.mxu0
  %v953 = vsel %vm306, %v950, -inf
  %954 = vmax.xlane.f32.xlu0 %v953
  %v955 = vpop.xlane.xlu0 %954
  %v956 = vsub.f32 %v950, %v955
  %v957 = vmul.f32 %v956, 1.442695
  %v958 = vpow.pop %v957
  %v959 = vsel %vm306, %v958, 0.0
  %960 = vadd.xlane.f32.xlu0 %v959
  %v961 = vpop.xlane.xlu0 %960
  %v962 = vrcp.pop %v961
  %v963 = vmul.f32 %v958, %v962
  %964 = vrot.lane.b32.xlu0 %v221, 80
  %v965 = vpop.permute.xlu0 %964
  %v968 = vsel %vm306, %v963, 0
  %970 = vmatprep.subr.mxu0 0.0
  %971 = vmatpush1.msra.mxu0 %v965
  %972 = vmatprep.subr.mxu0 0.0
  %973 = vmatpush1.msra.mxu0 0.0
  %974 = vmatprep.subr.mxu0 0.0
  %975 = vmatpush1.msra.mxu0 0.0
  %976 = vmatprep.subr.mxu0 0.0
  %977 = vmatpush1.msra.mxu0 0.0
  %978 = vmatprep.subr.mxu0 0.0
  %979 = vmatpush1.msra.mxu0 0.0
  %980 = vmatprep.subr.mxu0 0.0
  %981 = vmatpush1.msra.mxu0 0.0
  %982 = vmatprep.subr.mxu0 0.0
  %983 = vmatpush1.msra.mxu0 0.0
  %984 = vmatprep.subr.mxu0 0.0
  %985 = vmatpush1.msra.mxu0 0.0
  %986 = vmatprep.subr.mxu0 0.0
  %987 = vmatpush1.msra.mxu0 0.0
  %988 = vmatprep.subr.mxu0 0.0
  %989 = vmatpush1.msra.mxu0 0.0
  %990 = vmatprep.subr.mxu0 0.0
  %991 = vmatpush1.msra.mxu0 0.0
  %992 = vmatprep.subr.mxu0 0.0
  %993 = vmatpush1.msra.mxu0 0.0
  %994 = vmatprep.subr.mxu0 0.0
  %995 = vmatpush1.msra.mxu0 0.0
  %996 = vmatprep.subr.mxu0 0.0
  %997 = vmatpush1.msra.mxu0 0.0
  %998 = vmatprep.subr.mxu0 0.0
  %999 = vmatpush1.msra.mxu0 0.0
  %1000 = vmatprep.subr.mxu0 0.0
  %1001 = vmatpush1.msra.mxu0 0.0
  %1002 = vmatprep.subr.mxu0 0.0
  %1003 = vmatpush1.msra.mxu0 0.0
  %1004 = vmatprep.subr.mxu0 0.0
  %1005 = vmatpush1.msra.mxu0 0.0
  %1006 = vmatprep.subr.mxu0 0.0
  %1007 = vmatpush1.msra.mxu0 0.0
  %1008 = vmatprep.subr.mxu0 0.0
  %1009 = vmatpush1.msra.mxu0 0.0
  %1010 = vmatprep.subr.mxu0 0.0
  %1011 = vmatpush1.msra.mxu0 0.0
  %1012 = vmatprep.subr.mxu0 0.0
  %1013 = vmatpush1.msra.mxu0 0.0
  %1014 = vmatprep.subr.mxu0 0.0
  %1015 = vmatpush1.msra.mxu0 0.0
  %1016 = vmatprep.subr.mxu0 0.0
  %1017 = vmatpush1.msra.mxu0 0.0
  %1018 = vmatprep.subr.mxu0 0.0
  %1019 = vmatpush1.msra.mxu0 0.0
  %1020 = vmatprep.subr.mxu0 0.0
  %1021 = vmatpush1.msra.mxu0 0.0
  %1022 = vmatprep.subr.mxu0 0.0
  %1023 = vmatpush1.msra.mxu0 0.0
  %1024 = vmatprep.subr.mxu0 0.0
  %1025 = vmatpush1.msra.mxu0 0.0
  %1026 = vmatprep.subr.mxu0 0.0
  %1027 = vmatpush1.msra.mxu0 0.0
  %1028 = vmatprep.subr.mxu0 0.0
  %1029 = vmatpush1.msra.mxu0 0.0
  %1030 = vmatprep.subr.mxu0 0.0
  %1031 = vmatpush1.msra.mxu0 0.0
  %1032 = vmatprep.subr.mxu0 0.0
  %1033 = vmatpush1.msra.mxu0 0.0
  %1034 = vmatprep.mubr.f32.mxu0 0.0
  %1035 = vmatmul.mubr.f32.gmra.mrb[0].mxu0 %v968
  %v1036 = vpop.f32.mrb[0].mxu0
  %v1037 = vadd.f32 0.0, %v1036
  %v1038 = vpop.f32.mrb[0].mxu0
  %1039 = vdwg.mxu0
  %v1040 = vpack.c.bf16 %v1037, %v1037
  %v1043 = vunpack.c.l.b16 %v117
  %v1044 = vunpack.c.l.b16 %v118
  %v1045 = vpack.c.b16 %v1044, %v1043
  %v1048 = vsel %vm65, %v1040, 0
  %1050 = vmatprep.subr.bf16.mxu0 0
  %1051 = vmatpush1.bf16.msra.mxu0 %v1045
  %1052 = vmatprep.subr.bf16.mxu0 0
  %1053 = vmatpush1.bf16.msra.mxu0 0
  %1054 = vmatprep.subr.bf16.mxu0 0
  %1055 = vmatpush1.bf16.msra.mxu0 0
  %1056 = vmatprep.subr.bf16.mxu0 0
  %1057 = vmatpush1.bf16.msra.mxu0 0
  %1058 = vmatprep.subr.bf16.mxu0 0
  %1059 = vmatpush1.bf16.msra.mxu0 0
  %1060 = vmatprep.subr.bf16.mxu0 0
  %1061 = vmatpush1.bf16.msra.mxu0 0
  %1062 = vmatprep.subr.bf16.mxu0 0
  %1063 = vmatpush1.bf16.msra.mxu0 0
  %1064 = vmatprep.subr.bf16.mxu0 0
  %1065 = vmatpush1.bf16.msra.mxu0 0
  %1066 = vmatprep.subr.bf16.mxu0 0
  %1067 = vmatpush1.bf16.msra.mxu0 0
  %1068 = vmatprep.subr.bf16.mxu0 0
  %1069 = vmatpush1.bf16.msra.mxu0 0
  %1070 = vmatprep.subr.bf16.mxu0 0
  %1071 = vmatpush1.bf16.msra.mxu0 0
  %1072 = vmatprep.subr.bf16.mxu0 0
  %1073 = vmatpush1.bf16.msra.mxu0 0
  %1074 = vmatprep.subr.bf16.mxu0 0
  %1075 = vmatpush1.bf16.msra.mxu0 0
  %1076 = vmatprep.subr.bf16.mxu0 0
  %1077 = vmatpush1.bf16.msra.mxu0 0
  %1078 = vmatprep.subr.bf16.mxu0 0
  %1079 = vmatpush1.bf16.msra.mxu0 0
  %1080 = vmatprep.subr.bf16.mxu0 0
  %1081 = vmatpush1.bf16.msra.mxu0 0
  %1082 = vmatprep.mubr.bf16.mxu0 0
  %1083 = vmatmul.mubr.bf16.gmra.mrb[0].mxu0 %v1048
  %v1084 = vpop.f32.mrb[0].mxu0
  %v1085 = vadd.f32 0.0, %v1084
  %v1086 = vpop.f32.mrb[0].mxu0
  %v1087 = vpop.f32.mrb[0].mxu0
  %v1088 = vpop.f32.mrb[0].mxu0
  %1089 = vdwg.mxu0
  %v1090 = vadd.f32 %v874, %v1085
  %v1091 = vadd.f32 %v109, %v1090
  %v1092 = vsel %vm180, %v1091, 0.0
  %1093 = vadd.xlane.f32.xlu0 %v1092
  %v1094 = vpop.xlane.xlu0 %1093
  %v1095 = vrcp.pop 64.0
  %v1096 = vmul.f32 %v1094, %v1095
  %v1097 = vsub.f32 %v1091, %v1096
  %v1098 = vmul.f32 %v1097, %v1097
  %v1099 = vsel %vm180, %v1098, 0.0
  %1100 = vadd.xlane.f32.xlu0 %v1099
  %v1101 = vpop.xlane.xlu0 %1100
  %v1102 = vmul.f32 %v1101, %v1095
  %v1103 = vadd.f32 %v1102, 1e-05
  %v1104 = vrsqrt.pop %v1103
  %v1105 = vmul.f32 %v1097, %v1104
  %v1106 = vlaneseq
  %v1107 = vshrl.u32 %v1106, 7
  %v1108 = vsub.s32 1, %v1107
  %v1109 = vrot.slane %v110, %v1108
  %v1110 = vmul.f32 %v1105, %v1109
  %v1111 = vlaneseq
  %v1112 = vshrl.u32 %v1111, 7
  %v1113 = vsub.s32 2, %v1112
  %v1114 = vrot.slane %v110, %v1113
  %v1115 = vadd.f32 %v1110, %v1114
  %v1116 = vpack.c.bf16 %v1115, %v1115
  %v1117 = vld [vmem:[%s7] sm:$0xff]
  %v1118 = vld [vmem:[%s7 + $0x8] sm:$0xff]
  %v1119 = vld [vmem:[%s7 + $0x10] sm:$0xff]
  %v1120 = vld [vmem:[%s7 + $0x18] sm:$0xff]
  %v1121 = vld [vmem:[%s7 + $0x20] sm:$0xff]
  %v1122 = vld [vmem:[%s7 + $0x28] sm:$0xff]
  %v1123 = vld [vmem:[%s7 + $0x30] sm:$0xff]
  %v1124 = vld [vmem:[%s7 + $0x38] sm:$0xff]
  %v1125 = vld [vmem:[%s7 + $0x40] sm:$0xff]
  %v1126 = vld [vmem:[%s7 + $0x48] sm:$0xff]
  %v1127 = vld [vmem:[%s7 + $0x50] sm:$0xff]
  %v1128 = vld [vmem:[%s7 + $0x58] sm:$0xff]
  %v1129 = vld [vmem:[%s7 + $0x60] sm:$0xff]
  %v1130 = vld [vmem:[%s7 + $0x68] sm:$0xff]
  %v1131 = vld [vmem:[%s7 + $0x70] sm:$0xff]
  %v1132 = vld [vmem:[%s7 + $0x78] sm:$0xff]
  %v1133 = vld [vmem:[%s7 + $0x80] sm:$0xff]
  %v1134 = vld [vmem:[%s7 + $0x88] sm:$0xff]
  %v1135 = vld [vmem:[%s7 + $0x90] sm:$0xff]
  %v1136 = vld [vmem:[%s7 + $0x98] sm:$0xff]
  %v1137 = vld [vmem:[%s7 + $0xa0] sm:$0xff]
  %v1138 = vld [vmem:[%s7 + $0xa8] sm:$0xff]
  %v1139 = vld [vmem:[%s7 + $0xb0] sm:$0xff]
  %v1140 = vld [vmem:[%s7 + $0xb8] sm:$0xff]
  %v1141 = vld [vmem:[%s7 + $0xc0] sm:$0xff]
  %v1142 = vld [vmem:[%s7 + $0xc8] sm:$0xff]
  %v1143 = vld [vmem:[%s7 + $0xd0] sm:$0xff]
  %v1144 = vld [vmem:[%s7 + $0xd8] sm:$0xff]
  %v1145 = vld [vmem:[%s7 + $0xe0] sm:$0xff]
  %v1146 = vld [vmem:[%s7 + $0xe8] sm:$0xff]
  %v1147 = vld [vmem:[%s7 + $0xf0] sm:$0xff]
  %v1148 = vld [vmem:[%s7 + $0xf8] sm:$0xff]
  %v1149 = vld [vmem:[%s7 + $0x100] sm:$0xff]
  %v1150 = vld [vmem:[%s7 + $0x108] sm:$0xff]
  %v1151 = vld [vmem:[%s7 + $0x110] sm:$0xff]
  %v1152 = vld [vmem:[%s7 + $0x118] sm:$0xff]
  %v1153 = vld [vmem:[%s7 + $0x120] sm:$0xff]
  %v1154 = vld [vmem:[%s7 + $0x128] sm:$0xff]
  %v1155 = vld [vmem:[%s7 + $0x130] sm:$0xff]
  %v1156 = vld [vmem:[%s7 + $0x138] sm:$0xff]
  %v1157 = vld [vmem:[%s7 + $0x140] sm:$0xff]
  %v1158 = vld [vmem:[%s7 + $0x148] sm:$0xff]
  %v1159 = vld [vmem:[%s7 + $0x150] sm:$0xff]
  %v1160 = vld [vmem:[%s7 + $0x158] sm:$0xff]
  %v1161 = vld [vmem:[%s7 + $0x160] sm:$0xff]
  %v1162 = vld [vmem:[%s7 + $0x168] sm:$0xff]
  %v1163 = vld [vmem:[%s7 + $0x170] sm:$0xff]
  %v1164 = vld [vmem:[%s7 + $0x178] sm:$0xff]
  %v1165 = vld [vmem:[%s7 + $0x180] sm:$0xff]
  %v1166 = vld [vmem:[%s7 + $0x188] sm:$0xff]
  %v1167 = vld [vmem:[%s7 + $0x190] sm:$0xff]
  %v1168 = vld [vmem:[%s7 + $0x198] sm:$0xff]
  %v1169 = vld [vmem:[%s7 + $0x1a0] sm:$0xff]
  %v1170 = vld [vmem:[%s7 + $0x1a8] sm:$0xff]
  %v1171 = vld [vmem:[%s7 + $0x1b0] sm:$0xff]
  %v1172 = vld [vmem:[%s7 + $0x1b8] sm:$0xff]
  %v1173 = vld [vmem:[%s7 + $0x1c0] sm:$0xff]
  %v1174 = vld [vmem:[%s7 + $0x1c8] sm:$0xff]
  %v1175 = vld [vmem:[%s7 + $0x1d0] sm:$0xff]
  %v1176 = vld [vmem:[%s7 + $0x1d8] sm:$0xff]
  %v1177 = vld [vmem:[%s7 + $0x1e0] sm:$0xff]
  %v1178 = vld [vmem:[%s7 + $0x1e8] sm:$0xff]
  %v1179 = vld [vmem:[%s7 + $0x1f0] sm:$0xff]
  %v1180 = vld [vmem:[%s7 + $0x1f8] sm:$0xff]
  %v1181 = vld [vmem:[%s8] sm:$0xff]
  %v1182 = vld [vmem:[%s8 + $0x8] sm:$0xff]
  %v1185 = vlaneseq
  %v1186 = vshrl.u32 %v1185, 7
  %v1187 = vsub.s32 0, %v1186
  %v1188 = vrot.slane %v1181, %v1187
  %v1189 = vlaneseq
  %v1190 = vshrl.u32 %v1189, 7
  %v1191 = vsub.s32 1, %v1190
  %v1192 = vrot.slane %v1181, %v1191
  %v1193 = vlaneseq
  %v1194 = vshrl.u32 %v1193, 7
  %v1195 = vsub.s32 2, %v1194
  %v1196 = vrot.slane %v1181, %v1195
  %v1197 = vlaneseq
  %v1198 = vshrl.u32 %v1197, 7
  %v1199 = vsub.s32 3, %v1198
  %v1200 = vrot.slane %v1181, %v1199
  %v1201 = vlaneseq
  %v1202 = vshrl.u32 %v1201, 7
  %v1203 = vsub.s32 4, %v1202
  %v1204 = vrot.slane %v1181, %v1203
  %v1205 = vlaneseq
  %v1206 = vshrl.u32 %v1205, 7
  %v1207 = vsub.s32 5, %v1206
  %v1208 = vrot.slane %v1181, %v1207
  %v1209 = vlaneseq
  %v1210 = vshrl.u32 %v1209, 7
  %v1211 = vsub.s32 6, %v1210
  %v1212 = vrot.slane %v1181, %v1211
  %v1213 = vlaneseq
  %v1214 = vshrl.u32 %v1213, 7
  %v1215 = vsub.s32 7, %v1214
  %v1216 = vrot.slane %v1181, %v1215
  %v1217 = vlaneseq
  %v1218 = vshrl.u32 %v1217, 7
  %v1219 = vsub.s32 0, %v1218
  %v1220 = vrot.slane %v1182, %v1219
  %v1221 = vlaneseq
  %v1222 = vshrl.u32 %v1221, 7
  %v1223 = vsub.s32 1, %v1222
  %v1224 = vrot.slane %v1182, %v1223
  %v1225 = vlaneseq
  %v1226 = vshrl.u32 %v1225, 7
  %v1227 = vsub.s32 2, %v1226
  %v1228 = vrot.slane %v1182, %v1227
  %v1229 = vlaneseq
  %v1230 = vshrl.u32 %v1229, 7
  %v1231 = vsub.s32 3, %v1230
  %v1232 = vrot.slane %v1182, %v1231
  %v1233 = vlaneseq
  %v1234 = vshrl.u32 %v1233, 7
  %v1235 = vsub.s32 4, %v1234
  %v1236 = vrot.slane %v1182, %v1235
  %v1237 = vlaneseq
  %v1238 = vshrl.u32 %v1237, 7
  %v1239 = vsub.s32 5, %v1238
  %v1240 = vrot.slane %v1182, %v1239
  %v1241 = vlaneseq
  %v1242 = vshrl.u32 %v1241, 7
  %v1243 = vsub.s32 6, %v1242
  %v1244 = vrot.slane %v1182, %v1243
  %v1245 = vlaneseq
  %v1246 = vshrl.u32 %v1245, 7
  %v1247 = vsub.s32 7, %v1246
  %v1248 = vrot.slane %v1182, %v1247
  %v1329 = vunpack.c.l.b16 %v1117
  %v1330 = vunpack.c.h.b16 %v1117
  %v1331 = vunpack.c.l.b16 %v1118
  %v1332 = vunpack.c.h.b16 %v1118
  %v1333 = vunpack.c.l.b16 %v1119
  %v1334 = vunpack.c.h.b16 %v1119
  %v1335 = vunpack.c.l.b16 %v1120
  %v1336 = vunpack.c.h.b16 %v1120
  %v1337 = vunpack.c.l.b16 %v1121
  %v1338 = vunpack.c.h.b16 %v1121
  %v1339 = vunpack.c.l.b16 %v1122
  %v1340 = vunpack.c.h.b16 %v1122
  %v1341 = vunpack.c.l.b16 %v1123
  %v1342 = vunpack.c.h.b16 %v1123
  %v1343 = vunpack.c.l.b16 %v1124
  %v1344 = vunpack.c.h.b16 %v1124
  %v1345 = vunpack.c.l.b16 %v1125
  %v1346 = vunpack.c.h.b16 %v1125
  %v1347 = vunpack.c.l.b16 %v1126
  %v1348 = vunpack.c.h.b16 %v1126
  %v1349 = vunpack.c.l.b16 %v1127
  %v1350 = vunpack.c.h.b16 %v1127
  %v1351 = vunpack.c.l.b16 %v1128
  %v1352 = vunpack.c.h.b16 %v1128
  %v1353 = vunpack.c.l.b16 %v1129
  %v1354 = vunpack.c.h.b16 %v1129
  %v1355 = vunpack.c.l.b16 %v1130
  %v1356 = vunpack.c.h.b16 %v1130
  %v1357 = vunpack.c.l.b16 %v1131
  %v1358 = vunpack.c.h.b16 %v1131
  %v1359 = vunpack.c.l.b16 %v1132
  %v1360 = vunpack.c.h.b16 %v1132
  %v1361 = vunpack.c.l.b16 %v1133
  %v1362 = vunpack.c.h.b16 %v1133
  %v1363 = vunpack.c.l.b16 %v1134
  %v1364 = vunpack.c.h.b16 %v1134
  %v1365 = vunpack.c.l.b16 %v1135
  %v1366 = vunpack.c.h.b16 %v1135
  %v1367 = vunpack.c.l.b16 %v1136
  %v1368 = vunpack.c.h.b16 %v1136
  %v1369 = vunpack.c.l.b16 %v1137
  %v1370 = vunpack.c.h.b16 %v1137
  %v1371 = vunpack.c.l.b16 %v1138
  %v1372 = vunpack.c.h.b16 %v1138
  %v1373 = vunpack.c.l.b16 %v1139
  %v1374 = vunpack.c.h.b16 %v1139
  %v1375 = vunpack.c.l.b16 %v1140
  %v1376 = vunpack.c.h.b16 %v1140
  %v1377 = vunpack.c.l.b16 %v1141
  %v1378 = vunpack.c.h.b16 %v1141
  %v1379 = vunpack.c.l.b16 %v1142
  %v1380 = vunpack.c.h.b16 %v1142
  %v1381 = vunpack.c.l.b16 %v1143
  %v1382 = vunpack.c.h.b16 %v1143
  %v1383 = vunpack.c.l.b16 %v1144
  %v1384 = vunpack.c.h.b16 %v1144
  %v1385 = vunpack.c.l.b16 %v1145
  %v1386 = vunpack.c.h.b16 %v1145
  %v1387 = vunpack.c.l.b16 %v1146
  %v1388 = vunpack.c.h.b16 %v1146
  %v1389 = vunpack.c.l.b16 %v1147
  %v1390 = vunpack.c.h.b16 %v1147
  %v1391 = vunpack.c.l.b16 %v1148
  %v1392 = vunpack.c.h.b16 %v1148
  %v1393 = vunpack.c.l.b16 %v1149
  %v1394 = vunpack.c.h.b16 %v1149
  %v1395 = vunpack.c.l.b16 %v1150
  %v1396 = vunpack.c.h.b16 %v1150
  %v1397 = vunpack.c.l.b16 %v1151
  %v1398 = vunpack.c.h.b16 %v1151
  %v1399 = vunpack.c.l.b16 %v1152
  %v1400 = vunpack.c.h.b16 %v1152
  %v1401 = vunpack.c.l.b16 %v1153
  %v1402 = vunpack.c.h.b16 %v1153
  %v1403 = vunpack.c.l.b16 %v1154
  %v1404 = vunpack.c.h.b16 %v1154
  %v1405 = vunpack.c.l.b16 %v1155
  %v1406 = vunpack.c.h.b16 %v1155
  %v1407 = vunpack.c.l.b16 %v1156
  %v1408 = vunpack.c.h.b16 %v1156
  %v1409 = vunpack.c.l.b16 %v1157
  %v1410 = vunpack.c.h.b16 %v1157
  %v1411 = vunpack.c.l.b16 %v1158
  %v1412 = vunpack.c.h.b16 %v1158
  %v1413 = vunpack.c.l.b16 %v1159
  %v1414 = vunpack.c.h.b16 %v1159
  %v1415 = vunpack.c.l.b16 %v1160
  %v1416 = vunpack.c.h.b16 %v1160
  %v1417 = vunpack.c.l.b16 %v1161
  %v1418 = vunpack.c.h.b16 %v1161
  %v1419 = vunpack.c.l.b16 %v1162
  %v1420 = vunpack.c.h.b16 %v1162
  %v1421 = vunpack.c.l.b16 %v1163
  %v1422 = vunpack.c.h.b16 %v1163
  %v1423 = vunpack.c.l.b16 %v1164
  %v1424 = vunpack.c.h.b16 %v1164
  %v1425 = vunpack.c.l.b16 %v1165
  %v1426 = vunpack.c.h.b16 %v1165
  %v1427 = vunpack.c.l.b16 %v1166
  %v1428 = vunpack.c.h.b16 %v1166
  %v1429 = vunpack.c.l.b16 %v1167
  %v1430 = vunpack.c.h.b16 %v1167
  %v1431 = vunpack.c.l.b16 %v1168
  %v1432 = vunpack.c.h.b16 %v1168
  %v1433 = vunpack.c.l.b16 %v1169
  %v1434 = vunpack.c.h.b16 %v1169
  %v1435 = vunpack.c.l.b16 %v1170
  %v1436 = vunpack.c.h.b16 %v1170
  %v1437 = vunpack.c.l.b16 %v1171
  %v1438 = vunpack.c.h.b16 %v1171
  %v1439 = vunpack.c.l.b16 %v1172
  %v1440 = vunpack.c.h.b16 %v1172
  %v1441 = vunpack.c.l.b16 %v1173
  %v1442 = vunpack.c.h.b16 %v1173
  %v1443 = vunpack.c.l.b16 %v1174
  %v1444 = vunpack.c.h.b16 %v1174
  %v1445 = vunpack.c.l.b16 %v1175
  %v1446 = vunpack.c.h.b16 %v1175
  %v1447 = vunpack.c.l.b16 %v1176
  %v1448 = vunpack.c.h.b16 %v1176
  %v1449 = vunpack.c.l.b16 %v1177
  %v1450 = vunpack.c.h.b16 %v1177
  %v1451 = vunpack.c.l.b16 %v1178
  %v1452 = vunpack.c.h.b16 %v1178
  %v1453 = vunpack.c.l.b16 %v1179
  %v1454 = vunpack.c.h.b16 %v1179
  %v1455 = vunpack.c.l.b16 %v1180
  %v1456 = vunpack.c.h.b16 %v1180
  %v1457 = vpack.c.b16 %v1345, %v1329
  %v1458 = vpack.c.b16 %v1346, %v1330
  %v1459 = vpack.c.b16 %v1347, %v1331
  %v1460 = vpack.c.b16 %v1348, %v1332
  %v1461 = vpack.c.b16 %v1349, %v1333
  %v1462 = vpack.c.b16 %v1350, %v1334
  %v1463 = vpack.c.b16 %v1351, %v1335
  %v1464 = vpack.c.b16 %v1352, %v1336
  %v1465 = vpack.c.b16 %v1353, %v1337
  %v1466 = vpack.c.b16 %v1354, %v1338
  %v1467 = vpack.c.b16 %v1355, %v1339
  %v1468 = vpack.c.b16 %v1356, %v1340
  %v1469 = vpack.c.b16 %v1357, %v1341
  %v1470 = vpack.c.b16 %v1358, %v1342
  %v1471 = vpack.c.b16 %v1359, %v1343
  %v1472 = vpack.c.b16 %v1360, %v1344
  %v1473 = vpack.c.b16 %v1377, %v1361
  %v1474 = vpack.c.b16 %v1378, %v1362
  %v1475 = vpack.c.b16 %v1379, %v1363
  %v1476 = vpack.c.b16 %v1380, %v1364
  %v1477 = vpack.c.b16 %v1381, %v1365
  %v1478 = vpack.c.b16 %v1382, %v1366
  %v1479 = vpack.c.b16 %v1383, %v1367
  %v1480 = vpack.c.b16 %v1384, %v1368
  %v1481 = vpack.c.b16 %v1385, %v1369
  %v1482 = vpack.c.b16 %v1386, %v1370
  %v1483 = vpack.c.b16 %v1387, %v1371
  %v1484 = vpack.c.b16 %v1388, %v1372
  %v1485 = vpack.c.b16 %v1389, %v1373
  %v1486 = vpack.c.b16 %v1390, %v1374
  %v1487 = vpack.c.b16 %v1391, %v1375
  %v1488 = vpack.c.b16 %v1392, %v1376
  %v1489 = vpack.c.b16 %v1409, %v1393
  %v1490 = vpack.c.b16 %v1410, %v1394
  %v1491 = vpack.c.b16 %v1411, %v1395
  %v1492 = vpack.c.b16 %v1412, %v1396
  %v1493 = vpack.c.b16 %v1413, %v1397
  %v1494 = vpack.c.b16 %v1414, %v1398
  %v1495 = vpack.c.b16 %v1415, %v1399
  %v1496 = vpack.c.b16 %v1416, %v1400
  %v1497 = vpack.c.b16 %v1417, %v1401
  %v1498 = vpack.c.b16 %v1418, %v1402
  %v1499 = vpack.c.b16 %v1419, %v1403
  %v1500 = vpack.c.b16 %v1420, %v1404
  %v1501 = vpack.c.b16 %v1421, %v1405
  %v1502 = vpack.c.b16 %v1422, %v1406
  %v1503 = vpack.c.b16 %v1423, %v1407
  %v1504 = vpack.c.b16 %v1424, %v1408
  %v1505 = vpack.c.b16 %v1441, %v1425
  %v1506 = vpack.c.b16 %v1442, %v1426
  %v1507 = vpack.c.b16 %v1443, %v1427
  %v1508 = vpack.c.b16 %v1444, %v1428
  %v1509 = vpack.c.b16 %v1445, %v1429
  %v1510 = vpack.c.b16 %v1446, %v1430
  %v1511 = vpack.c.b16 %v1447, %v1431
  %v1512 = vpack.c.b16 %v1448, %v1432
  %v1513 = vpack.c.b16 %v1449, %v1433
  %v1514 = vpack.c.b16 %v1450, %v1434
  %v1515 = vpack.c.b16 %v1451, %v1435
  %v1516 = vpack.c.b16 %v1452, %v1436
  %v1517 = vpack.c.b16 %v1453, %v1437
  %v1518 = vpack.c.b16 %v1454, %v1438
  %v1519 = vpack.c.b16 %v1455, %v1439
  %v1520 = vpack.c.b16 %v1456, %v1440
  %v1586 = vsel %vm180, %v1116, 0
  %1588 = vmatprep.subr.bf16.mxu0 %v1458
  %1589 = vmatpush1.bf16.msra.mxu0 %v1457
  %1590 = vmatprep.subr.bf16.mxu0 %v1474
  %1591 = vmatpush1.bf16.msra.mxu0 %v1473
  %1592 = vmatprep.subr.bf16.mxu0 %v1490
  %1593 = vmatpush1.bf16.msra.mxu0 %v1489
  %1594 = vmatprep.subr.bf16.mxu0 %v1506
  %1595 = vmatpush1.bf16.msra.mxu0 %v1505
  %1596 = vmatprep.subr.bf16.mxu0 0
  %1597 = vmatpush1.bf16.msra.mxu0 0
  %1598 = vmatprep.subr.bf16.mxu0 0
  %1599 = vmatpush1.bf16.msra.mxu0 0
  %1600 = vmatprep.subr.bf16.mxu0 0
  %1601 = vmatpush1.bf16.msra.mxu0 0
  %1602 = vmatprep.subr.bf16.mxu0 0
  %1603 = vmatpush1.bf16.msra.mxu0 0
  %1604 = vmatprep.subr.bf16.mxu0 0
  %1605 = vmatpush1.bf16.msra.mxu0 0
  %1606 = vmatprep.subr.bf16.mxu0 0
  %1607 = vmatpush1.bf16.msra.mxu0 0
  %1608 = vmatprep.subr.bf16.mxu0 0
  %1609 = vmatpush1.bf16.msra.mxu0 0
  %1610 = vmatprep.subr.bf16.mxu0 0
  %1611 = vmatpush1.bf16.msra.mxu0 0
  %1612 = vmatprep.subr.bf16.mxu0 0
  %1613 = vmatpush1.bf16.msra.mxu0 0
  %1614 = vmatprep.subr.bf16.mxu0 0
  %1615 = vmatpush1.bf16.msra.mxu0 0
  %1616 = vmatprep.subr.bf16.mxu0 0
  %1617 = vmatpush1.bf16.msra.mxu0 0
  %1618 = vmatprep.subr.bf16.mxu0 0
  %1619 = vmatpush1.bf16.msra.mxu0 0
  %1620 = vmatprep.mubr.bf16.mxu0 0
  %1621 = vmatmul.mubr.bf16.gmra.mrb[0].mxu0 %v1586
  %v1622 = vpop.f32.mrb[0].mxu0
  %v1623 = vadd.f32 %v1188, %v1622
  %v1624 = vpop.f32.mrb[0].mxu0
  %v1625 = vadd.f32 %v1192, %v1624
  %v1626 = vpop.f32.mrb[0].mxu0
  %v1627 = vpop.f32.mrb[0].mxu0
  %1628 = vdwg.mxu0
  %1629 = vmatprep.subr.bf16.mxu0 %v1460
  %1630 = vmatpush1.bf16.msra.mxu0 %v1459
  %1631 = vmatprep.subr.bf16.mxu0 %v1476
  %1632 = vmatpush1.bf16.msra.mxu0 %v1475
  %1633 = vmatprep.subr.bf16.mxu0 %v1492
  %1634 = vmatpush1.bf16.msra.mxu0 %v1491
  %1635 = vmatprep.subr.bf16.mxu0 %v1508
  %1636 = vmatpush1.bf16.msra.mxu0 %v1507
  %1637 = vmatprep.subr.bf16.mxu0 0
  %1638 = vmatpush1.bf16.msra.mxu0 0
  %1639 = vmatprep.subr.bf16.mxu0 0
  %1640 = vmatpush1.bf16.msra.mxu0 0
  %1641 = vmatprep.subr.bf16.mxu0 0
  %1642 = vmatpush1.bf16.msra.mxu0 0
  %1643 = vmatprep.subr.bf16.mxu0 0
  %1644 = vmatpush1.bf16.msra.mxu0 0
  %1645 = vmatprep.subr.bf16.mxu0 0
  %1646 = vmatpush1.bf16.msra.mxu0 0
  %1647 = vmatprep.subr.bf16.mxu0 0
  %1648 = vmatpush1.bf16.msra.mxu0 0
  %1649 = vmatprep.subr.bf16.mxu0 0
  %1650 = vmatpush1.bf16.msra.mxu0 0
  %1651 = vmatprep.subr.bf16.mxu0 0
  %1652 = vmatpush1.bf16.msra.mxu0 0
  %1653 = vmatprep.subr.bf16.mxu0 0
  %1654 = vmatpush1.bf16.msra.mxu0 0
  %1655 = vmatprep.subr.bf16.mxu0 0
  %1656 = vmatpush1.bf16.msra.mxu0 0
  %1657 = vmatprep.subr.bf16.mxu0 0
  %1658 = vmatpush1.bf16.msra.mxu0 0
  %1659 = vmatprep.subr.bf16.mxu0 0
  %1660 = vmatpush1.bf16.msra.mxu0 0
  %1661 = vmatprep.mubr.bf16.mxu0 0
  %1662 = vmatmul.mubr.bf16.gmra.mrb[0].mxu0 %v1586
  %v1663 = vpop.f32.mrb[0].mxu0
  %v1664 = vadd.f32 %v1196, %v1663
  %v1665 = vpop.f32.mrb[0].mxu0
  %v1666 = vadd.f32 %v1200, %v1665
  %v1667 = vpop.f32.mrb[0].mxu0
  %v1668 = vpop.f32.mrb[0].mxu0
  %1669 = vdwg.mxu0
  %1670 = vmatprep.subr.bf16.mxu0 %v1462
  %1671 = vmatpush1.bf16.msra.mxu0 %v1461
  %1672 = vmatprep.subr.bf16.mxu0 %v1478
  %1673 = vmatpush1.bf16.msra.mxu0 %v1477
  %1674 = vmatprep.subr.bf16.mxu0 %v1494
  %1675 = vmatpush1.bf16.msra.mxu0 %v1493
  %1676 = vmatprep.subr.bf16.mxu0 %v1510
  %1677 = vmatpush1.bf16.msra.mxu0 %v1509
  %1678 = vmatprep.subr.bf16.mxu0 0
  %1679 = vmatpush1.bf16.msra.mxu0 0
  %1680 = vmatprep.subr.bf16.mxu0 0
  %1681 = vmatpush1.bf16.msra.mxu0 0
  %1682 = vmatprep.subr.bf16.mxu0 0
  %1683 = vmatpush1.bf16.msra.mxu0 0
  %1684 = vmatprep.subr.bf16.mxu0 0
  %1685 = vmatpush1.bf16.msra.mxu0 0
  %1686 = vmatprep.subr.bf16.mxu0 0
  %1687 = vmatpush1.bf16.msra.mxu0 0
  %1688 = vmatprep.subr.bf16.mxu0 0
  %1689 = vmatpush1.bf16.msra.mxu0 0
  %1690 = vmatprep.subr.bf16.mxu0 0
  %1691 = vmatpush1.bf16.msra.mxu0 0
  %1692 = vmatprep.subr.bf16.mxu0 0
  %1693 = vmatpush1.bf16.msra.mxu0 0
  %1694 = vmatprep.subr.bf16.mxu0 0
  %1695 = vmatpush1.bf16.msra.mxu0 0
  %1696 = vmatprep.subr.bf16.mxu0 0
  %1697 = vmatpush1.bf16.msra.mxu0 0
  %1698 = vmatprep.subr.bf16.mxu0 0
  %1699 = vmatpush1.bf16.msra.mxu0 0
  %1700 = vmatprep.subr.bf16.mxu0 0
  %1701 = vmatpush1.bf16.msra.mxu0 0
  %1702 = vmatprep.mubr.bf16.mxu0 0
  %1703 = vmatmul.mubr.bf16.gmra.mrb[0].mxu0 %v1586
  %v1704 = vpop.f32.mrb[0].mxu0
  %v1705 = vadd.f32 %v1204, %v1704
  %v1706 = vpop.f32.mrb[0].mxu0
  %v1707 = vadd.f32 %v1208, %v1706
  %v1708 = vpop.f32.mrb[0].mxu0
  %v1709 = vpop.f32.mrb[0].mxu0
  %1710 = vdwg.mxu0
  %1711 = vmatprep.subr.bf16.mxu0 %v1464
  %1712 = vmatpush1.bf16.msra.mxu0 %v1463
  %1713 = vmatprep.subr.bf16.mxu0 %v1480
  %1714 = vmatpush1.bf16.msra.mxu0 %v1479
  %1715 = vmatprep.subr.bf16.mxu0 %v1496
  %1716 = vmatpush1.bf16.msra.mxu0 %v1495
  %1717 = vmatprep.subr.bf16.mxu0 %v1512
  %1718 = vmatpush1.bf16.msra.mxu0 %v1511
  %1719 = vmatprep.subr.bf16.mxu0 0
  %1720 = vmatpush1.bf16.msra.mxu0 0
  %1721 = vmatprep.subr.bf16.mxu0 0
  %1722 = vmatpush1.bf16.msra.mxu0 0
  %1723 = vmatprep.subr.bf16.mxu0 0
  %1724 = vmatpush1.bf16.msra.mxu0 0
  %1725 = vmatprep.subr.bf16.mxu0 0
  %1726 = vmatpush1.bf16.msra.mxu0 0
  %1727 = vmatprep.subr.bf16.mxu0 0
  %1728 = vmatpush1.bf16.msra.mxu0 0
  %1729 = vmatprep.subr.bf16.mxu0 0
  %1730 = vmatpush1.bf16.msra.mxu0 0
  %1731 = vmatprep.subr.bf16.mxu0 0
  %1732 = vmatpush1.bf16.msra.mxu0 0
  %1733 = vmatprep.subr.bf16.mxu0 0
  %1734 = vmatpush1.bf16.msra.mxu0 0
  %1735 = vmatprep.subr.bf16.mxu0 0
  %1736 = vmatpush1.bf16.msra.mxu0 0
  %1737 = vmatprep.subr.bf16.mxu0 0
  %1738 = vmatpush1.bf16.msra.mxu0 0
  %1739 = vmatprep.subr.bf16.mxu0 0
  %1740 = vmatpush1.bf16.msra.mxu0 0
  %1741 = vmatprep.subr.bf16.mxu0 0
  %1742 = vmatpush1.bf16.msra.mxu0 0
  %1743 = vmatprep.mubr.bf16.mxu0 0
  %1744 = vmatmul.mubr.bf16.gmra.mrb[0].mxu0 %v1586
  %v1745 = vpop.f32.mrb[0].mxu0
  %v1746 = vadd.f32 %v1212, %v1745
  %v1747 = vpop.f32.mrb[0].mxu0
  %v1748 = vadd.f32 %v1216, %v1747
  %v1749 = vpop.f32.mrb[0].mxu0
  %v1750 = vpop.f32.mrb[0].mxu0
  %1751 = vdwg.mxu0
  %1752 = vmatprep.subr.bf16.mxu0 %v1466
  %1753 = vmatpush1.bf16.msra.mxu0 %v1465
  %1754 = vmatprep.subr.bf16.mxu0 %v1482
  %1755 = vmatpush1.bf16.msra.mxu0 %v1481
  %1756 = vmatprep.subr.bf16.mxu0 %v1498
  %1757 = vmatpush1.bf16.msra.mxu0 %v1497
  %1758 = vmatprep.subr.bf16.mxu0 %v1514
  %1759 = vmatpush1.bf16.msra.mxu0 %v1513
  %1760 = vmatprep.subr.bf16.mxu0 0
  %1761 = vmatpush1.bf16.msra.mxu0 0
  %1762 = vmatprep.subr.bf16.mxu0 0
  %1763 = vmatpush1.bf16.msra.mxu0 0
  %1764 = vmatprep.subr.bf16.mxu0 0
  %1765 = vmatpush1.bf16.msra.mxu0 0
  %1766 = vmatprep.subr.bf16.mxu0 0
  %1767 = vmatpush1.bf16.msra.mxu0 0
  %1768 = vmatprep.subr.bf16.mxu0 0
  %1769 = vmatpush1.bf16.msra.mxu0 0
  %1770 = vmatprep.subr.bf16.mxu0 0
  %1771 = vmatpush1.bf16.msra.mxu0 0
  %1772 = vmatprep.subr.bf16.mxu0 0
  %1773 = vmatpush1.bf16.msra.mxu0 0
  %1774 = vmatprep.subr.bf16.mxu0 0
  %1775 = vmatpush1.bf16.msra.mxu0 0
  %1776 = vmatprep.subr.bf16.mxu0 0
  %1777 = vmatpush1.bf16.msra.mxu0 0
  %1778 = vmatprep.subr.bf16.mxu0 0
  %1779 = vmatpush1.bf16.msra.mxu0 0
  %1780 = vmatprep.subr.bf16.mxu0 0
  %1781 = vmatpush1.bf16.msra.mxu0 0
  %1782 = vmatprep.subr.bf16.mxu0 0
  %1783 = vmatpush1.bf16.msra.mxu0 0
  %1784 = vmatprep.mubr.bf16.mxu0 0
  %1785 = vmatmul.mubr.bf16.gmra.mrb[0].mxu0 %v1586
  %v1786 = vpop.f32.mrb[0].mxu0
  %v1787 = vadd.f32 %v1220, %v1786
  %v1788 = vpop.f32.mrb[0].mxu0
  %v1789 = vadd.f32 %v1224, %v1788
  %v1790 = vpop.f32.mrb[0].mxu0
  %v1791 = vpop.f32.mrb[0].mxu0
  %1792 = vdwg.mxu0
  %1793 = vmatprep.subr.bf16.mxu0 %v1468
  %1794 = vmatpush1.bf16.msra.mxu0 %v1467
  %1795 = vmatprep.subr.bf16.mxu0 %v1484
  %1796 = vmatpush1.bf16.msra.mxu0 %v1483
  %1797 = vmatprep.subr.bf16.mxu0 %v1500
  %1798 = vmatpush1.bf16.msra.mxu0 %v1499
  %1799 = vmatprep.subr.bf16.mxu0 %v1516
  %1800 = vmatpush1.bf16.msra.mxu0 %v1515
  %1801 = vmatprep.subr.bf16.mxu0 0
  %1802 = vmatpush1.bf16.msra.mxu0 0
  %1803 = vmatprep.subr.bf16.mxu0 0
  %1804 = vmatpush1.bf16.msra.mxu0 0
  %1805 = vmatprep.subr.bf16.mxu0 0
  %1806 = vmatpush1.bf16.msra.mxu0 0
  %1807 = vmatprep.subr.bf16.mxu0 0
  %1808 = vmatpush1.bf16.msra.mxu0 0
  %1809 = vmatprep.subr.bf16.mxu0 0
  %1810 = vmatpush1.bf16.msra.mxu0 0
  %1811 = vmatprep.subr.bf16.mxu0 0
  %1812 = vmatpush1.bf16.msra.mxu0 0
  %1813 = vmatprep.subr.bf16.mxu0 0
  %1814 = vmatpush1.bf16.msra.mxu0 0
  %1815 = vmatprep.subr.bf16.mxu0 0
  %1816 = vmatpush1.bf16.msra.mxu0 0
  %1817 = vmatprep.subr.bf16.mxu0 0
  %1818 = vmatpush1.bf16.msra.mxu0 0
  %1819 = vmatprep.subr.bf16.mxu0 0
  %1820 = vmatpush1.bf16.msra.mxu0 0
  %1821 = vmatprep.subr.bf16.mxu0 0
  %1822 = vmatpush1.bf16.msra.mxu0 0
  %1823 = vmatprep.subr.bf16.mxu0 0
  %1824 = vmatpush1.bf16.msra.mxu0 0
  %1825 = vmatprep.mubr.bf16.mxu0 0
  %1826 = vmatmul.mubr.bf16.gmra.mrb[0].mxu0 %v1586
  %v1827 = vpop.f32.mrb[0].mxu0
  %v1828 = vadd.f32 %v1228, %v1827
  %v1829 = vpop.f32.mrb[0].mxu0
  %v1830 = vadd.f32 %v1232, %v1829
  %v1831 = vpop.f32.mrb[0].mxu0
  %v1832 = vpop.f32.mrb[0].mxu0
  %1833 = vdwg.mxu0
  %1834 = vmatprep.subr.bf16.mxu0 %v1470
  %1835 = vmatpush1.bf16.msra.mxu0 %v1469
  %1836 = vmatprep.subr.bf16.mxu0 %v1486
  %1837 = vmatpush1.bf16.msra.mxu0 %v1485
  %1838 = vmatprep.subr.bf16.mxu0 %v1502
  %1839 = vmatpush1.bf16.msra.mxu0 %v1501
  %1840 = vmatprep.subr.bf16.mxu0 %v1518
  %1841 = vmatpush1.bf16.msra.mxu0 %v1517
  %1842 = vmatprep.subr.bf16.mxu0 0
  %1843 = vmatpush1.bf16.msra.mxu0 0
  %1844 = vmatprep.subr.bf16.mxu0 0
  %1845 = vmatpush1.bf16.msra.mxu0 0
  %1846 = vmatprep.subr.bf16.mxu0 0
  %1847 = vmatpush1.bf16.msra.mxu0 0
  %1848 = vmatprep.subr.bf16.mxu0 0
  %1849 = vmatpush1.bf16.msra.mxu0 0
  %1850 = vmatprep.subr.bf16.mxu0 0
  %1851 = vmatpush1.bf16.msra.mxu0 0
  %1852 = vmatprep.subr.bf16.mxu0 0
  %1853 = vmatpush1.bf16.msra.mxu0 0
  %1854 = vmatprep.subr.bf16.mxu0 0
  %1855 = vmatpush1.bf16.msra.mxu0 0
  %1856 = vmatprep.subr.bf16.mxu0 0
  %1857 = vmatpush1.bf16.msra.mxu0 0
  %1858 = vmatprep.subr.bf16.mxu0 0
  %1859 = vmatpush1.bf16.msra.mxu0 0
  %1860 = vmatprep.subr.bf16.mxu0 0
  %1861 = vmatpush1.bf16.msra.mxu0 0
  %1862 = vmatprep.subr.bf16.mxu0 0
  %1863 = vmatpush1.bf16.msra.mxu0 0
  %1864 = vmatprep.subr.bf16.mxu0 0
  %1865 = vmatpush1.bf16.msra.mxu0 0
  %1866 = vmatprep.mubr.bf16.mxu0 0
  %1867 = vmatmul.mubr.bf16.gmra.mrb[0].mxu0 %v1586
  %v1868 = vpop.f32.mrb[0].mxu0
  %v1869 = vadd.f32 %v1236, %v1868
  %v1870 = vpop.f32.mrb[0].mxu0
  %v1871 = vadd.f32 %v1240, %v1870
  %v1872 = vpop.f32.mrb[0].mxu0
  %v1873 = vpop.f32.mrb[0].mxu0
  %1874 = vdwg.mxu0
  %1875 = vmatprep.subr.bf16.mxu0 %v1472
  %1876 = vmatpush1.bf16.msra.mxu0 %v1471
  %1877 = vmatprep.subr.bf16.mxu0 %v1488
  %1878 = vmatpush1.bf16.msra.mxu0 %v1487
  %1879 = vmatprep.subr.bf16.mxu0 %v1504
  %1880 = vmatpush1.bf16.msra.mxu0 %v1503
  %1881 = vmatprep.subr.bf16.mxu0 %v1520
  %1882 = vmatpush1.bf16.msra.mxu0 %v1519
  %1883 = vmatprep.subr.bf16.mxu0 0
  %1884 = vmatpush1.bf16.msra.mxu0 0
  %1885 = vmatprep.subr.bf16.mxu0 0
  %1886 = vmatpush1.bf16.msra.mxu0 0
  %1887 = vmatprep.subr.bf16.mxu0 0
  %1888 = vmatpush1.bf16.msra.mxu0 0
  %1889 = vmatprep.subr.bf16.mxu0 0
  %1890 = vmatpush1.bf16.msra.mxu0 0
  %1891 = vmatprep.subr.bf16.mxu0 0
  %1892 = vmatpush1.bf16.msra.mxu0 0
  %1893 = vmatprep.subr.bf16.mxu0 0
  %1894 = vmatpush1.bf16.msra.mxu0 0
  %1895 = vmatprep.subr.bf16.mxu0 0
  %1896 = vmatpush1.bf16.msra.mxu0 0
  %1897 = vmatprep.subr.bf16.mxu0 0
  %1898 = vmatpush1.bf16.msra.mxu0 0
  %1899 = vmatprep.subr.bf16.mxu0 0
  %1900 = vmatpush1.bf16.msra.mxu0 0
  %1901 = vmatprep.subr.bf16.mxu0 0
  %1902 = vmatpush1.bf16.msra.mxu0 0
  %1903 = vmatprep.subr.bf16.mxu0 0
  %1904 = vmatpush1.bf16.msra.mxu0 0
  %1905 = vmatprep.subr.bf16.mxu0 0
  %1906 = vmatpush1.bf16.msra.mxu0 0
  %1907 = vmatprep.mubr.bf16.mxu0 0
  %1908 = vmatmul.mubr.bf16.gmra.mrb[0].mxu0 %v1586
  %v1909 = vpop.f32.mrb[0].mxu0
  %v1910 = vadd.f32 %v1244, %v1909
  %v1911 = vpop.f32.mrb[0].mxu0
  %v1912 = vadd.f32 %v1248, %v1911
  %v1913 = vpop.f32.mrb[0].mxu0
  %v1914 = vpop.f32.mrb[0].mxu0
  %1915 = vdwg.mxu0
  %v1916 = vmax.f32 %v1623, 0.0
  %v1917 = vmax.f32 %v1625, 0.0
  %v1918 = vmax.f32 %v1664, 0.0
  %v1919 = vmax.f32 %v1666, 0.0
  %v1920 = vmax.f32 %v1705, 0.0
  %v1921 = vmax.f32 %v1707, 0.0
  %v1922 = vmax.f32 %v1746, 0.0
  %v1923 = vmax.f32 %v1748, 0.0
  %v1924 = vmax.f32 %v1787, 0.0
  %v1925 = vmax.f32 %v1789, 0.0
  %v1926 = vmax.f32 %v1828, 0.0
  %v1927 = vmax.f32 %v1830, 0.0
  %v1928 = vmax.f32 %v1869, 0.0
  %v1929 = vmax.f32 %v1871, 0.0
  %v1930 = vmax.f32 %v1910, 0.0
  %v1931 = vmax.f32 %v1912, 0.0
  %v1932 = vpack.c.bf16 %v1916, %v1916
  %v1933 = vpack.c.bf16 %v1917, %v1917
  %v1934 = vpack.c.bf16 %v1918, %v1918
  %v1935 = vpack.c.bf16 %v1919, %v1919
  %v1936 = vpack.c.bf16 %v1920, %v1920
  %v1937 = vpack.c.bf16 %v1921, %v1921
  %v1938 = vpack.c.bf16 %v1922, %v1922
  %v1939 = vpack.c.bf16 %v1923, %v1923
  %v1940 = vpack.c.bf16 %v1924, %v1924
  %v1941 = vpack.c.bf16 %v1925, %v1925
  %v1942 = vpack.c.bf16 %v1926, %v1926
  %v1943 = vpack.c.bf16 %v1927, %v1927
  %v1944 = vpack.c.bf16 %v1928, %v1928
  %v1945 = vpack.c.bf16 %v1929, %v1929
  %v1946 = vpack.c.bf16 %v1930, %v1930
  %v1947 = vpack.c.bf16 %v1931, %v1931
  %v1948 = vld [vmem:[%s9] sm:$0xf]
  %v1949 = vld [vmem:[%s9 + $0x4] sm:$0xf]
  %v1950 = vld [vmem:[%s9 + $0x8] sm:$0xf]
  %v1951 = vld [vmem:[%s9 + $0xc] sm:$0xf]
  %v1952 = vld [vmem:[%s9 + $0x10] sm:$0xf]
  %v1953 = vld [vmem:[%s9 + $0x14] sm:$0xf]
  %v1954 = vld [vmem:[%s9 + $0x18] sm:$0xf]
  %v1955 = vld [vmem:[%s9 + $0x1c] sm:$0xf]
  %v1956 = vld [vmem:[%s9 + $0x20] sm:$0xf]
  %v1957 = vld [vmem:[%s9 + $0x24] sm:$0xf]
  %v1958 = vld [vmem:[%s9 + $0x28] sm:$0xf]
  %v1959 = vld [vmem:[%s9 + $0x2c] sm:$0xf]
  %v1960 = vld [vmem:[%s9 + $0x30] sm:$0xf]
  %v1961 = vld [vmem:[%s9 + $0x34] sm:$0xf]
  %v1962 = vld [vmem:[%s9 + $0x38] sm:$0xf]
  %v1963 = vld [vmem:[%s9 + $0x3c] sm:$0xf]
  %v1964 = vld [vmem:[%s9 + $0x40] sm:$0xf]
  %v1965 = vld [vmem:[%s9 + $0x44] sm:$0xf]
  %v1966 = vld [vmem:[%s9 + $0x48] sm:$0xf]
  %v1967 = vld [vmem:[%s9 + $0x4c] sm:$0xf]
  %v1968 = vld [vmem:[%s9 + $0x50] sm:$0xf]
  %v1969 = vld [vmem:[%s9 + $0x54] sm:$0xf]
  %v1970 = vld [vmem:[%s9 + $0x58] sm:$0xf]
  %v1971 = vld [vmem:[%s9 + $0x5c] sm:$0xf]
  %v1972 = vld [vmem:[%s9 + $0x60] sm:$0xf]
  %v1973 = vld [vmem:[%s9 + $0x64] sm:$0xf]
  %v1974 = vld [vmem:[%s9 + $0x68] sm:$0xf]
  %v1975 = vld [vmem:[%s9 + $0x6c] sm:$0xf]
  %v1976 = vld [vmem:[%s9 + $0x70] sm:$0xf]
  %v1977 = vld [vmem:[%s9 + $0x74] sm:$0xf]
  %v1978 = vld [vmem:[%s9 + $0x78] sm:$0xf]
  %v1979 = vld [vmem:[%s9 + $0x7c] sm:$0xf]
  %v1980 = vld [vmem:[%s9 + $0x80] sm:$0xf]
  %v1981 = vld [vmem:[%s9 + $0x84] sm:$0xf]
  %v1982 = vld [vmem:[%s9 + $0x88] sm:$0xf]
  %v1983 = vld [vmem:[%s9 + $0x8c] sm:$0xf]
  %v1984 = vld [vmem:[%s9 + $0x90] sm:$0xf]
  %v1985 = vld [vmem:[%s9 + $0x94] sm:$0xf]
  %v1986 = vld [vmem:[%s9 + $0x98] sm:$0xf]
  %v1987 = vld [vmem:[%s9 + $0x9c] sm:$0xf]
  %v1988 = vld [vmem:[%s9 + $0xa0] sm:$0xf]
  %v1989 = vld [vmem:[%s9 + $0xa4] sm:$0xf]
  %v1990 = vld [vmem:[%s9 + $0xa8] sm:$0xf]
  %v1991 = vld [vmem:[%s9 + $0xac] sm:$0xf]
  %v1992 = vld [vmem:[%s9 + $0xb0] sm:$0xf]
  %v1993 = vld [vmem:[%s9 + $0xb4] sm:$0xf]
  %v1994 = vld [vmem:[%s9 + $0xb8] sm:$0xf]
  %v1995 = vld [vmem:[%s9 + $0xbc] sm:$0xf]
  %v1996 = vld [vmem:[%s9 + $0xc0] sm:$0xf]
  %v1997 = vld [vmem:[%s9 + $0xc4] sm:$0xf]
  %v1998 = vld [vmem:[%s9 + $0xc8] sm:$0xf]
  %v1999 = vld [vmem:[%s9 + $0xcc] sm:$0xf]
  %v2000 = vld [vmem:[%s9 + $0xd0] sm:$0xf]
  %v2001 = vld [vmem:[%s9 + $0xd4] sm:$0xf]
  %v2002 = vld [vmem:[%s9 + $0xd8] sm:$0xf]
  %v2003 = vld [vmem:[%s9 + $0xdc] sm:$0xf]
  %v2004 = vld [vmem:[%s9 + $0xe0] sm:$0xf]
  %v2005 = vld [vmem:[%s9 + $0xe4] sm:$0xf]
  %v2006 = vld [vmem:[%s9 + $0xe8] sm:$0xf]
  %v2007 = vld [vmem:[%s9 + $0xec] sm:$0xf]
  %v2008 = vld [vmem:[%s9 + $0xf0] sm:$0xf]
  %v2009 = vld [vmem:[%s9 + $0xf4] sm:$0xf]
  %v2010 = vld [vmem:[%s9 + $0xf8] sm:$0xf]
  %v2011 = vld [vmem:[%s9 + $0xfc] sm:$0xf]
  %v2012 = vld [vmem:[%s9 + $0x100] sm:$0xf]
  %v2013 = vld [vmem:[%s9 + $0x104] sm:$0xf]
  %v2014 = vld [vmem:[%s9 + $0x108] sm:$0xf]
  %v2015 = vld [vmem:[%s9 + $0x10c] sm:$0xf]
  %v2016 = vld [vmem:[%s9 + $0x110] sm:$0xf]
  %v2017 = vld [vmem:[%s9 + $0x114] sm:$0xf]
  %v2018 = vld [vmem:[%s9 + $0x118] sm:$0xf]
  %v2019 = vld [vmem:[%s9 + $0x11c] sm:$0xf]
  %v2020 = vld [vmem:[%s9 + $0x120] sm:$0xf]
  %v2021 = vld [vmem:[%s9 + $0x124] sm:$0xf]
  %v2022 = vld [vmem:[%s9 + $0x128] sm:$0xf]
  %v2023 = vld [vmem:[%s9 + $0x12c] sm:$0xf]
  %v2024 = vld [vmem:[%s9 + $0x130] sm:$0xf]
  %v2025 = vld [vmem:[%s9 + $0x134] sm:$0xf]
  %v2026 = vld [vmem:[%s9 + $0x138] sm:$0xf]
  %v2027 = vld [vmem:[%s9 + $0x13c] sm:$0xf]
  %v2028 = vld [vmem:[%s9 + $0x140] sm:$0xf]
  %v2029 = vld [vmem:[%s9 + $0x144] sm:$0xf]
  %v2030 = vld [vmem:[%s9 + $0x148] sm:$0xf]
  %v2031 = vld [vmem:[%s9 + $0x14c] sm:$0xf]
  %v2032 = vld [vmem:[%s9 + $0x150] sm:$0xf]
  %v2033 = vld [vmem:[%s9 + $0x154] sm:$0xf]
  %v2034 = vld [vmem:[%s9 + $0x158] sm:$0xf]
  %v2035 = vld [vmem:[%s9 + $0x15c] sm:$0xf]
  %v2036 = vld [vmem:[%s9 + $0x160] sm:$0xf]
  %v2037 = vld [vmem:[%s9 + $0x164] sm:$0xf]
  %v2038 = vld [vmem:[%s9 + $0x168] sm:$0xf]
  %v2039 = vld [vmem:[%s9 + $0x16c] sm:$0xf]
  %v2040 = vld [vmem:[%s9 + $0x170] sm:$0xf]
  %v2041 = vld [vmem:[%s9 + $0x174] sm:$0xf]
  %v2042 = vld [vmem:[%s9 + $0x178] sm:$0xf]
  %v2043 = vld [vmem:[%s9 + $0x17c] sm:$0xf]
  %v2044 = vld [vmem:[%s9 + $0x180] sm:$0xf]
  %v2045 = vld [vmem:[%s9 + $0x184] sm:$0xf]
  %v2046 = vld [vmem:[%s9 + $0x188] sm:$0xf]
  %v2047 = vld [vmem:[%s9 + $0x18c] sm:$0xf]
  %v2048 = vld [vmem:[%s9 + $0x190] sm:$0xf]
  %v2049 = vld [vmem:[%s9 + $0x194] sm:$0xf]
  %v2050 = vld [vmem:[%s9 + $0x198] sm:$0xf]
  %v2051 = vld [vmem:[%s9 + $0x19c] sm:$0xf]
  %v2052 = vld [vmem:[%s9 + $0x1a0] sm:$0xf]
  %v2053 = vld [vmem:[%s9 + $0x1a4] sm:$0xf]
  %v2054 = vld [vmem:[%s9 + $0x1a8] sm:$0xf]
  %v2055 = vld [vmem:[%s9 + $0x1ac] sm:$0xf]
  %v2056 = vld [vmem:[%s9 + $0x1b0] sm:$0xf]
  %v2057 = vld [vmem:[%s9 + $0x1b4] sm:$0xf]
  %v2058 = vld [vmem:[%s9 + $0x1b8] sm:$0xf]
  %v2059 = vld [vmem:[%s9 + $0x1bc] sm:$0xf]
  %v2060 = vld [vmem:[%s9 + $0x1c0] sm:$0xf]
  %v2061 = vld [vmem:[%s9 + $0x1c4] sm:$0xf]
  %v2062 = vld [vmem:[%s9 + $0x1c8] sm:$0xf]
  %v2063 = vld [vmem:[%s9 + $0x1cc] sm:$0xf]
  %v2064 = vld [vmem:[%s9 + $0x1d0] sm:$0xf]
  %v2065 = vld [vmem:[%s9 + $0x1d4] sm:$0xf]
  %v2066 = vld [vmem:[%s9 + $0x1d8] sm:$0xf]
  %v2067 = vld [vmem:[%s9 + $0x1dc] sm:$0xf]
  %v2068 = vld [vmem:[%s9 + $0x1e0] sm:$0xf]
  %v2069 = vld [vmem:[%s9 + $0x1e4] sm:$0xf]
  %v2070 = vld [vmem:[%s9 + $0x1e8] sm:$0xf]
  %v2071 = vld [vmem:[%s9 + $0x1ec] sm:$0xf]
  %v2072 = vld [vmem:[%s9 + $0x1f0] sm:$0xf]
  %v2073 = vld [vmem:[%s9 + $0x1f4] sm:$0xf]
  %v2074 = vld [vmem:[%s9 + $0x1f8] sm:$0xf]
  %v2075 = vld [vmem:[%s9 + $0x1fc] sm:$0xf]
  %v2076 = vld [vmem:[%s9 + $0x200] sm:$0xf]
  %v2077 = vld [vmem:[%s9 + $0x204] sm:$0xf]
  %v2078 = vld [vmem:[%s9 + $0x208] sm:$0xf]
  %v2079 = vld [vmem:[%s9 + $0x20c] sm:$0xf]
  %v2080 = vld [vmem:[%s9 + $0x210] sm:$0xf]
  %v2081 = vld [vmem:[%s9 + $0x214] sm:$0xf]
  %v2082 = vld [vmem:[%s9 + $0x218] sm:$0xf]
  %v2083 = vld [vmem:[%s9 + $0x21c] sm:$0xf]
  %v2084 = vld [vmem:[%s9 + $0x220] sm:$0xf]
  %v2085 = vld [vmem:[%s9 + $0x224] sm:$0xf]
  %v2086 = vld [vmem:[%s9 + $0x228] sm:$0xf]
  %v2087 = vld [vmem:[%s9 + $0x22c] sm:$0xf]
  %v2088 = vld [vmem:[%s9 + $0x230] sm:$0xf]
  %v2089 = vld [vmem:[%s9 + $0x234] sm:$0xf]
  %v2090 = vld [vmem:[%s9 + $0x238] sm:$0xf]
  %v2091 = vld [vmem:[%s9 + $0x23c] sm:$0xf]
  %v2092 = vld [vmem:[%s9 + $0x240] sm:$0xf]
  %v2093 = vld [vmem:[%s9 + $0x244] sm:$0xf]
  %v2094 = vld [vmem:[%s9 + $0x248] sm:$0xf]
  %v2095 = vld [vmem:[%s9 + $0x24c] sm:$0xf]
  %v2096 = vld [vmem:[%s9 + $0x250] sm:$0xf]
  %v2097 = vld [vmem:[%s9 + $0x254] sm:$0xf]
  %v2098 = vld [vmem:[%s9 + $0x258] sm:$0xf]
  %v2099 = vld [vmem:[%s9 + $0x25c] sm:$0xf]
  %v2100 = vld [vmem:[%s9 + $0x260] sm:$0xf]
  %v2101 = vld [vmem:[%s9 + $0x264] sm:$0xf]
  %v2102 = vld [vmem:[%s9 + $0x268] sm:$0xf]
  %v2103 = vld [vmem:[%s9 + $0x26c] sm:$0xf]
  %v2104 = vld [vmem:[%s9 + $0x270] sm:$0xf]
  %v2105 = vld [vmem:[%s9 + $0x274] sm:$0xf]
  %v2106 = vld [vmem:[%s9 + $0x278] sm:$0xf]
  %v2107 = vld [vmem:[%s9 + $0x27c] sm:$0xf]
  %v2108 = vld [vmem:[%s9 + $0x280] sm:$0xf]
  %v2109 = vld [vmem:[%s9 + $0x284] sm:$0xf]
  %v2110 = vld [vmem:[%s9 + $0x288] sm:$0xf]
  %v2111 = vld [vmem:[%s9 + $0x28c] sm:$0xf]
  %v2112 = vld [vmem:[%s9 + $0x290] sm:$0xf]
  %v2113 = vld [vmem:[%s9 + $0x294] sm:$0xf]
  %v2114 = vld [vmem:[%s9 + $0x298] sm:$0xf]
  %v2115 = vld [vmem:[%s9 + $0x29c] sm:$0xf]
  %v2116 = vld [vmem:[%s9 + $0x2a0] sm:$0xf]
  %v2117 = vld [vmem:[%s9 + $0x2a4] sm:$0xf]
  %v2118 = vld [vmem:[%s9 + $0x2a8] sm:$0xf]
  %v2119 = vld [vmem:[%s9 + $0x2ac] sm:$0xf]
  %v2120 = vld [vmem:[%s9 + $0x2b0] sm:$0xf]
  %v2121 = vld [vmem:[%s9 + $0x2b4] sm:$0xf]
  %v2122 = vld [vmem:[%s9 + $0x2b8] sm:$0xf]
  %v2123 = vld [vmem:[%s9 + $0x2bc] sm:$0xf]
  %v2124 = vld [vmem:[%s9 + $0x2c0] sm:$0xf]
  %v2125 = vld [vmem:[%s9 + $0x2c4] sm:$0xf]
  %v2126 = vld [vmem:[%s9 + $0x2c8] sm:$0xf]
  %v2127 = vld [vmem:[%s9 + $0x2cc] sm:$0xf]
  %v2128 = vld [vmem:[%s9 + $0x2d0] sm:$0xf]
  %v2129 = vld [vmem:[%s9 + $0x2d4] sm:$0xf]
  %v2130 = vld [vmem:[%s9 + $0x2d8] sm:$0xf]
  %v2131 = vld [vmem:[%s9 + $0x2dc] sm:$0xf]
  %v2132 = vld [vmem:[%s9 + $0x2e0] sm:$0xf]
  %v2133 = vld [vmem:[%s9 + $0x2e4] sm:$0xf]
  %v2134 = vld [vmem:[%s9 + $0x2e8] sm:$0xf]
  %v2135 = vld [vmem:[%s9 + $0x2ec] sm:$0xf]
  %v2136 = vld [vmem:[%s9 + $0x2f0] sm:$0xf]
  %v2137 = vld [vmem:[%s9 + $0x2f4] sm:$0xf]
  %v2138 = vld [vmem:[%s9 + $0x2f8] sm:$0xf]
  %v2139 = vld [vmem:[%s9 + $0x2fc] sm:$0xf]
  %v2140 = vld [vmem:[%s9 + $0x300] sm:$0xf]
  %v2141 = vld [vmem:[%s9 + $0x304] sm:$0xf]
  %v2142 = vld [vmem:[%s9 + $0x308] sm:$0xf]
  %v2143 = vld [vmem:[%s9 + $0x30c] sm:$0xf]
  %v2144 = vld [vmem:[%s9 + $0x310] sm:$0xf]
  %v2145 = vld [vmem:[%s9 + $0x314] sm:$0xf]
  %v2146 = vld [vmem:[%s9 + $0x318] sm:$0xf]
  %v2147 = vld [vmem:[%s9 + $0x31c] sm:$0xf]
  %v2148 = vld [vmem:[%s9 + $0x320] sm:$0xf]
  %v2149 = vld [vmem:[%s9 + $0x324] sm:$0xf]
  %v2150 = vld [vmem:[%s9 + $0x328] sm:$0xf]
  %v2151 = vld [vmem:[%s9 + $0x32c] sm:$0xf]
  %v2152 = vld [vmem:[%s9 + $0x330] sm:$0xf]
  %v2153 = vld [vmem:[%s9 + $0x334] sm:$0xf]
  %v2154 = vld [vmem:[%s9 + $0x338] sm:$0xf]
  %v2155 = vld [vmem:[%s9 + $0x33c] sm:$0xf]
  %v2156 = vld [vmem:[%s9 + $0x340] sm:$0xf]
  %v2157 = vld [vmem:[%s9 + $0x344] sm:$0xf]
  %v2158 = vld [vmem:[%s9 + $0x348] sm:$0xf]
  %v2159 = vld [vmem:[%s9 + $0x34c] sm:$0xf]
  %v2160 = vld [vmem:[%s9 + $0x350] sm:$0xf]
  %v2161 = vld [vmem:[%s9 + $0x354] sm:$0xf]
  %v2162 = vld [vmem:[%s9 + $0x358] sm:$0xf]
  %v2163 = vld [vmem:[%s9 + $0x35c] sm:$0xf]
  %v2164 = vld [vmem:[%s9 + $0x360] sm:$0xf]
  %v2165 = vld [vmem:[%s9 + $0x364] sm:$0xf]
  %v2166 = vld [vmem:[%s9 + $0x368] sm:$0xf]
  %v2167 = vld [vmem:[%s9 + $0x36c] sm:$0xf]
  %v2168 = vld [vmem:[%s9 + $0x370] sm:$0xf]
  %v2169 = vld [vmem:[%s9 + $0x374] sm:$0xf]
  %v2170 = vld [vmem:[%s9 + $0x378] sm:$0xf]
  %v2171 = vld [vmem:[%s9 + $0x37c] sm:$0xf]
  %v2172 = vld [vmem:[%s9 + $0x380] sm:$0xf]
  %v2173 = vld [vmem:[%s9 + $0x384] sm:$0xf]
  %v2174 = vld [vmem:[%s9 + $0x388] sm:$0xf]
  %v2175 = vld [vmem:[%s9 + $0x38c] sm:$0xf]
  %v2176 = vld [vmem:[%s9 + $0x390] sm:$0xf]
  %v2177 = vld [vmem:[%s9 + $0x394] sm:$0xf]
  %v2178 = vld [vmem:[%s9 + $0x398] sm:$0xf]
  %v2179 = vld [vmem:[%s9 + $0x39c] sm:$0xf]
  %v2180 = vld [vmem:[%s9 + $0x3a0] sm:$0xf]
  %v2181 = vld [vmem:[%s9 + $0x3a4] sm:$0xf]
  %v2182 = vld [vmem:[%s9 + $0x3a8] sm:$0xf]
  %v2183 = vld [vmem:[%s9 + $0x3ac] sm:$0xf]
  %v2184 = vld [vmem:[%s9 + $0x3b0] sm:$0xf]
  %v2185 = vld [vmem:[%s9 + $0x3b4] sm:$0xf]
  %v2186 = vld [vmem:[%s9 + $0x3b8] sm:$0xf]
  %v2187 = vld [vmem:[%s9 + $0x3bc] sm:$0xf]
  %v2188 = vld [vmem:[%s9 + $0x3c0] sm:$0xf]
  %v2189 = vld [vmem:[%s9 + $0x3c4] sm:$0xf]
  %v2190 = vld [vmem:[%s9 + $0x3c8] sm:$0xf]
  %v2191 = vld [vmem:[%s9 + $0x3cc] sm:$0xf]
  %v2192 = vld [vmem:[%s9 + $0x3d0] sm:$0xf]
  %v2193 = vld [vmem:[%s9 + $0x3d4] sm:$0xf]
  %v2194 = vld [vmem:[%s9 + $0x3d8] sm:$0xf]
  %v2195 = vld [vmem:[%s9 + $0x3dc] sm:$0xf]
  %v2196 = vld [vmem:[%s9 + $0x3e0] sm:$0xf]
  %v2197 = vld [vmem:[%s9 + $0x3e4] sm:$0xf]
  %v2198 = vld [vmem:[%s9 + $0x3e8] sm:$0xf]
  %v2199 = vld [vmem:[%s9 + $0x3ec] sm:$0xf]
  %v2200 = vld [vmem:[%s9 + $0x3f0] sm:$0xf]
  %v2201 = vld [vmem:[%s9 + $0x3f4] sm:$0xf]
  %v2202 = vld [vmem:[%s9 + $0x3f8] sm:$0xf]
  %v2203 = vld [vmem:[%s9 + $0x3fc] sm:$0xf]
  %v2204 = vlaneseq
  %v2205 = vshrl.u32 %v2204, 7
  %v2206 = vsub.s32 3, %v2205
  %v2207 = vrot.slane %v110, %v2206
  %v2464 = vunpack.c.l.b16 %v1948
  %v2465 = vunpack.c.l.b16 %v1949
  %v2466 = vunpack.c.l.b16 %v1950
  %v2467 = vunpack.c.l.b16 %v1951
  %v2468 = vunpack.c.l.b16 %v1952
  %v2469 = vunpack.c.l.b16 %v1953
  %v2470 = vunpack.c.l.b16 %v1954
  %v2471 = vunpack.c.l.b16 %v1955
  %v2472 = vunpack.c.l.b16 %v1956
  %v2473 = vunpack.c.l.b16 %v1957
  %v2474 = vunpack.c.l.b16 %v1958
  %v2475 = vunpack.c.l.b16 %v1959
  %v2476 = vunpack.c.l.b16 %v1960
  %v2477 = vunpack.c.l.b16 %v1961
  %v2478 = vunpack.c.l.b16 %v1962
  %v2479 = vunpack.c.l.b16 %v1963
  %v2480 = vunpack.c.l.b16 %v1964
  %v2481 = vunpack.c.l.b16 %v1965
  %v2482 = vunpack.c.l.b16 %v1966
  %v2483 = vunpack.c.l.b16 %v1967
  %v2484 = vunpack.c.l.b16 %v1968
  %v2485 = vunpack.c.l.b16 %v1969
  %v2486 = vunpack.c.l.b16 %v1970
  %v2487 = vunpack.c.l.b16 %v1971
  %v2488 = vunpack.c.l.b16 %v1972
  %v2489 = vunpack.c.l.b16 %v1973
  %v2490 = vunpack.c.l.b16 %v1974
  %v2491 = vunpack.c.l.b16 %v1975
  %v2492 = vunpack.c.l.b16 %v1976
  %v2493 = vunpack.c.l.b16 %v1977
  %v2494 = vunpack.c.l.b16 %v1978
  %v2495 = vunpack.c.l.b16 %v1979
  %v2496 = vunpack.c.l.b16 %v1980
  %v2497 = vunpack.c.l.b16 %v1981
  %v2498 = vunpack.c.l.b16 %v1982
  %v2499 = vunpack.c.l.b16 %v1983
  %v2500 = vunpack.c.l.b16 %v1984
  %v2501 = vunpack.c.l.b16 %v1985
  %v2502 = vunpack.c.l.b16 %v1986
  %v2503 = vunpack.c.l.b16 %v1987
  %v2504 = vunpack.c.l.b16 %v1988
  %v2505 = vunpack.c.l.b16 %v1989
  %v2506 = vunpack.c.l.b16 %v1990
  %v2507 = vunpack.c.l.b16 %v1991
  %v2508 = vunpack.c.l.b16 %v1992
  %v2509 = vunpack.c.l.b16 %v1993
  %v2510 = vunpack.c.l.b16 %v1994
  %v2511 = vunpack.c.l.b16 %v1995
  %v2512 = vunpack.c.l.b16 %v1996
  %v2513 = vunpack.c.l.b16 %v1997
  %v2514 = vunpack.c.l.b16 %v1998
  %v2515 = vunpack.c.l.b16 %v1999
  %v2516 = vunpack.c.l.b16 %v2000
  %v2517 = vunpack.c.l.b16 %v2001
  %v2518 = vunpack.c.l.b16 %v2002
  %v2519 = vunpack.c.l.b16 %v2003
  %v2520 = vunpack.c.l.b16 %v2004
  %v2521 = vunpack.c.l.b16 %v2005
  %v2522 = vunpack.c.l.b16 %v2006
  %v2523 = vunpack.c.l.b16 %v2007
  %v2524 = vunpack.c.l.b16 %v2008
  %v2525 = vunpack.c.l.b16 %v2009
  %v2526 = vunpack.c.l.b16 %v2010
  %v2527 = vunpack.c.l.b16 %v2011
  %v2528 = vunpack.c.l.b16 %v2012
  %v2529 = vunpack.c.l.b16 %v2013
  %v2530 = vunpack.c.l.b16 %v2014
  %v2531 = vunpack.c.l.b16 %v2015
  %v2532 = vunpack.c.l.b16 %v2016
  %v2533 = vunpack.c.l.b16 %v2017
  %v2534 = vunpack.c.l.b16 %v2018
  %v2535 = vunpack.c.l.b16 %v2019
  %v2536 = vunpack.c.l.b16 %v2020
  %v2537 = vunpack.c.l.b16 %v2021
  %v2538 = vunpack.c.l.b16 %v2022
  %v2539 = vunpack.c.l.b16 %v2023
  %v2540 = vunpack.c.l.b16 %v2024
  %v2541 = vunpack.c.l.b16 %v2025
  %v2542 = vunpack.c.l.b16 %v2026
  %v2543 = vunpack.c.l.b16 %v2027
  %v2544 = vunpack.c.l.b16 %v2028
  %v2545 = vunpack.c.l.b16 %v2029
  %v2546 = vunpack.c.l.b16 %v2030
  %v2547 = vunpack.c.l.b16 %v2031
  %v2548 = vunpack.c.l.b16 %v2032
  %v2549 = vunpack.c.l.b16 %v2033
  %v2550 = vunpack.c.l.b16 %v2034
  %v2551 = vunpack.c.l.b16 %v2035
  %v2552 = vunpack.c.l.b16 %v2036
  %v2553 = vunpack.c.l.b16 %v2037
  %v2554 = vunpack.c.l.b16 %v2038
  %v2555 = vunpack.c.l.b16 %v2039
  %v2556 = vunpack.c.l.b16 %v2040
  %v2557 = vunpack.c.l.b16 %v2041
  %v2558 = vunpack.c.l.b16 %v2042
  %v2559 = vunpack.c.l.b16 %v2043
  %v2560 = vunpack.c.l.b16 %v2044
  %v2561 = vunpack.c.l.b16 %v2045
  %v2562 = vunpack.c.l.b16 %v2046
  %v2563 = vunpack.c.l.b16 %v2047
  %v2564 = vunpack.c.l.b16 %v2048
  %v2565 = vunpack.c.l.b16 %v2049
  %v2566 = vunpack.c.l.b16 %v2050
  %v2567 = vunpack.c.l.b16 %v2051
  %v2568 = vunpack.c.l.b16 %v2052
  %v2569 = vunpack.c.l.b16 %v2053
  %v2570 = vunpack.c.l.b16 %v2054
  %v2571 = vunpack.c.l.b16 %v2055
  %v2572 = vunpack.c.l.b16 %v2056
  %v2573 = vunpack.c.l.b16 %v2057
  %v2574 = vunpack.c.l.b16 %v2058
  %v2575 = vunpack.c.l.b16 %v2059
  %v2576 = vunpack.c.l.b16 %v2060
  %v2577 = vunpack.c.l.b16 %v2061
  %v2578 = vunpack.c.l.b16 %v2062
  %v2579 = vunpack.c.l.b16 %v2063
  %v2580 = vunpack.c.l.b16 %v2064
  %v2581 = vunpack.c.l.b16 %v2065
  %v2582 = vunpack.c.l.b16 %v2066
  %v2583 = vunpack.c.l.b16 %v2067
  %v2584 = vunpack.c.l.b16 %v2068
  %v2585 = vunpack.c.l.b16 %v2069
  %v2586 = vunpack.c.l.b16 %v2070
  %v2587 = vunpack.c.l.b16 %v2071
  %v2588 = vunpack.c.l.b16 %v2072
  %v2589 = vunpack.c.l.b16 %v2073
  %v2590 = vunpack.c.l.b16 %v2074
  %v2591 = vunpack.c.l.b16 %v2075
  %v2592 = vunpack.c.l.b16 %v2076
  %v2593 = vunpack.c.l.b16 %v2077
  %v2594 = vunpack.c.l.b16 %v2078
  %v2595 = vunpack.c.l.b16 %v2079
  %v2596 = vunpack.c.l.b16 %v2080
  %v2597 = vunpack.c.l.b16 %v2081
  %v2598 = vunpack.c.l.b16 %v2082
  %v2599 = vunpack.c.l.b16 %v2083
  %v2600 = vunpack.c.l.b16 %v2084
  %v2601 = vunpack.c.l.b16 %v2085
  %v2602 = vunpack.c.l.b16 %v2086
  %v2603 = vunpack.c.l.b16 %v2087
  %v2604 = vunpack.c.l.b16 %v2088
  %v2605 = vunpack.c.l.b16 %v2089
  %v2606 = vunpack.c.l.b16 %v2090
  %v2607 = vunpack.c.l.b16 %v2091
  %v2608 = vunpack.c.l.b16 %v2092
  %v2609 = vunpack.c.l.b16 %v2093
  %v2610 = vunpack.c.l.b16 %v2094
  %v2611 = vunpack.c.l.b16 %v2095
  %v2612 = vunpack.c.l.b16 %v2096
  %v2613 = vunpack.c.l.b16 %v2097
  %v2614 = vunpack.c.l.b16 %v2098
  %v2615 = vunpack.c.l.b16 %v2099
  %v2616 = vunpack.c.l.b16 %v2100
  %v2617 = vunpack.c.l.b16 %v2101
  %v2618 = vunpack.c.l.b16 %v2102
  %v2619 = vunpack.c.l.b16 %v2103
  %v2620 = vunpack.c.l.b16 %v2104
  %v2621 = vunpack.c.l.b16 %v2105
  %v2622 = vunpack.c.l.b16 %v2106
  %v2623 = vunpack.c.l.b16 %v2107
  %v2624 = vunpack.c.l.b16 %v2108
  %v2625 = vunpack.c.l.b16 %v2109
  %v2626 = vunpack.c.l.b16 %v2110
  %v2627 = vunpack.c.l.b16 %v2111
  %v2628 = vunpack.c.l.b16 %v2112
  %v2629 = vunpack.c.l.b16 %v2113
  %v2630 = vunpack.c.l.b16 %v2114
  %v2631 = vunpack.c.l.b16 %v2115
  %v2632 = vunpack.c.l.b16 %v2116
  %v2633 = vunpack.c.l.b16 %v2117
  %v2634 = vunpack.c.l.b16 %v2118
  %v2635 = vunpack.c.l.b16 %v2119
  %v2636 = vunpack.c.l.b16 %v2120
  %v2637 = vunpack.c.l.b16 %v2121
  %v2638 = vunpack.c.l.b16 %v2122
  %v2639 = vunpack.c.l.b16 %v2123
  %v2640 = vunpack.c.l.b16 %v2124
  %v2641 = vunpack.c.l.b16 %v2125
  %v2642 = vunpack.c.l.b16 %v2126
  %v2643 = vunpack.c.l.b16 %v2127
  %v2644 = vunpack.c.l.b16 %v2128
  %v2645 = vunpack.c.l.b16 %v2129
  %v2646 = vunpack.c.l.b16 %v2130
  %v2647 = vunpack.c.l.b16 %v2131
  %v2648 = vunpack.c.l.b16 %v2132
  %v2649 = vunpack.c.l.b16 %v2133
  %v2650 = vunpack.c.l.b16 %v2134
  %v2651 = vunpack.c.l.b16 %v2135
  %v2652 = vunpack.c.l.b16 %v2136
  %v2653 = vunpack.c.l.b16 %v2137
  %v2654 = vunpack.c.l.b16 %v2138
  %v2655 = vunpack.c.l.b16 %v2139
  %v2656 = vunpack.c.l.b16 %v2140
  %v2657 = vunpack.c.l.b16 %v2141
  %v2658 = vunpack.c.l.b16 %v2142
  %v2659 = vunpack.c.l.b16 %v2143
  %v2660 = vunpack.c.l.b16 %v2144
  %v2661 = vunpack.c.l.b16 %v2145
  %v2662 = vunpack.c.l.b16 %v2146
  %v2663 = vunpack.c.l.b16 %v2147
  %v2664 = vunpack.c.l.b16 %v2148
  %v2665 = vunpack.c.l.b16 %v2149
  %v2666 = vunpack.c.l.b16 %v2150
  %v2667 = vunpack.c.l.b16 %v2151
  %v2668 = vunpack.c.l.b16 %v2152
  %v2669 = vunpack.c.l.b16 %v2153
  %v2670 = vunpack.c.l.b16 %v2154
  %v2671 = vunpack.c.l.b16 %v2155
  %v2672 = vunpack.c.l.b16 %v2156
  %v2673 = vunpack.c.l.b16 %v2157
  %v2674 = vunpack.c.l.b16 %v2158
  %v2675 = vunpack.c.l.b16 %v2159
  %v2676 = vunpack.c.l.b16 %v2160
  %v2677 = vunpack.c.l.b16 %v2161
  %v2678 = vunpack.c.l.b16 %v2162
  %v2679 = vunpack.c.l.b16 %v2163
  %v2680 = vunpack.c.l.b16 %v2164
  %v2681 = vunpack.c.l.b16 %v2165
  %v2682 = vunpack.c.l.b16 %v2166
  %v2683 = vunpack.c.l.b16 %v2167
  %v2684 = vunpack.c.l.b16 %v2168
  %v2685 = vunpack.c.l.b16 %v2169
  %v2686 = vunpack.c.l.b16 %v2170
  %v2687 = vunpack.c.l.b16 %v2171
  %v2688 = vunpack.c.l.b16 %v2172
  %v2689 = vunpack.c.l.b16 %v2173
  %v2690 = vunpack.c.l.b16 %v2174
  %v2691 = vunpack.c.l.b16 %v2175
  %v2692 = vunpack.c.l.b16 %v2176
  %v2693 = vunpack.c.l.b16 %v2177
  %v2694 = vunpack.c.l.b16 %v2178
  %v2695 = vunpack.c.l.b16 %v2179
  %v2696 = vunpack.c.l.b16 %v2180
  %v2697 = vunpack.c.l.b16 %v2181
  %v2698 = vunpack.c.l.b16 %v2182
  %v2699 = vunpack.c.l.b16 %v2183
  %v2700 = vunpack.c.l.b16 %v2184
  %v2701 = vunpack.c.l.b16 %v2185
  %v2702 = vunpack.c.l.b16 %v2186
  %v2703 = vunpack.c.l.b16 %v2187
  %v2704 = vunpack.c.l.b16 %v2188
  %v2705 = vunpack.c.l.b16 %v2189
  %v2706 = vunpack.c.l.b16 %v2190
  %v2707 = vunpack.c.l.b16 %v2191
  %v2708 = vunpack.c.l.b16 %v2192
  %v2709 = vunpack.c.l.b16 %v2193
  %v2710 = vunpack.c.l.b16 %v2194
  %v2711 = vunpack.c.l.b16 %v2195
  %v2712 = vunpack.c.l.b16 %v2196
  %v2713 = vunpack.c.l.b16 %v2197
  %v2714 = vunpack.c.l.b16 %v2198
  %v2715 = vunpack.c.l.b16 %v2199
  %v2716 = vunpack.c.l.b16 %v2200
  %v2717 = vunpack.c.l.b16 %v2201
  %v2718 = vunpack.c.l.b16 %v2202
  %v2719 = vunpack.c.l.b16 %v2203
  %v2720 = vpack.c.b16 %v2465, %v2464
  %v2721 = vpack.c.b16 %v2467, %v2466
  %v2722 = vpack.c.b16 %v2469, %v2468
  %v2723 = vpack.c.b16 %v2471, %v2470
  %v2724 = vpack.c.b16 %v2473, %v2472
  %v2725 = vpack.c.b16 %v2475, %v2474
  %v2726 = vpack.c.b16 %v2477, %v2476
  %v2727 = vpack.c.b16 %v2479, %v2478
  %v2728 = vpack.c.b16 %v2481, %v2480
  %v2729 = vpack.c.b16 %v2483, %v2482
  %v2730 = vpack.c.b16 %v2485, %v2484
  %v2731 = vpack.c.b16 %v2487, %v2486
  %v2732 = vpack.c.b16 %v2489, %v2488
  %v2733 = vpack.c.b16 %v2491, %v2490
  %v2734 = vpack.c.b16 %v2493, %v2492
  %v2735 = vpack.c.b16 %v2495, %v2494
  %v2736 = vpack.c.b16 %v2497, %v2496
  %v2737 = vpack.c.b16 %v2499, %v2498
  %v2738 = vpack.c.b16 %v2501, %v2500
  %v2739 = vpack.c.b16 %v2503, %v2502
  %v2740 = vpack.c.b16 %v2505, %v2504
  %v2741 = vpack.c.b16 %v2507, %v2506
  %v2742 = vpack.c.b16 %v2509, %v2508
  %v2743 = vpack.c.b16 %v2511, %v2510
  %v2744 = vpack.c.b16 %v2513, %v2512
  %v2745 = vpack.c.b16 %v2515, %v2514
  %v2746 = vpack.c.b16 %v2517, %v2516
  %v2747 = vpack.c.b16 %v2519, %v2518
  %v2748 = vpack.c.b16 %v2521, %v2520
  %v2749 = vpack.c.b16 %v2523, %v2522
  %v2750 = vpack.c.b16 %v2525, %v2524
  %v2751 = vpack.c.b16 %v2527, %v2526
  %v2752 = vpack.c.b16 %v2529, %v2528
  %v2753 = vpack.c.b16 %v2531, %v2530
  %v2754 = vpack.c.b16 %v2533, %v2532
  %v2755 = vpack.c.b16 %v2535, %v2534
  %v2756 = vpack.c.b16 %v2537, %v2536
  %v2757 = vpack.c.b16 %v2539, %v2538
  %v2758 = vpack.c.b16 %v2541, %v2540
  %v2759 = vpack.c.b16 %v2543, %v2542
  %v2760 = vpack.c.b16 %v2545, %v2544
  %v2761 = vpack.c.b16 %v2547, %v2546
  %v2762 = vpack.c.b16 %v2549, %v2548
  %v2763 = vpack.c.b16 %v2551, %v2550
  %v2764 = vpack.c.b16 %v2553, %v2552
  %v2765 = vpack.c.b16 %v2555, %v2554
  %v2766 = vpack.c.b16 %v2557, %v2556
  %v2767 = vpack.c.b16 %v2559, %v2558
  %v2768 = vpack.c.b16 %v2561, %v2560
  %v2769 = vpack.c.b16 %v2563, %v2562
  %v2770 = vpack.c.b16 %v2565, %v2564
  %v2771 = vpack.c.b16 %v2567, %v2566
  %v2772 = vpack.c.b16 %v2569, %v2568
  %v2773 = vpack.c.b16 %v2571, %v2570
  %v2774 = vpack.c.b16 %v2573, %v2572
  %v2775 = vpack.c.b16 %v2575, %v2574
  %v2776 = vpack.c.b16 %v2577, %v2576
  %v2777 = vpack.c.b16 %v2579, %v2578
  %v2778 = vpack.c.b16 %v2581, %v2580
  %v2779 = vpack.c.b16 %v2583, %v2582
  %v2780 = vpack.c.b16 %v2585, %v2584
  %v2781 = vpack.c.b16 %v2587, %v2586
  %v2782 = vpack.c.b16 %v2589, %v2588
  %v2783 = vpack.c.b16 %v2591, %v2590
  %v2784 = vpack.c.b16 %v2593, %v2592
  %v2785 = vpack.c.b16 %v2595, %v2594
  %v2786 = vpack.c.b16 %v2597, %v2596
  %v2787 = vpack.c.b16 %v2599, %v2598
  %v2788 = vpack.c.b16 %v2601, %v2600
  %v2789 = vpack.c.b16 %v2603, %v2602
  %v2790 = vpack.c.b16 %v2605, %v2604
  %v2791 = vpack.c.b16 %v2607, %v2606
  %v2792 = vpack.c.b16 %v2609, %v2608
  %v2793 = vpack.c.b16 %v2611, %v2610
  %v2794 = vpack.c.b16 %v2613, %v2612
  %v2795 = vpack.c.b16 %v2615, %v2614
  %v2796 = vpack.c.b16 %v2617, %v2616
  %v2797 = vpack.c.b16 %v2619, %v2618
  %v2798 = vpack.c.b16 %v2621, %v2620
  %v2799 = vpack.c.b16 %v2623, %v2622
  %v2800 = vpack.c.b16 %v2625, %v2624
  %v2801 = vpack.c.b16 %v2627, %v2626
  %v2802 = vpack.c.b16 %v2629, %v2628
  %v2803 = vpack.c.b16 %v2631, %v2630
  %v2804 = vpack.c.b16 %v2633, %v2632
  %v2805 = vpack.c.b16 %v2635, %v2634
  %v2806 = vpack.c.b16 %v2637, %v2636
  %v2807 = vpack.c.b16 %v2639, %v2638
  %v2808 = vpack.c.b16 %v2641, %v2640
  %v2809 = vpack.c.b16 %v2643, %v2642
  %v2810 = vpack.c.b16 %v2645, %v2644
  %v2811 = vpack.c.b16 %v2647, %v2646
  %v2812 = vpack.c.b16 %v2649, %v2648
  %v2813 = vpack.c.b16 %v2651, %v2650
  %v2814 = vpack.c.b16 %v2653, %v2652
  %v2815 = vpack.c.b16 %v2655, %v2654
  %v2816 = vpack.c.b16 %v2657, %v2656
  %v2817 = vpack.c.b16 %v2659, %v2658
  %v2818 = vpack.c.b16 %v2661, %v2660
  %v2819 = vpack.c.b16 %v2663, %v2662
  %v2820 = vpack.c.b16 %v2665, %v2664
  %v2821 = vpack.c.b16 %v2667, %v2666
  %v2822 = vpack.c.b16 %v2669, %v2668
  %v2823 = vpack.c.b16 %v2671, %v2670
  %v2824 = vpack.c.b16 %v2673, %v2672
  %v2825 = vpack.c.b16 %v2675, %v2674
  %v2826 = vpack.c.b16 %v2677, %v2676
  %v2827 = vpack.c.b16 %v2679, %v2678
  %v2828 = vpack.c.b16 %v2681, %v2680
  %v2829 = vpack.c.b16 %v2683, %v2682
  %v2830 = vpack.c.b16 %v2685, %v2684
  %v2831 = vpack.c.b16 %v2687, %v2686
  %v2832 = vpack.c.b16 %v2689, %v2688
  %v2833 = vpack.c.b16 %v2691, %v2690
  %v2834 = vpack.c.b16 %v2693, %v2692
  %v2835 = vpack.c.b16 %v2695, %v2694
  %v2836 = vpack.c.b16 %v2697, %v2696
  %v2837 = vpack.c.b16 %v2699, %v2698
  %v2838 = vpack.c.b16 %v2701, %v2700
  %v2839 = vpack.c.b16 %v2703, %v2702
  %v2840 = vpack.c.b16 %v2705, %v2704
  %v2841 = vpack.c.b16 %v2707, %v2706
  %v2842 = vpack.c.b16 %v2709, %v2708
  %v2843 = vpack.c.b16 %v2711, %v2710
  %v2844 = vpack.c.b16 %v2713, %v2712
  %v2845 = vpack.c.b16 %v2715, %v2714
  %v2846 = vpack.c.b16 %v2717, %v2716
  %v2847 = vpack.c.b16 %v2719, %v2718
  %2976 = vmatprep.subr.bf16.mxu0 0
  %2977 = vmatpush1.bf16.msra.mxu0 %v2720
  %2978 = vmatprep.subr.bf16.mxu0 0
  %2979 = vmatpush1.bf16.msra.mxu0 %v2721
  %2980 = vmatprep.subr.bf16.mxu0 0
  %2981 = vmatpush1.bf16.msra.mxu0 %v2722
  %2982 = vmatprep.subr.bf16.mxu0 0
  %2983 = vmatpush1.bf16.msra.mxu0 %v2723
  %2984 = vmatprep.subr.bf16.mxu0 0
  %2985 = vmatpush1.bf16.msra.mxu0 %v2724
  %2986 = vmatprep.subr.bf16.mxu0 0
  %2987 = vmatpush1.bf16.msra.mxu0 %v2725
  %2988 = vmatprep.subr.bf16.mxu0 0
  %2989 = vmatpush1.bf16.msra.mxu0 %v2726
  %2990 = vmatprep.subr.bf16.mxu0 0
  %2991 = vmatpush1.bf16.msra.mxu0 %v2727
  %2992 = vmatprep.subr.bf16.mxu0 0
  %2993 = vmatpush1.bf16.msra.mxu0 %v2728
  %2994 = vmatprep.subr.bf16.mxu0 0
  %2995 = vmatpush1.bf16.msra.mxu0 %v2729
  %2996 = vmatprep.subr.bf16.mxu0 0
  %2997 = vmatpush1.bf16.msra.mxu0 %v2730
  %2998 = vmatprep.subr.bf16.mxu0 0
  %2999 = vmatpush1.bf16.msra.mxu0 %v2731
  %3000 = vmatprep.subr.bf16.mxu0 0
  %3001 = vmatpush1.bf16.msra.mxu0 %v2732
  %3002 = vmatprep.subr.bf16.mxu0 0
  %3003 = vmatpush1.bf16.msra.mxu0 %v2733
  %3004 = vmatprep.subr.bf16.mxu0 0
  %3005 = vmatpush1.bf16.msra.mxu0 %v2734
  %3006 = vmatprep.subr.bf16.mxu0 0
  %3007 = vmatpush1.bf16.msra.mxu0 %v2735
  %3008 = vmatprep.mubr.bf16.mxu0 %v1933
  %3009 = vmatmul.mubr.bf16.gmra.mrb[0].mxu0 %v1932
  %v3010 = vpop.f32.mrb[0].mxu0
  %v3011 = vadd.f32 %v2207, %v3010
  %v3012 = vpop.f32.mrb[0].mxu0
  %v3013 = vpop.f32.mrb[0].mxu0
  %v3014 = vpop.f32.mrb[0].mxu0
  %3015 = vdwg.mxu0
  %3016 = vmatprep.subr.bf16.mxu0 0
  %3017 = vmatpush1.bf16.msra.mxu0 %v2736
  %3018 = vmatprep.subr.bf16.mxu0 0
  %3019 = vmatpush1.bf16.msra.mxu0 %v2737
  %3020 = vmatprep.subr.bf16.mxu0 0
  %3021 = vmatpush1.bf16.msra.mxu0 %v2738
  %3022 = vmatprep.subr.bf16.mxu0 0
  %3023 = vmatpush1.bf16.msra.mxu0 %v2739
  %3024 = vmatprep.subr.bf16.mxu0 0
  %3025 = vmatpush1.bf16.msra.mxu0 %v2740
  %3026 = vmatprep.subr.bf16.mxu0 0
  %3027 = vmatpush1.bf16.msra.mxu0 %v2741
  %3028 = vmatprep.subr.bf16.mxu0 0
  %3029 = vmatpush1.bf16.msra.mxu0 %v2742
  %3030 = vmatprep.subr.bf16.mxu0 0
  %3031 = vmatpush1.bf16.msra.mxu0 %v2743
  %3032 = vmatprep.subr.bf16.mxu0 0
  %3033 = vmatpush1.bf16.msra.mxu0 %v2744
  %3034 = vmatprep.subr.bf16.mxu0 0
  %3035 = vmatpush1.bf16.msra.mxu0 %v2745
  %3036 = vmatprep.subr.bf16.mxu0 0
  %3037 = vmatpush1.bf16.msra.mxu0 %v2746
  %3038 = vmatprep.subr.bf16.mxu0 0
  %3039 = vmatpush1.bf16.msra.mxu0 %v2747
  %3040 = vmatprep.subr.bf16.mxu0 0
  %3041 = vmatpush1.bf16.msra.mxu0 %v2748
  %3042 = vmatprep.subr.bf16.mxu0 0
  %3043 = vmatpush1.bf16.msra.mxu0 %v2749
  %3044 = vmatprep.subr.bf16.mxu0 0
  %3045 = vmatpush1.bf16.msra.mxu0 %v2750
  %3046 = vmatprep.subr.bf16.mxu0 0
  %3047 = vmatpush1.bf16.msra.mxu0 %v2751
  %3048 = vmatprep.mubr.bf16.mxu0 %v1935
  %3049 = vmatmul.mubr.bf16.gmra.mrb[0].mxu0 %v1934
  %v3050 = vpop.f32.mrb[0].mxu0
  %v3051 = vadd.f32 %v3011, %v3050
  %v3052 = vpop.f32.mrb[0].mxu0
  %v3053 = vpop.f32.mrb[0].mxu0
  %v3054 = vpop.f32.mrb[0].mxu0
  %3055 = vdwg.mxu0
  %3056 = vmatprep.subr.bf16.mxu0 0
  %3057 = vmatpush1.bf16.msra.mxu0 %v2752
  %3058 = vmatprep.subr.bf16.mxu0 0
  %3059 = vmatpush1.bf16.msra.mxu0 %v2753
  %3060 = vmatprep.subr.bf16.mxu0 0
  %3061 = vmatpush1.bf16.msra.mxu0 %v2754
  %3062 = vmatprep.subr.bf16.mxu0 0
  %3063 = vmatpush1.bf16.msra.mxu0 %v2755
  %3064 = vmatprep.subr.bf16.mxu0 0
  %3065 = vmatpush1.bf16.msra.mxu0 %v2756
  %3066 = vmatprep.subr.bf16.mxu0 0
  %3067 = vmatpush1.bf16.msra.mxu0 %v2757
  %3068 = vmatprep.subr.bf16.mxu0 0
  %3069 = vmatpush1.bf16.msra.mxu0 %v2758
  %3070 = vmatprep.subr.bf16.mxu0 0
  %3071 = vmatpush1.bf16.msra.mxu0 %v2759
  %3072 = vmatprep.subr.bf16.mxu0 0
  %3073 = vmatpush1.bf16.msra.mxu0 %v2760
  %3074 = vmatprep.subr.bf16.mxu0 0
  %3075 = vmatpush1.bf16.msra.mxu0 %v2761
  %3076 = vmatprep.subr.bf16.mxu0 0
  %3077 = vmatpush1.bf16.msra.mxu0 %v2762
  %3078 = vmatprep.subr.bf16.mxu0 0
  %3079 = vmatpush1.bf16.msra.mxu0 %v2763
  %3080 = vmatprep.subr.bf16.mxu0 0
  %3081 = vmatpush1.bf16.msra.mxu0 %v2764
  %3082 = vmatprep.subr.bf16.mxu0 0
  %3083 = vmatpush1.bf16.msra.mxu0 %v2765
  %3084 = vmatprep.subr.bf16.mxu0 0
  %3085 = vmatpush1.bf16.msra.mxu0 %v2766
  %3086 = vmatprep.subr.bf16.mxu0 0
  %3087 = vmatpush1.bf16.msra.mxu0 %v2767
  %3088 = vmatprep.mubr.bf16.mxu0 %v1937
  %3089 = vmatmul.mubr.bf16.gmra.mrb[0].mxu0 %v1936
  %v3090 = vpop.f32.mrb[0].mxu0
  %v3091 = vadd.f32 %v3051, %v3090
  %v3092 = vpop.f32.mrb[0].mxu0
  %v3093 = vpop.f32.mrb[0].mxu0
  %v3094 = vpop.f32.mrb[0].mxu0
  %3095 = vdwg.mxu0
  %3096 = vmatprep.subr.bf16.mxu0 0
  %3097 = vmatpush1.bf16.msra.mxu0 %v2768
  %3098 = vmatprep.subr.bf16.mxu0 0
  %3099 = vmatpush1.bf16.msra.mxu0 %v2769
  %3100 = vmatprep.subr.bf16.mxu0 0
  %3101 = vmatpush1.bf16.msra.mxu0 %v2770
  %3102 = vmatprep.subr.bf16.mxu0 0
  %3103 = vmatpush1.bf16.msra.mxu0 %v2771
  %3104 = vmatprep.subr.bf16.mxu0 0
  %3105 = vmatpush1.bf16.msra.mxu0 %v2772
  %3106 = vmatprep.subr.bf16.mxu0 0
  %3107 = vmatpush1.bf16.msra.mxu0 %v2773
  %3108 = vmatprep.subr.bf16.mxu0 0
  %3109 = vmatpush1.bf16.msra.mxu0 %v2774
  %3110 = vmatprep.subr.bf16.mxu0 0
  %3111 = vmatpush1.bf16.msra.mxu0 %v2775
  %3112 = vmatprep.subr.bf16.mxu0 0
  %3113 = vmatpush1.bf16.msra.mxu0 %v2776
  %3114 = vmatprep.subr.bf16.mxu0 0
  %3115 = vmatpush1.bf16.msra.mxu0 %v2777
  %3116 = vmatprep.subr.bf16.mxu0 0
  %3117 = vmatpush1.bf16.msra.mxu0 %v2778
  %3118 = vmatprep.subr.bf16.mxu0 0
  %3119 = vmatpush1.bf16.msra.mxu0 %v2779
  %3120 = vmatprep.subr.bf16.mxu0 0
  %3121 = vmatpush1.bf16.msra.mxu0 %v2780
  %3122 = vmatprep.subr.bf16.mxu0 0
  %3123 = vmatpush1.bf16.msra.mxu0 %v2781
  %3124 = vmatprep.subr.bf16.mxu0 0
  %3125 = vmatpush1.bf16.msra.mxu0 %v2782
  %3126 = vmatprep.subr.bf16.mxu0 0
  %3127 = vmatpush1.bf16.msra.mxu0 %v2783
  %3128 = vmatprep.mubr.bf16.mxu0 %v1939
  %3129 = vmatmul.mubr.bf16.gmra.mrb[0].mxu0 %v1938
  %v3130 = vpop.f32.mrb[0].mxu0
  %v3131 = vadd.f32 %v3091, %v3130
  %v3132 = vpop.f32.mrb[0].mxu0
  %v3133 = vpop.f32.mrb[0].mxu0
  %v3134 = vpop.f32.mrb[0].mxu0
  %3135 = vdwg.mxu0
  %3136 = vmatprep.subr.bf16.mxu0 0
  %3137 = vmatpush1.bf16.msra.mxu0 %v2784
  %3138 = vmatprep.subr.bf16.mxu0 0
  %3139 = vmatpush1.bf16.msra.mxu0 %v2785
  %3140 = vmatprep.subr.bf16.mxu0 0
  %3141 = vmatpush1.bf16.msra.mxu0 %v2786
  %3142 = vmatprep.subr.bf16.mxu0 0
  %3143 = vmatpush1.bf16.msra.mxu0 %v2787
  %3144 = vmatprep.subr.bf16.mxu0 0
  %3145 = vmatpush1.bf16.msra.mxu0 %v2788
  %3146 = vmatprep.subr.bf16.mxu0 0
  %3147 = vmatpush1.bf16.msra.mxu0 %v2789
  %3148 = vmatprep.subr.bf16.mxu0 0
  %3149 = vmatpush1.bf16.msra.mxu0 %v2790
  %3150 = vmatprep.subr.bf16.mxu0 0
  %3151 = vmatpush1.bf16.msra.mxu0 %v2791
  %3152 = vmatprep.subr.bf16.mxu0 0
  %3153 = vmatpush1.bf16.msra.mxu0 %v2792
  %3154 = vmatprep.subr.bf16.mxu0 0
  %3155 = vmatpush1.bf16.msra.mxu0 %v2793
  %3156 = vmatprep.subr.bf16.mxu0 0
  %3157 = vmatpush1.bf16.msra.mxu0 %v2794
  %3158 = vmatprep.subr.bf16.mxu0 0
  %3159 = vmatpush1.bf16.msra.mxu0 %v2795
  %3160 = vmatprep.subr.bf16.mxu0 0
  %3161 = vmatpush1.bf16.msra.mxu0 %v2796
  %3162 = vmatprep.subr.bf16.mxu0 0
  %3163 = vmatpush1.bf16.msra.mxu0 %v2797
  %3164 = vmatprep.subr.bf16.mxu0 0
  %3165 = vmatpush1.bf16.msra.mxu0 %v2798
  %3166 = vmatprep.subr.bf16.mxu0 0
  %3167 = vmatpush1.bf16.msra.mxu0 %v2799
  %3168 = vmatprep.mubr.bf16.mxu0 %v1941
  %3169 = vmatmul.mubr.bf16.gmra.mrb[0].mxu0 %v1940
  %v3170 = vpop.f32.mrb[0].mxu0
  %v3171 = vadd.f32 %v3131, %v3170
  %v3172 = vpop.f32.mrb[0].mxu0
  %v3173 = vpop.f32.mrb[0].mxu0
  %v3174 = vpop.f32.mrb[0].mxu0
  %3175 = vdwg.mxu0
  %3176 = vmatprep.subr.bf16.mxu0 0
  %3177 = vmatpush1.bf16.msra.mxu0 %v2800
  %3178 = vmatprep.subr.bf16.mxu0 0
  %3179 = vmatpush1.bf16.msra.mxu0 %v2801
  %3180 = vmatprep.subr.bf16.mxu0 0
  %3181 = vmatpush1.bf16.msra.mxu0 %v2802
  %3182 = vmatprep.subr.bf16.mxu0 0
  %3183 = vmatpush1.bf16.msra.mxu0 %v2803
  %3184 = vmatprep.subr.bf16.mxu0 0
  %3185 = vmatpush1.bf16.msra.mxu0 %v2804
  %3186 = vmatprep.subr.bf16.mxu0 0
  %3187 = vmatpush1.bf16.msra.mxu0 %v2805
  %3188 = vmatprep.subr.bf16.mxu0 0
  %3189 = vmatpush1.bf16.msra.mxu0 %v2806
  %3190 = vmatprep.subr.bf16.mxu0 0
  %3191 = vmatpush1.bf16.msra.mxu0 %v2807
  %3192 = vmatprep.subr.bf16.mxu0 0
  %3193 = vmatpush1.bf16.msra.mxu0 %v2808
  %3194 = vmatprep.subr.bf16.mxu0 0
  %3195 = vmatpush1.bf16.msra.mxu0 %v2809
  %3196 = vmatprep.subr.bf16.mxu0 0
  %3197 = vmatpush1.bf16.msra.mxu0 %v2810
  %3198 = vmatprep.subr.bf16.mxu0 0
  %3199 = vmatpush1.bf16.msra.mxu0 %v2811
  %3200 = vmatprep.subr.bf16.mxu0 0
  %3201 = vmatpush1.bf16.msra.mxu0 %v2812
  %3202 = vmatprep.subr.bf16.mxu0 0
  %3203 = vmatpush1.bf16.msra.mxu0 %v2813
  %3204 = vmatprep.subr.bf16.mxu0 0
  %3205 = vmatpush1.bf16.msra.mxu0 %v2814
  %3206 = vmatprep.subr.bf16.mxu0 0
  %3207 = vmatpush1.bf16.msra.mxu0 %v2815
  %3208 = vmatprep.mubr.bf16.mxu0 %v1943
  %3209 = vmatmul.mubr.bf16.gmra.mrb[0].mxu0 %v1942
  %v3210 = vpop.f32.mrb[0].mxu0
  %v3211 = vadd.f32 %v3171, %v3210
  %v3212 = vpop.f32.mrb[0].mxu0
  %v3213 = vpop.f32.mrb[0].mxu0
  %v3214 = vpop.f32.mrb[0].mxu0
  %3215 = vdwg.mxu0
  %3216 = vmatprep.subr.bf16.mxu0 0
  %3217 = vmatpush1.bf16.msra.mxu0 %v2816
  %3218 = vmatprep.subr.bf16.mxu0 0
  %3219 = vmatpush1.bf16.msra.mxu0 %v2817
  %3220 = vmatprep.subr.bf16.mxu0 0
  %3221 = vmatpush1.bf16.msra.mxu0 %v2818
  %3222 = vmatprep.subr.bf16.mxu0 0
  %3223 = vmatpush1.bf16.msra.mxu0 %v2819
  %3224 = vmatprep.subr.bf16.mxu0 0
  %3225 = vmatpush1.bf16.msra.mxu0 %v2820
  %3226 = vmatprep.subr.bf16.mxu0 0
  %3227 = vmatpush1.bf16.msra.mxu0 %v2821
  %3228 = vmatprep.subr.bf16.mxu0 0
  %3229 = vmatpush1.bf16.msra.mxu0 %v2822
  %3230 = vmatprep.subr.bf16.mxu0 0
  %3231 = vmatpush1.bf16.msra.mxu0 %v2823
  %3232 = vmatprep.subr.bf16.mxu0 0
  %3233 = vmatpush1.bf16.msra.mxu0 %v2824
  %3234 = vmatprep.subr.bf16.mxu0 0
  %3235 = vmatpush1.bf16.msra.mxu0 %v2825
  %3236 = vmatprep.subr.bf16.mxu0 0
  %3237 = vmatpush1.bf16.msra.mxu0 %v2826
  %3238 = vmatprep.subr.bf16.mxu0 0
  %3239 = vmatpush1.bf16.msra.mxu0 %v2827
  %3240 = vmatprep.subr.bf16.mxu0 0
  %3241 = vmatpush1.bf16.msra.mxu0 %v2828
  %3242 = vmatprep.subr.bf16.mxu0 0
  %3243 = vmatpush1.bf16.msra.mxu0 %v2829
  %3244 = vmatprep.subr.bf16.mxu0 0
  %3245 = vmatpush1.bf16.msra.mxu0 %v2830
  %3246 = vmatprep.subr.bf16.mxu0 0
  %3247 = vmatpush1.bf16.msra.mxu0 %v2831
  %3248 = vmatprep.mubr.bf16.mxu0 %v1945
  %3249 = vmatmul.mubr.bf16.gmra.mrb[0].mxu0 %v1944
  %v3250 = vpop.f32.mrb[0].mxu0
  %v3251 = vadd.f32 %v3211, %v3250
  %v3252 = vpop.f32.mrb[0].mxu0
  %v3253 = vpop.f32.mrb[0].mxu0
  %v3254 = vpop.f32.mrb[0].mxu0
  %3255 = vdwg.mxu0
  %3256 = vmatprep.subr.bf16.mxu0 0
  %3257 = vmatpush1.bf16.msra.mxu0 %v2832
  %3258 = vmatprep.subr.bf16.mxu0 0
  %3259 = vmatpush1.bf16.msra.mxu0 %v2833
  %3260 = vmatprep.subr.bf16.mxu0 0
  %3261 = vmatpush1.bf16.msra.mxu0 %v2834
  %3262 = vmatprep.subr.bf16.mxu0 0
  %3263 = vmatpush1.bf16.msra.mxu0 %v2835
  %3264 = vmatprep.subr.bf16.mxu0 0
  %3265 = vmatpush1.bf16.msra.mxu0 %v2836
  %3266 = vmatprep.subr.bf16.mxu0 0
  %3267 = vmatpush1.bf16.msra.mxu0 %v2837
  %3268 = vmatprep.subr.bf16.mxu0 0
  %3269 = vmatpush1.bf16.msra.mxu0 %v2838
  %3270 = vmatprep.subr.bf16.mxu0 0
  %3271 = vmatpush1.bf16.msra.mxu0 %v2839
  %3272 = vmatprep.subr.bf16.mxu0 0
  %3273 = vmatpush1.bf16.msra.mxu0 %v2840
  %3274 = vmatprep.subr.bf16.mxu0 0
  %3275 = vmatpush1.bf16.msra.mxu0 %v2841
  %3276 = vmatprep.subr.bf16.mxu0 0
  %3277 = vmatpush1.bf16.msra.mxu0 %v2842
  %3278 = vmatprep.subr.bf16.mxu0 0
  %3279 = vmatpush1.bf16.msra.mxu0 %v2843
  %3280 = vmatprep.subr.bf16.mxu0 0
  %3281 = vmatpush1.bf16.msra.mxu0 %v2844
  %3282 = vmatprep.subr.bf16.mxu0 0
  %3283 = vmatpush1.bf16.msra.mxu0 %v2845
  %3284 = vmatprep.subr.bf16.mxu0 0
  %3285 = vmatpush1.bf16.msra.mxu0 %v2846
  %3286 = vmatprep.subr.bf16.mxu0 0
  %3287 = vmatpush1.bf16.msra.mxu0 %v2847
  %3288 = vmatprep.mubr.bf16.mxu0 %v1947
  %3289 = vmatmul.mubr.bf16.gmra.mrb[0].mxu0 %v1946
  %v3290 = vpop.f32.mrb[0].mxu0
  %v3291 = vadd.f32 %v3251, %v3290
  %v3292 = vpop.f32.mrb[0].mxu0
  %v3293 = vpop.f32.mrb[0].mxu0
  %v3294 = vpop.f32.mrb[0].mxu0
  %3295 = vdwg.mxu0
  %v3296 = vadd.f32 %v1115, %v3291
  %v3297 = vsel %vm180, %v3296, 0.0
  %3298 = vadd.xlane.f32.xlu0 %v3297
  %v3299 = vpop.xlane.xlu0 %3298
  %v3300 = vmul.f32 %v3299, %v1095
  %v3301 = vsub.f32 %v3296, %v3300
  %v3302 = vmul.f32 %v3301, %v3301
  %v3303 = vsel %vm180, %v3302, 0.0
  %3304 = vadd.xlane.f32.xlu0 %v3303
  %v3305 = vpop.xlane.xlu0 %3304
  %v3306 = vmul.f32 %v3305, %v1095
  %v3307 = vadd.f32 %v3306, 1e-05
  %v3308 = vrsqrt.pop %v3307
  %v3309 = vmul.f32 %v3301, %v3308
  %v3310 = vlaneseq
  %v3311 = vshrl.u32 %v3310, 7
  %v3312 = vsub.s32 4, %v3311
  %v3313 = vrot.slane %v110, %v3312
  %v3314 = vmul.f32 %v3309, %v3313
  %v3315 = vlaneseq
  %v3316 = vshrl.u32 %v3315, 7
  %v3317 = vsub.s32 5, %v3316
  %v3318 = vrot.slane %v110, %v3317
  %v3319 = vadd.f32 %v3314, %v3318
  %s3320 = scalar_lea.vmem %s6, 8
  %v3321 = vld [vmem:[%s3320] sm:$0xff]
  %s3322 = scalar_lea.vmem %s5, 32
  %v3323 = vld [vmem:[%s3322] sm:$0xf]
  %v3324 = vld [vmem:[%s3322 + $0x4] sm:$0xf]
  %v3325 = vld [vmem:[%s3322 + $0x8] sm:$0xf]
  %v3326 = vld [vmem:[%s3322 + $0xc] sm:$0xf]
  %v3327 = vld [vmem:[%s3322 + $0x10] sm:$0xf]
  %v3328 = vld [vmem:[%s3322 + $0x14] sm:$0xf]
  %v3329 = vld [vmem:[%s3322 + $0x18] sm:$0xf]
  %v3330 = vld [vmem:[%s3322 + $0x1c] sm:$0xf]
  %v3331 = vpack.c.bf16 %v3319, %v3319
  %s3332 = scalar_lea.vmem %s3, 64
  %v3333 = vld [vmem:[%s3332] sm:$0xff]
  %v3334 = vld [vmem:[%s3332 + $0x8] sm:$0xff]
  %v3335 = vld [vmem:[%s3332 + $0x10] sm:$0xff]
  %v3336 = vld [vmem:[%s3332 + $0x18] sm:$0xff]
  %v3337 = vld [vmem:[%s3332 + $0x20] sm:$0xff]
  %v3338 = vld [vmem:[%s3332 + $0x28] sm:$0xff]
  %v3339 = vld [vmem:[%s3332 + $0x30] sm:$0xff]
  %v3340 = vld [vmem:[%s3332 + $0x38] sm:$0xff]
  %s3341 = scalar_lea.vmem %s4, 2
  %v3342 = vld [vmem:[%s3341] sm:$0x3]
  %v3344 = vlaneseq
  %v3345 = vshrl.u32 %v3344, 7
  %v3346 = vsub.s32 0, %v3345
  %v3347 = vrot.slane %v3342, %v3346
  %v3348 = vlaneseq
  %v3349 = vshrl.u32 %v3348, 7
  %v3350 = vsub.s32 1, %v3349
  %v3351 = vrot.slane %v3342, %v3350
  %v3362 = vunpack.c.l.b16 %v3333
  %v3363 = vunpack.c.h.b16 %v3333
  %v3364 = vunpack.c.l.b16 %v3334
  %v3365 = vunpack.c.h.b16 %v3334
  %v3366 = vunpack.c.l.b16 %v3335
  %v3367 = vunpack.c.h.b16 %v3335
  %v3368 = vunpack.c.l.b16 %v3336
  %v3369 = vunpack.c.h.b16 %v3336
  %v3370 = vunpack.c.l.b16 %v3337
  %v3371 = vunpack.c.h.b16 %v3337
  %v3372 = vunpack.c.l.b16 %v3338
  %v3373 = vunpack.c.h.b16 %v3338
  %v3374 = vunpack.c.l.b16 %v3339
  %v3375 = vunpack.c.h.b16 %v3339
  %v3376 = vunpack.c.l.b16 %v3340
  %v3377 = vunpack.c.h.b16 %v3340
  %v3378 = vpack.c.b16 %v3364, %v3362
  %v3379 = vpack.c.b16 %v3365, %v3363
  %v3380 = vpack.c.b16 %v3368, %v3366
  %v3381 = vpack.c.b16 %v3369, %v3367
  %v3382 = vpack.c.b16 %v3372, %v3370
  %v3383 = vpack.c.b16 %v3373, %v3371
  %v3384 = vpack.c.b16 %v3376, %v3374
  %v3385 = vpack.c.b16 %v3377, %v3375
  %v3395 = vsel %vm180, %v3331, 0
  %3397 = vmatprep.subr.bf16.mxu0 %v3379
  %3398 = vmatpush1.bf16.msra.mxu0 %v3378
  %3399 = vmatprep.subr.bf16.mxu0 %v3381
  %3400 = vmatpush1.bf16.msra.mxu0 %v3380
  %3401 = vmatprep.subr.bf16.mxu0 %v3383
  %3402 = vmatpush1.bf16.msra.mxu0 %v3382
  %3403 = vmatprep.subr.bf16.mxu0 %v3385
  %3404 = vmatpush1.bf16.msra.mxu0 %v3384
  %3405 = vmatprep.subr.bf16.mxu0 0
  %3406 = vmatpush1.bf16.msra.mxu0 0
  %3407 = vmatprep.subr.bf16.mxu0 0
  %3408 = vmatpush1.bf16.msra.mxu0 0
  %3409 = vmatprep.subr.bf16.mxu0 0
  %3410 = vmatpush1.bf16.msra.mxu0 0
  %3411 = vmatprep.subr.bf16.mxu0 0
  %3412 = vmatpush1.bf16.msra.mxu0 0
  %3413 = vmatprep.subr.bf16.mxu0 0
  %3414 = vmatpush1.bf16.msra.mxu0 0
  %3415 = vmatprep.subr.bf16.mxu0 0
  %3416 = vmatpush1.bf16.msra.mxu0 0
  %3417 = vmatprep.subr.bf16.mxu0 0
  %3418 = vmatpush1.bf16.msra.mxu0 0
  %3419 = vmatprep.subr.bf16.mxu0 0
  %3420 = vmatpush1.bf16.msra.mxu0 0
  %3421 = vmatprep.subr.bf16.mxu0 0
  %3422 = vmatpush1.bf16.msra.mxu0 0
  %3423 = vmatprep.subr.bf16.mxu0 0
  %3424 = vmatpush1.bf16.msra.mxu0 0
  %3425 = vmatprep.subr.bf16.mxu0 0
  %3426 = vmatpush1.bf16.msra.mxu0 0
  %3427 = vmatprep.subr.bf16.mxu0 0
  %3428 = vmatpush1.bf16.msra.mxu0 0
  %3429 = vmatprep.mubr.bf16.mxu0 0
  %3430 = vmatmul.mubr.bf16.gmra.mrb[0].mxu0 %v3395
  %v3431 = vpop.f32.mrb[0].mxu0
  %v3432 = vadd.f32 %v3347, %v3431
  %v3433 = vpop.f32.mrb[0].mxu0
  %v3434 = vadd.f32 %v3351, %v3433
  %v3435 = vpop.f32.mrb[0].mxu0
  %v3436 = vpop.f32.mrb[0].mxu0
  %3437 = vdwg.mxu0
  %v3438 = vlaneseq
  %v3439 = vshrl.u32 %v3438, 7
  %v3440 = vsub.s32 0, %v3439
  %v3441 = vrot.slane %v3321, %v3440
  %3443 = vrot.lane.b32.xlu0 %v3432, 64
  %v3444 = vpop.permute.xlu0 %3443
  %v3445 = vsel %vm65, %v3432, 0
  %v3447 = vsel %vm65, %v3444, 0
  %3449 = vmatprep.subr.mxu0 0.0
  %3450 = vmatpush1.xpose.msra.mxu0 %v3447
  %3451 = vmatprep.subr.mxu0 0.0
  %3452 = vmatpush1.xpose.msra.mxu0 0.0
  %3453 = vmatprep.subr.mxu0 0.0
  %3454 = vmatpush1.xpose.msra.mxu0 0.0
  %3455 = vmatprep.subr.mxu0 0.0
  %3456 = vmatpush1.xpose.msra.mxu0 0.0
  %3457 = vmatprep.subr.mxu0 0.0
  %3458 = vmatpush1.xpose.msra.mxu0 0.0
  %3459 = vmatprep.subr.mxu0 0.0
  %3460 = vmatpush1.xpose.msra.mxu0 0.0
  %3461 = vmatprep.subr.mxu0 0.0
  %3462 = vmatpush1.xpose.msra.mxu0 0.0
  %3463 = vmatprep.subr.mxu0 0.0
  %3464 = vmatpush1.xpose.msra.mxu0 0.0
  %3465 = vmatprep.subr.mxu0 0.0
  %3466 = vmatpush1.xpose.msra.mxu0 0.0
  %3467 = vmatprep.subr.mxu0 0.0
  %3468 = vmatpush1.xpose.msra.mxu0 0.0
  %3469 = vmatprep.subr.mxu0 0.0
  %3470 = vmatpush1.xpose.msra.mxu0 0.0
  %3471 = vmatprep.subr.mxu0 0.0
  %3472 = vmatpush1.xpose.msra.mxu0 0.0
  %3473 = vmatprep.subr.mxu0 0.0
  %3474 = vmatpush1.xpose.msra.mxu0 0.0
  %3475 = vmatprep.subr.mxu0 0.0
  %3476 = vmatpush1.xpose.msra.mxu0 0.0
  %3477 = vmatprep.subr.mxu0 0.0
  %3478 = vmatpush1.xpose.msra.mxu0 0.0
  %3479 = vmatprep.subr.mxu0 0.0
  %3480 = vmatpush1.xpose.msra.mxu0 0.0
  %3481 = vmatprep.subr.mxu0 0.0
  %3482 = vmatpush1.xpose.msra.mxu0 0.0
  %3483 = vmatprep.subr.mxu0 0.0
  %3484 = vmatpush1.xpose.msra.mxu0 0.0
  %3485 = vmatprep.subr.mxu0 0.0
  %3486 = vmatpush1.xpose.msra.mxu0 0.0
  %3487 = vmatprep.subr.mxu0 0.0
  %3488 = vmatpush1.xpose.msra.mxu0 0.0
  %3489 = vmatprep.subr.mxu0 0.0
  %3490 = vmatpush1.xpose.msra.mxu0 0.0
  %3491 = vmatprep.subr.mxu0 0.0
  %3492 = vmatpush1.xpose.msra.mxu0 0.0
  %3493 = vmatprep.subr.mxu0 0.0
  %3494 = vmatpush1.xpose.msra.mxu0 0.0
  %3495 = vmatprep.subr.mxu0 0.0
  %3496 = vmatpush1.xpose.msra.mxu0 0.0
  %3497 = vmatprep.subr.mxu0 0.0
  %3498 = vmatpush1.xpose.msra.mxu0 0.0
  %3499 = vmatprep.subr.mxu0 0.0
  %3500 = vmatpush1.xpose.msra.mxu0 0.0
  %3501 = vmatprep.subr.mxu0 0.0
  %3502 = vmatpush1.xpose.msra.mxu0 0.0
  %3503 = vmatprep.subr.mxu0 0.0
  %3504 = vmatpush1.xpose.msra.mxu0 0.0
  %3505 = vmatprep.subr.mxu0 0.0
  %3506 = vmatpush1.xpose.msra.mxu0 0.0
  %3507 = vmatprep.subr.mxu0 0.0
  %3508 = vmatpush1.xpose.msra.mxu0 0.0
  %3509 = vmatprep.subr.mxu0 0.0
  %3510 = vmatpush1.xpose.msra.mxu0 0.0
  %3511 = vmatprep.subr.mxu0 0.0
  %3512 = vmatpush1.xpose.msra.mxu0 0.0
  %3513 = vmatprep.mubr.f32.mxu0 0.0
  %3514 = vmatmul.mubr.f32.gmra.mrb[0].mxu0 %v3445
  %v3515 = vpop.f32.mrb[0].mxu0
  %v3516 = vadd.f32 0.0, %v3515
  %v3517 = vpop.f32.mrb[0].mxu0
  %3518 = vdwg.mxu0
  %v3519 = vsel %vm306, %v3516, -inf
  %3520 = vmax.xlane.f32.xlu0 %v3519
  %v3521 = vpop.xlane.xlu0 %3520
  %v3522 = vsub.f32 %v3516, %v3521
  %v3523 = vmul.f32 %v3522, 1.442695
  %v3524 = vpow.pop %v3523
  %v3525 = vsel %vm306, %v3524, 0.0
  %3526 = vadd.xlane.f32.xlu0 %v3525
  %v3527 = vpop.xlane.xlu0 %3526
  %v3528 = vrcp.pop %v3527
  %v3529 = vmul.f32 %v3524, %v3528
  %v3531 = vsel %vm306, %v3529, 0
  %3533 = vmatprep.subr.mxu0 0.0
  %3534 = vmatpush1.msra.mxu0 %v3434
  %3535 = vmatprep.subr.mxu0 0.0
  %3536 = vmatpush1.msra.mxu0 0.0
  %3537 = vmatprep.subr.mxu0 0.0
  %3538 = vmatpush1.msra.mxu0 0.0
  %3539 = vmatprep.subr.mxu0 0.0
  %3540 = vmatpush1.msra.mxu0 0.0
  %3541 = vmatprep.subr.mxu0 0.0
  %3542 = vmatpush1.msra.mxu0 0.0
  %3543 = vmatprep.subr.mxu0 0.0
  %3544 = vmatpush1.msra.mxu0 0.0
  %3545 = vmatprep.subr.mxu0 0.0
  %3546 = vmatpush1.msra.mxu0 0.0
  %3547 = vmatprep.subr.mxu0 0.0
  %3548 = vmatpush1.msra.mxu0 0.0
  %3549 = vmatprep.subr.mxu0 0.0
  %3550 = vmatpush1.msra.mxu0 0.0
  %3551 = vmatprep.subr.mxu0 0.0
  %3552 = vmatpush1.msra.mxu0 0.0
  %3553 = vmatprep.subr.mxu0 0.0
  %3554 = vmatpush1.msra.mxu0 0.0
  %3555 = vmatprep.subr.mxu0 0.0
  %3556 = vmatpush1.msra.mxu0 0.0
  %3557 = vmatprep.subr.mxu0 0.0
  %3558 = vmatpush1.msra.mxu0 0.0
  %3559 = vmatprep.subr.mxu0 0.0
  %3560 = vmatpush1.msra.mxu0 0.0
  %3561 = vmatprep.subr.mxu0 0.0
  %3562 = vmatpush1.msra.mxu0 0.0
  %3563 = vmatprep.subr.mxu0 0.0
  %3564 = vmatpush1.msra.mxu0 0.0
  %3565 = vmatprep.subr.mxu0 0.0
  %3566 = vmatpush1.msra.mxu0 0.0
  %3567 = vmatprep.subr.mxu0 0.0
  %3568 = vmatpush1.msra.mxu0 0.0
  %3569 = vmatprep.subr.mxu0 0.0
  %3570 = vmatpush1.msra.mxu0 0.0
  %3571 = vmatprep.subr.mxu0 0.0
  %3572 = vmatpush1.msra.mxu0 0.0
  %3573 = vmatprep.subr.mxu0 0.0
  %3574 = vmatpush1.msra.mxu0 0.0
  %3575 = vmatprep.subr.mxu0 0.0
  %3576 = vmatpush1.msra.mxu0 0.0
  %3577 = vmatprep.subr.mxu0 0.0
  %3578 = vmatpush1.msra.mxu0 0.0
  %3579 = vmatprep.subr.mxu0 0.0
  %3580 = vmatpush1.msra.mxu0 0.0
  %3581 = vmatprep.subr.mxu0 0.0
  %3582 = vmatpush1.msra.mxu0 0.0
  %3583 = vmatprep.subr.mxu0 0.0
  %3584 = vmatpush1.msra.mxu0 0.0
  %3585 = vmatprep.subr.mxu0 0.0
  %3586 = vmatpush1.msra.mxu0 0.0
  %3587 = vmatprep.subr.mxu0 0.0
  %3588 = vmatpush1.msra.mxu0 0.0
  %3589 = vmatprep.subr.mxu0 0.0
  %3590 = vmatpush1.msra.mxu0 0.0
  %3591 = vmatprep.subr.mxu0 0.0
  %3592 = vmatpush1.msra.mxu0 0.0
  %3593 = vmatprep.subr.mxu0 0.0
  %3594 = vmatpush1.msra.mxu0 0.0
  %3595 = vmatprep.subr.mxu0 0.0
  %3596 = vmatpush1.msra.mxu0 0.0
  %3597 = vmatprep.mubr.f32.mxu0 0.0
  %3598 = vmatmul.mubr.f32.gmra.mrb[0].mxu0 %v3531
  %v3599 = vpop.f32.mrb[0].mxu0
  %v3600 = vadd.f32 0.0, %v3599
  %v3601 = vpop.f32.mrb[0].mxu0
  %3602 = vdwg.mxu0
  %v3603 = vpack.c.bf16 %v3600, %v3600
  %v3606 = vunpack.c.l.b16 %v3323
  %v3607 = vunpack.c.l.b16 %v3324
  %v3608 = vpack.c.b16 %v3607, %v3606
  %v3611 = vsel %vm65, %v3603, 0
  %3613 = vmatprep.subr.bf16.mxu0 0
  %3614 = vmatpush1.bf16.msra.mxu0 %v3608
  %3615 = vmatprep.subr.bf16.mxu0 0
  %3616 = vmatpush1.bf16.msra.mxu0 0
  %3617 = vmatprep.subr.bf16.mxu0 0
  %3618 = vmatpush1.bf16.msra.mxu0 0
  %3619 = vmatprep.subr.bf16.mxu0 0
  %3620 = vmatpush1.bf16.msra.mxu0 0
  %3621 = vmatprep.subr.bf16.mxu0 0
  %3622 = vmatpush1.bf16.msra.mxu0 0
  %3623 = vmatprep.subr.bf16.mxu0 0
  %3624 = vmatpush1.bf16.msra.mxu0 0
  %3625 = vmatprep.subr.bf16.mxu0 0
  %3626 = vmatpush1.bf16.msra.mxu0 0
  %3627 = vmatprep.subr.bf16.mxu0 0
  %3628 = vmatpush1.bf16.msra.mxu0 0
  %3629 = vmatprep.subr.bf16.mxu0 0
  %3630 = vmatpush1.bf16.msra.mxu0 0
  %3631 = vmatprep.subr.bf16.mxu0 0
  %3632 = vmatpush1.bf16.msra.mxu0 0
  %3633 = vmatprep.subr.bf16.mxu0 0
  %3634 = vmatpush1.bf16.msra.mxu0 0
  %3635 = vmatprep.subr.bf16.mxu0 0
  %3636 = vmatpush1.bf16.msra.mxu0 0
  %3637 = vmatprep.subr.bf16.mxu0 0
  %3638 = vmatpush1.bf16.msra.mxu0 0
  %3639 = vmatprep.subr.bf16.mxu0 0
  %3640 = vmatpush1.bf16.msra.mxu0 0
  %3641 = vmatprep.subr.bf16.mxu0 0
  %3642 = vmatpush1.bf16.msra.mxu0 0
  %3643 = vmatprep.subr.bf16.mxu0 0
  %3644 = vmatpush1.bf16.msra.mxu0 0
  %3645 = vmatprep.mubr.bf16.mxu0 0
  %3646 = vmatmul.mubr.bf16.gmra.mrb[0].mxu0 %v3611
  %v3647 = vpop.f32.mrb[0].mxu0
  %v3648 = vadd.f32 0.0, %v3647
  %v3649 = vpop.f32.mrb[0].mxu0
  %v3650 = vpop.f32.mrb[0].mxu0
  %v3651 = vpop.f32.mrb[0].mxu0
  %3652 = vdwg.mxu0
  %v3653 = vadd.f32 %v3441, %v3648
  %3654 = vrot.lane.b32.xlu0 %v3432, 112
  %v3655 = vpop.permute.xlu0 %3654
  %3656 = vrot.lane.b32.xlu0 %v3432, 48
  %v3657 = vpop.permute.xlu0 %3656
  %v3658 = vsel %vm65, %v3655, 0
  %v3660 = vsel %vm65, %v3657, 0
  %3662 = vmatprep.subr.mxu0 0.0
  %3663 = vmatpush1.xpose.msra.mxu0 %v3660
  %3664 = vmatprep.subr.mxu0 0.0
  %3665 = vmatpush1.xpose.msra.mxu0 0.0
  %3666 = vmatprep.subr.mxu0 0.0
  %3667 = vmatpush1.xpose.msra.mxu0 0.0
  %3668 = vmatprep.subr.mxu0 0.0
  %3669 = vmatpush1.xpose.msra.mxu0 0.0
  %3670 = vmatprep.subr.mxu0 0.0
  %3671 = vmatpush1.xpose.msra.mxu0 0.0
  %3672 = vmatprep.subr.mxu0 0.0
  %3673 = vmatpush1.xpose.msra.mxu0 0.0
  %3674 = vmatprep.subr.mxu0 0.0
  %3675 = vmatpush1.xpose.msra.mxu0 0.0
  %3676 = vmatprep.subr.mxu0 0.0
  %3677 = vmatpush1.xpose.msra.mxu0 0.0
  %3678 = vmatprep.subr.mxu0 0.0
  %3679 = vmatpush1.xpose.msra.mxu0 0.0
  %3680 = vmatprep.subr.mxu0 0.0
  %3681 = vmatpush1.xpose.msra.mxu0 0.0
  %3682 = vmatprep.subr.mxu0 0.0
  %3683 = vmatpush1.xpose.msra.mxu0 0.0
  %3684 = vmatprep.subr.mxu0 0.0
  %3685 = vmatpush1.xpose.msra.mxu0 0.0
  %3686 = vmatprep.subr.mxu0 0.0
  %3687 = vmatpush1.xpose.msra.mxu0 0.0
  %3688 = vmatprep.subr.mxu0 0.0
  %3689 = vmatpush1.xpose.msra.mxu0 0.0
  %3690 = vmatprep.subr.mxu0 0.0
  %3691 = vmatpush1.xpose.msra.mxu0 0.0
  %3692 = vmatprep.subr.mxu0 0.0
  %3693 = vmatpush1.xpose.msra.mxu0 0.0
  %3694 = vmatprep.subr.mxu0 0.0
  %3695 = vmatpush1.xpose.msra.mxu0 0.0
  %3696 = vmatprep.subr.mxu0 0.0
  %3697 = vmatpush1.xpose.msra.mxu0 0.0
  %3698 = vmatprep.subr.mxu0 0.0
  %3699 = vmatpush1.xpose.msra.mxu0 0.0
  %3700 = vmatprep.subr.mxu0 0.0
  %3701 = vmatpush1.xpose.msra.mxu0 0.0
  %3702 = vmatprep.subr.mxu0 0.0
  %3703 = vmatpush1.xpose.msra.mxu0 0.0
  %3704 = vmatprep.subr.mxu0 0.0
  %3705 = vmatpush1.xpose.msra.mxu0 0.0
  %3706 = vmatprep.subr.mxu0 0.0
  %3707 = vmatpush1.xpose.msra.mxu0 0.0
  %3708 = vmatprep.subr.mxu0 0.0
  %3709 = vmatpush1.xpose.msra.mxu0 0.0
  %3710 = vmatprep.subr.mxu0 0.0
  %3711 = vmatpush1.xpose.msra.mxu0 0.0
  %3712 = vmatprep.subr.mxu0 0.0
  %3713 = vmatpush1.xpose.msra.mxu0 0.0
  %3714 = vmatprep.subr.mxu0 0.0
  %3715 = vmatpush1.xpose.msra.mxu0 0.0
  %3716 = vmatprep.subr.mxu0 0.0
  %3717 = vmatpush1.xpose.msra.mxu0 0.0
  %3718 = vmatprep.subr.mxu0 0.0
  %3719 = vmatpush1.xpose.msra.mxu0 0.0
  %3720 = vmatprep.subr.mxu0 0.0
  %3721 = vmatpush1.xpose.msra.mxu0 0.0
  %3722 = vmatprep.subr.mxu0 0.0
  %3723 = vmatpush1.xpose.msra.mxu0 0.0
  %3724 = vmatprep.subr.mxu0 0.0
  %3725 = vmatpush1.xpose.msra.mxu0 0.0
  %3726 = vmatprep.mubr.f32.mxu0 0.0
  %3727 = vmatmul.mubr.f32.gmra.mrb[0].mxu0 %v3658
  %v3728 = vpop.f32.mrb[0].mxu0
  %v3729 = vadd.f32 0.0, %v3728
  %v3730 = vpop.f32.mrb[0].mxu0
  %3731 = vdwg.mxu0
  %v3732 = vsel %vm306, %v3729, -inf
  %3733 = vmax.xlane.f32.xlu0 %v3732
  %v3734 = vpop.xlane.xlu0 %3733
  %v3735 = vsub.f32 %v3729, %v3734
  %v3736 = vmul.f32 %v3735, 1.442695
  %v3737 = vpow.pop %v3736
  %v3738 = vsel %vm306, %v3737, 0.0
  %3739 = vadd.xlane.f32.xlu0 %v3738
  %v3740 = vpop.xlane.xlu0 %3739
  %v3741 = vrcp.pop %v3740
  %v3742 = vmul.f32 %v3737, %v3741
  %3744 = vrot.lane.b32.xlu0 %v3434, 112
  %v3745 = vpop.permute.xlu0 %3744
  %v3748 = vsel %vm306, %v3742, 0
  %3750 = vmatprep.subr.mxu0 0.0
  %3751 = vmatpush1.msra.mxu0 %v3745
  %3752 = vmatprep.subr.mxu0 0.0
  %3753 = vmatpush1.msra.mxu0 0.0
  %3754 = vmatprep.subr.mxu0 0.0
  %3755 = vmatpush1.msra.mxu0 0.0
  %3756 = vmatprep.subr.mxu0 0.0
  %3757 = vmatpush1.msra.mxu0 0.0
  %3758 = vmatprep.subr.mxu0 0.0
  %3759 = vmatpush1.msra.mxu0 0.0
  %3760 = vmatprep.subr.mxu0 0.0
  %3761 = vmatpush1.msra.mxu0 0.0
  %3762 = vmatprep.subr.mxu0 0.0
  %3763 = vmatpush1.msra.mxu0 0.0
  %3764 = vmatprep.subr.mxu0 0.0
  %3765 = vmatpush1.msra.mxu0 0.0
  %3766 = vmatprep.subr.mxu0 0.0
  %3767 = vmatpush1.msra.mxu0 0.0
  %3768 = vmatprep.subr.mxu0 0.0
  %3769 = vmatpush1.msra.mxu0 0.0
  %3770 = vmatprep.subr.mxu0 0.0
  %3771 = vmatpush1.msra.mxu0 0.0
  %3772 = vmatprep.subr.mxu0 0.0
  %3773 = vmatpush1.msra.mxu0 0.0
  %3774 = vmatprep.subr.mxu0 0.0
  %3775 = vmatpush1.msra.mxu0 0.0
  %3776 = vmatprep.subr.mxu0 0.0
  %3777 = vmatpush1.msra.mxu0 0.0
  %3778 = vmatprep.subr.mxu0 0.0
  %3779 = vmatpush1.msra.mxu0 0.0
  %3780 = vmatprep.subr.mxu0 0.0
  %3781 = vmatpush1.msra.mxu0 0.0
  %3782 = vmatprep.subr.mxu0 0.0
  %3783 = vmatpush1.msra.mxu0 0.0
  %3784 = vmatprep.subr.mxu0 0.0
  %3785 = vmatpush1.msra.mxu0 0.0
  %3786 = vmatprep.subr.mxu0 0.0
  %3787 = vmatpush1.msra.mxu0 0.0
  %3788 = vmatprep.subr.mxu0 0.0
  %3789 = vmatpush1.msra.mxu0 0.0
  %3790 = vmatprep.subr.mxu0 0.0
  %3791 = vmatpush1.msra.mxu0 0.0
  %3792 = vmatprep.subr.mxu0 0.0
  %3793 = vmatpush1.msra.mxu0 0.0
  %3794 = vmatprep.subr.mxu0 0.0
  %3795 = vmatpush1.msra.mxu0 0.0
  %3796 = vmatprep.subr.mxu0 0.0
  %3797 = vmatpush1.msra.mxu0 0.0
  %3798 = vmatprep.subr.mxu0 0.0
  %3799 = vmatpush1.msra.mxu0 0.0
  %3800 = vmatprep.subr.mxu0 0.0
  %3801 = vmatpush1.msra.mxu0 0.0
  %3802 = vmatprep.subr.mxu0 0.0
  %3803 = vmatpush1.msra.mxu0 0.0
  %3804 = vmatprep.subr.mxu0 0.0
  %3805 = vmatpush1.msra.mxu0 0.0
  %3806 = vmatprep.subr.mxu0 0.0
  %3807 = vmatpush1.msra.mxu0 0.0
  %3808 = vmatprep.subr.mxu0 0.0
  %3809 = vmatpush1.msra.mxu0 0.0
  %3810 = vmatprep.subr.mxu0 0.0
  %3811 = vmatpush1.msra.mxu0 0.0
  %3812 = vmatprep.subr.mxu0 0.0
  %3813 = vmatpush1.msra.mxu0 0.0
  %3814 = vmatprep.mubr.f32.mxu0 0.0
  %3815 = vmatmul.mubr.f32.gmra.mrb[0].mxu0 %v3748
  %v3816 = vpop.f32.mrb[0].mxu0
  %v3817 = vadd.f32 0.0, %v3816
  %v3818 = vpop.f32.mrb[0].mxu0
  %3819 = vdwg.mxu0
  %v3820 = vpack.c.bf16 %v3817, %v3817
  %v3823 = vunpack.c.l.b16 %v3325
  %v3824 = vunpack.c.l.b16 %v3326
  %v3825 = vpack.c.b16 %v3824, %v3823
  %v3828 = vsel %vm65, %v3820, 0
  %3830 = vmatprep.subr.bf16.mxu0 0
  %3831 = vmatpush1.bf16.msra.mxu0 %v3825
  %3832 = vmatprep.subr.bf16.mxu0 0
  %3833 = vmatpush1.bf16.msra.mxu0 0
  %3834 = vmatprep.subr.bf16.mxu0 0
  %3835 = vmatpush1.bf16.msra.mxu0 0
  %3836 = vmatprep.subr.bf16.mxu0 0
  %3837 = vmatpush1.bf16.msra.mxu0 0
  %3838 = vmatprep.subr.bf16.mxu0 0
  %3839 = vmatpush1.bf16.msra.mxu0 0
  %3840 = vmatprep.subr.bf16.mxu0 0
  %3841 = vmatpush1.bf16.msra.mxu0 0
  %3842 = vmatprep.subr.bf16.mxu0 0
  %3843 = vmatpush1.bf16.msra.mxu0 0
  %3844 = vmatprep.subr.bf16.mxu0 0
  %3845 = vmatpush1.bf16.msra.mxu0 0
  %3846 = vmatprep.subr.bf16.mxu0 0
  %3847 = vmatpush1.bf16.msra.mxu0 0
  %3848 = vmatprep.subr.bf16.mxu0 0
  %3849 = vmatpush1.bf16.msra.mxu0 0
  %3850 = vmatprep.subr.bf16.mxu0 0
  %3851 = vmatpush1.bf16.msra.mxu0 0
  %3852 = vmatprep.subr.bf16.mxu0 0
  %3853 = vmatpush1.bf16.msra.mxu0 0
  %3854 = vmatprep.subr.bf16.mxu0 0
  %3855 = vmatpush1.bf16.msra.mxu0 0
  %3856 = vmatprep.subr.bf16.mxu0 0
  %3857 = vmatpush1.bf16.msra.mxu0 0
  %3858 = vmatprep.subr.bf16.mxu0 0
  %3859 = vmatpush1.bf16.msra.mxu0 0
  %3860 = vmatprep.subr.bf16.mxu0 0
  %3861 = vmatpush1.bf16.msra.mxu0 0
  %3862 = vmatprep.mubr.bf16.mxu0 0
  %3863 = vmatmul.mubr.bf16.gmra.mrb[0].mxu0 %v3828
  %v3864 = vpop.f32.mrb[0].mxu0
  %v3865 = vadd.f32 0.0, %v3864
  %v3866 = vpop.f32.mrb[0].mxu0
  %v3867 = vpop.f32.mrb[0].mxu0
  %v3868 = vpop.f32.mrb[0].mxu0
  %3869 = vdwg.mxu0
  %v3870 = vadd.f32 %v3653, %v3865
  %3871 = vrot.lane.b32.xlu0 %v3432, 96
  %v3872 = vpop.permute.xlu0 %3871
  %3873 = vrot.lane.b32.xlu0 %v3432, 32
  %v3874 = vpop.permute.xlu0 %3873
  %v3875 = vsel %vm65, %v3872, 0
  %v3877 = vsel %vm65, %v3874, 0
  %3879 = vmatprep.subr.mxu0 0.0
  %3880 = vmatpush1.xpose.msra.mxu0 %v3877
  %3881 = vmatprep.subr.mxu0 0.0
  %3882 = vmatpush1.xpose.msra.mxu0 0.0
  %3883 = vmatprep.subr.mxu0 0.0
  %3884 = vmatpush1.xpose.msra.mxu0 0.0
  %3885 = vmatprep.subr.mxu0 0.0
  %3886 = vmatpush1.xpose.msra.mxu0 0.0
  %3887 = vmatprep.subr.mxu0 0.0
  %3888 = vmatpush1.xpose.msra.mxu0 0.0
  %3889 = vmatprep.subr.mxu0 0.0
  %3890 = vmatpush1.xpose.msra.mxu0 0.0
  %3891 = vmatprep.subr.mxu0 0.0
  %3892 = vmatpush1.xpose.msra.mxu0 0.0
  %3893 = vmatprep.subr.mxu0 0.0
  %3894 = vmatpush1.xpose.msra.mxu0 0.0
  %3895 = vmatprep.subr.mxu0 0.0
  %3896 = vmatpush1.xpose.msra.mxu0 0.0
  %3897 = vmatprep.subr.mxu0 0.0
  %3898 = vmatpush1.xpose.msra.mxu0 0.0
  %3899 = vmatprep.subr.mxu0 0.0
  %3900 = vmatpush1.xpose.msra.mxu0 0.0
  %3901 = vmatprep.subr.mxu0 0.0
  %3902 = vmatpush1.xpose.msra.mxu0 0.0
  %3903 = vmatprep.subr.mxu0 0.0
  %3904 = vmatpush1.xpose.msra.mxu0 0.0
  %3905 = vmatprep.subr.mxu0 0.0
  %3906 = vmatpush1.xpose.msra.mxu0 0.0
  %3907 = vmatprep.subr.mxu0 0.0
  %3908 = vmatpush1.xpose.msra.mxu0 0.0
  %3909 = vmatprep.subr.mxu0 0.0
  %3910 = vmatpush1.xpose.msra.mxu0 0.0
  %3911 = vmatprep.subr.mxu0 0.0
  %3912 = vmatpush1.xpose.msra.mxu0 0.0
  %3913 = vmatprep.subr.mxu0 0.0
  %3914 = vmatpush1.xpose.msra.mxu0 0.0
  %3915 = vmatprep.subr.mxu0 0.0
  %3916 = vmatpush1.xpose.msra.mxu0 0.0
  %3917 = vmatprep.subr.mxu0 0.0
  %3918 = vmatpush1.xpose.msra.mxu0 0.0
  %3919 = vmatprep.subr.mxu0 0.0
  %3920 = vmatpush1.xpose.msra.mxu0 0.0
  %3921 = vmatprep.subr.mxu0 0.0
  %3922 = vmatpush1.xpose.msra.mxu0 0.0
  %3923 = vmatprep.subr.mxu0 0.0
  %3924 = vmatpush1.xpose.msra.mxu0 0.0
  %3925 = vmatprep.subr.mxu0 0.0
  %3926 = vmatpush1.xpose.msra.mxu0 0.0
  %3927 = vmatprep.subr.mxu0 0.0
  %3928 = vmatpush1.xpose.msra.mxu0 0.0
  %3929 = vmatprep.subr.mxu0 0.0
  %3930 = vmatpush1.xpose.msra.mxu0 0.0
  %3931 = vmatprep.subr.mxu0 0.0
  %3932 = vmatpush1.xpose.msra.mxu0 0.0
  %3933 = vmatprep.subr.mxu0 0.0
  %3934 = vmatpush1.xpose.msra.mxu0 0.0
  %3935 = vmatprep.subr.mxu0 0.0
  %3936 = vmatpush1.xpose.msra.mxu0 0.0
  %3937 = vmatprep.subr.mxu0 0.0
  %3938 = vmatpush1.xpose.msra.mxu0 0.0
  %3939 = vmatprep.subr.mxu0 0.0
  %3940 = vmatpush1.xpose.msra.mxu0 0.0
  %3941 = vmatprep.subr.mxu0 0.0
  %3942 = vmatpush1.xpose.msra.mxu0 0.0
  %3943 = vmatprep.mubr.f32.mxu0 0.0
  %3944 = vmatmul.mubr.f32.gmra.mrb[0].mxu0 %v3875
  %v3945 = vpop.f32.mrb[0].mxu0
  %v3946 = vadd.f32 0.0, %v3945
  %v3947 = vpop.f32.mrb[0].mxu0
  %3948 = vdwg.mxu0
  %v3949 = vsel %vm306, %v3946, -inf
  %3950 = vmax.xlane.f32.xlu0 %v3949
  %v3951 = vpop.xlane.xlu0 %3950
  %v3952 = vsub.f32 %v3946, %v3951
  %v3953 = vmul.f32 %v3952, 1.442695
  %v3954 = vpow.pop %v3953
  %v3955 = vsel %vm306, %v3954, 0.0
  %3956 = vadd.xlane.f32.xlu0 %v3955
  %v3957 = vpop.xlane.xlu0 %3956
  %v3958 = vrcp.pop %v3957
  %v3959 = vmul.f32 %v3954, %v3958
  %3960 = vrot.lane.b32.xlu0 %v3434, 96
  %v3961 = vpop.permute.xlu0 %3960
  %v3964 = vsel %vm306, %v3959, 0
  %3966 = vmatprep.subr.mxu0 0.0
  %3967 = vmatpush1.msra.mxu0 %v3961
  %3968 = vmatprep.subr.mxu0 0.0
  %3969 = vmatpush1.msra.mxu0 0.0
  %3970 = vmatprep.subr.mxu0 0.0
  %3971 = vmatpush1.msra.mxu0 0.0
  %3972 = vmatprep.subr.mxu0 0.0
  %3973 = vmatpush1.msra.mxu0 0.0
  %3974 = vmatprep.subr.mxu0 0.0
  %3975 = vmatpush1.msra.mxu0 0.0
  %3976 = vmatprep.subr.mxu0 0.0
  %3977 = vmatpush1.msra.mxu0 0.0
  %3978 = vmatprep.subr.mxu0 0.0
  %3979 = vmatpush1.msra.mxu0 0.0
  %3980 = vmatprep.subr.mxu0 0.0
  %3981 = vmatpush1.msra.mxu0 0.0
  %3982 = vmatprep.subr.mxu0 0.0
  %3983 = vmatpush1.msra.mxu0 0.0
  %3984 = vmatprep.subr.mxu0 0.0
  %3985 = vmatpush1.msra.mxu0 0.0
  %3986 = vmatprep.subr.mxu0 0.0
  %3987 = vmatpush1.msra.mxu0 0.0
  %3988 = vmatprep.subr.mxu0 0.0
  %3989 = vmatpush1.msra.mxu0 0.0
  %3990 = vmatprep.subr.mxu0 0.0
  %3991 = vmatpush1.msra.mxu0 0.0
  %3992 = vmatprep.subr.mxu0 0.0
  %3993 = vmatpush1.msra.mxu0 0.0
  %3994 = vmatprep.subr.mxu0 0.0
  %3995 = vmatpush1.msra.mxu0 0.0
  %3996 = vmatprep.subr.mxu0 0.0
  %3997 = vmatpush1.msra.mxu0 0.0
  %3998 = vmatprep.subr.mxu0 0.0
  %3999 = vmatpush1.msra.mxu0 0.0
  %4000 = vmatprep.subr.mxu0 0.0
  %4001 = vmatpush1.msra.mxu0 0.0
  %4002 = vmatprep.subr.mxu0 0.0
  %4003 = vmatpush1.msra.mxu0 0.0
  %4004 = vmatprep.subr.mxu0 0.0
  %4005 = vmatpush1.msra.mxu0 0.0
  %4006 = vmatprep.subr.mxu0 0.0
  %4007 = vmatpush1.msra.mxu0 0.0
  %4008 = vmatprep.subr.mxu0 0.0
  %4009 = vmatpush1.msra.mxu0 0.0
  %4010 = vmatprep.subr.mxu0 0.0
  %4011 = vmatpush1.msra.mxu0 0.0
  %4012 = vmatprep.subr.mxu0 0.0
  %4013 = vmatpush1.msra.mxu0 0.0
  %4014 = vmatprep.subr.mxu0 0.0
  %4015 = vmatpush1.msra.mxu0 0.0
  %4016 = vmatprep.subr.mxu0 0.0
  %4017 = vmatpush1.msra.mxu0 0.0
  %4018 = vmatprep.subr.mxu0 0.0
  %4019 = vmatpush1.msra.mxu0 0.0
  %4020 = vmatprep.subr.mxu0 0.0
  %4021 = vmatpush1.msra.mxu0 0.0
  %4022 = vmatprep.subr.mxu0 0.0
  %4023 = vmatpush1.msra.mxu0 0.0
  %4024 = vmatprep.subr.mxu0 0.0
  %4025 = vmatpush1.msra.mxu0 0.0
  %4026 = vmatprep.subr.mxu0 0.0
  %4027 = vmatpush1.msra.mxu0 0.0
  %4028 = vmatprep.subr.mxu0 0.0
  %4029 = vmatpush1.msra.mxu0 0.0
  %4030 = vmatprep.mubr.f32.mxu0 0.0
  %4031 = vmatmul.mubr.f32.gmra.mrb[0].mxu0 %v3964
  %v4032 = vpop.f32.mrb[0].mxu0
  %v4033 = vadd.f32 0.0, %v4032
  %v4034 = vpop.f32.mrb[0].mxu0
  %4035 = vdwg.mxu0
  %v4036 = vpack.c.bf16 %v4033, %v4033
  %v4039 = vunpack.c.l.b16 %v3327
  %v4040 = vunpack.c.l.b16 %v3328
  %v4041 = vpack.c.b16 %v4040, %v4039
  %v4044 = vsel %vm65, %v4036, 0
  %4046 = vmatprep.subr.bf16.mxu0 0
  %4047 = vmatpush1.bf16.msra.mxu0 %v4041
  %4048 = vmatprep.subr.bf16.mxu0 0
  %4049 = vmatpush1.bf16.msra.mxu0 0
  %4050 = vmatprep.subr.bf16.mxu0 0
  %4051 = vmatpush1.bf16.msra.mxu0 0
  %4052 = vmatprep.subr.bf16.mxu0 0
  %4053 = vmatpush1.bf16.msra.mxu0 0
  %4054 = vmatprep.subr.bf16.mxu0 0
  %4055 = vmatpush1.bf16.msra.mxu0 0
  %4056 = vmatprep.subr.bf16.mxu0 0
  %4057 = vmatpush1.bf16.msra.mxu0 0
  %4058 = vmatprep.subr.bf16.mxu0 0
  %4059 = vmatpush1.bf16.msra.mxu0 0
  %4060 = vmatprep.subr.bf16.mxu0 0
  %4061 = vmatpush1.bf16.msra.mxu0 0
  %4062 = vmatprep.subr.bf16.mxu0 0
  %4063 = vmatpush1.bf16.msra.mxu0 0
  %4064 = vmatprep.subr.bf16.mxu0 0
  %4065 = vmatpush1.bf16.msra.mxu0 0
  %4066 = vmatprep.subr.bf16.mxu0 0
  %4067 = vmatpush1.bf16.msra.mxu0 0
  %4068 = vmatprep.subr.bf16.mxu0 0
  %4069 = vmatpush1.bf16.msra.mxu0 0
  %4070 = vmatprep.subr.bf16.mxu0 0
  %4071 = vmatpush1.bf16.msra.mxu0 0
  %4072 = vmatprep.subr.bf16.mxu0 0
  %4073 = vmatpush1.bf16.msra.mxu0 0
  %4074 = vmatprep.subr.bf16.mxu0 0
  %4075 = vmatpush1.bf16.msra.mxu0 0
  %4076 = vmatprep.subr.bf16.mxu0 0
  %4077 = vmatpush1.bf16.msra.mxu0 0
  %4078 = vmatprep.mubr.bf16.mxu0 0
  %4079 = vmatmul.mubr.bf16.gmra.mrb[0].mxu0 %v4044
  %v4080 = vpop.f32.mrb[0].mxu0
  %v4081 = vadd.f32 0.0, %v4080
  %v4082 = vpop.f32.mrb[0].mxu0
  %v4083 = vpop.f32.mrb[0].mxu0
  %v4084 = vpop.f32.mrb[0].mxu0
  %4085 = vdwg.mxu0
  %v4086 = vadd.f32 %v3870, %v4081
  %4087 = vrot.lane.b32.xlu0 %v3432, 80
  %v4088 = vpop.permute.xlu0 %4087
  %4089 = vrot.lane.b32.xlu0 %v3432, 16
  %v4090 = vpop.permute.xlu0 %4089
  %v4091 = vsel %vm65, %v4088, 0
  %v4093 = vsel %vm65, %v4090, 0
  %4095 = vmatprep.subr.mxu0 0.0
  %4096 = vmatpush1.xpose.msra.mxu0 %v4093
  %4097 = vmatprep.subr.mxu0 0.0
  %4098 = vmatpush1.xpose.msra.mxu0 0.0
  %4099 = vmatprep.subr.mxu0 0.0
  %4100 = vmatpush1.xpose.msra.mxu0 0.0
  %4101 = vmatprep.subr.mxu0 0.0
  %4102 = vmatpush1.xpose.msra.mxu0 0.0
  %4103 = vmatprep.subr.mxu0 0.0
  %4104 = vmatpush1.xpose.msra.mxu0 0.0
  %4105 = vmatprep.subr.mxu0 0.0
  %4106 = vmatpush1.xpose.msra.mxu0 0.0
  %4107 = vmatprep.subr.mxu0 0.0
  %4108 = vmatpush1.xpose.msra.mxu0 0.0
  %4109 = vmatprep.subr.mxu0 0.0
  %4110 = vmatpush1.xpose.msra.mxu0 0.0
  %4111 = vmatprep.subr.mxu0 0.0
  %4112 = vmatpush1.xpose.msra.mxu0 0.0
  %4113 = vmatprep.subr.mxu0 0.0
  %4114 = vmatpush1.xpose.msra.mxu0 0.0
  %4115 = vmatprep.subr.mxu0 0.0
  %4116 = vmatpush1.xpose.msra.mxu0 0.0
  %4117 = vmatprep.subr.mxu0 0.0
  %4118 = vmatpush1.xpose.msra.mxu0 0.0
  %4119 = vmatprep.subr.mxu0 0.0
  %4120 = vmatpush1.xpose.msra.mxu0 0.0
  %4121 = vmatprep.subr.mxu0 0.0
  %4122 = vmatpush1.xpose.msra.mxu0 0.0
  %4123 = vmatprep.subr.mxu0 0.0
  %4124 = vmatpush1.xpose.msra.mxu0 0.0
  %4125 = vmatprep.subr.mxu0 0.0
  %4126 = vmatpush1.xpose.msra.mxu0 0.0
  %4127 = vmatprep.subr.mxu0 0.0
  %4128 = vmatpush1.xpose.msra.mxu0 0.0
  %4129 = vmatprep.subr.mxu0 0.0
  %4130 = vmatpush1.xpose.msra.mxu0 0.0
  %4131 = vmatprep.subr.mxu0 0.0
  %4132 = vmatpush1.xpose.msra.mxu0 0.0
  %4133 = vmatprep.subr.mxu0 0.0
  %4134 = vmatpush1.xpose.msra.mxu0 0.0
  %4135 = vmatprep.subr.mxu0 0.0
  %4136 = vmatpush1.xpose.msra.mxu0 0.0
  %4137 = vmatprep.subr.mxu0 0.0
  %4138 = vmatpush1.xpose.msra.mxu0 0.0
  %4139 = vmatprep.subr.mxu0 0.0
  %4140 = vmatpush1.xpose.msra.mxu0 0.0
  %4141 = vmatprep.subr.mxu0 0.0
  %4142 = vmatpush1.xpose.msra.mxu0 0.0
  %4143 = vmatprep.subr.mxu0 0.0
  %4144 = vmatpush1.xpose.msra.mxu0 0.0
  %4145 = vmatprep.subr.mxu0 0.0
  %4146 = vmatpush1.xpose.msra.mxu0 0.0
  %4147 = vmatprep.subr.mxu0 0.0
  %4148 = vmatpush1.xpose.msra.mxu0 0.0
  %4149 = vmatprep.subr.mxu0 0.0
  %4150 = vmatpush1.xpose.msra.mxu0 0.0
  %4151 = vmatprep.subr.mxu0 0.0
  %4152 = vmatpush1.xpose.msra.mxu0 0.0
  %4153 = vmatprep.subr.mxu0 0.0
  %4154 = vmatpush1.xpose.msra.mxu0 0.0
  %4155 = vmatprep.subr.mxu0 0.0
  %4156 = vmatpush1.xpose.msra.mxu0 0.0
  %4157 = vmatprep.subr.mxu0 0.0
  %4158 = vmatpush1.xpose.msra.mxu0 0.0
  %4159 = vmatprep.mubr.f32.mxu0 0.0
  %4160 = vmatmul.mubr.f32.gmra.mrb[0].mxu0 %v4091
  %v4161 = vpop.f32.mrb[0].mxu0
  %v4162 = vadd.f32 0.0, %v4161
  %v4163 = vpop.f32.mrb[0].mxu0
  %4164 = vdwg.mxu0
  %v4165 = vsel %vm306, %v4162, -inf
  %4166 = vmax.xlane.f32.xlu0 %v4165
  %v4167 = vpop.xlane.xlu0 %4166
  %v4168 = vsub.f32 %v4162, %v4167
  %v4169 = vmul.f32 %v4168, 1.442695
  %v4170 = vpow.pop %v4169
  %v4171 = vsel %vm306, %v4170, 0.0
  %4172 = vadd.xlane.f32.xlu0 %v4171
  %v4173 = vpop.xlane.xlu0 %4172
  %v4174 = vrcp.pop %v4173
  %v4175 = vmul.f32 %v4170, %v4174
  %4176 = vrot.lane.b32.xlu0 %v3434, 80
  %v4177 = vpop.permute.xlu0 %4176
  %v4180 = vsel %vm306, %v4175, 0
  %4182 = vmatprep.subr.mxu0 0.0
  %4183 = vmatpush1.msra.mxu0 %v4177
  %4184 = vmatprep.subr.mxu0 0.0
  %4185 = vmatpush1.msra.mxu0 0.0
  %4186 = vmatprep.subr.mxu0 0.0
  %4187 = vmatpush1.msra.mxu0 0.0
  %4188 = vmatprep.subr.mxu0 0.0
  %4189 = vmatpush1.msra.mxu0 0.0
  %4190 = vmatprep.subr.mxu0 0.0
  %4191 = vmatpush1.msra.mxu0 0.0
  %4192 = vmatprep.subr.mxu0 0.0
  %4193 = vmatpush1.msra.mxu0 0.0
  %4194 = vmatprep.subr.mxu0 0.0
  %4195 = vmatpush1.msra.mxu0 0.0
  %4196 = vmatprep.subr.mxu0 0.0
  %4197 = vmatpush1.msra.mxu0 0.0
  %4198 = vmatprep.subr.mxu0 0.0
  %4199 = vmatpush1.msra.mxu0 0.0
  %4200 = vmatprep.subr.mxu0 0.0
  %4201 = vmatpush1.msra.mxu0 0.0
  %4202 = vmatprep.subr.mxu0 0.0
  %4203 = vmatpush1.msra.mxu0 0.0
  %4204 = vmatprep.subr.mxu0 0.0
  %4205 = vmatpush1.msra.mxu0 0.0
  %4206 = vmatprep.subr.mxu0 0.0
  %4207 = vmatpush1.msra.mxu0 0.0
  %4208 = vmatprep.subr.mxu0 0.0
  %4209 = vmatpush1.msra.mxu0 0.0
  %4210 = vmatprep.subr.mxu0 0.0
  %4211 = vmatpush1.msra.mxu0 0.0
  %4212 = vmatprep.subr.mxu0 0.0
  %4213 = vmatpush1.msra.mxu0 0.0
  %4214 = vmatprep.subr.mxu0 0.0
  %4215 = vmatpush1.msra.mxu0 0.0
  %4216 = vmatprep.subr.mxu0 0.0
  %4217 = vmatpush1.msra.mxu0 0.0
  %4218 = vmatprep.subr.mxu0 0.0
  %4219 = vmatpush1.msra.mxu0 0.0
  %4220 = vmatprep.subr.mxu0 0.0
  %4221 = vmatpush1.msra.mxu0 0.0
  %4222 = vmatprep.subr.mxu0 0.0
  %4223 = vmatpush1.msra.mxu0 0.0
  %4224 = vmatprep.subr.mxu0 0.0
  %4225 = vmatpush1.msra.mxu0 0.0
  %4226 = vmatprep.subr.mxu0 0.0
  %4227 = vmatpush1.msra.mxu0 0.0
  %4228 = vmatprep.subr.mxu0 0.0
  %4229 = vmatpush1.msra.mxu0 0.0
  %4230 = vmatprep.subr.mxu0 0.0
  %4231 = vmatpush1.msra.mxu0 0.0
  %4232 = vmatprep.subr.mxu0 0.0
  %4233 = vmatpush1.msra.mxu0 0.0
  %4234 = vmatprep.subr.mxu0 0.0
  %4235 = vmatpush1.msra.mxu0 0.0
  %4236 = vmatprep.subr.mxu0 0.0
  %4237 = vmatpush1.msra.mxu0 0.0
  %4238 = vmatprep.subr.mxu0 0.0
  %4239 = vmatpush1.msra.mxu0 0.0
  %4240 = vmatprep.subr.mxu0 0.0
  %4241 = vmatpush1.msra.mxu0 0.0
  %4242 = vmatprep.subr.mxu0 0.0
  %4243 = vmatpush1.msra.mxu0 0.0
  %4244 = vmatprep.subr.mxu0 0.0
  %4245 = vmatpush1.msra.mxu0 0.0
  %4246 = vmatprep.mubr.f32.mxu0 0.0
  %4247 = vmatmul.mubr.f32.gmra.mrb[0].mxu0 %v4180
  %v4248 = vpop.f32.mrb[0].mxu0
  %v4249 = vadd.f32 0.0, %v4248
  %v4250 = vpop.f32.mrb[0].mxu0
  %4251 = vdwg.mxu0
  %v4252 = vpack.c.bf16 %v4249, %v4249
  %v4255 = vunpack.c.l.b16 %v3329
  %v4256 = vunpack.c.l.b16 %v3330
  %v4257 = vpack.c.b16 %v4256, %v4255
  %v4260 = vsel %vm65, %v4252, 0
  %4262 = vmatprep.subr.bf16.mxu0 0
  %4263 = vmatpush1.bf16.msra.mxu0 %v4257
  %4264 = vmatprep.subr.bf16.mxu0 0
  %4265 = vmatpush1.bf16.msra.mxu0 0
  %4266 = vmatprep.subr.bf16.mxu0 0
  %4267 = vmatpush1.bf16.msra.mxu0 0
  %4268 = vmatprep.subr.bf16.mxu0 0
  %4269 = vmatpush1.bf16.msra.mxu0 0
  %4270 = vmatprep.subr.bf16.mxu0 0
  %4271 = vmatpush1.bf16.msra.mxu0 0
  %4272 = vmatprep.subr.bf16.mxu0 0
  %4273 = vmatpush1.bf16.msra.mxu0 0
  %4274 = vmatprep.subr.bf16.mxu0 0
  %4275 = vmatpush1.bf16.msra.mxu0 0
  %4276 = vmatprep.subr.bf16.mxu0 0
  %4277 = vmatpush1.bf16.msra.mxu0 0
  %4278 = vmatprep.subr.bf16.mxu0 0
  %4279 = vmatpush1.bf16.msra.mxu0 0
  %4280 = vmatprep.subr.bf16.mxu0 0
  %4281 = vmatpush1.bf16.msra.mxu0 0
  %4282 = vmatprep.subr.bf16.mxu0 0
  %4283 = vmatpush1.bf16.msra.mxu0 0
  %4284 = vmatprep.subr.bf16.mxu0 0
  %4285 = vmatpush1.bf16.msra.mxu0 0
  %4286 = vmatprep.subr.bf16.mxu0 0
  %4287 = vmatpush1.bf16.msra.mxu0 0
  %4288 = vmatprep.subr.bf16.mxu0 0
  %4289 = vmatpush1.bf16.msra.mxu0 0
  %4290 = vmatprep.subr.bf16.mxu0 0
  %4291 = vmatpush1.bf16.msra.mxu0 0
  %4292 = vmatprep.subr.bf16.mxu0 0
  %4293 = vmatpush1.bf16.msra.mxu0 0
  %4294 = vmatprep.mubr.bf16.mxu0 0
  %4295 = vmatmul.mubr.bf16.gmra.mrb[0].mxu0 %v4260
  %v4296 = vpop.f32.mrb[0].mxu0
  %v4297 = vadd.f32 0.0, %v4296
  %v4298 = vpop.f32.mrb[0].mxu0
  %v4299 = vpop.f32.mrb[0].mxu0
  %v4300 = vpop.f32.mrb[0].mxu0
  %4301 = vdwg.mxu0
  %v4302 = vadd.f32 %v4086, %v4297
  %v4303 = vadd.f32 %v3319, %v4302
  %v4304 = vsel %vm180, %v4303, 0.0
  %4305 = vadd.xlane.f32.xlu0 %v4304
  %v4306 = vpop.xlane.xlu0 %4305
  %v4307 = vmul.f32 %v4306, %v1095
  %v4308 = vsub.f32 %v4303, %v4307
  %v4309 = vmul.f32 %v4308, %v4308
  %v4310 = vsel %vm180, %v4309, 0.0
  %4311 = vadd.xlane.f32.xlu0 %v4310
  %v4312 = vpop.xlane.xlu0 %4311
  %v4313 = vmul.f32 %v4312, %v1095
  %v4314 = vadd.f32 %v4313, 1e-05
  %v4315 = vrsqrt.pop %v4314
  %v4316 = vmul.f32 %v4308, %v4315
  %v4317 = vlaneseq
  %v4318 = vshrl.u32 %v4317, 7
  %v4319 = vsub.s32 1, %v4318
  %v4320 = vrot.slane %v3321, %v4319
  %v4321 = vmul.f32 %v4316, %v4320
  %v4322 = vlaneseq
  %v4323 = vshrl.u32 %v4322, 7
  %v4324 = vsub.s32 2, %v4323
  %v4325 = vrot.slane %v3321, %v4324
  %v4326 = vadd.f32 %v4321, %v4325
  %v4327 = vpack.c.bf16 %v4326, %v4326
  %s4328 = scalar_lea.vmem %s7, 512
  %v4329 = vld [vmem:[%s4328] sm:$0xff]
  %v4330 = vld [vmem:[%s4328 + $0x8] sm:$0xff]
  %v4331 = vld [vmem:[%s4328 + $0x10] sm:$0xff]
  %v4332 = vld [vmem:[%s4328 + $0x18] sm:$0xff]
  %v4333 = vld [vmem:[%s4328 + $0x20] sm:$0xff]
  %v4334 = vld [vmem:[%s4328 + $0x28] sm:$0xff]
  %v4335 = vld [vmem:[%s4328 + $0x30] sm:$0xff]
  %v4336 = vld [vmem:[%s4328 + $0x38] sm:$0xff]
  %v4337 = vld [vmem:[%s4328 + $0x40] sm:$0xff]
  %v4338 = vld [vmem:[%s4328 + $0x48] sm:$0xff]
  %v4339 = vld [vmem:[%s4328 + $0x50] sm:$0xff]
  %v4340 = vld [vmem:[%s4328 + $0x58] sm:$0xff]
  %v4341 = vld [vmem:[%s4328 + $0x60] sm:$0xff]
  %v4342 = vld [vmem:[%s4328 + $0x68] sm:$0xff]
  %v4343 = vld [vmem:[%s4328 + $0x70] sm:$0xff]
  %v4344 = vld [vmem:[%s4328 + $0x78] sm:$0xff]
  %v4345 = vld [vmem:[%s4328 + $0x80] sm:$0xff]
  %v4346 = vld [vmem:[%s4328 + $0x88] sm:$0xff]
  %v4347 = vld [vmem:[%s4328 + $0x90] sm:$0xff]
  %v4348 = vld [vmem:[%s4328 + $0x98] sm:$0xff]
  %v4349 = vld [vmem:[%s4328 + $0xa0] sm:$0xff]
  %v4350 = vld [vmem:[%s4328 + $0xa8] sm:$0xff]
  %v4351 = vld [vmem:[%s4328 + $0xb0] sm:$0xff]
  %v4352 = vld [vmem:[%s4328 + $0xb8] sm:$0xff]
  %v4353 = vld [vmem:[%s4328 + $0xc0] sm:$0xff]
  %v4354 = vld [vmem:[%s4328 + $0xc8] sm:$0xff]
  %v4355 = vld [vmem:[%s4328 + $0xd0] sm:$0xff]
  %v4356 = vld [vmem:[%s4328 + $0xd8] sm:$0xff]
  %v4357 = vld [vmem:[%s4328 + $0xe0] sm:$0xff]
  %v4358 = vld [vmem:[%s4328 + $0xe8] sm:$0xff]
  %v4359 = vld [vmem:[%s4328 + $0xf0] sm:$0xff]
  %v4360 = vld [vmem:[%s4328 + $0xf8] sm:$0xff]
  %v4361 = vld [vmem:[%s4328 + $0x100] sm:$0xff]
  %v4362 = vld [vmem:[%s4328 + $0x108] sm:$0xff]
  %v4363 = vld [vmem:[%s4328 + $0x110] sm:$0xff]
  %v4364 = vld [vmem:[%s4328 + $0x118] sm:$0xff]
  %v4365 = vld [vmem:[%s4328 + $0x120] sm:$0xff]
  %v4366 = vld [vmem:[%s4328 + $0x128] sm:$0xff]
  %v4367 = vld [vmem:[%s4328 + $0x130] sm:$0xff]
  %v4368 = vld [vmem:[%s4328 + $0x138] sm:$0xff]
  %v4369 = vld [vmem:[%s4328 + $0x140] sm:$0xff]
  %v4370 = vld [vmem:[%s4328 + $0x148] sm:$0xff]
  %v4371 = vld [vmem:[%s4328 + $0x150] sm:$0xff]
  %v4372 = vld [vmem:[%s4328 + $0x158] sm:$0xff]
  %v4373 = vld [vmem:[%s4328 + $0x160] sm:$0xff]
  %v4374 = vld [vmem:[%s4328 + $0x168] sm:$0xff]
  %v4375 = vld [vmem:[%s4328 + $0x170] sm:$0xff]
  %v4376 = vld [vmem:[%s4328 + $0x178] sm:$0xff]
  %v4377 = vld [vmem:[%s4328 + $0x180] sm:$0xff]
  %v4378 = vld [vmem:[%s4328 + $0x188] sm:$0xff]
  %v4379 = vld [vmem:[%s4328 + $0x190] sm:$0xff]
  %v4380 = vld [vmem:[%s4328 + $0x198] sm:$0xff]
  %v4381 = vld [vmem:[%s4328 + $0x1a0] sm:$0xff]
  %v4382 = vld [vmem:[%s4328 + $0x1a8] sm:$0xff]
  %v4383 = vld [vmem:[%s4328 + $0x1b0] sm:$0xff]
  %v4384 = vld [vmem:[%s4328 + $0x1b8] sm:$0xff]
  %v4385 = vld [vmem:[%s4328 + $0x1c0] sm:$0xff]
  %v4386 = vld [vmem:[%s4328 + $0x1c8] sm:$0xff]
  %v4387 = vld [vmem:[%s4328 + $0x1d0] sm:$0xff]
  %v4388 = vld [vmem:[%s4328 + $0x1d8] sm:$0xff]
  %v4389 = vld [vmem:[%s4328 + $0x1e0] sm:$0xff]
  %v4390 = vld [vmem:[%s4328 + $0x1e8] sm:$0xff]
  %v4391 = vld [vmem:[%s4328 + $0x1f0] sm:$0xff]
  %v4392 = vld [vmem:[%s4328 + $0x1f8] sm:$0xff]
  %s4393 = scalar_lea.vmem %s8, 16
  %v4394 = vld [vmem:[%s4393] sm:$0xff]
  %v4395 = vld [vmem:[%s4393 + $0x8] sm:$0xff]
  %v4398 = vlaneseq
  %v4399 = vshrl.u32 %v4398, 7
  %v4400 = vsub.s32 0, %v4399
  %v4401 = vrot.slane %v4394, %v4400
  %v4402 = vlaneseq
  %v4403 = vshrl.u32 %v4402, 7
  %v4404 = vsub.s32 1, %v4403
  %v4405 = vrot.slane %v4394, %v4404
  %v4406 = vlaneseq
  %v4407 = vshrl.u32 %v4406, 7
  %v4408 = vsub.s32 2, %v4407
  %v4409 = vrot.slane %v4394, %v4408
  %v4410 = vlaneseq
  %v4411 = vshrl.u32 %v4410, 7
  %v4412 = vsub.s32 3, %v4411
  %v4413 = vrot.slane %v4394, %v4412
  %v4414 = vlaneseq
  %v4415 = vshrl.u32 %v4414, 7
  %v4416 = vsub.s32 4, %v4415
  %v4417 = vrot.slane %v4394, %v4416
  %v4418 = vlaneseq
  %v4419 = vshrl.u32 %v4418, 7
  %v4420 = vsub.s32 5, %v4419
  %v4421 = vrot.slane %v4394, %v4420
  %v4422 = vlaneseq
  %v4423 = vshrl.u32 %v4422, 7
  %v4424 = vsub.s32 6, %v4423
  %v4425 = vrot.slane %v4394, %v4424
  %v4426 = vlaneseq
  %v4427 = vshrl.u32 %v4426, 7
  %v4428 = vsub.s32 7, %v4427
  %v4429 = vrot.slane %v4394, %v4428
  %v4430 = vlaneseq
  %v4431 = vshrl.u32 %v4430, 7
  %v4432 = vsub.s32 0, %v4431
  %v4433 = vrot.slane %v4395, %v4432
  %v4434 = vlaneseq
  %v4435 = vshrl.u32 %v4434, 7
  %v4436 = vsub.s32 1, %v4435
  %v4437 = vrot.slane %v4395, %v4436
  %v4438 = vlaneseq
  %v4439 = vshrl.u32 %v4438, 7
  %v4440 = vsub.s32 2, %v4439
  %v4441 = vrot.slane %v4395, %v4440
  %v4442 = vlaneseq
  %v4443 = vshrl.u32 %v4442, 7
  %v4444 = vsub.s32 3, %v4443
  %v4445 = vrot.slane %v4395, %v4444
  %v4446 = vlaneseq
  %v4447 = vshrl.u32 %v4446, 7
  %v4448 = vsub.s32 4, %v4447
  %v4449 = vrot.slane %v4395, %v4448
  %v4450 = vlaneseq
  %v4451 = vshrl.u32 %v4450, 7
  %v4452 = vsub.s32 5, %v4451
  %v4453 = vrot.slane %v4395, %v4452
  %v4454 = vlaneseq
  %v4455 = vshrl.u32 %v4454, 7
  %v4456 = vsub.s32 6, %v4455
  %v4457 = vrot.slane %v4395, %v4456
  %v4458 = vlaneseq
  %v4459 = vshrl.u32 %v4458, 7
  %v4460 = vsub.s32 7, %v4459
  %v4461 = vrot.slane %v4395, %v4460
  %v4542 = vunpack.c.l.b16 %v4329
  %v4543 = vunpack.c.h.b16 %v4329
  %v4544 = vunpack.c.l.b16 %v4330
  %v4545 = vunpack.c.h.b16 %v4330
  %v4546 = vunpack.c.l.b16 %v4331
  %v4547 = vunpack.c.h.b16 %v4331
  %v4548 = vunpack.c.l.b16 %v4332
  %v4549 = vunpack.c.h.b16 %v4332
  %v4550 = vunpack.c.l.b16 %v4333
  %v4551 = vunpack.c.h.b16 %v4333
  %v4552 = vunpack.c.l.b16 %v4334
  %v4553 = vunpack.c.h.b16 %v4334
  %v4554 = vunpack.c.l.b16 %v4335
  %v4555 = vunpack.c.h.b16 %v4335
  %v4556 = vunpack.c.l.b16 %v4336
  %v4557 = vunpack.c.h.b16 %v4336
  %v4558 = vunpack.c.l.b16 %v4337
  %v4559 = vunpack.c.h.b16 %v4337
  %v4560 = vunpack.c.l.b16 %v4338
  %v4561 = vunpack.c.h.b16 %v4338
  %v4562 = vunpack.c.l.b16 %v4339
  %v4563 = vunpack.c.h.b16 %v4339
  %v4564 = vunpack.c.l.b16 %v4340
  %v4565 = vunpack.c.h.b16 %v4340
  %v4566 = vunpack.c.l.b16 %v4341
  %v4567 = vunpack.c.h.b16 %v4341
  %v4568 = vunpack.c.l.b16 %v4342
  %v4569 = vunpack.c.h.b16 %v4342
  %v4570 = vunpack.c.l.b16 %v4343
  %v4571 = vunpack.c.h.b16 %v4343
  %v4572 = vunpack.c.l.b16 %v4344
  %v4573 = vunpack.c.h.b16 %v4344
  %v4574 = vunpack.c.l.b16 %v4345
  %v4575 = vunpack.c.h.b16 %v4345
  %v4576 = vunpack.c.l.b16 %v4346
  %v4577 = vunpack.c.h.b16 %v4346
  %v4578 = vunpack.c.l.b16 %v4347
  %v4579 = vunpack.c.h.b16 %v4347
  %v4580 = vunpack.c.l.b16 %v4348
  %v4581 = vunpack.c.h.b16 %v4348
  %v4582 = vunpack.c.l.b16 %v4349
  %v4583 = vunpack.c.h.b16 %v4349
  %v4584 = vunpack.c.l.b16 %v4350
  %v4585 = vunpack.c.h.b16 %v4350
  %v4586 = vunpack.c.l.b16 %v4351
  %v4587 = vunpack.c.h.b16 %v4351
  %v4588 = vunpack.c.l.b16 %v4352
  %v4589 = vunpack.c.h.b16 %v4352
  %v4590 = vunpack.c.l.b16 %v4353
  %v4591 = vunpack.c.h.b16 %v4353
  %v4592 = vunpack.c.l.b16 %v4354
  %v4593 = vunpack.c.h.b16 %v4354
  %v4594 = vunpack.c.l.b16 %v4355
  %v4595 = vunpack.c.h.b16 %v4355
  %v4596 = vunpack.c.l.b16 %v4356
  %v4597 = vunpack.c.h.b16 %v4356
  %v4598 = vunpack.c.l.b16 %v4357
  %v4599 = vunpack.c.h.b16 %v4357
  %v4600 = vunpack.c.l.b16 %v4358
  %v4601 = vunpack.c.h.b16 %v4358
  %v4602 = vunpack.c.l.b16 %v4359
  %v4603 = vunpack.c.h.b16 %v4359
  %v4604 = vunpack.c.l.b16 %v4360
  %v4605 = vunpack.c.h.b16 %v4360
  %v4606 = vunpack.c.l.b16 %v4361
  %v4607 = vunpack.c.h.b16 %v4361
  %v4608 = vunpack.c.l.b16 %v4362
  %v4609 = vunpack.c.h.b16 %v4362
  %v4610 = vunpack.c.l.b16 %v4363
  %v4611 = vunpack.c.h.b16 %v4363
  %v4612 = vunpack.c.l.b16 %v4364
  %v4613 = vunpack.c.h.b16 %v4364
  %v4614 = vunpack.c.l.b16 %v4365
  %v4615 = vunpack.c.h.b16 %v4365
  %v4616 = vunpack.c.l.b16 %v4366
  %v4617 = vunpack.c.h.b16 %v4366
  %v4618 = vunpack.c.l.b16 %v4367
  %v4619 = vunpack.c.h.b16 %v4367
  %v4620 = vunpack.c.l.b16 %v4368
  %v4621 = vunpack.c.h.b16 %v4368
  %v4622 = vunpack.c.l.b16 %v4369
  %v4623 = vunpack.c.h.b16 %v4369
  %v4624 = vunpack.c.l.b16 %v4370
  %v4625 = vunpack.c.h.b16 %v4370
  %v4626 = vunpack.c.l.b16 %v4371
  %v4627 = vunpack.c.h.b16 %v4371
  %v4628 = vunpack.c.l.b16 %v4372
  %v4629 = vunpack.c.h.b16 %v4372
  %v4630 = vunpack.c.l.b16 %v4373
  %v4631 = vunpack.c.h.b16 %v4373
  %v4632 = vunpack.c.l.b16 %v4374
  %v4633 = vunpack.c.h.b16 %v4374
  %v4634 = vunpack.c.l.b16 %v4375
  %v4635 = vunpack.c.h.b16 %v4375
  %v4636 = vunpack.c.l.b16 %v4376
  %v4637 = vunpack.c.h.b16 %v4376
  %v4638 = vunpack.c.l.b16 %v4377
  %v4639 = vunpack.c.h.b16 %v4377
  %v4640 = vunpack.c.l.b16 %v4378
  %v4641 = vunpack.c.h.b16 %v4378
  %v4642 = vunpack.c.l.b16 %v4379
  %v4643 = vunpack.c.h.b16 %v4379
  %v4644 = vunpack.c.l.b16 %v4380
  %v4645 = vunpack.c.h.b16 %v4380
  %v4646 = vunpack.c.l.b16 %v4381
  %v4647 = vunpack.c.h.b16 %v4381
  %v4648 = vunpack.c.l.b16 %v4382
  %v4649 = vunpack.c.h.b16 %v4382
  %v4650 = vunpack.c.l.b16 %v4383
  %v4651 = vunpack.c.h.b16 %v4383
  %v4652 = vunpack.c.l.b16 %v4384
  %v4653 = vunpack.c.h.b16 %v4384
  %v4654 = vunpack.c.l.b16 %v4385
  %v4655 = vunpack.c.h.b16 %v4385
  %v4656 = vunpack.c.l.b16 %v4386
  %v4657 = vunpack.c.h.b16 %v4386
  %v4658 = vunpack.c.l.b16 %v4387
  %v4659 = vunpack.c.h.b16 %v4387
  %v4660 = vunpack.c.l.b16 %v4388
  %v4661 = vunpack.c.h.b16 %v4388
  %v4662 = vunpack.c.l.b16 %v4389
  %v4663 = vunpack.c.h.b16 %v4389
  %v4664 = vunpack.c.l.b16 %v4390
  %v4665 = vunpack.c.h.b16 %v4390
  %v4666 = vunpack.c.l.b16 %v4391
  %v4667 = vunpack.c.h.b16 %v4391
  %v4668 = vunpack.c.l.b16 %v4392
  %v4669 = vunpack.c.h.b16 %v4392
  %v4670 = vpack.c.b16 %v4558, %v4542
  %v4671 = vpack.c.b16 %v4559, %v4543
  %v4672 = vpack.c.b16 %v4560, %v4544
  %v4673 = vpack.c.b16 %v4561, %v4545
  %v4674 = vpack.c.b16 %v4562, %v4546
  %v4675 = vpack.c.b16 %v4563, %v4547
  %v4676 = vpack.c.b16 %v4564, %v4548
  %v4677 = vpack.c.b16 %v4565, %v4549
  %v4678 = vpack.c.b16 %v4566, %v4550
  %v4679 = vpack.c.b16 %v4567, %v4551
  %v4680 = vpack.c.b16 %v4568, %v4552
  %v4681 = vpack.c.b16 %v4569, %v4553
  %v4682 = vpack.c.b16 %v4570, %v4554
  %v4683 = vpack.c.b16 %v4571, %v4555
  %v4684 = vpack.c.b16 %v4572, %v4556
  %v4685 = vpack.c.b16 %v4573, %v4557
  %v4686 = vpack.c.b16 %v4590, %v4574
  %v4687 = vpack.c.b16 %v4591, %v4575
  %v4688 = vpack.c.b16 %v4592, %v4576
  %v4689 = vpack.c.b16 %v4593, %v4577
  %v4690 = vpack.c.b16 %v4594, %v4578
  %v4691 = vpack.c.b16 %v4595, %v4579
  %v4692 = vpack.c.b16 %v4596, %v4580
  %v4693 = vpack.c.b16 %v4597, %v4581
  %v4694 = vpack.c.b16 %v4598, %v4582
  %v4695 = vpack.c.b16 %v4599, %v4583
  %v4696 = vpack.c.b16 %v4600, %v4584
  %v4697 = vpack.c.b16 %v4601, %v4585
  %v4698 = vpack.c.b16 %v4602, %v4586
  %v4699 = vpack.c.b16 %v4603, %v4587
  %v4700 = vpack.c.b16 %v4604, %v4588
  %v4701 = vpack.c.b16 %v4605, %v4589
  %v4702 = vpack.c.b16 %v4622, %v4606
  %v4703 = vpack.c.b16 %v4623, %v4607
  %v4704 = vpack.c.b16 %v4624, %v4608
  %v4705 = vpack.c.b16 %v4625, %v4609
  %v4706 = vpack.c.b16 %v4626, %v4610
  %v4707 = vpack.c.b16 %v4627, %v4611
  %v4708 = vpack.c.b16 %v4628, %v4612
  %v4709 = vpack.c.b16 %v4629, %v4613
  %v4710 = vpack.c.b16 %v4630, %v4614
  %v4711 = vpack.c.b16 %v4631, %v4615
  %v4712 = vpack.c.b16 %v4632, %v4616
  %v4713 = vpack.c.b16 %v4633, %v4617
  %v4714 = vpack.c.b16 %v4634, %v4618
  %v4715 = vpack.c.b16 %v4635, %v4619
  %v4716 = vpack.c.b16 %v4636, %v4620
  %v4717 = vpack.c.b16 %v4637, %v4621
  %v4718 = vpack.c.b16 %v4654, %v4638
  %v4719 = vpack.c.b16 %v4655, %v4639
  %v4720 = vpack.c.b16 %v4656, %v4640
  %v4721 = vpack.c.b16 %v4657, %v4641
  %v4722 = vpack.c.b16 %v4658, %v4642
  %v4723 = vpack.c.b16 %v4659, %v4643
  %v4724 = vpack.c.b16 %v4660, %v4644
  %v4725 = vpack.c.b16 %v4661, %v4645
  %v4726 = vpack.c.b16 %v4662, %v4646
  %v4727 = vpack.c.b16 %v4663, %v4647
  %v4728 = vpack.c.b16 %v4664, %v4648
  %v4729 = vpack.c.b16 %v4665, %v4649
  %v4730 = vpack.c.b16 %v4666, %v4650
  %v4731 = vpack.c.b16 %v4667, %v4651
  %v4732 = vpack.c.b16 %v4668, %v4652
  %v4733 = vpack.c.b16 %v4669, %v4653
  %v4799 = vsel %vm180, %v4327, 0
  %4801 = vmatprep.subr.bf16.mxu0 %v4671
  %4802 = vmatpush1.bf16.msra.mxu0 %v4670
  %4803 = vmatprep.subr.bf16.mxu0 %v4687
  %4804 = vmatpush1.bf16.msra.mxu0 %v4686
  %4805 = vmatprep.subr.bf16.mxu0 %v4703
  %4806 = vmatpush1.bf16.msra.mxu0 %v4702
  %4807 = vmatprep.subr.bf16.mxu0 %v4719
  %4808 = vmatpush1.bf16.msra.mxu0 %v4718
  %4809 = vmatprep.subr.bf16.mxu0 0
  %4810 = vmatpush1.bf16.msra.mxu0 0
  %4811 = vmatprep.subr.bf16.mxu0 0
  %4812 = vmatpush1.bf16.msra.mxu0 0
  %4813 = vmatprep.subr.bf16.mxu0 0
  %4814 = vmatpush1.bf16.msra.mxu0 0
  %4815 = vmatprep.subr.bf16.mxu0 0
  %4816 = vmatpush1.bf16.msra.mxu0 0
  %4817 = vmatprep.subr.bf16.mxu0 0
  %4818 = vmatpush1.bf16.msra.mxu0 0
  %4819 = vmatprep.subr.bf16.mxu0 0
  %4820 = vmatpush1.bf16.msra.mxu0 0
  %4821 = vmatprep.subr.bf16.mxu0 0
  %4822 = vmatpush1.bf16.msra.mxu0 0
  %4823 = vmatprep.subr.bf16.mxu0 0
  %4824 = vmatpush1.bf16.msra.mxu0 0
  %4825 = vmatprep.subr.bf16.mxu0 0
  %4826 = vmatpush1.bf16.msra.mxu0 0
  %4827 = vmatprep.subr.bf16.mxu0 0
  %4828 = vmatpush1.bf16.msra.mxu0 0
  %4829 = vmatprep.subr.bf16.mxu0 0
  %4830 = vmatpush1.bf16.msra.mxu0 0
  %4831 = vmatprep.subr.bf16.mxu0 0
  %4832 = vmatpush1.bf16.msra.mxu0 0
  %4833 = vmatprep.mubr.bf16.mxu0 0
  %4834 = vmatmul.mubr.bf16.gmra.mrb[0].mxu0 %v4799
  %v4835 = vpop.f32.mrb[0].mxu0
  %v4836 = vadd.f32 %v4401, %v4835
  %v4837 = vpop.f32.mrb[0].mxu0
  %v4838 = vadd.f32 %v4405, %v4837
  %v4839 = vpop.f32.mrb[0].mxu0
  %v4840 = vpop.f32.mrb[0].mxu0
  %4841 = vdwg.mxu0
  %4842 = vmatprep.subr.bf16.mxu0 %v4673
  %4843 = vmatpush1.bf16.msra.mxu0 %v4672
  %4844 = vmatprep.subr.bf16.mxu0 %v4689
  %4845 = vmatpush1.bf16.msra.mxu0 %v4688
  %4846 = vmatprep.subr.bf16.mxu0 %v4705
  %4847 = vmatpush1.bf16.msra.mxu0 %v4704
  %4848 = vmatprep.subr.bf16.mxu0 %v4721
  %4849 = vmatpush1.bf16.msra.mxu0 %v4720
  %4850 = vmatprep.subr.bf16.mxu0 0
  %4851 = vmatpush1.bf16.msra.mxu0 0
  %4852 = vmatprep.subr.bf16.mxu0 0
  %4853 = vmatpush1.bf16.msra.mxu0 0
  %4854 = vmatprep.subr.bf16.mxu0 0
  %4855 = vmatpush1.bf16.msra.mxu0 0
  %4856 = vmatprep.subr.bf16.mxu0 0
  %4857 = vmatpush1.bf16.msra.mxu0 0
  %4858 = vmatprep.subr.bf16.mxu0 0
  %4859 = vmatpush1.bf16.msra.mxu0 0
  %4860 = vmatprep.subr.bf16.mxu0 0
  %4861 = vmatpush1.bf16.msra.mxu0 0
  %4862 = vmatprep.subr.bf16.mxu0 0
  %4863 = vmatpush1.bf16.msra.mxu0 0
  %4864 = vmatprep.subr.bf16.mxu0 0
  %4865 = vmatpush1.bf16.msra.mxu0 0
  %4866 = vmatprep.subr.bf16.mxu0 0
  %4867 = vmatpush1.bf16.msra.mxu0 0
  %4868 = vmatprep.subr.bf16.mxu0 0
  %4869 = vmatpush1.bf16.msra.mxu0 0
  %4870 = vmatprep.subr.bf16.mxu0 0
  %4871 = vmatpush1.bf16.msra.mxu0 0
  %4872 = vmatprep.subr.bf16.mxu0 0
  %4873 = vmatpush1.bf16.msra.mxu0 0
  %4874 = vmatprep.mubr.bf16.mxu0 0
  %4875 = vmatmul.mubr.bf16.gmra.mrb[0].mxu0 %v4799
  %v4876 = vpop.f32.mrb[0].mxu0
  %v4877 = vadd.f32 %v4409, %v4876
  %v4878 = vpop.f32.mrb[0].mxu0
  %v4879 = vadd.f32 %v4413, %v4878
  %v4880 = vpop.f32.mrb[0].mxu0
  %v4881 = vpop.f32.mrb[0].mxu0
  %4882 = vdwg.mxu0
  %4883 = vmatprep.subr.bf16.mxu0 %v4675
  %4884 = vmatpush1.bf16.msra.mxu0 %v4674
  %4885 = vmatprep.subr.bf16.mxu0 %v4691
  %4886 = vmatpush1.bf16.msra.mxu0 %v4690
  %4887 = vmatprep.subr.bf16.mxu0 %v4707
  %4888 = vmatpush1.bf16.msra.mxu0 %v4706
  %4889 = vmatprep.subr.bf16.mxu0 %v4723
  %4890 = vmatpush1.bf16.msra.mxu0 %v4722
  %4891 = vmatprep.subr.bf16.mxu0 0
  %4892 = vmatpush1.bf16.msra.mxu0 0
  %4893 = vmatprep.subr.bf16.mxu0 0
  %4894 = vmatpush1.bf16.msra.mxu0 0
  %4895 = vmatprep.subr.bf16.mxu0 0
  %4896 = vmatpush1.bf16.msra.mxu0 0
  %4897 = vmatprep.subr.bf16.mxu0 0
  %4898 = vmatpush1.bf16.msra.mxu0 0
  %4899 = vmatprep.subr.bf16.mxu0 0
  %4900 = vmatpush1.bf16.msra.mxu0 0
  %4901 = vmatprep.subr.bf16.mxu0 0
  %4902 = vmatpush1.bf16.msra.mxu0 0
  %4903 = vmatprep.subr.bf16.mxu0 0
  %4904 = vmatpush1.bf16.msra.mxu0 0
  %4905 = vmatprep.subr.bf16.mxu0 0
  %4906 = vmatpush1.bf16.msra.mxu0 0
  %4907 = vmatprep.subr.bf16.mxu0 0
  %4908 = vmatpush1.bf16.msra.mxu0 0
  %4909 = vmatprep.subr.bf16.mxu0 0
  %4910 = vmatpush1.bf16.msra.mxu0 0
  %4911 = vmatprep.subr.bf16.mxu0 0
  %4912 = vmatpush1.bf16.msra.mxu0 0
  %4913 = vmatprep.subr.bf16.mxu0 0
  %4914 = vmatpush1.bf16.msra.mxu0 0
  %4915 = vmatprep.mubr.bf16.mxu0 0
  %4916 = vmatmul.mubr.bf16.gmra.mrb[0].mxu0 %v4799
  %v4917 = vpop.f32.mrb[0].mxu0
  %v4918 = vadd.f32 %v4417, %v4917
  %v4919 = vpop.f32.mrb[0].mxu0
  %v4920 = vadd.f32 %v4421, %v4919
  %v4921 = vpop.f32.mrb[0].mxu0
  %v4922 = vpop.f32.mrb[0].mxu0
  %4923 = vdwg.mxu0
  %4924 = vmatprep.subr.bf16.mxu0 %v4677
  %4925 = vmatpush1.bf16.msra.mxu0 %v4676
  %4926 = vmatprep.subr.bf16.mxu0 %v4693
  %4927 = vmatpush1.bf16.msra.mxu0 %v4692
  %4928 = vmatprep.subr.bf16.mxu0 %v4709
  %4929 = vmatpush1.bf16.msra.mxu0 %v4708
  %4930 = vmatprep.subr.bf16.mxu0 %v4725
  %4931 = vmatpush1.bf16.msra.mxu0 %v4724
  %4932 = vmatprep.subr.bf16.mxu0 0
  %4933 = vmatpush1.bf16.msra.mxu0 0
  %4934 = vmatprep.subr.bf16.mxu0 0
  %4935 = vmatpush1.bf16.msra.mxu0 0
  %4936 = vmatprep.subr.bf16.mxu0 0
  %4937 = vmatpush1.bf16.msra.mxu0 0
  %4938 = vmatprep.subr.bf16.mxu0 0
  %4939 = vmatpush1.bf16.msra.mxu0 0
  %4940 = vmatprep.subr.bf16.mxu0 0
  %4941 = vmatpush1.bf16.msra.mxu0 0
  %4942 = vmatprep.subr.bf16.mxu0 0
  %4943 = vmatpush1.bf16.msra.mxu0 0
  %4944 = vmatprep.subr.bf16.mxu0 0
  %4945 = vmatpush1.bf16.msra.mxu0 0
  %4946 = vmatprep.subr.bf16.mxu0 0
  %4947 = vmatpush1.bf16.msra.mxu0 0
  %4948 = vmatprep.subr.bf16.mxu0 0
  %4949 = vmatpush1.bf16.msra.mxu0 0
  %4950 = vmatprep.subr.bf16.mxu0 0
  %4951 = vmatpush1.bf16.msra.mxu0 0
  %4952 = vmatprep.subr.bf16.mxu0 0
  %4953 = vmatpush1.bf16.msra.mxu0 0
  %4954 = vmatprep.subr.bf16.mxu0 0
  %4955 = vmatpush1.bf16.msra.mxu0 0
  %4956 = vmatprep.mubr.bf16.mxu0 0
  %4957 = vmatmul.mubr.bf16.gmra.mrb[0].mxu0 %v4799
  %v4958 = vpop.f32.mrb[0].mxu0
  %v4959 = vadd.f32 %v4425, %v4958
  %v4960 = vpop.f32.mrb[0].mxu0
  %v4961 = vadd.f32 %v4429, %v4960
  %v4962 = vpop.f32.mrb[0].mxu0
  %v4963 = vpop.f32.mrb[0].mxu0
  %4964 = vdwg.mxu0
  %4965 = vmatprep.subr.bf16.mxu0 %v4679
  %4966 = vmatpush1.bf16.msra.mxu0 %v4678
  %4967 = vmatprep.subr.bf16.mxu0 %v4695
  %4968 = vmatpush1.bf16.msra.mxu0 %v4694
  %4969 = vmatprep.subr.bf16.mxu0 %v4711
  %4970 = vmatpush1.bf16.msra.mxu0 %v4710
  %4971 = vmatprep.subr.bf16.mxu0 %v4727
  %4972 = vmatpush1.bf16.msra.mxu0 %v4726
  %4973 = vmatprep.subr.bf16.mxu0 0
  %4974 = vmatpush1.bf16.msra.mxu0 0
  %4975 = vmatprep.subr.bf16.mxu0 0
  %4976 = vmatpush1.bf16.msra.mxu0 0
  %4977 = vmatprep.subr.bf16.mxu0 0
  %4978 = vmatpush1.bf16.msra.mxu0 0
  %4979 = vmatprep.subr.bf16.mxu0 0
  %4980 = vmatpush1.bf16.msra.mxu0 0
  %4981 = vmatprep.subr.bf16.mxu0 0
  %4982 = vmatpush1.bf16.msra.mxu0 0
  %4983 = vmatprep.subr.bf16.mxu0 0
  %4984 = vmatpush1.bf16.msra.mxu0 0
  %4985 = vmatprep.subr.bf16.mxu0 0
  %4986 = vmatpush1.bf16.msra.mxu0 0
  %4987 = vmatprep.subr.bf16.mxu0 0
  %4988 = vmatpush1.bf16.msra.mxu0 0
  %4989 = vmatprep.subr.bf16.mxu0 0
  %4990 = vmatpush1.bf16.msra.mxu0 0
  %4991 = vmatprep.subr.bf16.mxu0 0
  %4992 = vmatpush1.bf16.msra.mxu0 0
  %4993 = vmatprep.subr.bf16.mxu0 0
  %4994 = vmatpush1.bf16.msra.mxu0 0
  %4995 = vmatprep.subr.bf16.mxu0 0
  %4996 = vmatpush1.bf16.msra.mxu0 0
  %4997 = vmatprep.mubr.bf16.mxu0 0
  %4998 = vmatmul.mubr.bf16.gmra.mrb[0].mxu0 %v4799
  %v4999 = vpop.f32.mrb[0].mxu0
  %v5000 = vadd.f32 %v4433, %v4999
  %v5001 = vpop.f32.mrb[0].mxu0
  %v5002 = vadd.f32 %v4437, %v5001
  %v5003 = vpop.f32.mrb[0].mxu0
  %v5004 = vpop.f32.mrb[0].mxu0
  %5005 = vdwg.mxu0
  %5006 = vmatprep.subr.bf16.mxu0 %v4681
  %5007 = vmatpush1.bf16.msra.mxu0 %v4680
  %5008 = vmatprep.subr.bf16.mxu0 %v4697
  %5009 = vmatpush1.bf16.msra.mxu0 %v4696
  %5010 = vmatprep.subr.bf16.mxu0 %v4713
  %5011 = vmatpush1.bf16.msra.mxu0 %v4712
  %5012 = vmatprep.subr.bf16.mxu0 %v4729
  %5013 = vmatpush1.bf16.msra.mxu0 %v4728
  %5014 = vmatprep.subr.bf16.mxu0 0
  %5015 = vmatpush1.bf16.msra.mxu0 0
  %5016 = vmatprep.subr.bf16.mxu0 0
  %5017 = vmatpush1.bf16.msra.mxu0 0
  %5018 = vmatprep.subr.bf16.mxu0 0
  %5019 = vmatpush1.bf16.msra.mxu0 0
  %5020 = vmatprep.subr.bf16.mxu0 0
  %5021 = vmatpush1.bf16.msra.mxu0 0
  %5022 = vmatprep.subr.bf16.mxu0 0
  %5023 = vmatpush1.bf16.msra.mxu0 0
  %5024 = vmatprep.subr.bf16.mxu0 0
  %5025 = vmatpush1.bf16.msra.mxu0 0
  %5026 = vmatprep.subr.bf16.mxu0 0
  %5027 = vmatpush1.bf16.msra.mxu0 0
  %5028 = vmatprep.subr.bf16.mxu0 0
  %5029 = vmatpush1.bf16.msra.mxu0 0
  %5030 = vmatprep.subr.bf16.mxu0 0
  %5031 = vmatpush1.bf16.msra.mxu0 0
  %5032 = vmatprep.subr.bf16.mxu0 0
  %5033 = vmatpush1.bf16.msra.mxu0 0
  %5034 = vmatprep.subr.bf16.mxu0 0
  %5035 = vmatpush1.bf16.msra.mxu0 0
  %5036 = vmatprep.subr.bf16.mxu0 0
  %5037 = vmatpush1.bf16.msra.mxu0 0
  %5038 = vmatprep.mubr.bf16.mxu0 0
  %5039 = vmatmul.mubr.bf16.gmra.mrb[0].mxu0 %v4799
  %v5040 = vpop.f32.mrb[0].mxu0
  %v5041 = vadd.f32 %v4441, %v5040
  %v5042 = vpop.f32.mrb[0].mxu0
  %v5043 = vadd.f32 %v4445, %v5042
  %v5044 = vpop.f32.mrb[0].mxu0
  %v5045 = vpop.f32.mrb[0].mxu0
  %5046 = vdwg.mxu0
  %5047 = vmatprep.subr.bf16.mxu0 %v4683
  %5048 = vmatpush1.bf16.msra.mxu0 %v4682
  %5049 = vmatprep.subr.bf16.mxu0 %v4699
  %5050 = vmatpush1.bf16.msra.mxu0 %v4698
  %5051 = vmatprep.subr.bf16.mxu0 %v4715
  %5052 = vmatpush1.bf16.msra.mxu0 %v4714
  %5053 = vmatprep.subr.bf16.mxu0 %v4731
  %5054 = vmatpush1.bf16.msra.mxu0 %v4730
  %5055 = vmatprep.subr.bf16.mxu0 0
  %5056 = vmatpush1.bf16.msra.mxu0 0
  %5057 = vmatprep.subr.bf16.mxu0 0
  %5058 = vmatpush1.bf16.msra.mxu0 0
  %5059 = vmatprep.subr.bf16.mxu0 0
  %5060 = vmatpush1.bf16.msra.mxu0 0
  %5061 = vmatprep.subr.bf16.mxu0 0
  %5062 = vmatpush1.bf16.msra.mxu0 0
  %5063 = vmatprep.subr.bf16.mxu0 0
  %5064 = vmatpush1.bf16.msra.mxu0 0
  %5065 = vmatprep.subr.bf16.mxu0 0
  %5066 = vmatpush1.bf16.msra.mxu0 0
  %5067 = vmatprep.subr.bf16.mxu0 0
  %5068 = vmatpush1.bf16.msra.mxu0 0
  %5069 = vmatprep.subr.bf16.mxu0 0
  %5070 = vmatpush1.bf16.msra.mxu0 0
  %5071 = vmatprep.subr.bf16.mxu0 0
  %5072 = vmatpush1.bf16.msra.mxu0 0
  %5073 = vmatprep.subr.bf16.mxu0 0
  %5074 = vmatpush1.bf16.msra.mxu0 0
  %5075 = vmatprep.subr.bf16.mxu0 0
  %5076 = vmatpush1.bf16.msra.mxu0 0
  %5077 = vmatprep.subr.bf16.mxu0 0
  %5078 = vmatpush1.bf16.msra.mxu0 0
  %5079 = vmatprep.mubr.bf16.mxu0 0
  %5080 = vmatmul.mubr.bf16.gmra.mrb[0].mxu0 %v4799
  %v5081 = vpop.f32.mrb[0].mxu0
  %v5082 = vadd.f32 %v4449, %v5081
  %v5083 = vpop.f32.mrb[0].mxu0
  %v5084 = vadd.f32 %v4453, %v5083
  %v5085 = vpop.f32.mrb[0].mxu0
  %v5086 = vpop.f32.mrb[0].mxu0
  %5087 = vdwg.mxu0
  %5088 = vmatprep.subr.bf16.mxu0 %v4685
  %5089 = vmatpush1.bf16.msra.mxu0 %v4684
  %5090 = vmatprep.subr.bf16.mxu0 %v4701
  %5091 = vmatpush1.bf16.msra.mxu0 %v4700
  %5092 = vmatprep.subr.bf16.mxu0 %v4717
  %5093 = vmatpush1.bf16.msra.mxu0 %v4716
  %5094 = vmatprep.subr.bf16.mxu0 %v4733
  %5095 = vmatpush1.bf16.msra.mxu0 %v4732
  %5096 = vmatprep.subr.bf16.mxu0 0
  %5097 = vmatpush1.bf16.msra.mxu0 0
  %5098 = vmatprep.subr.bf16.mxu0 0
  %5099 = vmatpush1.bf16.msra.mxu0 0
  %5100 = vmatprep.subr.bf16.mxu0 0
  %5101 = vmatpush1.bf16.msra.mxu0 0
  %5102 = vmatprep.subr.bf16.mxu0 0
  %5103 = vmatpush1.bf16.msra.mxu0 0
  %5104 = vmatprep.subr.bf16.mxu0 0
  %5105 = vmatpush1.bf16.msra.mxu0 0
  %5106 = vmatprep.subr.bf16.mxu0 0
  %5107 = vmatpush1.bf16.msra.mxu0 0
  %5108 = vmatprep.subr.bf16.mxu0 0
  %5109 = vmatpush1.bf16.msra.mxu0 0
  %5110 = vmatprep.subr.bf16.mxu0 0
  %5111 = vmatpush1.bf16.msra.mxu0 0
  %5112 = vmatprep.subr.bf16.mxu0 0
  %5113 = vmatpush1.bf16.msra.mxu0 0
  %5114 = vmatprep.subr.bf16.mxu0 0
  %5115 = vmatpush1.bf16.msra.mxu0 0
  %5116 = vmatprep.subr.bf16.mxu0 0
  %5117 = vmatpush1.bf16.msra.mxu0 0
  %5118 = vmatprep.subr.bf16.mxu0 0
  %5119 = vmatpush1.bf16.msra.mxu0 0
  %5120 = vmatprep.mubr.bf16.mxu0 0
  %5121 = vmatmul.mubr.bf16.gmra.mrb[0].mxu0 %v4799
  %v5122 = vpop.f32.mrb[0].mxu0
  %v5123 = vadd.f32 %v4457, %v5122
  %v5124 = vpop.f32.mrb[0].mxu0
  %v5125 = vadd.f32 %v4461, %v5124
  %v5126 = vpop.f32.mrb[0].mxu0
  %v5127 = vpop.f32.mrb[0].mxu0
  %5128 = vdwg.mxu0
  %v5129 = vmax.f32 %v4836, 0.0
  %v5130 = vmax.f32 %v4838, 0.0
  %v5131 = vmax.f32 %v4877, 0.0
  %v5132 = vmax.f32 %v4879, 0.0
  %v5133 = vmax.f32 %v4918, 0.0
  %v5134 = vmax.f32 %v4920, 0.0
  %v5135 = vmax.f32 %v4959, 0.0
  %v5136 = vmax.f32 %v4961, 0.0
  %v5137 = vmax.f32 %v5000, 0.0
  %v5138 = vmax.f32 %v5002, 0.0
  %v5139 = vmax.f32 %v5041, 0.0
  %v5140 = vmax.f32 %v5043, 0.0
  %v5141 = vmax.f32 %v5082, 0.0
  %v5142 = vmax.f32 %v5084, 0.0
  %v5143 = vmax.f32 %v5123, 0.0
  %v5144 = vmax.f32 %v5125, 0.0
  %v5145 = vpack.c.bf16 %v5129, %v5129
  %v5146 = vpack.c.bf16 %v5130, %v5130
  %v5147 = vpack.c.bf16 %v5131, %v5131
  %v5148 = vpack.c.bf16 %v5132, %v5132
  %v5149 = vpack.c.bf16 %v5133, %v5133
  %v5150 = vpack.c.bf16 %v5134, %v5134
  %v5151 = vpack.c.bf16 %v5135, %v5135
  %v5152 = vpack.c.bf16 %v5136, %v5136
  %v5153 = vpack.c.bf16 %v5137, %v5137
  %v5154 = vpack.c.bf16 %v5138, %v5138
  %v5155 = vpack.c.bf16 %v5139, %v5139
  %v5156 = vpack.c.bf16 %v5140, %v5140
  %v5157 = vpack.c.bf16 %v5141, %v5141
  %v5158 = vpack.c.bf16 %v5142, %v5142
  %v5159 = vpack.c.bf16 %v5143, %v5143
  %v5160 = vpack.c.bf16 %v5144, %v5144
  %s5161 = scalar_lea.vmem %s9, 1024
  %v5162 = vld [vmem:[%s5161] sm:$0xf]
  %v5163 = vld [vmem:[%s5161 + $0x4] sm:$0xf]
  %v5164 = vld [vmem:[%s5161 + $0x8] sm:$0xf]
  %v5165 = vld [vmem:[%s5161 + $0xc] sm:$0xf]
  %v5166 = vld [vmem:[%s5161 + $0x10] sm:$0xf]
  %v5167 = vld [vmem:[%s5161 + $0x14] sm:$0xf]
  %v5168 = vld [vmem:[%s5161 + $0x18] sm:$0xf]
  %v5169 = vld [vmem:[%s5161 + $0x1c] sm:$0xf]
  %v5170 = vld [vmem:[%s5161 + $0x20] sm:$0xf]
  %v5171 = vld [vmem:[%s5161 + $0x24] sm:$0xf]
  %v5172 = vld [vmem:[%s5161 + $0x28] sm:$0xf]
  %v5173 = vld [vmem:[%s5161 + $0x2c] sm:$0xf]
  %v5174 = vld [vmem:[%s5161 + $0x30] sm:$0xf]
  %v5175 = vld [vmem:[%s5161 + $0x34] sm:$0xf]
  %v5176 = vld [vmem:[%s5161 + $0x38] sm:$0xf]
  %v5177 = vld [vmem:[%s5161 + $0x3c] sm:$0xf]
  %v5178 = vld [vmem:[%s5161 + $0x40] sm:$0xf]
  %v5179 = vld [vmem:[%s5161 + $0x44] sm:$0xf]
  %v5180 = vld [vmem:[%s5161 + $0x48] sm:$0xf]
  %v5181 = vld [vmem:[%s5161 + $0x4c] sm:$0xf]
  %v5182 = vld [vmem:[%s5161 + $0x50] sm:$0xf]
  %v5183 = vld [vmem:[%s5161 + $0x54] sm:$0xf]
  %v5184 = vld [vmem:[%s5161 + $0x58] sm:$0xf]
  %v5185 = vld [vmem:[%s5161 + $0x5c] sm:$0xf]
  %v5186 = vld [vmem:[%s5161 + $0x60] sm:$0xf]
  %v5187 = vld [vmem:[%s5161 + $0x64] sm:$0xf]
  %v5188 = vld [vmem:[%s5161 + $0x68] sm:$0xf]
  %v5189 = vld [vmem:[%s5161 + $0x6c] sm:$0xf]
  %v5190 = vld [vmem:[%s5161 + $0x70] sm:$0xf]
  %v5191 = vld [vmem:[%s5161 + $0x74] sm:$0xf]
  %v5192 = vld [vmem:[%s5161 + $0x78] sm:$0xf]
  %v5193 = vld [vmem:[%s5161 + $0x7c] sm:$0xf]
  %v5194 = vld [vmem:[%s5161 + $0x80] sm:$0xf]
  %v5195 = vld [vmem:[%s5161 + $0x84] sm:$0xf]
  %v5196 = vld [vmem:[%s5161 + $0x88] sm:$0xf]
  %v5197 = vld [vmem:[%s5161 + $0x8c] sm:$0xf]
  %v5198 = vld [vmem:[%s5161 + $0x90] sm:$0xf]
  %v5199 = vld [vmem:[%s5161 + $0x94] sm:$0xf]
  %v5200 = vld [vmem:[%s5161 + $0x98] sm:$0xf]
  %v5201 = vld [vmem:[%s5161 + $0x9c] sm:$0xf]
  %v5202 = vld [vmem:[%s5161 + $0xa0] sm:$0xf]
  %v5203 = vld [vmem:[%s5161 + $0xa4] sm:$0xf]
  %v5204 = vld [vmem:[%s5161 + $0xa8] sm:$0xf]
  %v5205 = vld [vmem:[%s5161 + $0xac] sm:$0xf]
  %v5206 = vld [vmem:[%s5161 + $0xb0] sm:$0xf]
  %v5207 = vld [vmem:[%s5161 + $0xb4] sm:$0xf]
  %v5208 = vld [vmem:[%s5161 + $0xb8] sm:$0xf]
  %v5209 = vld [vmem:[%s5161 + $0xbc] sm:$0xf]
  %v5210 = vld [vmem:[%s5161 + $0xc0] sm:$0xf]
  %v5211 = vld [vmem:[%s5161 + $0xc4] sm:$0xf]
  %v5212 = vld [vmem:[%s5161 + $0xc8] sm:$0xf]
  %v5213 = vld [vmem:[%s5161 + $0xcc] sm:$0xf]
  %v5214 = vld [vmem:[%s5161 + $0xd0] sm:$0xf]
  %v5215 = vld [vmem:[%s5161 + $0xd4] sm:$0xf]
  %v5216 = vld [vmem:[%s5161 + $0xd8] sm:$0xf]
  %v5217 = vld [vmem:[%s5161 + $0xdc] sm:$0xf]
  %v5218 = vld [vmem:[%s5161 + $0xe0] sm:$0xf]
  %v5219 = vld [vmem:[%s5161 + $0xe4] sm:$0xf]
  %v5220 = vld [vmem:[%s5161 + $0xe8] sm:$0xf]
  %v5221 = vld [vmem:[%s5161 + $0xec] sm:$0xf]
  %v5222 = vld [vmem:[%s5161 + $0xf0] sm:$0xf]
  %v5223 = vld [vmem:[%s5161 + $0xf4] sm:$0xf]
  %v5224 = vld [vmem:[%s5161 + $0xf8] sm:$0xf]
  %v5225 = vld [vmem:[%s5161 + $0xfc] sm:$0xf]
  %v5226 = vld [vmem:[%s5161 + $0x100] sm:$0xf]
  %v5227 = vld [vmem:[%s5161 + $0x104] sm:$0xf]
  %v5228 = vld [vmem:[%s5161 + $0x108] sm:$0xf]
  %v5229 = vld [vmem:[%s5161 + $0x10c] sm:$0xf]
  %v5230 = vld [vmem:[%s5161 + $0x110] sm:$0xf]
  %v5231 = vld [vmem:[%s5161 + $0x114] sm:$0xf]
  %v5232 = vld [vmem:[%s5161 + $0x118] sm:$0xf]
  %v5233 = vld [vmem:[%s5161 + $0x11c] sm:$0xf]
  %v5234 = vld [vmem:[%s5161 + $0x120] sm:$0xf]
  %v5235 = vld [vmem:[%s5161 + $0x124] sm:$0xf]
  %v5236 = vld [vmem:[%s5161 + $0x128] sm:$0xf]
  %v5237 = vld [vmem:[%s5161 + $0x12c] sm:$0xf]
  %v5238 = vld [vmem:[%s5161 + $0x130] sm:$0xf]
  %v5239 = vld [vmem:[%s5161 + $0x134] sm:$0xf]
  %v5240 = vld [vmem:[%s5161 + $0x138] sm:$0xf]
  %v5241 = vld [vmem:[%s5161 + $0x13c] sm:$0xf]
  %v5242 = vld [vmem:[%s5161 + $0x140] sm:$0xf]
  %v5243 = vld [vmem:[%s5161 + $0x144] sm:$0xf]
  %v5244 = vld [vmem:[%s5161 + $0x148] sm:$0xf]
  %v5245 = vld [vmem:[%s5161 + $0x14c] sm:$0xf]
  %v5246 = vld [vmem:[%s5161 + $0x150] sm:$0xf]
  %v5247 = vld [vmem:[%s5161 + $0x154] sm:$0xf]
  %v5248 = vld [vmem:[%s5161 + $0x158] sm:$0xf]
  %v5249 = vld [vmem:[%s5161 + $0x15c] sm:$0xf]
  %v5250 = vld [vmem:[%s5161 + $0x160] sm:$0xf]
  %v5251 = vld [vmem:[%s5161 + $0x164] sm:$0xf]
  %v5252 = vld [vmem:[%s5161 + $0x168] sm:$0xf]
  %v5253 = vld [vmem:[%s5161 + $0x16c] sm:$0xf]
  %v5254 = vld [vmem:[%s5161 + $0x170] sm:$0xf]
  %v5255 = vld [vmem:[%s5161 + $0x174] sm:$0xf]
  %v5256 = vld [vmem:[%s5161 + $0x178] sm:$0xf]
  %v5257 = vld [vmem:[%s5161 + $0x17c] sm:$0xf]
  %v5258 = vld [vmem:[%s5161 + $0x180] sm:$0xf]
  %v5259 = vld [vmem:[%s5161 + $0x184] sm:$0xf]
  %v5260 = vld [vmem:[%s5161 + $0x188] sm:$0xf]
  %v5261 = vld [vmem:[%s5161 + $0x18c] sm:$0xf]
  %v5262 = vld [vmem:[%s5161 + $0x190] sm:$0xf]
  %v5263 = vld [vmem:[%s5161 + $0x194] sm:$0xf]
  %v5264 = vld [vmem:[%s5161 + $0x198] sm:$0xf]
  %v5265 = vld [vmem:[%s5161 + $0x19c] sm:$0xf]
  %v5266 = vld [vmem:[%s5161 + $0x1a0] sm:$0xf]
  %v5267 = vld [vmem:[%s5161 + $0x1a4] sm:$0xf]
  %v5268 = vld [vmem:[%s5161 + $0x1a8] sm:$0xf]
  %v5269 = vld [vmem:[%s5161 + $0x1ac] sm:$0xf]
  %v5270 = vld [vmem:[%s5161 + $0x1b0] sm:$0xf]
  %v5271 = vld [vmem:[%s5161 + $0x1b4] sm:$0xf]
  %v5272 = vld [vmem:[%s5161 + $0x1b8] sm:$0xf]
  %v5273 = vld [vmem:[%s5161 + $0x1bc] sm:$0xf]
  %v5274 = vld [vmem:[%s5161 + $0x1c0] sm:$0xf]
  %v5275 = vld [vmem:[%s5161 + $0x1c4] sm:$0xf]
  %v5276 = vld [vmem:[%s5161 + $0x1c8] sm:$0xf]
  %v5277 = vld [vmem:[%s5161 + $0x1cc] sm:$0xf]
  %v5278 = vld [vmem:[%s5161 + $0x1d0] sm:$0xf]
  %v5279 = vld [vmem:[%s5161 + $0x1d4] sm:$0xf]
  %v5280 = vld [vmem:[%s5161 + $0x1d8] sm:$0xf]
  %v5281 = vld [vmem:[%s5161 + $0x1dc] sm:$0xf]
  %v5282 = vld [vmem:[%s5161 + $0x1e0] sm:$0xf]
  %v5283 = vld [vmem:[%s5161 + $0x1e4] sm:$0xf]
  %v5284 = vld [vmem:[%s5161 + $0x1e8] sm:$0xf]
  %v5285 = vld [vmem:[%s5161 + $0x1ec] sm:$0xf]
  %v5286 = vld [vmem:[%s5161 + $0x1f0] sm:$0xf]
  %v5287 = vld [vmem:[%s5161 + $0x1f4] sm:$0xf]
  %v5288 = vld [vmem:[%s5161 + $0x1f8] sm:$0xf]
  %v5289 = vld [vmem:[%s5161 + $0x1fc] sm:$0xf]
  %v5290 = vld [vmem:[%s5161 + $0x200] sm:$0xf]
  %v5291 = vld [vmem:[%s5161 + $0x204] sm:$0xf]
  %v5292 = vld [vmem:[%s5161 + $0x208] sm:$0xf]
  %v5293 = vld [vmem:[%s5161 + $0x20c] sm:$0xf]
  %v5294 = vld [vmem:[%s5161 + $0x210] sm:$0xf]
  %v5295 = vld [vmem:[%s5161 + $0x214] sm:$0xf]
  %v5296 = vld [vmem:[%s5161 + $0x218] sm:$0xf]
  %v5297 = vld [vmem:[%s5161 + $0x21c] sm:$0xf]
  %v5298 = vld [vmem:[%s5161 + $0x220] sm:$0xf]
  %v5299 = vld [vmem:[%s5161 + $0x224] sm:$0xf]
  %v5300 = vld [vmem:[%s5161 + $0x228] sm:$0xf]
  %v5301 = vld [vmem:[%s5161 + $0x22c] sm:$0xf]
  %v5302 = vld [vmem:[%s5161 + $0x230] sm:$0xf]
  %v5303 = vld [vmem:[%s5161 + $0x234] sm:$0xf]
  %v5304 = vld [vmem:[%s5161 + $0x238] sm:$0xf]
  %v5305 = vld [vmem:[%s5161 + $0x23c] sm:$0xf]
  %v5306 = vld [vmem:[%s5161 + $0x240] sm:$0xf]
  %v5307 = vld [vmem:[%s5161 + $0x244] sm:$0xf]
  %v5308 = vld [vmem:[%s5161 + $0x248] sm:$0xf]
  %v5309 = vld [vmem:[%s5161 + $0x24c] sm:$0xf]
  %v5310 = vld [vmem:[%s5161 + $0x250] sm:$0xf]
  %v5311 = vld [vmem:[%s5161 + $0x254] sm:$0xf]
  %v5312 = vld [vmem:[%s5161 + $0x258] sm:$0xf]
  %v5313 = vld [vmem:[%s5161 + $0x25c] sm:$0xf]
  %v5314 = vld [vmem:[%s5161 + $0x260] sm:$0xf]
  %v5315 = vld [vmem:[%s5161 + $0x264] sm:$0xf]
  %v5316 = vld [vmem:[%s5161 + $0x268] sm:$0xf]
  %v5317 = vld [vmem:[%s5161 + $0x26c] sm:$0xf]
  %v5318 = vld [vmem:[%s5161 + $0x270] sm:$0xf]
  %v5319 = vld [vmem:[%s5161 + $0x274] sm:$0xf]
  %v5320 = vld [vmem:[%s5161 + $0x278] sm:$0xf]
  %v5321 = vld [vmem:[%s5161 + $0x27c] sm:$0xf]
  %v5322 = vld [vmem:[%s5161 + $0x280] sm:$0xf]
  %v5323 = vld [vmem:[%s5161 + $0x284] sm:$0xf]
  %v5324 = vld [vmem:[%s5161 + $0x288] sm:$0xf]
  %v5325 = vld [vmem:[%s5161 + $0x28c] sm:$0xf]
  %v5326 = vld [vmem:[%s5161 + $0x290] sm:$0xf]
  %v5327 = vld [vmem:[%s5161 + $0x294] sm:$0xf]
  %v5328 = vld [vmem:[%s5161 + $0x298] sm:$0xf]
  %v5329 = vld [vmem:[%s5161 + $0x29c] sm:$0xf]
  %v5330 = vld [vmem:[%s5161 + $0x2a0] sm:$0xf]
  %v5331 = vld [vmem:[%s5161 + $0x2a4] sm:$0xf]
  %v5332 = vld [vmem:[%s5161 + $0x2a8] sm:$0xf]
  %v5333 = vld [vmem:[%s5161 + $0x2ac] sm:$0xf]
  %v5334 = vld [vmem:[%s5161 + $0x2b0] sm:$0xf]
  %v5335 = vld [vmem:[%s5161 + $0x2b4] sm:$0xf]
  %v5336 = vld [vmem:[%s5161 + $0x2b8] sm:$0xf]
  %v5337 = vld [vmem:[%s5161 + $0x2bc] sm:$0xf]
  %v5338 = vld [vmem:[%s5161 + $0x2c0] sm:$0xf]
  %v5339 = vld [vmem:[%s5161 + $0x2c4] sm:$0xf]
  %v5340 = vld [vmem:[%s5161 + $0x2c8] sm:$0xf]
  %v5341 = vld [vmem:[%s5161 + $0x2cc] sm:$0xf]
  %v5342 = vld [vmem:[%s5161 + $0x2d0] sm:$0xf]
  %v5343 = vld [vmem:[%s5161 + $0x2d4] sm:$0xf]
  %v5344 = vld [vmem:[%s5161 + $0x2d8] sm:$0xf]
  %v5345 = vld [vmem:[%s5161 + $0x2dc] sm:$0xf]
  %v5346 = vld [vmem:[%s5161 + $0x2e0] sm:$0xf]
  %v5347 = vld [vmem:[%s5161 + $0x2e4] sm:$0xf]
  %v5348 = vld [vmem:[%s5161 + $0x2e8] sm:$0xf]
  %v5349 = vld [vmem:[%s5161 + $0x2ec] sm:$0xf]
  %v5350 = vld [vmem:[%s5161 + $0x2f0] sm:$0xf]
  %v5351 = vld [vmem:[%s5161 + $0x2f4] sm:$0xf]
  %v5352 = vld [vmem:[%s5161 + $0x2f8] sm:$0xf]
  %v5353 = vld [vmem:[%s5161 + $0x2fc] sm:$0xf]
  %v5354 = vld [vmem:[%s5161 + $0x300] sm:$0xf]
  %v5355 = vld [vmem:[%s5161 + $0x304] sm:$0xf]
  %v5356 = vld [vmem:[%s5161 + $0x308] sm:$0xf]
  %v5357 = vld [vmem:[%s5161 + $0x30c] sm:$0xf]
  %v5358 = vld [vmem:[%s5161 + $0x310] sm:$0xf]
  %v5359 = vld [vmem:[%s5161 + $0x314] sm:$0xf]
  %v5360 = vld [vmem:[%s5161 + $0x318] sm:$0xf]
  %v5361 = vld [vmem:[%s5161 + $0x31c] sm:$0xf]
  %v5362 = vld [vmem:[%s5161 + $0x320] sm:$0xf]
  %v5363 = vld [vmem:[%s5161 + $0x324] sm:$0xf]
  %v5364 = vld [vmem:[%s5161 + $0x328] sm:$0xf]
  %v5365 = vld [vmem:[%s5161 + $0x32c] sm:$0xf]
  %v5366 = vld [vmem:[%s5161 + $0x330] sm:$0xf]
  %v5367 = vld [vmem:[%s5161 + $0x334] sm:$0xf]
  %v5368 = vld [vmem:[%s5161 + $0x338] sm:$0xf]
  %v5369 = vld [vmem:[%s5161 + $0x33c] sm:$0xf]
  %v5370 = vld [vmem:[%s5161 + $0x340] sm:$0xf]
  %v5371 = vld [vmem:[%s5161 + $0x344] sm:$0xf]
  %v5372 = vld [vmem:[%s5161 + $0x348] sm:$0xf]
  %v5373 = vld [vmem:[%s5161 + $0x34c] sm:$0xf]
  %v5374 = vld [vmem:[%s5161 + $0x350] sm:$0xf]
  %v5375 = vld [vmem:[%s5161 + $0x354] sm:$0xf]
  %v5376 = vld [vmem:[%s5161 + $0x358] sm:$0xf]
  %v5377 = vld [vmem:[%s5161 + $0x35c] sm:$0xf]
  %v5378 = vld [vmem:[%s5161 + $0x360] sm:$0xf]
  %v5379 = vld [vmem:[%s5161 + $0x364] sm:$0xf]
  %v5380 = vld [vmem:[%s5161 + $0x368] sm:$0xf]
  %v5381 = vld [vmem:[%s5161 + $0x36c] sm:$0xf]
  %v5382 = vld [vmem:[%s5161 + $0x370] sm:$0xf]
  %v5383 = vld [vmem:[%s5161 + $0x374] sm:$0xf]
  %v5384 = vld [vmem:[%s5161 + $0x378] sm:$0xf]
  %v5385 = vld [vmem:[%s5161 + $0x37c] sm:$0xf]
  %v5386 = vld [vmem:[%s5161 + $0x380] sm:$0xf]
  %v5387 = vld [vmem:[%s5161 + $0x384] sm:$0xf]
  %v5388 = vld [vmem:[%s5161 + $0x388] sm:$0xf]
  %v5389 = vld [vmem:[%s5161 + $0x38c] sm:$0xf]
  %v5390 = vld [vmem:[%s5161 + $0x390] sm:$0xf]
  %v5391 = vld [vmem:[%s5161 + $0x394] sm:$0xf]
  %v5392 = vld [vmem:[%s5161 + $0x398] sm:$0xf]
  %v5393 = vld [vmem:[%s5161 + $0x39c] sm:$0xf]
  %v5394 = vld [vmem:[%s5161 + $0x3a0] sm:$0xf]
  %v5395 = vld [vmem:[%s5161 + $0x3a4] sm:$0xf]
  %v5396 = vld [vmem:[%s5161 + $0x3a8] sm:$0xf]
  %v5397 = vld [vmem:[%s5161 + $0x3ac] sm:$0xf]
  %v5398 = vld [vmem:[%s5161 + $0x3b0] sm:$0xf]
  %v5399 = vld [vmem:[%s5161 + $0x3b4] sm:$0xf]
  %v5400 = vld [vmem:[%s5161 + $0x3b8] sm:$0xf]
  %v5401 = vld [vmem:[%s5161 + $0x3bc] sm:$0xf]
  %v5402 = vld [vmem:[%s5161 + $0x3c0] sm:$0xf]
  %v5403 = vld [vmem:[%s5161 + $0x3c4] sm:$0xf]
  %v5404 = vld [vmem:[%s5161 + $0x3c8] sm:$0xf]
  %v5405 = vld [vmem:[%s5161 + $0x3cc] sm:$0xf]
  %v5406 = vld [vmem:[%s5161 + $0x3d0] sm:$0xf]
  %v5407 = vld [vmem:[%s5161 + $0x3d4] sm:$0xf]
  %v5408 = vld [vmem:[%s5161 + $0x3d8] sm:$0xf]
  %v5409 = vld [vmem:[%s5161 + $0x3dc] sm:$0xf]
  %v5410 = vld [vmem:[%s5161 + $0x3e0] sm:$0xf]
  %v5411 = vld [vmem:[%s5161 + $0x3e4] sm:$0xf]
  %v5412 = vld [vmem:[%s5161 + $0x3e8] sm:$0xf]
  %v5413 = vld [vmem:[%s5161 + $0x3ec] sm:$0xf]
  %v5414 = vld [vmem:[%s5161 + $0x3f0] sm:$0xf]
  %v5415 = vld [vmem:[%s5161 + $0x3f4] sm:$0xf]
  %v5416 = vld [vmem:[%s5161 + $0x3f8] sm:$0xf]
  %v5417 = vld [vmem:[%s5161 + $0x3fc] sm:$0xf]
  %v5418 = vlaneseq
  %v5419 = vshrl.u32 %v5418, 7
  %v5420 = vsub.s32 3, %v5419
  %v5421 = vrot.slane %v3321, %v5420
  %v5678 = vunpack.c.l.b16 %v5162
  %v5679 = vunpack.c.l.b16 %v5163
  %v5680 = vunpack.c.l.b16 %v5164
  %v5681 = vunpack.c.l.b16 %v5165
  %v5682 = vunpack.c.l.b16 %v5166
  %v5683 = vunpack.c.l.b16 %v5167
  %v5684 = vunpack.c.l.b16 %v5168
  %v5685 = vunpack.c.l.b16 %v5169
  %v5686 = vunpack.c.l.b16 %v5170
  %v5687 = vunpack.c.l.b16 %v5171
  %v5688 = vunpack.c.l.b16 %v5172
  %v5689 = vunpack.c.l.b16 %v5173
  %v5690 = vunpack.c.l.b16 %v5174
  %v5691 = vunpack.c.l.b16 %v5175
  %v5692 = vunpack.c.l.b16 %v5176
  %v5693 = vunpack.c.l.b16 %v5177
  %v5694 = vunpack.c.l.b16 %v5178
  %v5695 = vunpack.c.l.b16 %v5179
  %v5696 = vunpack.c.l.b16 %v5180
  %v5697 = vunpack.c.l.b16 %v5181
  %v5698 = vunpack.c.l.b16 %v5182
  %v5699 = vunpack.c.l.b16 %v5183
  %v5700 = vunpack.c.l.b16 %v5184
  %v5701 = vunpack.c.l.b16 %v5185
  %v5702 = vunpack.c.l.b16 %v5186
  %v5703 = vunpack.c.l.b16 %v5187
  %v5704 = vunpack.c.l.b16 %v5188
  %v5705 = vunpack.c.l.b16 %v5189
  %v5706 = vunpack.c.l.b16 %v5190
  %v5707 = vunpack.c.l.b16 %v5191
  %v5708 = vunpack.c.l.b16 %v5192
  %v5709 = vunpack.c.l.b16 %v5193
  %v5710 = vunpack.c.l.b16 %v5194
  %v5711 = vunpack.c.l.b16 %v5195
  %v5712 = vunpack.c.l.b16 %v5196
  %v5713 = vunpack.c.l.b16 %v5197
  %v5714 = vunpack.c.l.b16 %v5198
  %v5715 = vunpack.c.l.b16 %v5199
  %v5716 = vunpack.c.l.b16 %v5200
  %v5717 = vunpack.c.l.b16 %v5201
  %v5718 = vunpack.c.l.b16 %v5202
  %v5719 = vunpack.c.l.b16 %v5203
  %v5720 = vunpack.c.l.b16 %v5204
  %v5721 = vunpack.c.l.b16 %v5205
  %v5722 = vunpack.c.l.b16 %v5206
  %v5723 = vunpack.c.l.b16 %v5207
  %v5724 = vunpack.c.l.b16 %v5208
  %v5725 = vunpack.c.l.b16 %v5209
  %v5726 = vunpack.c.l.b16 %v5210
  %v5727 = vunpack.c.l.b16 %v5211
  %v5728 = vunpack.c.l.b16 %v5212
  %v5729 = vunpack.c.l.b16 %v5213
  %v5730 = vunpack.c.l.b16 %v5214
  %v5731 = vunpack.c.l.b16 %v5215
  %v5732 = vunpack.c.l.b16 %v5216
  %v5733 = vunpack.c.l.b16 %v5217
  %v5734 = vunpack.c.l.b16 %v5218
  %v5735 = vunpack.c.l.b16 %v5219
  %v5736 = vunpack.c.l.b16 %v5220
  %v5737 = vunpack.c.l.b16 %v5221
  %v5738 = vunpack.c.l.b16 %v5222
  %v5739 = vunpack.c.l.b16 %v5223
  %v5740 = vunpack.c.l.b16 %v5224
  %v5741 = vunpack.c.l.b16 %v5225
  %v5742 = vunpack.c.l.b16 %v5226
  %v5743 = vunpack.c.l.b16 %v5227
  %v5744 = vunpack.c.l.b16 %v5228
  %v5745 = vunpack.c.l.b16 %v5229
  %v5746 = vunpack.c.l.b16 %v5230
  %v5747 = vunpack.c.l.b16 %v5231
  %v5748 = vunpack.c.l.b16 %v5232
  %v5749 = vunpack.c.l.b16 %v5233
  %v5750 = vunpack.c.l.b16 %v5234
  %v5751 = vunpack.c.l.b16 %v5235
  %v5752 = vunpack.c.l.b16 %v5236
  %v5753 = vunpack.c.l.b16 %v5237
  %v5754 = vunpack.c.l.b16 %v5238
  %v5755 = vunpack.c.l.b16 %v5239
  %v5756 = vunpack.c.l.b16 %v5240
  %v5757 = vunpack.c.l.b16 %v5241
  %v5758 = vunpack.c.l.b16 %v5242
  %v5759 = vunpack.c.l.b16 %v5243
  %v5760 = vunpack.c.l.b16 %v5244
  %v5761 = vunpack.c.l.b16 %v5245
  %v5762 = vunpack.c.l.b16 %v5246
  %v5763 = vunpack.c.l.b16 %v5247
  %v5764 = vunpack.c.l.b16 %v5248
  %v5765 = vunpack.c.l.b16 %v5249
  %v5766 = vunpack.c.l.b16 %v5250
  %v5767 = vunpack.c.l.b16 %v5251
  %v5768 = vunpack.c.l.b16 %v5252
  %v5769 = vunpack.c.l.b16 %v5253
  %v5770 = vunpack.c.l.b16 %v5254
  %v5771 = vunpack.c.l.b16 %v5255
  %v5772 = vunpack.c.l.b16 %v5256
  %v5773 = vunpack.c.l.b16 %v5257
  %v5774 = vunpack.c.l.b16 %v5258
  %v5775 = vunpack.c.l.b16 %v5259
  %v5776 = vunpack.c.l.b16 %v5260
  %v5777 = vunpack.c.l.b16 %v5261
  %v5778 = vunpack.c.l.b16 %v5262
  %v5779 = vunpack.c.l.b16 %v5263
  %v5780 = vunpack.c.l.b16 %v5264
  %v5781 = vunpack.c.l.b16 %v5265
  %v5782 = vunpack.c.l.b16 %v5266
  %v5783 = vunpack.c.l.b16 %v5267
  %v5784 = vunpack.c.l.b16 %v5268
  %v5785 = vunpack.c.l.b16 %v5269
  %v5786 = vunpack.c.l.b16 %v5270
  %v5787 = vunpack.c.l.b16 %v5271
  %v5788 = vunpack.c.l.b16 %v5272
  %v5789 = vunpack.c.l.b16 %v5273
  %v5790 = vunpack.c.l.b16 %v5274
  %v5791 = vunpack.c.l.b16 %v5275
  %v5792 = vunpack.c.l.b16 %v5276
  %v5793 = vunpack.c.l.b16 %v5277
  %v5794 = vunpack.c.l.b16 %v5278
  %v5795 = vunpack.c.l.b16 %v5279
  %v5796 = vunpack.c.l.b16 %v5280
  %v5797 = vunpack.c.l.b16 %v5281
  %v5798 = vunpack.c.l.b16 %v5282
  %v5799 = vunpack.c.l.b16 %v5283
  %v5800 = vunpack.c.l.b16 %v5284
  %v5801 = vunpack.c.l.b16 %v5285
  %v5802 = vunpack.c.l.b16 %v5286
  %v5803 = vunpack.c.l.b16 %v5287
  %v5804 = vunpack.c.l.b16 %v5288
  %v5805 = vunpack.c.l.b16 %v5289
  %v5806 = vunpack.c.l.b16 %v5290
  %v5807 = vunpack.c.l.b16 %v5291
  %v5808 = vunpack.c.l.b16 %v5292
  %v5809 = vunpack.c.l.b16 %v5293
  %v5810 = vunpack.c.l.b16 %v5294
  %v5811 = vunpack.c.l.b16 %v5295
  %v5812 = vunpack.c.l.b16 %v5296
  %v5813 = vunpack.c.l.b16 %v5297
  %v5814 = vunpack.c.l.b16 %v5298
  %v5815 = vunpack.c.l.b16 %v5299
  %v5816 = vunpack.c.l.b16 %v5300
  %v5817 = vunpack.c.l.b16 %v5301
  %v5818 = vunpack.c.l.b16 %v5302
  %v5819 = vunpack.c.l.b16 %v5303
  %v5820 = vunpack.c.l.b16 %v5304
  %v5821 = vunpack.c.l.b16 %v5305
  %v5822 = vunpack.c.l.b16 %v5306
  %v5823 = vunpack.c.l.b16 %v5307
  %v5824 = vunpack.c.l.b16 %v5308
  %v5825 = vunpack.c.l.b16 %v5309
  %v5826 = vunpack.c.l.b16 %v5310
  %v5827 = vunpack.c.l.b16 %v5311
  %v5828 = vunpack.c.l.b16 %v5312
  %v5829 = vunpack.c.l.b16 %v5313
  %v5830 = vunpack.c.l.b16 %v5314
  %v5831 = vunpack.c.l.b16 %v5315
  %v5832 = vunpack.c.l.b16 %v5316
  %v5833 = vunpack.c.l.b16 %v5317
  %v5834 = vunpack.c.l.b16 %v5318
  %v5835 = vunpack.c.l.b16 %v5319
  %v5836 = vunpack.c.l.b16 %v5320
  %v5837 = vunpack.c.l.b16 %v5321
  %v5838 = vunpack.c.l.b16 %v5322
  %v5839 = vunpack.c.l.b16 %v5323
  %v5840 = vunpack.c.l.b16 %v5324
  %v5841 = vunpack.c.l.b16 %v5325
  %v5842 = vunpack.c.l.b16 %v5326
  %v5843 = vunpack.c.l.b16 %v5327
  %v5844 = vunpack.c.l.b16 %v5328
  %v5845 = vunpack.c.l.b16 %v5329
  %v5846 = vunpack.c.l.b16 %v5330
  %v5847 = vunpack.c.l.b16 %v5331
  %v5848 = vunpack.c.l.b16 %v5332
  %v5849 = vunpack.c.l.b16 %v5333
  %v5850 = vunpack.c.l.b16 %v5334
  %v5851 = vunpack.c.l.b16 %v5335
  %v5852 = vunpack.c.l.b16 %v5336
  %v5853 = vunpack.c.l.b16 %v5337
  %v5854 = vunpack.c.l.b16 %v5338
  %v5855 = vunpack.c.l.b16 %v5339
  %v5856 = vunpack.c.l.b16 %v5340
  %v5857 = vunpack.c.l.b16 %v5341
  %v5858 = vunpack.c.l.b16 %v5342
  %v5859 = vunpack.c.l.b16 %v5343
  %v5860 = vunpack.c.l.b16 %v5344
  %v5861 = vunpack.c.l.b16 %v5345
  %v5862 = vunpack.c.l.b16 %v5346
  %v5863 = vunpack.c.l.b16 %v5347
  %v5864 = vunpack.c.l.b16 %v5348
  %v5865 = vunpack.c.l.b16 %v5349
  %v5866 = vunpack.c.l.b16 %v5350
  %v5867 = vunpack.c.l.b16 %v5351
  %v5868 = vunpack.c.l.b16 %v5352
  %v5869 = vunpack.c.l.b16 %v5353
  %v5870 = vunpack.c.l.b16 %v5354
  %v5871 = vunpack.c.l.b16 %v5355
  %v5872 = vunpack.c.l.b16 %v5356
  %v5873 = vunpack.c.l.b16 %v5357
  %v5874 = vunpack.c.l.b16 %v5358
  %v5875 = vunpack.c.l.b16 %v5359
  %v5876 = vunpack.c.l.b16 %v5360
  %v5877 = vunpack.c.l.b16 %v5361
  %v5878 = vunpack.c.l.b16 %v5362
  %v5879 = vunpack.c.l.b16 %v5363
  %v5880 = vunpack.c.l.b16 %v5364
  %v5881 = vunpack.c.l.b16 %v5365
  %v5882 = vunpack.c.l.b16 %v5366
  %v5883 = vunpack.c.l.b16 %v5367
  %v5884 = vunpack.c.l.b16 %v5368
  %v5885 = vunpack.c.l.b16 %v5369
  %v5886 = vunpack.c.l.b16 %v5370
  %v5887 = vunpack.c.l.b16 %v5371
  %v5888 = vunpack.c.l.b16 %v5372
  %v5889 = vunpack.c.l.b16 %v5373
  %v5890 = vunpack.c.l.b16 %v5374
  %v5891 = vunpack.c.l.b16 %v5375
  %v5892 = vunpack.c.l.b16 %v5376
  %v5893 = vunpack.c.l.b16 %v5377
  %v5894 = vunpack.c.l.b16 %v5378
  %v5895 = vunpack.c.l.b16 %v5379
  %v5896 = vunpack.c.l.b16 %v5380
  %v5897 = vunpack.c.l.b16 %v5381
  %v5898 = vunpack.c.l.b16 %v5382
  %v5899 = vunpack.c.l.b16 %v5383
  %v5900 = vunpack.c.l.b16 %v5384
  %v5901 = vunpack.c.l.b16 %v5385
  %v5902 = vunpack.c.l.b16 %v5386
  %v5903 = vunpack.c.l.b16 %v5387
  %v5904 = vunpack.c.l.b16 %v5388
  %v5905 = vunpack.c.l.b16 %v5389
  %v5906 = vunpack.c.l.b16 %v5390
  %v5907 = vunpack.c.l.b16 %v5391
  %v5908 = vunpack.c.l.b16 %v5392
  %v5909 = vunpack.c.l.b16 %v5393
  %v5910 = vunpack.c.l.b16 %v5394
  %v5911 = vunpack.c.l.b16 %v5395
  %v5912 = vunpack.c.l.b16 %v5396
  %v5913 = vunpack.c.l.b16 %v5397
  %v5914 = vunpack.c.l.b16 %v5398
  %v5915 = vunpack.c.l.b16 %v5399
  %v5916 = vunpack.c.l.b16 %v5400
  %v5917 = vunpack.c.l.b16 %v5401
  %v5918 = vunpack.c.l.b16 %v5402
  %v5919 = vunpack.c.l.b16 %v5403
  %v5920 = vunpack.c.l.b16 %v5404
  %v5921 = vunpack.c.l.b16 %v5405
  %v5922 = vunpack.c.l.b16 %v5406
  %v5923 = vunpack.c.l.b16 %v5407
  %v5924 = vunpack.c.l.b16 %v5408
  %v5925 = vunpack.c.l.b16 %v5409
  %v5926 = vunpack.c.l.b16 %v5410
  %v5927 = vunpack.c.l.b16 %v5411
  %v5928 = vunpack.c.l.b16 %v5412
  %v5929 = vunpack.c.l.b16 %v5413
  %v5930 = vunpack.c.l.b16 %v5414
  %v5931 = vunpack.c.l.b16 %v5415
  %v5932 = vunpack.c.l.b16 %v5416
  %v5933 = vunpack.c.l.b16 %v5417
  %v5934 = vpack.c.b16 %v5679, %v5678
  %v5935 = vpack.c.b16 %v5681, %v5680
  %v5936 = vpack.c.b16 %v5683, %v5682
  %v5937 = vpack.c.b16 %v5685, %v5684
  %v5938 = vpack.c.b16 %v5687, %v5686
  %v5939 = vpack.c.b16 %v5689, %v5688
  %v5940 = vpack.c.b16 %v5691, %v5690
  %v5941 = vpack.c.b16 %v5693, %v5692
  %v5942 = vpack.c.b16 %v5695, %v5694
  %v5943 = vpack.c.b16 %v5697, %v5696
  %v5944 = vpack.c.b16 %v5699, %v5698
  %v5945 = vpack.c.b16 %v5701, %v5700
  %v5946 = vpack.c.b16 %v5703, %v5702
  %v5947 = vpack.c.b16 %v5705, %v5704
  %v5948 = vpack.c.b16 %v5707, %v5706
  %v5949 = vpack.c.b16 %v5709, %v5708
  %v5950 = vpack.c.b16 %v5711, %v5710
  %v5951 = vpack.c.b16 %v5713, %v5712
  %v5952 = vpack.c.b16 %v5715, %v5714
  %v5953 = vpack.c.b16 %v5717, %v5716
  %v5954 = vpack.c.b16 %v5719, %v5718
  %v5955 = vpack.c.b16 %v5721, %v5720
  %v5956 = vpack.c.b16 %v5723, %v5722
  %v5957 = vpack.c.b16 %v5725, %v5724
  %v5958 = vpack.c.b16 %v5727, %v5726
  %v5959 = vpack.c.b16 %v5729, %v5728
  %v5960 = vpack.c.b16 %v5731, %v5730
  %v5961 = vpack.c.b16 %v5733, %v5732
  %v5962 = vpack.c.b16 %v5735, %v5734
  %v5963 = vpack.c.b16 %v5737, %v5736
  %v5964 = vpack.c.b16 %v5739, %v5738
  %v5965 = vpack.c.b16 %v5741, %v5740
  %v5966 = vpack.c.b16 %v5743, %v5742
  %v5967 = vpack.c.b16 %v5745, %v5744
  %v5968 = vpack.c.b16 %v5747, %v5746
  %v5969 = vpack.c.b16 %v5749, %v5748
  %v5970 = vpack.c.b16 %v5751, %v5750
  %v5971 = vpack.c.b16 %v5753, %v5752
  %v5972 = vpack.c.b16 %v5755, %v5754
  %v5973 = vpack.c.b16 %v5757, %v5756
  %v5974 = vpack.c.b16 %v5759, %v5758
  %v5975 = vpack.c.b16 %v5761, %v5760
  %v5976 = vpack.c.b16 %v5763, %v5762
  %v5977 = vpack.c.b16 %v5765, %v5764
  %v5978 = vpack.c.b16 %v5767, %v5766
  %v5979 = vpack.c.b16 %v5769, %v5768
  %v5980 = vpack.c.b16 %v5771, %v5770
  %v5981 = vpack.c.b16 %v5773, %v5772
  %v5982 = vpack.c.b16 %v5775, %v5774
  %v5983 = vpack.c.b16 %v5777, %v5776
  %v5984 = vpack.c.b16 %v5779, %v5778
  %v5985 = vpack.c.b16 %v5781, %v5780
  %v5986 = vpack.c.b16 %v5783, %v5782
  %v5987 = vpack.c.b16 %v5785, %v5784
  %v5988 = vpack.c.b16 %v5787, %v5786
  %v5989 = vpack.c.b16 %v5789, %v5788
  %v5990 = vpack.c.b16 %v5791, %v5790
  %v5991 = vpack.c.b16 %v5793, %v5792
  %v5992 = vpack.c.b16 %v5795, %v5794
  %v5993 = vpack.c.b16 %v5797, %v5796
  %v5994 = vpack.c.b16 %v5799, %v5798
  %v5995 = vpack.c.b16 %v5801, %v5800
  %v5996 = vpack.c.b16 %v5803, %v5802
  %v5997 = vpack.c.b16 %v5805, %v5804
  %v5998 = vpack.c.b16 %v5807, %v5806
  %v5999 = vpack.c.b16 %v5809, %v5808
  %v6000 = vpack.c.b16 %v5811, %v5810
  %v6001 = vpack.c.b16 %v5813, %v5812
  %v6002 = vpack.c.b16 %v5815, %v5814
  %v6003 = vpack.c.b16 %v5817, %v5816
  %v6004 = vpack.c.b16 %v5819, %v5818
  %v6005 = vpack.c.b16 %v5821, %v5820
  %v6006 = vpack.c.b16 %v5823, %v5822
  %v6007 = vpack.c.b16 %v5825, %v5824
  %v6008 = vpack.c.b16 %v5827, %v5826
  %v6009 = vpack.c.b16 %v5829, %v5828
  %v6010 = vpack.c.b16 %v5831, %v5830
  %v6011 = vpack.c.b16 %v5833, %v5832
  %v6012 = vpack.c.b16 %v5835, %v5834
  %v6013 = vpack.c.b16 %v5837, %v5836
  %v6014 = vpack.c.b16 %v5839, %v5838
  %v6015 = vpack.c.b16 %v5841, %v5840
  %v6016 = vpack.c.b16 %v5843, %v5842
  %v6017 = vpack.c.b16 %v5845, %v5844
  %v6018 = vpack.c.b16 %v5847, %v5846
  %v6019 = vpack.c.b16 %v5849, %v5848
  %v6020 = vpack.c.b16 %v5851, %v5850
  %v6021 = vpack.c.b16 %v5853, %v5852
  %v6022 = vpack.c.b16 %v5855, %v5854
  %v6023 = vpack.c.b16 %v5857, %v5856
  %v6024 = vpack.c.b16 %v5859, %v5858
  %v6025 = vpack.c.b16 %v5861, %v5860
  %v6026 = vpack.c.b16 %v5863, %v5862
  %v6027 = vpack.c.b16 %v5865, %v5864
  %v6028 = vpack.c.b16 %v5867, %v5866
  %v6029 = vpack.c.b16 %v5869, %v5868
  %v6030 = vpack.c.b16 %v5871, %v5870
  %v6031 = vpack.c.b16 %v5873, %v5872
  %v6032 = vpack.c.b16 %v5875, %v5874
  %v6033 = vpack.c.b16 %v5877, %v5876
  %v6034 = vpack.c.b16 %v5879, %v5878
  %v6035 = vpack.c.b16 %v5881, %v5880
  %v6036 = vpack.c.b16 %v5883, %v5882
  %v6037 = vpack.c.b16 %v5885, %v5884
  %v6038 = vpack.c.b16 %v5887, %v5886
  %v6039 = vpack.c.b16 %v5889, %v5888
  %v6040 = vpack.c.b16 %v5891, %v5890
  %v6041 = vpack.c.b16 %v5893, %v5892
  %v6042 = vpack.c.b16 %v5895, %v5894
  %v6043 = vpack.c.b16 %v5897, %v5896
  %v6044 = vpack.c.b16 %v5899, %v5898
  %v6045 = vpack.c.b16 %v5901, %v5900
  %v6046 = vpack.c.b16 %v5903, %v5902
  %v6047 = vpack.c.b16 %v5905, %v5904
  %v6048 = vpack.c.b16 %v5907, %v5906
  %v6049 = vpack.c.b16 %v5909, %v5908
  %v6050 = vpack.c.b16 %v5911, %v5910
  %v6051 = vpack.c.b16 %v5913, %v5912
  %v6052 = vpack.c.b16 %v5915, %v5914
  %v6053 = vpack.c.b16 %v5917, %v5916
  %v6054 = vpack.c.b16 %v5919, %v5918
  %v6055 = vpack.c.b16 %v5921, %v5920
  %v6056 = vpack.c.b16 %v5923, %v5922
  %v6057 = vpack.c.b16 %v5925, %v5924
  %v6058 = vpack.c.b16 %v5927, %v5926
  %v6059 = vpack.c.b16 %v5929, %v5928
  %v6060 = vpack.c.b16 %v5931, %v5930
  %v6061 = vpack.c.b16 %v5933, %v5932
  %6190 = vmatprep.subr.bf16.mxu0 0
  %6191 = vmatpush1.bf16.msra.mxu0 %v5934
  %6192 = vmatprep.subr.bf16.mxu0 0
  %6193 = vmatpush1.bf16.msra.mxu0 %v5935
  %6194 = vmatprep.subr.bf16.mxu0 0
  %6195 = vmatpush1.bf16.msra.mxu0 %v5936
  %6196 = vmatprep.subr.bf16.mxu0 0
  %6197 = vmatpush1.bf16.msra.mxu0 %v5937
  %6198 = vmatprep.subr.bf16.mxu0 0
  %6199 = vmatpush1.bf16.msra.mxu0 %v5938
  %6200 = vmatprep.subr.bf16.mxu0 0
  %6201 = vmatpush1.bf16.msra.mxu0 %v5939
  %6202 = vmatprep.subr.bf16.mxu0 0
  %6203 = vmatpush1.bf16.msra.mxu0 %v5940
  %6204 = vmatprep.subr.bf16.mxu0 0
  %6205 = vmatpush1.bf16.msra.mxu0 %v5941
  %6206 = vmatprep.subr.bf16.mxu0 0
  %6207 = vmatpush1.bf16.msra.mxu0 %v5942
  %6208 = vmatprep.subr.bf16.mxu0 0
  %6209 = vmatpush1.bf16.msra.mxu0 %v5943
  %6210 = vmatprep.subr.bf16.mxu0 0
  %6211 = vmatpush1.bf16.msra.mxu0 %v5944
  %6212 = vmatprep.subr.bf16.mxu0 0
  %6213 = vmatpush1.bf16.msra.mxu0 %v5945
  %6214 = vmatprep.subr.bf16.mxu0 0
  %6215 = vmatpush1.bf16.msra.mxu0 %v5946
  %6216 = vmatprep.subr.bf16.mxu0 0
  %6217 = vmatpush1.bf16.msra.mxu0 %v5947
  %6218 = vmatprep.subr.bf16.mxu0 0
  %6219 = vmatpush1.bf16.msra.mxu0 %v5948
  %6220 = vmatprep.subr.bf16.mxu0 0
  %6221 = vmatpush1.bf16.msra.mxu0 %v5949
  %6222 = vmatprep.mubr.bf16.mxu0 %v5146
  %6223 = vmatmul.mubr.bf16.gmra.mrb[0].mxu0 %v5145
  %v6224 = vpop.f32.mrb[0].mxu0
  %v6225 = vadd.f32 %v5421, %v6224
  %v6226 = vpop.f32.mrb[0].mxu0
  %v6227 = vpop.f32.mrb[0].mxu0
  %v6228 = vpop.f32.mrb[0].mxu0
  %6229 = vdwg.mxu0
  %6230 = vmatprep.subr.bf16.mxu0 0
  %6231 = vmatpush1.bf16.msra.mxu0 %v5950
  %6232 = vmatprep.subr.bf16.mxu0 0
  %6233 = vmatpush1.bf16.msra.mxu0 %v5951
  %6234 = vmatprep.subr.bf16.mxu0 0
  %6235 = vmatpush1.bf16.msra.mxu0 %v5952
  %6236 = vmatprep.subr.bf16.mxu0 0
  %6237 = vmatpush1.bf16.msra.mxu0 %v5953
  %6238 = vmatprep.subr.bf16.mxu0 0
  %6239 = vmatpush1.bf16.msra.mxu0 %v5954
  %6240 = vmatprep.subr.bf16.mxu0 0
  %6241 = vmatpush1.bf16.msra.mxu0 %v5955
  %6242 = vmatprep.subr.bf16.mxu0 0
  %6243 = vmatpush1.bf16.msra.mxu0 %v5956
  %6244 = vmatprep.subr.bf16.mxu0 0
  %6245 = vmatpush1.bf16.msra.mxu0 %v5957
  %6246 = vmatprep.subr.bf16.mxu0 0
  %6247 = vmatpush1.bf16.msra.mxu0 %v5958
  %6248 = vmatprep.subr.bf16.mxu0 0
  %6249 = vmatpush1.bf16.msra.mxu0 %v5959
  %6250 = vmatprep.subr.bf16.mxu0 0
  %6251 = vmatpush1.bf16.msra.mxu0 %v5960
  %6252 = vmatprep.subr.bf16.mxu0 0
  %6253 = vmatpush1.bf16.msra.mxu0 %v5961
  %6254 = vmatprep.subr.bf16.mxu0 0
  %6255 = vmatpush1.bf16.msra.mxu0 %v5962
  %6256 = vmatprep.subr.bf16.mxu0 0
  %6257 = vmatpush1.bf16.msra.mxu0 %v5963
  %6258 = vmatprep.subr.bf16.mxu0 0
  %6259 = vmatpush1.bf16.msra.mxu0 %v5964
  %6260 = vmatprep.subr.bf16.mxu0 0
  %6261 = vmatpush1.bf16.msra.mxu0 %v5965
  %6262 = vmatprep.mubr.bf16.mxu0 %v5148
  %6263 = vmatmul.mubr.bf16.gmra.mrb[0].mxu0 %v5147
  %v6264 = vpop.f32.mrb[0].mxu0
  %v6265 = vadd.f32 %v6225, %v6264
  %v6266 = vpop.f32.mrb[0].mxu0
  %v6267 = vpop.f32.mrb[0].mxu0
  %v6268 = vpop.f32.mrb[0].mxu0
  %6269 = vdwg.mxu0
  %6270 = vmatprep.subr.bf16.mxu0 0
  %6271 = vmatpush1.bf16.msra.mxu0 %v5966
  %6272 = vmatprep.subr.bf16.mxu0 0
  %6273 = vmatpush1.bf16.msra.mxu0 %v5967
  %6274 = vmatprep.subr.bf16.mxu0 0
  %6275 = vmatpush1.bf16.msra.mxu0 %v5968
  %6276 = vmatprep.subr.bf16.mxu0 0
  %6277 = vmatpush1.bf16.msra.mxu0 %v5969
  %6278 = vmatprep.subr.bf16.mxu0 0
  %6279 = vmatpush1.bf16.msra.mxu0 %v5970
  %6280 = vmatprep.subr.bf16.mxu0 0
  %6281 = vmatpush1.bf16.msra.mxu0 %v5971
  %6282 = vmatprep.subr.bf16.mxu0 0
  %6283 = vmatpush1.bf16.msra.mxu0 %v5972
  %6284 = vmatprep.subr.bf16.mxu0 0
  %6285 = vmatpush1.bf16.msra.mxu0 %v5973
  %6286 = vmatprep.subr.bf16.mxu0 0
  %6287 = vmatpush1.bf16.msra.mxu0 %v5974
  %6288 = vmatprep.subr.bf16.mxu0 0
  %6289 = vmatpush1.bf16.msra.mxu0 %v5975
  %6290 = vmatprep.subr.bf16.mxu0 0
  %6291 = vmatpush1.bf16.msra.mxu0 %v5976
  %6292 = vmatprep.subr.bf16.mxu0 0
  %6293 = vmatpush1.bf16.msra.mxu0 %v5977
  %6294 = vmatprep.subr.bf16.mxu0 0
  %6295 = vmatpush1.bf16.msra.mxu0 %v5978
  %6296 = vmatprep.subr.bf16.mxu0 0
  %6297 = vmatpush1.bf16.msra.mxu0 %v5979
  %6298 = vmatprep.subr.bf16.mxu0 0
  %6299 = vmatpush1.bf16.msra.mxu0 %v5980
  %6300 = vmatprep.subr.bf16.mxu0 0
  %6301 = vmatpush1.bf16.msra.mxu0 %v5981
  %6302 = vmatprep.mubr.bf16.mxu0 %v5150
  %6303 = vmatmul.mubr.bf16.gmra.mrb[0].mxu0 %v5149
  %v6304 = vpop.f32.mrb[0].mxu0
  %v6305 = vadd.f32 %v6265, %v6304
  %v6306 = vpop.f32.mrb[0].mxu0
  %v6307 = vpop.f32.mrb[0].mxu0
  %v6308 = vpop.f32.mrb[0].mxu0
  %6309 = vdwg.mxu0
  %6310 = vmatprep.subr.bf16.mxu0 0
  %6311 = vmatpush1.bf16.msra.mxu0 %v5982
  %6312 = vmatprep.subr.bf16.mxu0 0
  %6313 = vmatpush1.bf16.msra.mxu0 %v5983
  %6314 = vmatprep.subr.bf16.mxu0 0
  %6315 = vmatpush1.bf16.msra.mxu0 %v5984
  %6316 = vmatprep.subr.bf16.mxu0 0
  %6317 = vmatpush1.bf16.msra.mxu0 %v5985
  %6318 = vmatprep.subr.bf16.mxu0 0
  %6319 = vmatpush1.bf16.msra.mxu0 %v5986
  %6320 = vmatprep.subr.bf16.mxu0 0
  %6321 = vmatpush1.bf16.msra.mxu0 %v5987
  %6322 = vmatprep.subr.bf16.mxu0 0
  %6323 = vmatpush1.bf16.msra.mxu0 %v5988
  %6324 = vmatprep.subr.bf16.mxu0 0
  %6325 = vmatpush1.bf16.msra.mxu0 %v5989
  %6326 = vmatprep.subr.bf16.mxu0 0
  %6327 = vmatpush1.bf16.msra.mxu0 %v5990
  %6328 = vmatprep.subr.bf16.mxu0 0
  %6329 = vmatpush1.bf16.msra.mxu0 %v5991
  %6330 = vmatprep.subr.bf16.mxu0 0
  %6331 = vmatpush1.bf16.msra.mxu0 %v5992
  %6332 = vmatprep.subr.bf16.mxu0 0
  %6333 = vmatpush1.bf16.msra.mxu0 %v5993
  %6334 = vmatprep.subr.bf16.mxu0 0
  %6335 = vmatpush1.bf16.msra.mxu0 %v5994
  %6336 = vmatprep.subr.bf16.mxu0 0
  %6337 = vmatpush1.bf16.msra.mxu0 %v5995
  %6338 = vmatprep.subr.bf16.mxu0 0
  %6339 = vmatpush1.bf16.msra.mxu0 %v5996
  %6340 = vmatprep.subr.bf16.mxu0 0
  %6341 = vmatpush1.bf16.msra.mxu0 %v5997
  %6342 = vmatprep.mubr.bf16.mxu0 %v5152
  %6343 = vmatmul.mubr.bf16.gmra.mrb[0].mxu0 %v5151
  %v6344 = vpop.f32.mrb[0].mxu0
  %v6345 = vadd.f32 %v6305, %v6344
  %v6346 = vpop.f32.mrb[0].mxu0
  %v6347 = vpop.f32.mrb[0].mxu0
  %v6348 = vpop.f32.mrb[0].mxu0
  %6349 = vdwg.mxu0
  %6350 = vmatprep.subr.bf16.mxu0 0
  %6351 = vmatpush1.bf16.msra.mxu0 %v5998
  %6352 = vmatprep.subr.bf16.mxu0 0
  %6353 = vmatpush1.bf16.msra.mxu0 %v5999
  %6354 = vmatprep.subr.bf16.mxu0 0
  %6355 = vmatpush1.bf16.msra.mxu0 %v6000
  %6356 = vmatprep.subr.bf16.mxu0 0
  %6357 = vmatpush1.bf16.msra.mxu0 %v6001
  %6358 = vmatprep.subr.bf16.mxu0 0
  %6359 = vmatpush1.bf16.msra.mxu0 %v6002
  %6360 = vmatprep.subr.bf16.mxu0 0
  %6361 = vmatpush1.bf16.msra.mxu0 %v6003
  %6362 = vmatprep.subr.bf16.mxu0 0
  %6363 = vmatpush1.bf16.msra.mxu0 %v6004
  %6364 = vmatprep.subr.bf16.mxu0 0
  %6365 = vmatpush1.bf16.msra.mxu0 %v6005
  %6366 = vmatprep.subr.bf16.mxu0 0
  %6367 = vmatpush1.bf16.msra.mxu0 %v6006
  %6368 = vmatprep.subr.bf16.mxu0 0
  %6369 = vmatpush1.bf16.msra.mxu0 %v6007
  %6370 = vmatprep.subr.bf16.mxu0 0
  %6371 = vmatpush1.bf16.msra.mxu0 %v6008
  %6372 = vmatprep.subr.bf16.mxu0 0
  %6373 = vmatpush1.bf16.msra.mxu0 %v6009
  %6374 = vmatprep.subr.bf16.mxu0 0
  %6375 = vmatpush1.bf16.msra.mxu0 %v6010
  %6376 = vmatprep.subr.bf16.mxu0 0
  %6377 = vmatpush1.bf16.msra.mxu0 %v6011
  %6378 = vmatprep.subr.bf16.mxu0 0
  %6379 = vmatpush1.bf16.msra.mxu0 %v6012
  %6380 = vmatprep.subr.bf16.mxu0 0
  %6381 = vmatpush1.bf16.msra.mxu0 %v6013
  %6382 = vmatprep.mubr.bf16.mxu0 %v5154
  %6383 = vmatmul.mubr.bf16.gmra.mrb[0].mxu0 %v5153
  %v6384 = vpop.f32.mrb[0].mxu0
  %v6385 = vadd.f32 %v6345, %v6384
  %v6386 = vpop.f32.mrb[0].mxu0
  %v6387 = vpop.f32.mrb[0].mxu0
  %v6388 = vpop.f32.mrb[0].mxu0
  %6389 = vdwg.mxu0
  %6390 = vmatprep.subr.bf16.mxu0 0
  %6391 = vmatpush1.bf16.msra.mxu0 %v6014
  %6392 = vmatprep.subr.bf16.mxu0 0
  %6393 = vmatpush1.bf16.msra.mxu0 %v6015
  %6394 = vmatprep.subr.bf16.mxu0 0
  %6395 = vmatpush1.bf16.msra.mxu0 %v6016
  %6396 = vmatprep.subr.bf16.mxu0 0
  %6397 = vmatpush1.bf16.msra.mxu0 %v6017
  %6398 = vmatprep.subr.bf16.mxu0 0
  %6399 = vmatpush1.bf16.msra.mxu0 %v6018
  %6400 = vmatprep.subr.bf16.mxu0 0
  %6401 = vmatpush1.bf16.msra.mxu0 %v6019
  %6402 = vmatprep.subr.bf16.mxu0 0
  %6403 = vmatpush1.bf16.msra.mxu0 %v6020
  %6404 = vmatprep.subr.bf16.mxu0 0
  %6405 = vmatpush1.bf16.msra.mxu0 %v6021
  %6406 = vmatprep.subr.bf16.mxu0 0
  %6407 = vmatpush1.bf16.msra.mxu0 %v6022
  %6408 = vmatprep.subr.bf16.mxu0 0
  %6409 = vmatpush1.bf16.msra.mxu0 %v6023
  %6410 = vmatprep.subr.bf16.mxu0 0
  %6411 = vmatpush1.bf16.msra.mxu0 %v6024
  %6412 = vmatprep.subr.bf16.mxu0 0
  %6413 = vmatpush1.bf16.msra.mxu0 %v6025
  %6414 = vmatprep.subr.bf16.mxu0 0
  %6415 = vmatpush1.bf16.msra.mxu0 %v6026
  %6416 = vmatprep.subr.bf16.mxu0 0
  %6417 = vmatpush1.bf16.msra.mxu0 %v6027
  %6418 = vmatprep.subr.bf16.mxu0 0
  %6419 = vmatpush1.bf16.msra.mxu0 %v6028
  %6420 = vmatprep.subr.bf16.mxu0 0
  %6421 = vmatpush1.bf16.msra.mxu0 %v6029
  %6422 = vmatprep.mubr.bf16.mxu0 %v5156
  %6423 = vmatmul.mubr.bf16.gmra.mrb[0].mxu0 %v5155
  %v6424 = vpop.f32.mrb[0].mxu0
  %v6425 = vadd.f32 %v6385, %v6424
  %v6426 = vpop.f32.mrb[0].mxu0
  %v6427 = vpop.f32.mrb[0].mxu0
  %v6428 = vpop.f32.mrb[0].mxu0
  %6429 = vdwg.mxu0
  %6430 = vmatprep.subr.bf16.mxu0 0
  %6431 = vmatpush1.bf16.msra.mxu0 %v6030
  %6432 = vmatprep.subr.bf16.mxu0 0
  %6433 = vmatpush1.bf16.msra.mxu0 %v6031
  %6434 = vmatprep.subr.bf16.mxu0 0
  %6435 = vmatpush1.bf16.msra.mxu0 %v6032
  %6436 = vmatprep.subr.bf16.mxu0 0
  %6437 = vmatpush1.bf16.msra.mxu0 %v6033
  %6438 = vmatprep.subr.bf16.mxu0 0
  %6439 = vmatpush1.bf16.msra.mxu0 %v6034
  %6440 = vmatprep.subr.bf16.mxu0 0
  %6441 = vmatpush1.bf16.msra.mxu0 %v6035
  %6442 = vmatprep.subr.bf16.mxu0 0
  %6443 = vmatpush1.bf16.msra.mxu0 %v6036
  %6444 = vmatprep.subr.bf16.mxu0 0
  %6445 = vmatpush1.bf16.msra.mxu0 %v6037
  %6446 = vmatprep.subr.bf16.mxu0 0
  %6447 = vmatpush1.bf16.msra.mxu0 %v6038
  %6448 = vmatprep.subr.bf16.mxu0 0
  %6449 = vmatpush1.bf16.msra.mxu0 %v6039
  %6450 = vmatprep.subr.bf16.mxu0 0
  %6451 = vmatpush1.bf16.msra.mxu0 %v6040
  %6452 = vmatprep.subr.bf16.mxu0 0
  %6453 = vmatpush1.bf16.msra.mxu0 %v6041
  %6454 = vmatprep.subr.bf16.mxu0 0
  %6455 = vmatpush1.bf16.msra.mxu0 %v6042
  %6456 = vmatprep.subr.bf16.mxu0 0
  %6457 = vmatpush1.bf16.msra.mxu0 %v6043
  %6458 = vmatprep.subr.bf16.mxu0 0
  %6459 = vmatpush1.bf16.msra.mxu0 %v6044
  %6460 = vmatprep.subr.bf16.mxu0 0
  %6461 = vmatpush1.bf16.msra.mxu0 %v6045
  %6462 = vmatprep.mubr.bf16.mxu0 %v5158
  %6463 = vmatmul.mubr.bf16.gmra.mrb[0].mxu0 %v5157
  %v6464 = vpop.f32.mrb[0].mxu0
  %v6465 = vadd.f32 %v6425, %v6464
  %v6466 = vpop.f32.mrb[0].mxu0
  %v6467 = vpop.f32.mrb[0].mxu0
  %v6468 = vpop.f32.mrb[0].mxu0
  %6469 = vdwg.mxu0
  %6470 = vmatprep.subr.bf16.mxu0 0
  %6471 = vmatpush1.bf16.msra.mxu0 %v6046
  %6472 = vmatprep.subr.bf16.mxu0 0
  %6473 = vmatpush1.bf16.msra.mxu0 %v6047
  %6474 = vmatprep.subr.bf16.mxu0 0
  %6475 = vmatpush1.bf16.msra.mxu0 %v6048
  %6476 = vmatprep.subr.bf16.mxu0 0
  %6477 = vmatpush1.bf16.msra.mxu0 %v6049
  %6478 = vmatprep.subr.bf16.mxu0 0
  %6479 = vmatpush1.bf16.msra.mxu0 %v6050
  %6480 = vmatprep.subr.bf16.mxu0 0
  %6481 = vmatpush1.bf16.msra.mxu0 %v6051
  %6482 = vmatprep.subr.bf16.mxu0 0
  %6483 = vmatpush1.bf16.msra.mxu0 %v6052
  %6484 = vmatprep.subr.bf16.mxu0 0
  %6485 = vmatpush1.bf16.msra.mxu0 %v6053
  %6486 = vmatprep.subr.bf16.mxu0 0
  %6487 = vmatpush1.bf16.msra.mxu0 %v6054
  %6488 = vmatprep.subr.bf16.mxu0 0
  %6489 = vmatpush1.bf16.msra.mxu0 %v6055
  %6490 = vmatprep.subr.bf16.mxu0 0
  %6491 = vmatpush1.bf16.msra.mxu0 %v6056
  %6492 = vmatprep.subr.bf16.mxu0 0
  %6493 = vmatpush1.bf16.msra.mxu0 %v6057
  %6494 = vmatprep.subr.bf16.mxu0 0
  %6495 = vmatpush1.bf16.msra.mxu0 %v6058
  %6496 = vmatprep.subr.bf16.mxu0 0
  %6497 = vmatpush1.bf16.msra.mxu0 %v6059
  %6498 = vmatprep.subr.bf16.mxu0 0
  %6499 = vmatpush1.bf16.msra.mxu0 %v6060
  %6500 = vmatprep.subr.bf16.mxu0 0
  %6501 = vmatpush1.bf16.msra.mxu0 %v6061
  %6502 = vmatprep.mubr.bf16.mxu0 %v5160
  %6503 = vmatmul.mubr.bf16.gmra.mrb[0].mxu0 %v5159
  %v6504 = vpop.f32.mrb[0].mxu0
  %v6505 = vadd.f32 %v6465, %v6504
  %v6506 = vpop.f32.mrb[0].mxu0
  %v6507 = vpop.f32.mrb[0].mxu0
  %v6508 = vpop.f32.mrb[0].mxu0
  %6509 = vdwg.mxu0
  %v6510 = vadd.f32 %v4326, %v6505
  %v6511 = vsel %vm180, %v6510, 0.0
  %6512 = vadd.xlane.f32.xlu0 %v6511
  %v6513 = vpop.xlane.xlu0 %6512
  %v6514 = vmul.f32 %v6513, %v1095
  %v6515 = vsub.f32 %v6510, %v6514
  %v6516 = vmul.f32 %v6515, %v6515
  %v6517 = vsel %vm180, %v6516, 0.0
  %6518 = vadd.xlane.f32.xlu0 %v6517
  %v6519 = vpop.xlane.xlu0 %6518
  %v6520 = vmul.f32 %v6519, %v1095
  %v6521 = vadd.f32 %v6520, 1e-05
  %v6522 = vrsqrt.pop %v6521
  %v6523 = vmul.f32 %v6515, %v6522
  %v6524 = vlaneseq
  %v6525 = vshrl.u32 %v6524, 7
  %v6526 = vsub.s32 4, %v6525
  %v6527 = vrot.slane %v3321, %v6526
  %v6528 = vmul.f32 %v6523, %v6527
  %v6529 = vlaneseq
  %v6530 = vshrl.u32 %v6529, 7
  %v6531 = vsub.s32 5, %v6530
  %v6532 = vrot.slane %v3321, %v6531
  %v6533 = vadd.f32 %v6528, %v6532
  %v6534 = vld [vmem:[%s10] sm:$0xff]
  %v6535 = vld [vmem:[%s10 + $0x8] sm:$0xff]
  %v6536 = vld [vmem:[%s10 + $0x10] sm:$0xff]
  %v6537 = vld [vmem:[%s10 + $0x18] sm:$0xff]
  %v6538 = vld [vmem:[%s10 + $0x20] sm:$0xff]
  %v6539 = vld [vmem:[%s10 + $0x28] sm:$0xff]
  %v6540 = vld [vmem:[%s10 + $0x30] sm:$0xff]
  %v6541 = vld [vmem:[%s10 + $0x38] sm:$0xff]
  %v6542 = vld [vmem:[%s11] sm:$0x1]
  %v6544 = vlaneseq
  %v6545 = vshrl.u32 %v6544, 7
  %v6546 = vsub.s32 0, %v6545
  %v6547 = vrot.slane %v6542, %v6546
  %v6550 = vsel %vm180, %v6533, 0
  %6552 = vmatprep.subr.mxu0 0.0
  %6553 = vmatpush1.msra.mxu0 %v6534
  %6554 = vmatprep.subr.mxu0 0.0
  %6555 = vmatpush1.msra.mxu0 %v6535
  %6556 = vmatprep.subr.mxu0 0.0
  %6557 = vmatpush1.msra.mxu0 %v6536
  %6558 = vmatprep.subr.mxu0 0.0
  %6559 = vmatpush1.msra.mxu0 %v6537
  %6560 = vmatprep.subr.mxu0 0.0
  %6561 = vmatpush1.msra.mxu0 %v6538
  %6562 = vmatprep.subr.mxu0 0.0
  %6563 = vmatpush1.msra.mxu0 %v6539
  %6564 = vmatprep.subr.mxu0 0.0
  %6565 = vmatpush1.msra.mxu0 %v6540
  %6566 = vmatprep.subr.mxu0 0.0
  %6567 = vmatpush1.msra.mxu0 %v6541
  %6568 = vmatprep.subr.mxu0 0.0
  %6569 = vmatpush1.msra.mxu0 0.0
  %6570 = vmatprep.subr.mxu0 0.0
  %6571 = vmatpush1.msra.mxu0 0.0
  %6572 = vmatprep.subr.mxu0 0.0
  %6573 = vmatpush1.msra.mxu0 0.0
  %6574 = vmatprep.subr.mxu0 0.0
  %6575 = vmatpush1.msra.mxu0 0.0
  %6576 = vmatprep.subr.mxu0 0.0
  %6577 = vmatpush1.msra.mxu0 0.0
  %6578 = vmatprep.subr.mxu0 0.0
  %6579 = vmatpush1.msra.mxu0 0.0
  %6580 = vmatprep.subr.mxu0 0.0
  %6581 = vmatpush1.msra.mxu0 0.0
  %6582 = vmatprep.subr.mxu0 0.0
  %6583 = vmatpush1.msra.mxu0 0.0
  %6584 = vmatprep.subr.mxu0 0.0
  %6585 = vmatpush1.msra.mxu0 0.0
  %6586 = vmatprep.subr.mxu0 0.0
  %6587 = vmatpush1.msra.mxu0 0.0
  %6588 = vmatprep.subr.mxu0 0.0
  %6589 = vmatpush1.msra.mxu0 0.0
  %6590 = vmatprep.subr.mxu0 0.0
  %6591 = vmatpush1.msra.mxu0 0.0
  %6592 = vmatprep.subr.mxu0 0.0
  %6593 = vmatpush1.msra.mxu0 0.0
  %6594 = vmatprep.subr.mxu0 0.0
  %6595 = vmatpush1.msra.mxu0 0.0
  %6596 = vmatprep.subr.mxu0 0.0
  %6597 = vmatpush1.msra.mxu0 0.0
  %6598 = vmatprep.subr.mxu0 0.0
  %6599 = vmatpush1.msra.mxu0 0.0
  %6600 = vmatprep.subr.mxu0 0.0
  %6601 = vmatpush1.msra.mxu0 0.0
  %6602 = vmatprep.subr.mxu0 0.0
  %6603 = vmatpush1.msra.mxu0 0.0
  %6604 = vmatprep.subr.mxu0 0.0
  %6605 = vmatpush1.msra.mxu0 0.0
  %6606 = vmatprep.subr.mxu0 0.0
  %6607 = vmatpush1.msra.mxu0 0.0
  %6608 = vmatprep.subr.mxu0 0.0
  %6609 = vmatpush1.msra.mxu0 0.0
  %6610 = vmatprep.subr.mxu0 0.0
  %6611 = vmatpush1.msra.mxu0 0.0
  %6612 = vmatprep.subr.mxu0 0.0
  %6613 = vmatpush1.msra.mxu0 0.0
  %6614 = vmatprep.subr.mxu0 0.0
  %6615 = vmatpush1.msra.mxu0 0.0
  %6616 = vmatprep.mubr.f32.mxu0 0.0
  %6617 = vmatmul.mubr.f32.gmra.mrb[0].mxu0 %v6550
  %v6618 = vpop.f32.mrb[0].mxu0
  %v6619 = vadd.f32 %v6547, %v6618
  %v6620 = vpop.f32.mrb[0].mxu0
  %6621 = vdwg.mxu0
  %v6622 = vmax.f32 %v6619, 0.0
  %v6623 = vld [vmem:[%s12] sm:$0xff]
  %v6624 = vld [vmem:[%s12 + $0x8] sm:$0xff]
  %v6625 = vld [vmem:[%s12 + $0x10] sm:$0xff]
  %v6626 = vld [vmem:[%s12 + $0x18] sm:$0xff]
  %v6627 = vld [vmem:[%s13] sm:$0x1]
  %v6629 = vlaneseq
  %v6630 = vshrl.u32 %v6629, 7
  %v6631 = vsub.s32 0, %v6630
  %v6632 = vrot.slane %v6627, %v6631
  %vm6634 = vcmask 261120
  %v6636 = vsel %vm6634, %v6622, 0
  %6638 = vmatprep.subr.mxu0 0.0
  %6639 = vmatpush1.msra.mxu0 %v6623
  %6640 = vmatprep.subr.mxu0 0.0
  %6641 = vmatpush1.msra.mxu0 %v6624
  %6642 = vmatprep.subr.mxu0 0.0
  %6643 = vmatpush1.msra.mxu0 %v6625
  %6644 = vmatprep.subr.mxu0 0.0
  %6645 = vmatpush1.msra.mxu0 %v6626
  %6646 = vmatprep.subr.mxu0 0.0
  %6647 = vmatpush1.msra.mxu0 0.0
  %6648 = vmatprep.subr.mxu0 0.0
  %6649 = vmatpush1.msra.mxu0 0.0
  %6650 = vmatprep.subr.mxu0 0.0
  %6651 = vmatpush1.msra.mxu0 0.0
  %6652 = vmatprep.subr.mxu0 0.0
  %6653 = vmatpush1.msra.mxu0 0.0
  %6654 = vmatprep.subr.mxu0 0.0
  %6655 = vmatpush1.msra.mxu0 0.0
  %6656 = vmatprep.subr.mxu0 0.0
  %6657 = vmatpush1.msra.mxu0 0.0
  %6658 = vmatprep.subr.mxu0 0.0
  %6659 = vmatpush1.msra.mxu0 0.0
  %6660 = vmatprep.subr.mxu0 0.0
  %6661 = vmatpush1.msra.mxu0 0.0
  %6662 = vmatprep.subr.mxu0 0.0
  %6663 = vmatpush1.msra.mxu0 0.0
  %6664 = vmatprep.subr.mxu0 0.0
  %6665 = vmatpush1.msra.mxu0 0.0
  %6666 = vmatprep.subr.mxu0 0.0
  %6667 = vmatpush1.msra.mxu0 0.0
  %6668 = vmatprep.subr.mxu0 0.0
  %6669 = vmatpush1.msra.mxu0 0.0
  %6670 = vmatprep.subr.mxu0 0.0
  %6671 = vmatpush1.msra.mxu0 0.0
  %6672 = vmatprep.subr.mxu0 0.0
  %6673 = vmatpush1.msra.mxu0 0.0
  %6674 = vmatprep.subr.mxu0 0.0
  %6675 = vmatpush1.msra.mxu0 0.0
  %6676 = vmatprep.subr.mxu0 0.0
  %6677 = vmatpush1.msra.mxu0 0.0
  %6678 = vmatprep.subr.mxu0 0.0
  %6679 = vmatpush1.msra.mxu0 0.0
  %6680 = vmatprep.subr.mxu0 0.0
  %6681 = vmatpush1.msra.mxu0 0.0
  %6682 = vmatprep.subr.mxu0 0.0
  %6683 = vmatpush1.msra.mxu0 0.0
  %6684 = vmatprep.subr.mxu0 0.0
  %6685 = vmatpush1.msra.mxu0 0.0
  %6686 = vmatprep.subr.mxu0 0.0
  %6687 = vmatpush1.msra.mxu0 0.0
  %6688 = vmatprep.subr.mxu0 0.0
  %6689 = vmatpush1.msra.mxu0 0.0
  %6690 = vmatprep.subr.mxu0 0.0
  %6691 = vmatpush1.msra.mxu0 0.0
  %6692 = vmatprep.subr.mxu0 0.0
  %6693 = vmatpush1.msra.mxu0 0.0
  %6694 = vmatprep.subr.mxu0 0.0
  %6695 = vmatpush1.msra.mxu0 0.0
  %6696 = vmatprep.subr.mxu0 0.0
  %6697 = vmatpush1.msra.mxu0 0.0
  %6698 = vmatprep.subr.mxu0 0.0
  %6699 = vmatpush1.msra.mxu0 0.0
  %6700 = vmatprep.subr.mxu0 0.0
  %6701 = vmatpush1.msra.mxu0 0.0
  %6702 = vmatprep.mubr.f32.mxu0 0.0
  %6703 = vmatmul.mubr.f32.gmra.mrb[0].mxu0 %v6636
  %v6704 = vpop.f32.mrb[0].mxu0
  %v6705 = vadd.f32 %v6632, %v6704
  %v6706 = vpop.f32.mrb[0].mxu0
  %6707 = vdwg.mxu0
  %vm6708 = vcmask 31744
  %6709 = vst.msk [vmem:[%s14] sm:$0xff] %vm6708, %v6705
  // Predicated region
  $region58: #{tpu_custom_call.1} parent=0 // pred_check
    _
  $region59: #{tpu_custom_call.1} parent=0 // pred_check_branch
    %6711 = sbr.rel (0) target = $region61
  $region60: #{tpu_custom_call.1} parent=0 // pred_region
    _
  $region61: #{tpu_custom_call.1} parent=0 // pred_fallthru
    _
  // Predicated region
  $region62: #{tpu_custom_call.1} parent=0 // pred_check
    _
  $region63: #{tpu_custom_call.1} parent=0 // pred_check_branch
    %6713 = sbr.rel (0) target = $region65
  $region64: #{tpu_custom_call.1} parent=0 // pred_region
    _
  $region65: #{tpu_custom_call.1} parent=0 // pred_fallthru
    _

</llo_original>
